<compile_context>
chip_gen: v5e
topology: v5e:2x2
jax: 0.10.0
libtpu: 0.0.40
codegen_flags: <defaults>
</compile_context>

<pallas_src>
import functools
import math

import jax
import jax.numpy as jnp
from jax.experimental import pallas as pl
from jax.experimental.pallas import tpu as pltpu


# ----------------------------------------------------------------------------
# Layout helpers (channels-first, flattened zero-padded spatial)
# ----------------------------------------------------------------------------
def _pad_flatten(x_nchw, pad):
    """Zero-pad H by (pad, pad+1), W by (pad, pad); flatten (Hp, Wp) -> Lp.

    The extra bottom row guarantees every shifted tap slice of length H*Wp
    stays inside the flat buffer (needed when dilation == pad)."""
    n, c, h, w = x_nchw.shape
    xp = jnp.pad(x_nchw, ((0, 0), (0, 0), (pad, pad + 1), (pad, pad)))
    w_pad = w + 2 * pad
    return xp.reshape(n, c, (h + 2 * pad + 1) * w_pad), w_pad


def _tap_offsets(pad, dil, w_pad):
    """Flat offsets of the 9 taps of a 3x3 conv (dilation dil, pad >= dil)."""
    return tuple((pad + (ty - 1) * dil) * w_pad + (pad + (tx - 1) * dil)
                 for ty in range(3) for tx in range(3))


def _batch_spec(c, l):
    # (batch squeezed, channels, flattened spatial) — last dim is lane-dense.
    return pl.BlockSpec((None, c, l), lambda b: (b, 0, 0))


def _const_spec(shape):
    nd = len(shape)
    return pl.BlockSpec(tuple(shape), lambda b: (0,) * nd)


_PARAMS = pltpu.CompilerParams(dimension_semantics=("parallel",))


# ----------------------------------------------------------------------------
# Pallas kernels
# ----------------------------------------------------------------------------
def _aspp_kernel(xp_ref, w1_ref, s1_ref, w2_ref, s2_ref, w3_ref, s3_ref,
                 wp_ref, gpb_ref, o_ref, *, off1, offs2, offs3, L):
    """Fully fused ASPP: 1x1 branch + two dilated 3x3 branches + projection.

    xp_ref : [Cin, Lp]   bf16  (zero-padded, flattened image, one batch elem)
    w1_ref : [F, Cin]          (BN scale folded)
    w2/w3  : [9, F, Cin]       (tap-major, BN scale folded)
    wp_ref : [3, F, F]         (projection blocks for b1/b2/b3)
    gpb_ref: [F, 1] f32        (global-pool branch folded into a bias)
    o_ref  : [F, L]    bf16    (extended flat output; garbage cols sliced off
                                by the wrapper)
    """
    f32 = jnp.float32

    def branch_3x3(w_ref, s_ref, offs):
        acc = jnp.zeros((w_ref.shape[1], L), f32)
        for t, off in enumerate(offs):
            acc = acc + jnp.dot(w_ref[t], xp_ref[:, off:off + L],
                                preferred_element_type=f32)
        return jnp.maximum(acc + s_ref[...], 0.0)

    center = xp_ref[:, off1:off1 + L]
    b1 = jnp.maximum(
        jnp.dot(w1_ref[...], center, preferred_element_type=f32) + s1_ref[...],
        0.0)
    b2 = branch_3x3(w2_ref, s2_ref, offs2)
    b3 = branch_3x3(w3_ref, s3_ref, offs3)

    out = jnp.dot(wp_ref[0], b1.astype(jnp.bfloat16), preferred_element_type=f32)
    out = out + jnp.dot(wp_ref[1], b2.astype(jnp.bfloat16),
                        preferred_element_type=f32)
    out = out + jnp.dot(wp_ref[2], b3.astype(jnp.bfloat16),
                        preferred_element_type=f32)
    out = out + gpb_ref[...]
    o_ref[...] = jnp.maximum(out, 0.0).astype(o_ref.dtype)


def _mix_kernel(up_ref, sk_ref, wu_ref, ws_ref, sh_ref, o_ref, *, offs, L):
    """3x3 ConvBnRelu over concat([up, skip]) with the concat fused away.

    up_ref : [Cu, Lp] bf16, sk_ref : [Cs, Lp] bf16 (both padded/flattened)
    wu_ref : [9, Cout, Cu], ws_ref : [9, Cout, Cs], sh_ref : [Cout, 1] f32
    """
    f32 = jnp.float32
    cout = wu_ref.shape[1]
    acc = jnp.zeros((cout, L), f32)
    for t, off in enumerate(offs):
        acc = acc + jnp.dot(wu_ref[t], up_ref[:, off:off + L],
                            preferred_element_type=f32)
        acc = acc + jnp.dot(ws_ref[t], sk_ref[:, off:off + L],
                            preferred_element_type=f32)
    o_ref[...] = jnp.maximum(acc + sh_ref[...], 0.0).astype(o_ref.dtype)


def _upconv_kernel(x_ref, w_ref, b_ref, o_ref):
    """ConvTranspose2d(k=2, s=2) as one matmul to 4*Cout rows (per batch)."""
    y = jnp.dot(w_ref[...], x_ref[...], preferred_element_type=jnp.float32)
    o_ref[...] = (y + b_ref[...]).astype(o_ref.dtype)


# ----------------------------------------------------------------------------
# Wrappers
# ----------------------------------------------------------------------------
def aspp_forward(x_nchw, p):
    n, cin, h, w = x_nchw.shape
    f = p['s1'].shape[0]

    # Global-pool branch: tiny per-batch vectors -> plain XLA, folded into a
    # per-batch bias for the fused projection (rank-1 term).
    pooled = jnp.mean(x_nchw, axis=(2, 3))                       # [n, Cin]
    gp = jax.nn.relu(pooled @ p['wg'].T + p['sg'])               # [n, F]
    gp_bias = (gp @ p['wp_gp'].T + p['sp'])[..., None]           # [n, F, 1]
    gp_bias = gp_bias.astype(jnp.float32)

    pad = 3                                    # max dilation of the branches
    xp, w_pad = _pad_flatten(x_nchw.astype(jnp.bfloat16), pad)
    lp = xp.shape[-1]
    l_ext = h * w_pad
    off1 = pad * w_pad + pad
    offs2 = _tap_offsets(pad, 2, w_pad)
    offs3 = _tap_offsets(pad, 3, w_pad)

    out_ext = pl.pallas_call(
        functools.partial(_aspp_kernel, off1=off1, offs2=offs2, offs3=offs3,
                          L=l_ext),
        out_shape=jax.ShapeDtypeStruct((n, f, l_ext), jnp.bfloat16),
        grid=(n,),
        in_specs=[
            _batch_spec(cin, lp),
            _const_spec(p['w1'].shape), _const_spec(p['s1'].shape),
            _const_spec(p['w2'].shape), _const_spec(p['s2'].shape),
            _const_spec(p['w3'].shape), _const_spec(p['s3'].shape),
            _const_spec(p['wp'].shape),
            _batch_spec(f, 1),
        ],
        out_specs=_batch_spec(f, l_ext),
        compiler_params=_PARAMS,
    )(xp, p['w1'], p['s1'], p['w2'], p['s2'], p['w3'], p['s3'], p['wp'],
      gp_bias)
    # drop the padded ("extended") columns
    return out_ext.reshape(n, f, h, w_pad)[:, :, :, :w]


def upconv2x2(x_nchw, w4, b4):
    n, cin, h, w = x_nchw.shape
    c4 = w4.shape[0]
    cout = c4 // 4
    l = h * w
    xf = x_nchw.reshape(n, cin, l)
    y = pl.pallas_call(
        _upconv_kernel,
        out_shape=jax.ShapeDtypeStruct((n, c4, l), jnp.bfloat16),
        grid=(n,),
        in_specs=[_batch_spec(cin, l), _const_spec(w4.shape),
                  _const_spec(b4.shape)],
        out_specs=_batch_spec(c4, l),
        compiler_params=_PARAMS,
    )(xf, w4, b4)
    # pixel shuffle (dy, dx, co, h, w) -> (co, 2h+dy, 2w+dx)
    # TODO(synk): interleave left as XLA glue; could be fused into the mix conv.
    y = y.reshape(n, 2, 2, cout, h, w)
    y = jnp.transpose(y, (0, 3, 4, 1, 5, 2)).reshape(n, cout, 2 * h, 2 * w)
    return y


def mixconv(up_nchw, skip_nchw, wu, ws, shift):
    n, cu, h, w = up_nchw.shape
    cs = skip_nchw.shape[1]
    cout = wu.shape[1]
    pad = 1
    upp, w_pad = _pad_flatten(up_nchw.astype(jnp.bfloat16), pad)
    skp, _ = _pad_flatten(skip_nchw.astype(jnp.bfloat16), pad)
    lp = upp.shape[-1]
    l_ext = h * w_pad
    offs = _tap_offsets(pad, 1, w_pad)

    y = pl.pallas_call(
        functools.partial(_mix_kernel, offs=offs, L=l_ext),
        out_shape=jax.ShapeDtypeStruct((n, cout, l_ext), jnp.bfloat16),
        grid=(n,),
        in_specs=[_batch_spec(cu, lp), _batch_spec(cs, lp),
                  _const_spec(wu.shape), _const_spec(ws.shape),
                  _const_spec(shift.shape)],
        out_specs=_batch_spec(cout, l_ext),
        compiler_params=_PARAMS,
    )(upp, skp, wu, ws, shift)
    return y.reshape(n, cout, h, w_pad)[:, :, :, :w]


def decoder_forward(features_nchw, skips_nchw, params, OS):
    x = aspp_forward(features_nchw.astype(jnp.float32), params['aspp'])
    current_os = OS
    for st in params['stages']:
        current_os //= 2
        up = upconv2x2(x, st['w4'], st['b4'])
        skip = skips_nchw[current_os]
        x = mixconv(up, skip, st['wu'], st['ws'], st['sm'])
    return x.astype(jnp.float32)


# ----------------------------------------------------------------------------
# Parameter init (deterministic, synthetic) with BN-scale folding
# ----------------------------------------------------------------------------
def _init_bn(key, c, eps=1e-5):
    k1, k2, k3, k4 = jax.random.split(key, 4)
    gamma = 1.0 + 0.1 * jax.random.normal(k1, (c,), jnp.float32)
    beta = 0.1 * jax.random.normal(k2, (c,), jnp.float32)
    mean = 0.1 * jax.random.normal(k3, (c,), jnp.float32)
    var = 1.0 + 0.1 * jax.random.uniform(k4, (c,), jnp.float32)
    scale = gamma / jnp.sqrt(var + eps)
    shift = beta - mean * scale
    return scale, shift


def _fold_taps(w_oihw, scale):
    """[Cout, Cin, 3, 3] * scale[Cout] -> tap-major [9, Cout, Cin]."""
    co, ci, kh, kw = w_oihw.shape
    wf = w_oihw * scale[:, None, None, None]
    return jnp.transpose(wf, (2, 3, 0, 1)).reshape(kh * kw, co, ci)


def init_decoder_params(key, feature_depth, aspp_channels, last_channels,
                        OS, skip_channels):
    keys = iter(jax.random.split(key, 32))
    f = aspp_channels
    cin = feature_depth
    bf16 = jnp.bfloat16

    aspp = {}
    # branch 1: 1x1 conv + BN
    w1 = jax.random.normal(next(keys), (f, cin), jnp.float32) / math.sqrt(cin)
    sc, sh = _init_bn(next(keys), f)
    aspp['w1'] = (w1 * sc[:, None]).astype(bf16)
    aspp['s1'] = sh[:, None]
    # branch 2: 3x3 conv dilation 2 + BN
    w2 = jax.random.normal(next(keys), (f, cin, 3, 3), jnp.float32) / math.sqrt(9 * cin)
    sc, sh = _init_bn(next(keys), f)
    aspp['w2'] = _fold_taps(w2, sc).astype(bf16)
    aspp['s2'] = sh[:, None]
    # branch 3: 3x3 conv dilation 3 + BN
    w3 = jax.random.normal(next(keys), (f, cin, 3, 3), jnp.float32) / math.sqrt(9 * cin)
    sc, sh = _init_bn(next(keys), f)
    aspp['w3'] = _fold_taps(w3, sc).astype(bf16)
    aspp['s3'] = sh[:, None]
    # global-pool branch: 1x1 conv + BN (kept f32, computed in the wrapper)
    wg = jax.random.normal(next(keys), (f, cin), jnp.float32) / math.sqrt(cin)
    sc, sh = _init_bn(next(keys), f)
    aspp['wg'] = wg * sc[:, None]
    aspp['sg'] = sh
    # projection: 1x1 conv over the 4F concat + BN, split into 4 K-blocks
    wproj = jax.random.normal(next(keys), (f, 4 * f), jnp.float32) / math.sqrt(4 * f)
    sc, sh = _init_bn(next(keys), f)
    wpf = wproj * sc[:, None]
    aspp['wp'] = jnp.stack([wpf[:, 0:f], wpf[:, f:2 * f], wpf[:, 2 * f:3 * f]],
                           axis=0).astype(bf16)
    aspp['wp_gp'] = wpf[:, 3 * f:4 * f]       # f32, used host-side
    aspp['sp'] = sh

    # decoder stages — mirrors the PyTorch __init__ while-loop
    stages = []
    current_os = OS
    current_depth = f
    while current_os > 1:
        current_os //= 2
        skip_depth = skip_channels[current_os]
        next_depth = skip_depth if current_os > 1 else last_channels
        st = {}
        # ConvTranspose2d(current_depth, current_depth, k=2, s=2), PyTorch
        # weight layout [Cin, Cout, kH, kW], bias [Cout].
        wu_t = jax.random.normal(
            next(keys), (current_depth, current_depth, 2, 2), jnp.float32
        ) / math.sqrt(current_depth * 4)
        bu = 0.1 * jax.random.normal(next(keys), (current_depth,), jnp.float32)
        st['w4'] = jnp.transpose(wu_t, (2, 3, 1, 0)).reshape(
            4 * current_depth, current_depth).astype(bf16)
        st['b4'] = jnp.tile(bu, 4)[:, None]   # f32 [4*Cout, 1]
        # ConvBnRelu(current_depth + skip_depth, next_depth, k=3)
        cin_tot = current_depth + skip_depth
        wm = jax.random.normal(
            next(keys), (next_depth, cin_tot, 3, 3), jnp.float32
        ) / math.sqrt(9 * cin_tot)
        sc, sh = _init_bn(next(keys), next_depth)
        wmf = _fold_taps(wm, sc)              # [9, Cout, Cin_tot]
        st['wu'] = wmf[:, :, :current_depth].astype(bf16)
        st['ws'] = wmf[:, :, current_depth:].astype(bf16)
        st['sm'] = sh[:, None]
        stages.append(st)
        current_depth = next_depth

    return {'aspp': aspp, 'stages': stages}


# ----------------------------------------------------------------------------
if __name__ == "__main__":
    key = jax.random.PRNGKey(0)
    k_feat, k_s2, k_s1, k_param = jax.random.split(key, 4)

    # Small, self-consistent shapes: input 32x32, OS=4 -> two decoder stages.
    OS = 4
    H, W = 32, 32
    feature_depth = 32
    aspp_channels = 16
    last_channels = 8

    features = jax.random.normal(
        k_feat, (2, feature_depth, H // OS, W // OS), jnp.float32)
    skips = {
        2: jax.random.normal(k_s2, (2, 8, H // 2, W // 2), jnp.float32),
        1: jax.random.normal(k_s1, (2, 3, H, W), jnp.float32),
    }
    skip_channels = {os_: arr.shape[1] for os_, arr in skips.items()}

    params = init_decoder_params(
        k_param, feature_depth, aspp_channels, last_channels, OS, skip_channels)

    fwd = jax.jit(lambda feat, sk, prm: decoder_forward(feat, sk, prm, OS))
    out = fwd(features, skips, params)
    out = jax.block_until_ready(out)
    assert out.shape == (2, last_channels, H, W), out.shape
    assert bool(jnp.all(jnp.isfinite(out)))
    print("KERNEL_OK")
</pallas_src>

<mosaic_0001>
module attributes {stable_mosaic.version = 11 : i64} {
  func.func @_aspp_kernel(%arg0: i32, %arg1: memref<1x32x210xbf16, #tpu.memory_space<vmem>>, %arg2: memref<16x32xbf16, #tpu.memory_space<vmem>>, %arg3: memref<16x1xf32, #tpu.memory_space<vmem>>, %arg4: memref<9x16x32xbf16, #tpu.memory_space<vmem>>, %arg5: memref<16x1xf32, #tpu.memory_space<vmem>>, %arg6: memref<9x16x32xbf16, #tpu.memory_space<vmem>>, %arg7: memref<16x1xf32, #tpu.memory_space<vmem>>, %arg8: memref<3x16x16xbf16, #tpu.memory_space<vmem>>, %arg9: memref<1x16x1xf32, #tpu.memory_space<vmem>>, %arg10: memref<1x16x112xbf16, #tpu.memory_space<vmem>>) attributes {dimension_semantics = [#tpu.dimension_semantics<parallel>], iteration_bounds = array<i64: 2>, scalar_prefetch = 0 : i64, scratch_operands = 0 : i64, tpu.core_type = #tpu.core_type<tc>, window_params = [{transform_indices = @transform_0, window_bounds = array<i64: 1, 32, 210>}, {pipeline_mode = #tpu.pipeline_mode<synchronous>, transform_indices = @transform_1, window_bounds = array<i64: 16, 32>}, {pipeline_mode = #tpu.pipeline_mode<synchronous>, transform_indices = @transform_2, window_bounds = array<i64: 16, 1>}, {pipeline_mode = #tpu.pipeline_mode<synchronous>, transform_indices = @transform_3, window_bounds = array<i64: 9, 16, 32>}, {pipeline_mode = #tpu.pipeline_mode<synchronous>, transform_indices = @transform_4, window_bounds = array<i64: 16, 1>}, {pipeline_mode = #tpu.pipeline_mode<synchronous>, transform_indices = @transform_5, window_bounds = array<i64: 9, 16, 32>}, {pipeline_mode = #tpu.pipeline_mode<synchronous>, transform_indices = @transform_6, window_bounds = array<i64: 16, 1>}, {pipeline_mode = #tpu.pipeline_mode<synchronous>, transform_indices = @transform_7, window_bounds = array<i64: 3, 16, 16>}, {transform_indices = @transform_8, window_bounds = array<i64: 1, 16, 1>}, {transform_indices = @transform_9, window_bounds = array<i64: 1, 16, 112>}]} {
    %c0 = arith.constant 0 : index
    %c0_0 = arith.constant 0 : index
    %c45 = arith.constant 45 : index
    %0 = vector.load %arg1[%c0, %c0_0, %c45] : memref<1x32x210xbf16, #tpu.memory_space<vmem>>, vector<1x32x112xbf16>
    %1 = vector.shape_cast %0 : vector<1x32x112xbf16> to vector<32x112xbf16>
    %c0_1 = arith.constant 0 : index
    %c0_2 = arith.constant 0 : index
    %2 = vector.load %arg2[%c0_1, %c0_2] : memref<16x32xbf16, #tpu.memory_space<vmem>>, vector<16x32xbf16>
    %cst = arith.constant dense<0.000000e+00> : vector<16x112xf32>
    %3 = tpu.matmul %2, %1, %cst {dimension_numbers = #tpu.dot_dimension_numbers<[1], [0], [0], [1], [0, 0, 1, 1], [], []>} : vector<16x32xbf16>, vector<32x112xbf16>, vector<16x112xf32> -> vector<16x112xf32>
    %c0_3 = arith.constant 0 : index
    %c0_4 = arith.constant 0 : index
    %4 = vector.load %arg3[%c0_3, %c0_4] : memref<16x1xf32, #tpu.memory_space<vmem>>, vector<16x1xf32>
    %5 = vector.broadcast %4 : vector<16x1xf32> to vector<16x112xf32>
    %6 = arith.addf %3, %5 : vector<16x112xf32>
    %cst_5 = arith.constant 0.000000e+00 : f32
    %7 = vector.broadcast %cst_5 : f32 to vector<16x112xf32>
    %8 = arith.maximumf %6, %7 : vector<16x112xf32>
    %cst_6 = arith.constant 0.000000e+00 : f32
    %9 = vector.broadcast %cst_6 : f32 to vector<16x112xf32>
    %c0_7 = arith.constant 0 : index
    %c0_8 = arith.constant 0 : index
    %c0_9 = arith.constant 0 : index
    %10 = vector.load %arg4[%c0_7, %c0_8, %c0_9] : memref<9x16x32xbf16, #tpu.memory_space<vmem>>, vector<1x16x32xbf16>
    %11 = vector.shape_cast %10 : vector<1x16x32xbf16> to vector<16x32xbf16>
    %c0_10 = arith.constant 0 : index
    %c0_11 = arith.constant 0 : index
    %c15 = arith.constant 15 : index
    %12 = vector.load %arg1[%c0_10, %c0_11, %c15] : memref<1x32x210xbf16, #tpu.memory_space<vmem>>, vector<1x32x112xbf16>
    %13 = vector.shape_cast %12 : vector<1x32x112xbf16> to vector<32x112xbf16>
    %cst_12 = arith.constant dense<0.000000e+00> : vector<16x112xf32>
    %14 = tpu.matmul %11, %13, %cst_12 {dimension_numbers = #tpu.dot_dimension_numbers<[1], [0], [0], [1], [0, 0, 1, 1], [], []>} : vector<16x32xbf16>, vector<32x112xbf16>, vector<16x112xf32> -> vector<16x112xf32>
    %15 = arith.addf %9, %14 : vector<16x112xf32>
    %c1 = arith.constant 1 : index
    %c0_13 = arith.constant 0 : index
    %c0_14 = arith.constant 0 : index
    %16 = vector.load %arg4[%c1, %c0_13, %c0_14] : memref<9x16x32xbf16, #tpu.memory_space<vmem>>, vector<1x16x32xbf16>
    %17 = vector.shape_cast %16 : vector<1x16x32xbf16> to vector<16x32xbf16>
    %c0_15 = arith.constant 0 : index
    %c0_16 = arith.constant 0 : index
    %c17 = arith.constant 17 : index
    %18 = vector.load %arg1[%c0_15, %c0_16, %c17] : memref<1x32x210xbf16, #tpu.memory_space<vmem>>, vector<1x32x112xbf16>
    %19 = vector.shape_cast %18 : vector<1x32x112xbf16> to vector<32x112xbf16>
    %cst_17 = arith.constant dense<0.000000e+00> : vector<16x112xf32>
    %20 = tpu.matmul %17, %19, %cst_17 {dimension_numbers = #tpu.dot_dimension_numbers<[1], [0], [0], [1], [0, 0, 1, 1], [], []>} : vector<16x32xbf16>, vector<32x112xbf16>, vector<16x112xf32> -> vector<16x112xf32>
    %21 = arith.addf %15, %20 : vector<16x112xf32>
    %c2 = arith.constant 2 : index
    %c0_18 = arith.constant 0 : index
    %c0_19 = arith.constant 0 : index
    %22 = vector.load %arg4[%c2, %c0_18, %c0_19] : memref<9x16x32xbf16, #tpu.memory_space<vmem>>, vector<1x16x32xbf16>
    %23 = vector.shape_cast %22 : vector<1x16x32xbf16> to vector<16x32xbf16>
    %c0_20 = arith.constant 0 : index
    %c0_21 = arith.constant 0 : index
    %c19 = arith.constant 19 : index
    %24 = vector.load %arg1[%c0_20, %c0_21, %c19] : memref<1x32x210xbf16, #tpu.memory_space<vmem>>, vector<1x32x112xbf16>
    %25 = vector.shape_cast %24 : vector<1x32x112xbf16> to vector<32x112xbf16>
    %cst_22 = arith.constant dense<0.000000e+00> : vector<16x112xf32>
    %26 = tpu.matmul %23, %25, %cst_22 {dimension_numbers = #tpu.dot_dimension_numbers<[1], [0], [0], [1], [0, 0, 1, 1], [], []>} : vector<16x32xbf16>, vector<32x112xbf16>, vector<16x112xf32> -> vector<16x112xf32>
    %27 = arith.addf %21, %26 : vector<16x112xf32>
    %c3 = arith.constant 3 : index
    %c0_23 = arith.constant 0 : index
    %c0_24 = arith.constant 0 : index
    %28 = vector.load %arg4[%c3, %c0_23, %c0_24] : memref<9x16x32xbf16, #tpu.memory_space<vmem>>, vector<1x16x32xbf16>
    %29 = vector.shape_cast %28 : vector<1x16x32xbf16> to vector<16x32xbf16>
    %c0_25 = arith.constant 0 : index
    %c0_26 = arith.constant 0 : index
    %c43 = arith.constant 43 : index
    %30 = vector.load %arg1[%c0_25, %c0_26, %c43] : memref<1x32x210xbf16, #tpu.memory_space<vmem>>, vector<1x32x112xbf16>
    %31 = vector.shape_cast %30 : vector<1x32x112xbf16> to vector<32x112xbf16>
    %cst_27 = arith.constant dense<0.000000e+00> : vector<16x112xf32>
    %32 = tpu.matmul %29, %31, %cst_27 {dimension_numbers = #tpu.dot_dimension_numbers<[1], [0], [0], [1], [0, 0, 1, 1], [], []>} : vector<16x32xbf16>, vector<32x112xbf16>, vector<16x112xf32> -> vector<16x112xf32>
    %33 = arith.addf %27, %32 : vector<16x112xf32>
    %c4 = arith.constant 4 : index
    %c0_28 = arith.constant 0 : index
    %c0_29 = arith.constant 0 : index
    %34 = vector.load %arg4[%c4, %c0_28, %c0_29] : memref<9x16x32xbf16, #tpu.memory_space<vmem>>, vector<1x16x32xbf16>
    %35 = vector.shape_cast %34 : vector<1x16x32xbf16> to vector<16x32xbf16>
    %c0_30 = arith.constant 0 : index
    %c0_31 = arith.constant 0 : index
    %c45_32 = arith.constant 45 : index
    %36 = vector.load %arg1[%c0_30, %c0_31, %c45_32] : memref<1x32x210xbf16, #tpu.memory_space<vmem>>, vector<1x32x112xbf16>
    %37 = vector.shape_cast %36 : vector<1x32x112xbf16> to vector<32x112xbf16>
    %cst_33 = arith.constant dense<0.000000e+00> : vector<16x112xf32>
    %38 = tpu.matmul %35, %37, %cst_33 {dimension_numbers = #tpu.dot_dimension_numbers<[1], [0], [0], [1], [0, 0, 1, 1], [], []>} : vector<16x32xbf16>, vector<32x112xbf16>, vector<16x112xf32> -> vector<16x112xf32>
    %39 = arith.addf %33, %38 : vector<16x112xf32>
    %c5 = arith.constant 5 : index
    %c0_34 = arith.constant 0 : index
    %c0_35 = arith.constant 0 : index
    %40 = vector.load %arg4[%c5, %c0_34, %c0_35] : memref<9x16x32xbf16, #tpu.memory_space<vmem>>, vector<1x16x32xbf16>
    %41 = vector.shape_cast %40 : vector<1x16x32xbf16> to vector<16x32xbf16>
    %c0_36 = arith.constant 0 : index
    %c0_37 = arith.constant 0 : index
    %c47 = arith.constant 47 : index
    %42 = vector.load %arg1[%c0_36, %c0_37, %c47] : memref<1x32x210xbf16, #tpu.memory_space<vmem>>, vector<1x32x112xbf16>
    %43 = vector.shape_cast %42 : vector<1x32x112xbf16> to vector<32x112xbf16>
    %cst_38 = arith.constant dense<0.000000e+00> : vector<16x112xf32>
    %44 = tpu.matmul %41, %43, %cst_38 {dimension_numbers = #tpu.dot_dimension_numbers<[1], [0], [0], [1], [0, 0, 1, 1], [], []>} : vector<16x32xbf16>, vector<32x112xbf16>, vector<16x112xf32> -> vector<16x112xf32>
    %45 = arith.addf %39, %44 : vector<16x112xf32>
    %c6 = arith.constant 6 : index
    %c0_39 = arith.constant 0 : index
    %c0_40 = arith.constant 0 : index
    %46 = vector.load %arg4[%c6, %c0_39, %c0_40] : memref<9x16x32xbf16, #tpu.memory_space<vmem>>, vector<1x16x32xbf16>
    %47 = vector.shape_cast %46 : vector<1x16x32xbf16> to vector<16x32xbf16>
    %c0_41 = arith.constant 0 : index
    %c0_42 = arith.constant 0 : index
    %c71 = arith.constant 71 : index
    %48 = vector.load %arg1[%c0_41, %c0_42, %c71] : memref<1x32x210xbf16, #tpu.memory_space<vmem>>, vector<1x32x112xbf16>
    %49 = vector.shape_cast %48 : vector<1x32x112xbf16> to vector<32x112xbf16>
    %cst_43 = arith.constant dense<0.000000e+00> : vector<16x112xf32>
    %50 = tpu.matmul %47, %49, %cst_43 {dimension_numbers = #tpu.dot_dimension_numbers<[1], [0], [0], [1], [0, 0, 1, 1], [], []>} : vector<16x32xbf16>, vector<32x112xbf16>, vector<16x112xf32> -> vector<16x112xf32>
    %51 = arith.addf %45, %50 : vector<16x112xf32>
    %c7 = arith.constant 7 : index
    %c0_44 = arith.constant 0 : index
    %c0_45 = arith.constant 0 : index
    %52 = vector.load %arg4[%c7, %c0_44, %c0_45] : memref<9x16x32xbf16, #tpu.memory_space<vmem>>, vector<1x16x32xbf16>
    %53 = vector.shape_cast %52 : vector<1x16x32xbf16> to vector<16x32xbf16>
    %c0_46 = arith.constant 0 : index
    %c0_47 = arith.constant 0 : index
    %c73 = arith.constant 73 : index
    %54 = vector.load %arg1[%c0_46, %c0_47, %c73] : memref<1x32x210xbf16, #tpu.memory_space<vmem>>, vector<1x32x112xbf16>
    %55 = vector.shape_cast %54 : vector<1x32x112xbf16> to vector<32x112xbf16>
    %cst_48 = arith.constant dense<0.000000e+00> : vector<16x112xf32>
    %56 = tpu.matmul %53, %55, %cst_48 {dimension_numbers = #tpu.dot_dimension_numbers<[1], [0], [0], [1], [0, 0, 1, 1], [], []>} : vector<16x32xbf16>, vector<32x112xbf16>, vector<16x112xf32> -> vector<16x112xf32>
    %57 = arith.addf %51, %56 : vector<16x112xf32>
    %c8 = arith.constant 8 : index
    %c0_49 = arith.constant 0 : index
    %c0_50 = arith.constant 0 : index
    %58 = vector.load %arg4[%c8, %c0_49, %c0_50] : memref<9x16x32xbf16, #tpu.memory_space<vmem>>, vector<1x16x32xbf16>
    %59 = vector.shape_cast %58 : vector<1x16x32xbf16> to vector<16x32xbf16>
    %c0_51 = arith.constant 0 : index
    %c0_52 = arith.constant 0 : index
    %c75 = arith.constant 75 : index
    %60 = vector.load %arg1[%c0_51, %c0_52, %c75] : memref<1x32x210xbf16, #tpu.memory_space<vmem>>, vector<1x32x112xbf16>
    %61 = vector.shape_cast %60 : vector<1x32x112xbf16> to vector<32x112xbf16>
    %cst_53 = arith.constant dense<0.000000e+00> : vector<16x112xf32>
    %62 = tpu.matmul %59, %61, %cst_53 {dimension_numbers = #tpu.dot_dimension_numbers<[1], [0], [0], [1], [0, 0, 1, 1], [], []>} : vector<16x32xbf16>, vector<32x112xbf16>, vector<16x112xf32> -> vector<16x112xf32>
    %63 = arith.addf %57, %62 : vector<16x112xf32>
    %c0_54 = arith.constant 0 : index
    %c0_55 = arith.constant 0 : index
    %64 = vector.load %arg5[%c0_54, %c0_55] : memref<16x1xf32, #tpu.memory_space<vmem>>, vector<16x1xf32>
    %65 = vector.broadcast %64 : vector<16x1xf32> to vector<16x112xf32>
    %66 = arith.addf %63, %65 : vector<16x112xf32>
    %cst_56 = arith.constant 0.000000e+00 : f32
    %67 = vector.broadcast %cst_56 : f32 to vector<16x112xf32>
    %68 = arith.maximumf %66, %67 : vector<16x112xf32>
    %cst_57 = arith.constant 0.000000e+00 : f32
    %69 = vector.broadcast %cst_57 : f32 to vector<16x112xf32>
    %c0_58 = arith.constant 0 : index
    %c0_59 = arith.constant 0 : index
    %c0_60 = arith.constant 0 : index
    %70 = vector.load %arg6[%c0_58, %c0_59, %c0_60] : memref<9x16x32xbf16, #tpu.memory_space<vmem>>, vector<1x16x32xbf16>
    %71 = vector.shape_cast %70 : vector<1x16x32xbf16> to vector<16x32xbf16>
    %c0_61 = arith.constant 0 : index
    %c0_62 = arith.constant 0 : index
    %c0_63 = arith.constant 0 : index
    %72 = vector.load %arg1[%c0_61, %c0_62, %c0_63] : memref<1x32x210xbf16, #tpu.memory_space<vmem>>, vector<1x32x112xbf16>
    %73 = vector.shape_cast %72 : vector<1x32x112xbf16> to vector<32x112xbf16>
    %cst_64 = arith.constant dense<0.000000e+00> : vector<16x112xf32>
    %74 = tpu.matmul %71, %73, %cst_64 {dimension_numbers = #tpu.dot_dimension_numbers<[1], [0], [0], [1], [0, 0, 1, 1], [], []>} : vector<16x32xbf16>, vector<32x112xbf16>, vector<16x112xf32> -> vector<16x112xf32>
    %75 = arith.addf %69, %74 : vector<16x112xf32>
    %c1_65 = arith.constant 1 : index
    %c0_66 = arith.constant 0 : index
    %c0_67 = arith.constant 0 : index
    %76 = vector.load %arg6[%c1_65, %c0_66, %c0_67] : memref<9x16x32xbf16, #tpu.memory_space<vmem>>, vector<1x16x32xbf16>
    %77 = vector.shape_cast %76 : vector<1x16x32xbf16> to vector<16x32xbf16>
    %c0_68 = arith.constant 0 : index
    %c0_69 = arith.constant 0 : index
    %c3_70 = arith.constant 3 : index
    %78 = vector.load %arg1[%c0_68, %c0_69, %c3_70] : memref<1x32x210xbf16, #tpu.memory_space<vmem>>, vector<1x32x112xbf16>
    %79 = vector.shape_cast %78 : vector<1x32x112xbf16> to vector<32x112xbf16>
    %cst_71 = arith.constant dense<0.000000e+00> : vector<16x112xf32>
    %80 = tpu.matmul %77, %79, %cst_71 {dimension_numbers = #tpu.dot_dimension_numbers<[1], [0], [0], [1], [0, 0, 1, 1], [], []>} : vector<16x32xbf16>, vector<32x112xbf16>, vector<16x112xf32> -> vector<16x112xf32>
    %81 = arith.addf %75, %80 : vector<16x112xf32>
    %c2_72 = arith.constant 2 : index
    %c0_73 = arith.constant 0 : index
    %c0_74 = arith.constant 0 : index
    %82 = vector.load %arg6[%c2_72, %c0_73, %c0_74] : memref<9x16x32xbf16, #tpu.memory_space<vmem>>, vector<1x16x32xbf16>
    %83 = vector.shape_cast %82 : vector<1x16x32xbf16> to vector<16x32xbf16>
    %c0_75 = arith.constant 0 : index
    %c0_76 = arith.constant 0 : index
    %c6_77 = arith.constant 6 : index
    %84 = vector.load %arg1[%c0_75, %c0_76, %c6_77] : memref<1x32x210xbf16, #tpu.memory_space<vmem>>, vector<1x32x112xbf16>
    %85 = vector.shape_cast %84 : vector<1x32x112xbf16> to vector<32x112xbf16>
    %cst_78 = arith.constant dense<0.000000e+00> : vector<16x112xf32>
    %86 = tpu.matmul %83, %85, %cst_78 {dimension_numbers = #tpu.dot_dimension_numbers<[1], [0], [0], [1], [0, 0, 1, 1], [], []>} : vector<16x32xbf16>, vector<32x112xbf16>, vector<16x112xf32> -> vector<16x112xf32>
    %87 = arith.addf %81, %86 : vector<16x112xf32>
    %c3_79 = arith.constant 3 : index
    %c0_80 = arith.constant 0 : index
    %c0_81 = arith.constant 0 : index
    %88 = vector.load %arg6[%c3_79, %c0_80, %c0_81] : memref<9x16x32xbf16, #tpu.memory_space<vmem>>, vector<1x16x32xbf16>
    %89 = vector.shape_cast %88 : vector<1x16x32xbf16> to vector<16x32xbf16>
    %c0_82 = arith.constant 0 : index
    %c0_83 = arith.constant 0 : index
    %c42 = arith.constant 42 : index
    %90 = vector.load %arg1[%c0_82, %c0_83, %c42] : memref<1x32x210xbf16, #tpu.memory_space<vmem>>, vector<1x32x112xbf16>
    %91 = vector.shape_cast %90 : vector<1x32x112xbf16> to vector<32x112xbf16>
    %cst_84 = arith.constant dense<0.000000e+00> : vector<16x112xf32>
    %92 = tpu.matmul %89, %91, %cst_84 {dimension_numbers = #tpu.dot_dimension_numbers<[1], [0], [0], [1], [0, 0, 1, 1], [], []>} : vector<16x32xbf16>, vector<32x112xbf16>, vector<16x112xf32> -> vector<16x112xf32>
    %93 = arith.addf %87, %92 : vector<16x112xf32>
    %c4_85 = arith.constant 4 : index
    %c0_86 = arith.constant 0 : index
    %c0_87 = arith.constant 0 : index
    %94 = vector.load %arg6[%c4_85, %c0_86, %c0_87] : memref<9x16x32xbf16, #tpu.memory_space<vmem>>, vector<1x16x32xbf16>
    %95 = vector.shape_cast %94 : vector<1x16x32xbf16> to vector<16x32xbf16>
    %c0_88 = arith.constant 0 : index
    %c0_89 = arith.constant 0 : index
    %c45_90 = arith.constant 45 : index
    %96 = vector.load %arg1[%c0_88, %c0_89, %c45_90] : memref<1x32x210xbf16, #tpu.memory_space<vmem>>, vector<1x32x112xbf16>
    %97 = vector.shape_cast %96 : vector<1x32x112xbf16> to vector<32x112xbf16>
    %cst_91 = arith.constant dense<0.000000e+00> : vector<16x112xf32>
    %98 = tpu.matmul %95, %97, %cst_91 {dimension_numbers = #tpu.dot_dimension_numbers<[1], [0], [0], [1], [0, 0, 1, 1], [], []>} : vector<16x32xbf16>, vector<32x112xbf16>, vector<16x112xf32> -> vector<16x112xf32>
    %99 = arith.addf %93, %98 : vector<16x112xf32>
    %c5_92 = arith.constant 5 : index
    %c0_93 = arith.constant 0 : index
    %c0_94 = arith.constant 0 : index
    %100 = vector.load %arg6[%c5_92, %c0_93, %c0_94] : memref<9x16x32xbf16, #tpu.memory_space<vmem>>, vector<1x16x32xbf16>
    %101 = vector.shape_cast %100 : vector<1x16x32xbf16> to vector<16x32xbf16>
    %c0_95 = arith.constant 0 : index
    %c0_96 = arith.constant 0 : index
    %c48 = arith.constant 48 : index
    %102 = vector.load %arg1[%c0_95, %c0_96, %c48] : memref<1x32x210xbf16, #tpu.memory_space<vmem>>, vector<1x32x112xbf16>
    %103 = vector.shape_cast %102 : vector<1x32x112xbf16> to vector<32x112xbf16>
    %cst_97 = arith.constant dense<0.000000e+00> : vector<16x112xf32>
    %104 = tpu.matmul %101, %103, %cst_97 {dimension_numbers = #tpu.dot_dimension_numbers<[1], [0], [0], [1], [0, 0, 1, 1], [], []>} : vector<16x32xbf16>, vector<32x112xbf16>, vector<16x112xf32> -> vector<16x112xf32>
    %105 = arith.addf %99, %104 : vector<16x112xf32>
    %c6_98 = arith.constant 6 : index
    %c0_99 = arith.constant 0 : index
    %c0_100 = arith.constant 0 : index
    %106 = vector.load %arg6[%c6_98, %c0_99, %c0_100] : memref<9x16x32xbf16, #tpu.memory_space<vmem>>, vector<1x16x32xbf16>
    %107 = vector.shape_cast %106 : vector<1x16x32xbf16> to vector<16x32xbf16>
    %c0_101 = arith.constant 0 : index
    %c0_102 = arith.constant 0 : index
    %c84 = arith.constant 84 : index
    %108 = vector.load %arg1[%c0_101, %c0_102, %c84] : memref<1x32x210xbf16, #tpu.memory_space<vmem>>, vector<1x32x112xbf16>
    %109 = vector.shape_cast %108 : vector<1x32x112xbf16> to vector<32x112xbf16>
    %cst_103 = arith.constant dense<0.000000e+00> : vector<16x112xf32>
    %110 = tpu.matmul %107, %109, %cst_103 {dimension_numbers = #tpu.dot_dimension_numbers<[1], [0], [0], [1], [0, 0, 1, 1], [], []>} : vector<16x32xbf16>, vector<32x112xbf16>, vector<16x112xf32> -> vector<16x112xf32>
    %111 = arith.addf %105, %110 : vector<16x112xf32>
    %c7_104 = arith.constant 7 : index
    %c0_105 = arith.constant 0 : index
    %c0_106 = arith.constant 0 : index
    %112 = vector.load %arg6[%c7_104, %c0_105, %c0_106] : memref<9x16x32xbf16, #tpu.memory_space<vmem>>, vector<1x16x32xbf16>
    %113 = vector.shape_cast %112 : vector<1x16x32xbf16> to vector<16x32xbf16>
    %c0_107 = arith.constant 0 : index
    %c0_108 = arith.constant 0 : index
    %c87 = arith.constant 87 : index
    %114 = vector.load %arg1[%c0_107, %c0_108, %c87] : memref<1x32x210xbf16, #tpu.memory_space<vmem>>, vector<1x32x112xbf16>
    %115 = vector.shape_cast %114 : vector<1x32x112xbf16> to vector<32x112xbf16>
    %cst_109 = arith.constant dense<0.000000e+00> : vector<16x112xf32>
    %116 = tpu.matmul %113, %115, %cst_109 {dimension_numbers = #tpu.dot_dimension_numbers<[1], [0], [0], [1], [0, 0, 1, 1], [], []>} : vector<16x32xbf16>, vector<32x112xbf16>, vector<16x112xf32> -> vector<16x112xf32>
    %117 = arith.addf %111, %116 : vector<16x112xf32>
    %c8_110 = arith.constant 8 : index
    %c0_111 = arith.constant 0 : index
    %c0_112 = arith.constant 0 : index
    %118 = vector.load %arg6[%c8_110, %c0_111, %c0_112] : memref<9x16x32xbf16, #tpu.memory_space<vmem>>, vector<1x16x32xbf16>
    %119 = vector.shape_cast %118 : vector<1x16x32xbf16> to vector<16x32xbf16>
    %c0_113 = arith.constant 0 : index
    %c0_114 = arith.constant 0 : index
    %c90 = arith.constant 90 : index
    %120 = vector.load %arg1[%c0_113, %c0_114, %c90] : memref<1x32x210xbf16, #tpu.memory_space<vmem>>, vector<1x32x112xbf16>
    %121 = vector.shape_cast %120 : vector<1x32x112xbf16> to vector<32x112xbf16>
    %cst_115 = arith.constant dense<0.000000e+00> : vector<16x112xf32>
    %122 = tpu.matmul %119, %121, %cst_115 {dimension_numbers = #tpu.dot_dimension_numbers<[1], [0], [0], [1], [0, 0, 1, 1], [], []>} : vector<16x32xbf16>, vector<32x112xbf16>, vector<16x112xf32> -> vector<16x112xf32>
    %123 = arith.addf %117, %122 : vector<16x112xf32>
    %c0_116 = arith.constant 0 : index
    %c0_117 = arith.constant 0 : index
    %124 = vector.load %arg7[%c0_116, %c0_117] : memref<16x1xf32, #tpu.memory_space<vmem>>, vector<16x1xf32>
    %125 = vector.broadcast %124 : vector<16x1xf32> to vector<16x112xf32>
    %126 = arith.addf %123, %125 : vector<16x112xf32>
    %cst_118 = arith.constant 0.000000e+00 : f32
    %127 = vector.broadcast %cst_118 : f32 to vector<16x112xf32>
    %128 = arith.maximumf %126, %127 : vector<16x112xf32>
    %c0_119 = arith.constant 0 : index
    %c0_120 = arith.constant 0 : index
    %c0_121 = arith.constant 0 : index
    %129 = vector.load %arg8[%c0_119, %c0_120, %c0_121] : memref<3x16x16xbf16, #tpu.memory_space<vmem>>, vector<1x16x16xbf16>
    %130 = vector.shape_cast %129 : vector<1x16x16xbf16> to vector<16x16xbf16>
    %131 = arith.truncf %8 : vector<16x112xf32> to vector<16x112xbf16>
    %cst_122 = arith.constant dense<0.000000e+00> : vector<16x112xf32>
    %132 = tpu.matmul %130, %131, %cst_122 {dimension_numbers = #tpu.dot_dimension_numbers<[1], [0], [0], [1], [0, 0, 1, 1], [], []>} : vector<16x16xbf16>, vector<16x112xbf16>, vector<16x112xf32> -> vector<16x112xf32>
    %c1_123 = arith.constant 1 : index
    %c0_124 = arith.constant 0 : index
    %c0_125 = arith.constant 0 : index
    %133 = vector.load %arg8[%c1_123, %c0_124, %c0_125] : memref<3x16x16xbf16, #tpu.memory_space<vmem>>, vector<1x16x16xbf16>
    %134 = vector.shape_cast %133 : vector<1x16x16xbf16> to vector<16x16xbf16>
    %135 = arith.truncf %68 : vector<16x112xf32> to vector<16x112xbf16>
    %cst_126 = arith.constant dense<0.000000e+00> : vector<16x112xf32>
    %136 = tpu.matmul %134, %135, %cst_126 {dimension_numbers = #tpu.dot_dimension_numbers<[1], [0], [0], [1], [0, 0, 1, 1], [], []>} : vector<16x16xbf16>, vector<16x112xbf16>, vector<16x112xf32> -> vector<16x112xf32>
    %137 = arith.addf %132, %136 : vector<16x112xf32>
    %c2_127 = arith.constant 2 : index
    %c0_128 = arith.constant 0 : index
    %c0_129 = arith.constant 0 : index
    %138 = vector.load %arg8[%c2_127, %c0_128, %c0_129] : memref<3x16x16xbf16, #tpu.memory_space<vmem>>, vector<1x16x16xbf16>
    %139 = vector.shape_cast %138 : vector<1x16x16xbf16> to vector<16x16xbf16>
    %140 = arith.truncf %128 : vector<16x112xf32> to vector<16x112xbf16>
    %cst_130 = arith.constant dense<0.000000e+00> : vector<16x112xf32>
    %141 = tpu.matmul %139, %140, %cst_130 {dimension_numbers = #tpu.dot_dimension_numbers<[1], [0], [0], [1], [0, 0, 1, 1], [], []>} : vector<16x16xbf16>, vector<16x112xbf16>, vector<16x112xf32> -> vector<16x112xf32>
    %142 = arith.addf %137, %141 : vector<16x112xf32>
    %c0_131 = arith.constant 0 : index
    %c0_132 = arith.constant 0 : index
    %c0_133 = arith.constant 0 : index
    %143 = vector.load %arg9[%c0_131, %c0_132, %c0_133] : memref<1x16x1xf32, #tpu.memory_space<vmem>>, vector<1x16x1xf32>
    %144 = vector.shape_cast %143 : vector<1x16x1xf32> to vector<16x1xf32>
    %145 = vector.broadcast %144 : vector<16x1xf32> to vector<16x112xf32>
    %146 = arith.addf %142, %145 : vector<16x112xf32>
    %cst_134 = arith.constant 0.000000e+00 : f32
    %147 = vector.broadcast %cst_134 : f32 to vector<16x112xf32>
    %148 = arith.maximumf %146, %147 : vector<16x112xf32>
    %149 = arith.truncf %148 : vector<16x112xf32> to vector<16x112xbf16>
    %c0_135 = arith.constant 0 : index
    %c0_136 = arith.constant 0 : index
    %c0_137 = arith.constant 0 : index
    %150 = vector.load %arg10[%c0_135, %c0_136, %c0_137] : memref<1x16x112xbf16, #tpu.memory_space<vmem>>, vector<1x16x112xbf16>
    %151 = vector.shape_cast %150 : vector<1x16x112xbf16> to vector<16x112xbf16>
    %152 = vector.shape_cast %149 : vector<16x112xbf16> to vector<1x16x112xbf16>
    tpu.vector_store %arg10[%c0_135, %c0_136, %c0_137], %152 {strides = array<i32>} : memref<1x16x112xbf16, #tpu.memory_space<vmem>>, vector<1x16x112xbf16>,
    return
  }
  func.func @transform_0(%arg0: i32) -> (i32, i32, i32) {
    %c0_i32 = arith.constant 0 : i32
    %c0_i32_0 = arith.constant 0 : i32
    %c0_i32_1 = arith.constant 0 : i32
    return %arg0, %c0_i32, %c0_i32_0 : i32, i32, i32
  }
  func.func @transform_1(%arg0: i32) -> (i32, i32) {
    %c0_i32 = arith.constant 0 : i32
    %c0_i32_0 = arith.constant 0 : i32
    %c0_i32_1 = arith.constant 0 : i32
    return %c0_i32, %c0_i32_0 : i32, i32
  }
  func.func @transform_2(%arg0: i32) -> (i32, i32) {
    %c0_i32 = arith.constant 0 : i32
    %c0_i32_0 = arith.constant 0 : i32
    %c0_i32_1 = arith.constant 0 : i32
    return %c0_i32, %c0_i32_0 : i32, i32
  }
  func.func @transform_3(%arg0: i32) -> (i32, i32, i32) {
    %c0_i32 = arith.constant 0 : i32
    %c0_i32_0 = arith.constant 0 : i32
    %c0_i32_1 = arith.constant 0 : i32
    %c0_i32_2 = arith.constant 0 : i32
    return %c0_i32, %c0_i32_0, %c0_i32_1 : i32, i32, i32
  }
  func.func @transform_4(%arg0: i32) -> (i32, i32) {
    %c0_i32 = arith.constant 0 : i32
    %c0_i32_0 = arith.constant 0 : i32
    %c0_i32_1 = arith.constant 0 : i32
    return %c0_i32, %c0_i32_0 : i32, i32
  }
  func.func @transform_5(%arg0: i32) -> (i32, i32, i32) {
    %c0_i32 = arith.constant 0 : i32
    %c0_i32_0 = arith.constant 0 : i32
    %c0_i32_1 = arith.constant 0 : i32
    %c0_i32_2 = arith.constant 0 : i32
    return %c0_i32, %c0_i32_0, %c0_i32_1 : i32, i32, i32
  }
  func.func @transform_6(%arg0: i32) -> (i32, i32) {
    %c0_i32 = arith.constant 0 : i32
    %c0_i32_0 = arith.constant 0 : i32
    %c0_i32_1 = arith.constant 0 : i32
    return %c0_i32, %c0_i32_0 : i32, i32
  }
  func.func @transform_7(%arg0: i32) -> (i32, i32, i32) {
    %c0_i32 = arith.constant 0 : i32
    %c0_i32_0 = arith.constant 0 : i32
    %c0_i32_1 = arith.constant 0 : i32
    %c0_i32_2 = arith.constant 0 : i32
    return %c0_i32, %c0_i32_0, %c0_i32_1 : i32, i32, i32
  }
  func.func @transform_8(%arg0: i32) -> (i32, i32, i32) {
    %c0_i32 = arith.constant 0 : i32
    %c0_i32_0 = arith.constant 0 : i32
    %c0_i32_1 = arith.constant 0 : i32
    return %arg0, %c0_i32, %c0_i32_0 : i32, i32, i32
  }
  func.func @transform_9(%arg0: i32) -> (i32, i32, i32) {
    %c0_i32 = arith.constant 0 : i32
    %c0_i32_0 = arith.constant 0 : i32
    %c0_i32_1 = arith.constant 0 : i32
    return %arg0, %c0_i32, %c0_i32_0 : i32, i32, i32
  }
}

module attributes {stable_mosaic.version = 11 : i64} {
  func.func @_upconv_kernel(%arg0: i32, %arg1: memref<1x16x64xbf16, #tpu.memory_space<vmem>>, %arg2: memref<64x16xbf16, #tpu.memory_space<vmem>>, %arg3: memref<64x1xf32, #tpu.memory_space<vmem>>, %arg4: memref<1x64x64xbf16, #tpu.memory_space<vmem>>) attributes {dimension_semantics = [#tpu.dimension_semantics<parallel>], iteration_bounds = array<i64: 2>, scalar_prefetch = 0 : i64, scratch_operands = 0 : i64, tpu.core_type = #tpu.core_type<tc>, window_params = [{transform_indices = @transform_0, window_bounds = array<i64: 1, 16, 64>}, {pipeline_mode = #tpu.pipeline_mode<synchronous>, transform_indices = @transform_1, window_bounds = array<i64: 64, 16>}, {pipeline_mode = #tpu.pipeline_mode<synchronous>, transform_indices = @transform_2, window_bounds = array<i64: 64, 1>}, {transform_indices = @transform_3, window_bounds = array<i64: 1, 64, 64>}]} {
    %c0 = arith.constant 0 : index
    %c0_0 = arith.constant 0 : index
    %0 = vector.load %arg2[%c0, %c0_0] : memref<64x16xbf16, #tpu.memory_space<vmem>>, vector<64x16xbf16>
    %c0_1 = arith.constant 0 : index
    %c0_2 = arith.constant 0 : index
    %c0_3 = arith.constant 0 : index
    %1 = vector.load %arg1[%c0_1, %c0_2, %c0_3] : memref<1x16x64xbf16, #tpu.memory_space<vmem>>, vector<1x16x64xbf16>
    %2 = vector.shape_cast %1 : vector<1x16x64xbf16> to vector<16x64xbf16>
    %cst = arith.constant dense<0.000000e+00> : vector<64x64xf32>
    %3 = tpu.matmul %0, %2, %cst {dimension_numbers = #tpu.dot_dimension_numbers<[1], [0], [0], [1], [0, 0, 1, 1], [], []>} : vector<64x16xbf16>, vector<16x64xbf16>, vector<64x64xf32> -> vector<64x64xf32>
    %c0_4 = arith.constant 0 : index
    %c0_5 = arith.constant 0 : index
    %4 = vector.load %arg3[%c0_4, %c0_5] : memref<64x1xf32, #tpu.memory_space<vmem>>, vector<64x1xf32>
    %5 = vector.broadcast %4 : vector<64x1xf32> to vector<64x64xf32>
    %6 = arith.addf %3, %5 : vector<64x64xf32>
    %7 = arith.truncf %6 : vector<64x64xf32> to vector<64x64xbf16>
    %c0_6 = arith.constant 0 : index
    %c0_7 = arith.constant 0 : index
    %c0_8 = arith.constant 0 : index
    %8 = vector.load %arg4[%c0_6, %c0_7, %c0_8] : memref<1x64x64xbf16, #tpu.memory_space<vmem>>, vector<1x64x64xbf16>
    %9 = vector.shape_cast %8 : vector<1x64x64xbf16> to vector<64x64xbf16>
    %10 = vector.shape_cast %7 : vector<64x64xbf16> to vector<1x64x64xbf16>
    tpu.vector_store %arg4[%c0_6, %c0_7, %c0_8], %10 {strides = array<i32>} : memref<1x64x64xbf16, #tpu.memory_space<vmem>>, vector<1x64x64xbf16>,
    return
  }
  func.func @transform_0(%arg0: i32) -> (i32, i32, i32) {
    %c0_i32 = arith.constant 0 : i32
    %c0_i32_0 = arith.constant 0 : i32
    %c0_i32_1 = arith.constant 0 : i32
    return %arg0, %c0_i32, %c0_i32_0 : i32, i32, i32
  }
  func.func @transform_1(%arg0: i32) -> (i32, i32) {
    %c0_i32 = arith.constant 0 : i32
    %c0_i32_0 = arith.constant 0 : i32
    %c0_i32_1 = arith.constant 0 : i32
    return %c0_i32, %c0_i32_0 : i32, i32
  }
  func.func @transform_2(%arg0: i32) -> (i32, i32) {
    %c0_i32 = arith.constant 0 : i32
    %c0_i32_0 = arith.constant 0 : i32
    %c0_i32_1 = arith.constant 0 : i32
    return %c0_i32, %c0_i32_0 : i32, i32
  }
  func.func @transform_3(%arg0: i32) -> (i32, i32, i32) {
    %c0_i32 = arith.constant 0 : i32
    %c0_i32_0 = arith.constant 0 : i32
    %c0_i32_1 = arith.constant 0 : i32
    return %arg0, %c0_i32, %c0_i32_0 : i32, i32, i32
  }
}

module attributes {stable_mosaic.version = 11 : i64} {
  func.func @_mix_kernel(%arg0: i32, %arg1: memref<1x16x342xbf16, #tpu.memory_space<vmem>>, %arg2: memref<1x8x342xbf16, #tpu.memory_space<vmem>>, %arg3: memref<9x8x16xbf16, #tpu.memory_space<vmem>>, %arg4: memref<9x8x8xbf16, #tpu.memory_space<vmem>>, %arg5: memref<8x1xf32, #tpu.memory_space<vmem>>, %arg6: memref<1x8x288xbf16, #tpu.memory_space<vmem>>) attributes {dimension_semantics = [#tpu.dimension_semantics<parallel>], iteration_bounds = array<i64: 2>, scalar_prefetch = 0 : i64, scratch_operands = 0 : i64, tpu.core_type = #tpu.core_type<tc>, window_params = [{transform_indices = @transform_0, window_bounds = array<i64: 1, 16, 342>}, {transform_indices = @transform_1, window_bounds = array<i64: 1, 8, 342>}, {pipeline_mode = #tpu.pipeline_mode<synchronous>, transform_indices = @transform_2, window_bounds = array<i64: 9, 8, 16>}, {pipeline_mode = #tpu.pipeline_mode<synchronous>, transform_indices = @transform_3, window_bounds = array<i64: 9, 8, 8>}, {pipeline_mode = #tpu.pipeline_mode<synchronous>, transform_indices = @transform_4, window_bounds = array<i64: 8, 1>}, {transform_indices = @transform_5, window_bounds = array<i64: 1, 8, 288>}]} {
    %cst = arith.constant 0.000000e+00 : f32
    %0 = vector.broadcast %cst : f32 to vector<8x288xf32>
    %c0 = arith.constant 0 : index
    %c0_0 = arith.constant 0 : index
    %c0_1 = arith.constant 0 : index
    %1 = vector.load %arg3[%c0, %c0_0, %c0_1] : memref<9x8x16xbf16, #tpu.memory_space<vmem>>, vector<1x8x16xbf16>
    %2 = vector.shape_cast %1 : vector<1x8x16xbf16> to vector<8x16xbf16>
    %c0_2 = arith.constant 0 : index
    %c0_3 = arith.constant 0 : index
    %c0_4 = arith.constant 0 : index
    %3 = vector.load %arg1[%c0_2, %c0_3, %c0_4] : memref<1x16x342xbf16, #tpu.memory_space<vmem>>, vector<1x16x288xbf16>
    %4 = vector.shape_cast %3 : vector<1x16x288xbf16> to vector<16x288xbf16>
    %cst_5 = arith.constant dense<0.000000e+00> : vector<8x288xf32>
    %5 = tpu.matmul %2, %4, %cst_5 {dimension_numbers = #tpu.dot_dimension_numbers<[1], [0], [0], [1], [0, 0, 1, 1], [], []>} : vector<8x16xbf16>, vector<16x288xbf16>, vector<8x288xf32> -> vector<8x288xf32>
    %6 = arith.addf %0, %5 : vector<8x288xf32>
    %c0_6 = arith.constant 0 : index
    %c0_7 = arith.constant 0 : index
    %c0_8 = arith.constant 0 : index
    %7 = vector.load %arg4[%c0_6, %c0_7, %c0_8] : memref<9x8x8xbf16, #tpu.memory_space<vmem>>, vector<1x8x8xbf16>
    %8 = vector.shape_cast %7 : vector<1x8x8xbf16> to vector<8x8xbf16>
    %c0_9 = arith.constant 0 : index
    %c0_10 = arith.constant 0 : index
    %c0_11 = arith.constant 0 : index
    %9 = vector.load %arg2[%c0_9, %c0_10, %c0_11] : memref<1x8x342xbf16, #tpu.memory_space<vmem>>, vector<1x8x288xbf16>
    %10 = vector.shape_cast %9 : vector<1x8x288xbf16> to vector<8x288xbf16>
    %cst_12 = arith.constant dense<0.000000e+00> : vector<8x288xf32>
    %11 = tpu.matmul %8, %10, %cst_12 {dimension_numbers = #tpu.dot_dimension_numbers<[1], [0], [0], [1], [0, 0, 1, 1], [], []>} : vector<8x8xbf16>, vector<8x288xbf16>, vector<8x288xf32> -> vector<8x288xf32>
    %12 = arith.addf %6, %11 : vector<8x288xf32>
    %c1 = arith.constant 1 : index
    %c0_13 = arith.constant 0 : index
    %c0_14 = arith.constant 0 : index
    %13 = vector.load %arg3[%c1, %c0_13, %c0_14] : memref<9x8x16xbf16, #tpu.memory_space<vmem>>, vector<1x8x16xbf16>
    %14 = vector.shape_cast %13 : vector<1x8x16xbf16> to vector<8x16xbf16>
    %c0_15 = arith.constant 0 : index
    %c0_16 = arith.constant 0 : index
    %c1_17 = arith.constant 1 : index
    %15 = vector.load %arg1[%c0_15, %c0_16, %c1_17] : memref<1x16x342xbf16, #tpu.memory_space<vmem>>, vector<1x16x288xbf16>
    %16 = vector.shape_cast %15 : vector<1x16x288xbf16> to vector<16x288xbf16>
    %cst_18 = arith.constant dense<0.000000e+00> : vector<8x288xf32>
    %17 = tpu.matmul %14, %16, %cst_18 {dimension_numbers = #tpu.dot_dimension_numbers<[1], [0], [0], [1], [0, 0, 1, 1], [], []>} : vector<8x16xbf16>, vector<16x288xbf16>, vector<8x288xf32> -> vector<8x288xf32>
    %18 = arith.addf %12, %17 : vector<8x288xf32>
    %c1_19 = arith.constant 1 : index
    %c0_20 = arith.constant 0 : index
    %c0_21 = arith.constant 0 : index
    %19 = vector.load %arg4[%c1_19, %c0_20, %c0_21] : memref<9x8x8xbf16, #tpu.memory_space<vmem>>, vector<1x8x8xbf16>
    %20 = vector.shape_cast %19 : vector<1x8x8xbf16> to vector<8x8xbf16>
    %c0_22 = arith.constant 0 : index
    %c0_23 = arith.constant 0 : index
    %c1_24 = arith.constant 1 : index
    %21 = vector.load %arg2[%c0_22, %c0_23, %c1_24] : memref<1x8x342xbf16, #tpu.memory_space<vmem>>, vector<1x8x288xbf16>
    %22 = vector.shape_cast %21 : vector<1x8x288xbf16> to vector<8x288xbf16>
    %cst_25 = arith.constant dense<0.000000e+00> : vector<8x288xf32>
    %23 = tpu.matmul %20, %22, %cst_25 {dimension_numbers = #tpu.dot_dimension_numbers<[1], [0], [0], [1], [0, 0, 1, 1], [], []>} : vector<8x8xbf16>, vector<8x288xbf16>, vector<8x288xf32> -> vector<8x288xf32>
    %24 = arith.addf %18, %23 : vector<8x288xf32>
    %c2 = arith.constant 2 : index
    %c0_26 = arith.constant 0 : index
    %c0_27 = arith.constant 0 : index
    %25 = vector.load %arg3[%c2, %c0_26, %c0_27] : memref<9x8x16xbf16, #tpu.memory_space<vmem>>, vector<1x8x16xbf16>
    %26 = vector.shape_cast %25 : vector<1x8x16xbf16> to vector<8x16xbf16>
    %c0_28 = arith.constant 0 : index
    %c0_29 = arith.constant 0 : index
    %c2_30 = arith.constant 2 : index
    %27 = vector.load %arg1[%c0_28, %c0_29, %c2_30] : memref<1x16x342xbf16, #tpu.memory_space<vmem>>, vector<1x16x288xbf16>
    %28 = vector.shape_cast %27 : vector<1x16x288xbf16> to vector<16x288xbf16>
    %cst_31 = arith.constant dense<0.000000e+00> : vector<8x288xf32>
    %29 = tpu.matmul %26, %28, %cst_31 {dimension_numbers = #tpu.dot_dimension_numbers<[1], [0], [0], [1], [0, 0, 1, 1], [], []>} : vector<8x16xbf16>, vector<16x288xbf16>, vector<8x288xf32> -> vector<8x288xf32>
    %30 = arith.addf %24, %29 : vector<8x288xf32>
    %c2_32 = arith.constant 2 : index
    %c0_33 = arith.constant 0 : index
    %c0_34 = arith.constant 0 : index
    %31 = vector.load %arg4[%c2_32, %c0_33, %c0_34] : memref<9x8x8xbf16, #tpu.memory_space<vmem>>, vector<1x8x8xbf16>
    %32 = vector.shape_cast %31 : vector<1x8x8xbf16> to vector<8x8xbf16>
    %c0_35 = arith.constant 0 : index
    %c0_36 = arith.constant 0 : index
    %c2_37 = arith.constant 2 : index
    %33 = vector.load %arg2[%c0_35, %c0_36, %c2_37] : memref<1x8x342xbf16, #tpu.memory_space<vmem>>, vector<1x8x288xbf16>
    %34 = vector.shape_cast %33 : vector<1x8x288xbf16> to vector<8x288xbf16>
    %cst_38 = arith.constant dense<0.000000e+00> : vector<8x288xf32>
    %35 = tpu.matmul %32, %34, %cst_38 {dimension_numbers = #tpu.dot_dimension_numbers<[1], [0], [0], [1], [0, 0, 1, 1], [], []>} : vector<8x8xbf16>, vector<8x288xbf16>, vector<8x288xf32> -> vector<8x288xf32>
    %36 = arith.addf %30, %35 : vector<8x288xf32>
    %c3 = arith.constant 3 : index
    %c0_39 = arith.constant 0 : index
    %c0_40 = arith.constant 0 : index
    %37 = vector.load %arg3[%c3, %c0_39, %c0_40] : memref<9x8x16xbf16, #tpu.memory_space<vmem>>, vector<1x8x16xbf16>
    %38 = vector.shape_cast %37 : vector<1x8x16xbf16> to vector<8x16xbf16>
    %c0_41 = arith.constant 0 : index
    %c0_42 = arith.constant 0 : index
    %c18 = arith.constant 18 : index
    %39 = vector.load %arg1[%c0_41, %c0_42, %c18] : memref<1x16x342xbf16, #tpu.memory_space<vmem>>, vector<1x16x288xbf16>
    %40 = vector.shape_cast %39 : vector<1x16x288xbf16> to vector<16x288xbf16>
    %cst_43 = arith.constant dense<0.000000e+00> : vector<8x288xf32>
    %41 = tpu.matmul %38, %40, %cst_43 {dimension_numbers = #tpu.dot_dimension_numbers<[1], [0], [0], [1], [0, 0, 1, 1], [], []>} : vector<8x16xbf16>, vector<16x288xbf16>, vector<8x288xf32> -> vector<8x288xf32>
    %42 = arith.addf %36, %41 : vector<8x288xf32>
    %c3_44 = arith.constant 3 : index
    %c0_45 = arith.constant 0 : index
    %c0_46 = arith.constant 0 : index
    %43 = vector.load %arg4[%c3_44, %c0_45, %c0_46] : memref<9x8x8xbf16, #tpu.memory_space<vmem>>, vector<1x8x8xbf16>
    %44 = vector.shape_cast %43 : vector<1x8x8xbf16> to vector<8x8xbf16>
    %c0_47 = arith.constant 0 : index
    %c0_48 = arith.constant 0 : index
    %c18_49 = arith.constant 18 : index
    %45 = vector.load %arg2[%c0_47, %c0_48, %c18_49] : memref<1x8x342xbf16, #tpu.memory_space<vmem>>, vector<1x8x288xbf16>
    %46 = vector.shape_cast %45 : vector<1x8x288xbf16> to vector<8x288xbf16>
    %cst_50 = arith.constant dense<0.000000e+00> : vector<8x288xf32>
    %47 = tpu.matmul %44, %46, %cst_50 {dimension_numbers = #tpu.dot_dimension_numbers<[1], [0], [0], [1], [0, 0, 1, 1], [], []>} : vector<8x8xbf16>, vector<8x288xbf16>, vector<8x288xf32> -> vector<8x288xf32>
    %48 = arith.addf %42, %47 : vector<8x288xf32>
    %c4 = arith.constant 4 : index
    %c0_51 = arith.constant 0 : index
    %c0_52 = arith.constant 0 : index
    %49 = vector.load %arg3[%c4, %c0_51, %c0_52] : memref<9x8x16xbf16, #tpu.memory_space<vmem>>, vector<1x8x16xbf16>
    %50 = vector.shape_cast %49 : vector<1x8x16xbf16> to vector<8x16xbf16>
    %c0_53 = arith.constant 0 : index
    %c0_54 = arith.constant 0 : index
    %c19 = arith.constant 19 : index
    %51 = vector.load %arg1[%c0_53, %c0_54, %c19] : memref<1x16x342xbf16, #tpu.memory_space<vmem>>, vector<1x16x288xbf16>
    %52 = vector.shape_cast %51 : vector<1x16x288xbf16> to vector<16x288xbf16>
    %cst_55 = arith.constant dense<0.000000e+00> : vector<8x288xf32>
    %53 = tpu.matmul %50, %52, %cst_55 {dimension_numbers = #tpu.dot_dimension_numbers<[1], [0], [0], [1], [0, 0, 1, 1], [], []>} : vector<8x16xbf16>, vector<16x288xbf16>, vector<8x288xf32> -> vector<8x288xf32>
    %54 = arith.addf %48, %53 : vector<8x288xf32>
    %c4_56 = arith.constant 4 : index
    %c0_57 = arith.constant 0 : index
    %c0_58 = arith.constant 0 : index
    %55 = vector.load %arg4[%c4_56, %c0_57, %c0_58] : memref<9x8x8xbf16, #tpu.memory_space<vmem>>, vector<1x8x8xbf16>
    %56 = vector.shape_cast %55 : vector<1x8x8xbf16> to vector<8x8xbf16>
    %c0_59 = arith.constant 0 : index
    %c0_60 = arith.constant 0 : index
    %c19_61 = arith.constant 19 : index
    %57 = vector.load %arg2[%c0_59, %c0_60, %c19_61] : memref<1x8x342xbf16, #tpu.memory_space<vmem>>, vector<1x8x288xbf16>
    %58 = vector.shape_cast %57 : vector<1x8x288xbf16> to vector<8x288xbf16>
    %cst_62 = arith.constant dense<0.000000e+00> : vector<8x288xf32>
    %59 = tpu.matmul %56, %58, %cst_62 {dimension_numbers = #tpu.dot_dimension_numbers<[1], [0], [0], [1], [0, 0, 1, 1], [], []>} : vector<8x8xbf16>, vector<8x288xbf16>, vector<8x288xf32> -> vector<8x288xf32>
    %60 = arith.addf %54, %59 : vector<8x288xf32>
    %c5 = arith.constant 5 : index
    %c0_63 = arith.constant 0 : index
    %c0_64 = arith.constant 0 : index
    %61 = vector.load %arg3[%c5, %c0_63, %c0_64] : memref<9x8x16xbf16, #tpu.memory_space<vmem>>, vector<1x8x16xbf16>
    %62 = vector.shape_cast %61 : vector<1x8x16xbf16> to vector<8x16xbf16>
    %c0_65 = arith.constant 0 : index
    %c0_66 = arith.constant 0 : index
    %c20 = arith.constant 20 : index
    %63 = vector.load %arg1[%c0_65, %c0_66, %c20] : memref<1x16x342xbf16, #tpu.memory_space<vmem>>, vector<1x16x288xbf16>
    %64 = vector.shape_cast %63 : vector<1x16x288xbf16> to vector<16x288xbf16>
    %cst_67 = arith.constant dense<0.000000e+00> : vector<8x288xf32>
    %65 = tpu.matmul %62, %64, %cst_67 {dimension_numbers = #tpu.dot_dimension_numbers<[1], [0], [0], [1], [0, 0, 1, 1], [], []>} : vector<8x16xbf16>, vector<16x288xbf16>, vector<8x288xf32> -> vector<8x288xf32>
    %66 = arith.addf %60, %65 : vector<8x288xf32>
    %c5_68 = arith.constant 5 : index
    %c0_69 = arith.constant 0 : index
    %c0_70 = arith.constant 0 : index
    %67 = vector.load %arg4[%c5_68, %c0_69, %c0_70] : memref<9x8x8xbf16, #tpu.memory_space<vmem>>, vector<1x8x8xbf16>
    %68 = vector.shape_cast %67 : vector<1x8x8xbf16> to vector<8x8xbf16>
    %c0_71 = arith.constant 0 : index
    %c0_72 = arith.constant 0 : index
    %c20_73 = arith.constant 20 : index
    %69 = vector.load %arg2[%c0_71, %c0_72, %c20_73] : memref<1x8x342xbf16, #tpu.memory_space<vmem>>, vector<1x8x288xbf16>
    %70 = vector.shape_cast %69 : vector<1x8x288xbf16> to vector<8x288xbf16>
    %cst_74 = arith.constant dense<0.000000e+00> : vector<8x288xf32>
    %71 = tpu.matmul %68, %70, %cst_74 {dimension_numbers = #tpu.dot_dimension_numbers<[1], [0], [0], [1], [0, 0, 1, 1], [], []>} : vector<8x8xbf16>, vector<8x288xbf16>, vector<8x288xf32> -> vector<8x288xf32>
    %72 = arith.addf %66, %71 : vector<8x288xf32>
    %c6 = arith.constant 6 : index
    %c0_75 = arith.constant 0 : index
    %c0_76 = arith.constant 0 : index
    %73 = vector.load %arg3[%c6, %c0_75, %c0_76] : memref<9x8x16xbf16, #tpu.memory_space<vmem>>, vector<1x8x16xbf16>
    %74 = vector.shape_cast %73 : vector<1x8x16xbf16> to vector<8x16xbf16>
    %c0_77 = arith.constant 0 : index
    %c0_78 = arith.constant 0 : index
    %c36 = arith.constant 36 : index
    %75 = vector.load %arg1[%c0_77, %c0_78, %c36] : memref<1x16x342xbf16, #tpu.memory_space<vmem>>, vector<1x16x288xbf16>
    %76 = vector.shape_cast %75 : vector<1x16x288xbf16> to vector<16x288xbf16>
    %cst_79 = arith.constant dense<0.000000e+00> : vector<8x288xf32>
    %77 = tpu.matmul %74, %76, %cst_79 {dimension_numbers = #tpu.dot_dimension_numbers<[1], [0], [0], [1], [0, 0, 1, 1], [], []>} : vector<8x16xbf16>, vector<16x288xbf16>, vector<8x288xf32> -> vector<8x288xf32>
    %78 = arith.addf %72, %77 : vector<8x288xf32>
    %c6_80 = arith.constant 6 : index
    %c0_81 = arith.constant 0 : index
    %c0_82 = arith.constant 0 : index
    %79 = vector.load %arg4[%c6_80, %c0_81, %c0_82] : memref<9x8x8xbf16, #tpu.memory_space<vmem>>, vector<1x8x8xbf16>
    %80 = vector.shape_cast %79 : vector<1x8x8xbf16> to vector<8x8xbf16>
    %c0_83 = arith.constant 0 : index
    %c0_84 = arith.constant 0 : index
    %c36_85 = arith.constant 36 : index
    %81 = vector.load %arg2[%c0_83, %c0_84, %c36_85] : memref<1x8x342xbf16, #tpu.memory_space<vmem>>, vector<1x8x288xbf16>
    %82 = vector.shape_cast %81 : vector<1x8x288xbf16> to vector<8x288xbf16>
    %cst_86 = arith.constant dense<0.000000e+00> : vector<8x288xf32>
    %83 = tpu.matmul %80, %82, %cst_86 {dimension_numbers = #tpu.dot_dimension_numbers<[1], [0], [0], [1], [0, 0, 1, 1], [], []>} : vector<8x8xbf16>, vector<8x288xbf16>, vector<8x288xf32> -> vector<8x288xf32>
    %84 = arith.addf %78, %83 : vector<8x288xf32>
    %c7 = arith.constant 7 : index
    %c0_87 = arith.constant 0 : index
    %c0_88 = arith.constant 0 : index
    %85 = vector.load %arg3[%c7, %c0_87, %c0_88] : memref<9x8x16xbf16, #tpu.memory_space<vmem>>, vector<1x8x16xbf16>
    %86 = vector.shape_cast %85 : vector<1x8x16xbf16> to vector<8x16xbf16>
    %c0_89 = arith.constant 0 : index
    %c0_90 = arith.constant 0 : index
    %c37 = arith.constant 37 : index
    %87 = vector.load %arg1[%c0_89, %c0_90, %c37] : memref<1x16x342xbf16, #tpu.memory_space<vmem>>, vector<1x16x288xbf16>
    %88 = vector.shape_cast %87 : vector<1x16x288xbf16> to vector<16x288xbf16>
    %cst_91 = arith.constant dense<0.000000e+00> : vector<8x288xf32>
    %89 = tpu.matmul %86, %88, %cst_91 {dimension_numbers = #tpu.dot_dimension_numbers<[1], [0], [0], [1], [0, 0, 1, 1], [], []>} : vector<8x16xbf16>, vector<16x288xbf16>, vector<8x288xf32> -> vector<8x288xf32>
    %90 = arith.addf %84, %89 : vector<8x288xf32>
    %c7_92 = arith.constant 7 : index
    %c0_93 = arith.constant 0 : index
    %c0_94 = arith.constant 0 : index
    %91 = vector.load %arg4[%c7_92, %c0_93, %c0_94] : memref<9x8x8xbf16, #tpu.memory_space<vmem>>, vector<1x8x8xbf16>
    %92 = vector.shape_cast %91 : vector<1x8x8xbf16> to vector<8x8xbf16>
    %c0_95 = arith.constant 0 : index
    %c0_96 = arith.constant 0 : index
    %c37_97 = arith.constant 37 : index
    %93 = vector.load %arg2[%c0_95, %c0_96, %c37_97] : memref<1x8x342xbf16, #tpu.memory_space<vmem>>, vector<1x8x288xbf16>
    %94 = vector.shape_cast %93 : vector<1x8x288xbf16> to vector<8x288xbf16>
    %cst_98 = arith.constant dense<0.000000e+00> : vector<8x288xf32>
    %95 = tpu.matmul %92, %94, %cst_98 {dimension_numbers = #tpu.dot_dimension_numbers<[1], [0], [0], [1], [0, 0, 1, 1], [], []>} : vector<8x8xbf16>, vector<8x288xbf16>, vector<8x288xf32> -> vector<8x288xf32>
    %96 = arith.addf %90, %95 : vector<8x288xf32>
    %c8 = arith.constant 8 : index
    %c0_99 = arith.constant 0 : index
    %c0_100 = arith.constant 0 : index
    %97 = vector.load %arg3[%c8, %c0_99, %c0_100] : memref<9x8x16xbf16, #tpu.memory_space<vmem>>, vector<1x8x16xbf16>
    %98 = vector.shape_cast %97 : vector<1x8x16xbf16> to vector<8x16xbf16>
    %c0_101 = arith.constant 0 : index
    %c0_102 = arith.constant 0 : index
    %c38 = arith.constant 38 : index
    %99 = vector.load %arg1[%c0_101, %c0_102, %c38] : memref<1x16x342xbf16, #tpu.memory_space<vmem>>, vector<1x16x288xbf16>
    %100 = vector.shape_cast %99 : vector<1x16x288xbf16> to vector<16x288xbf16>
    %cst_103 = arith.constant dense<0.000000e+00> : vector<8x288xf32>
    %101 = tpu.matmul %98, %100, %cst_103 {dimension_numbers = #tpu.dot_dimension_numbers<[1], [0], [0], [1], [0, 0, 1, 1], [], []>} : vector<8x16xbf16>, vector<16x288xbf16>, vector<8x288xf32> -> vector<8x288xf32>
    %102 = arith.addf %96, %101 : vector<8x288xf32>
    %c8_104 = arith.constant 8 : index
    %c0_105 = arith.constant 0 : index
    %c0_106 = arith.constant 0 : index
    %103 = vector.load %arg4[%c8_104, %c0_105, %c0_106] : memref<9x8x8xbf16, #tpu.memory_space<vmem>>, vector<1x8x8xbf16>
    %104 = vector.shape_cast %103 : vector<1x8x8xbf16> to vector<8x8xbf16>
    %c0_107 = arith.constant 0 : index
    %c0_108 = arith.constant 0 : index
    %c38_109 = arith.constant 38 : index
    %105 = vector.load %arg2[%c0_107, %c0_108, %c38_109] : memref<1x8x342xbf16, #tpu.memory_space<vmem>>, vector<1x8x288xbf16>
    %106 = vector.shape_cast %105 : vector<1x8x288xbf16> to vector<8x288xbf16>
    %cst_110 = arith.constant dense<0.000000e+00> : vector<8x288xf32>
    %107 = tpu.matmul %104, %106, %cst_110 {dimension_numbers = #tpu.dot_dimension_numbers<[1], [0], [0], [1], [0, 0, 1, 1], [], []>} : vector<8x8xbf16>, vector<8x288xbf16>, vector<8x288xf32> -> vector<8x288xf32>
    %108 = arith.addf %102, %107 : vector<8x288xf32>
    %c0_111 = arith.constant 0 : index
    %c0_112 = arith.constant 0 : index
    %109 = vector.load %arg5[%c0_111, %c0_112] : memref<8x1xf32, #tpu.memory_space<vmem>>, vector<8x1xf32>
    %110 = vector.broadcast %109 : vector<8x1xf32> to vector<8x288xf32>
    %111 = arith.addf %108, %110 : vector<8x288xf32>
    %cst_113 = arith.constant 0.000000e+00 : f32
    %112 = vector.broadcast %cst_113 : f32 to vector<8x288xf32>
    %113 = arith.maximumf %111, %112 : vector<8x288xf32>
    %114 = arith.truncf %113 : vector<8x288xf32> to vector<8x288xbf16>
    %c0_114 = arith.constant 0 : index
    %c0_115 = arith.constant 0 : index
    %c0_116 = arith.constant 0 : index
    %115 = vector.load %arg6[%c0_114, %c0_115, %c0_116] : memref<1x8x288xbf16, #tpu.memory_space<vmem>>, vector<1x8x288xbf16>
    %116 = vector.shape_cast %115 : vector<1x8x288xbf16> to vector<8x288xbf16>
    %117 = vector.shape_cast %114 : vector<8x288xbf16> to vector<1x8x288xbf16>
    tpu.vector_store %arg6[%c0_114, %c0_115, %c0_116], %117 {strides = array<i32>} : memref<1x8x288xbf16, #tpu.memory_space<vmem>>, vector<1x8x288xbf16>,
    return
  }
  func.func @transform_0(%arg0: i32) -> (i32, i32, i32) {
    %c0_i32 = arith.constant 0 : i32
    %c0_i32_0 = arith.constant 0 : i32
    %c0_i32_1 = arith.constant 0 : i32
    return %arg0, %c0_i32, %c0_i32_0 : i32, i32, i32
  }
  func.func @transform_1(%arg0: i32) -> (i32, i32, i32) {
    %c0_i32 = arith.constant 0 : i32
    %c0_i32_0 = arith.constant 0 : i32
    %c0_i32_1 = arith.constant 0 : i32
    return %arg0, %c0_i32, %c0_i32_0 : i32, i32, i32
  }
  func.func @transform_2(%arg0: i32) -> (i32, i32, i32) {
    %c0_i32 = arith.constant 0 : i32
    %c0_i32_0 = arith.constant 0 : i32
    %c0_i32_1 = arith.constant 0 : i32
    %c0_i32_2 = arith.constant 0 : i32
    return %c0_i32, %c0_i32_0, %c0_i32_1 : i32, i32, i32
  }
  func.func @transform_3(%arg0: i32) -> (i32, i32, i32) {
    %c0_i32 = arith.constant 0 : i32
    %c0_i32_0 = arith.constant 0 : i32
    %c0_i32_1 = arith.constant 0 : i32
    %c0_i32_2 = arith.constant 0 : i32
    return %c0_i32, %c0_i32_0, %c0_i32_1 : i32, i32, i32
  }
  func.func @transform_4(%arg0: i32) -> (i32, i32) {
    %c0_i32 = arith.constant 0 : i32
    %c0_i32_0 = arith.constant 0 : i32
    %c0_i32_1 = arith.constant 0 : i32
    return %c0_i32, %c0_i32_0 : i32, i32
  }
  func.func @transform_5(%arg0: i32) -> (i32, i32, i32) {
    %c0_i32 = arith.constant 0 : i32
    %c0_i32_0 = arith.constant 0 : i32
    %c0_i32_1 = arith.constant 0 : i32
    return %arg0, %c0_i32, %c0_i32_0 : i32, i32, i32
  }
}

module attributes {stable_mosaic.version = 11 : i64} {
  func.func @_upconv_kernel(%arg0: i32, %arg1: memref<1x8x256xbf16, #tpu.memory_space<vmem>>, %arg2: memref<32x8xbf16, #tpu.memory_space<vmem>>, %arg3: memref<32x1xf32, #tpu.memory_space<vmem>>, %arg4: memref<1x32x256xbf16, #tpu.memory_space<vmem>>) attributes {dimension_semantics = [#tpu.dimension_semantics<parallel>], iteration_bounds = array<i64: 2>, scalar_prefetch = 0 : i64, scratch_operands = 0 : i64, tpu.core_type = #tpu.core_type<tc>, window_params = [{transform_indices = @transform_0, window_bounds = array<i64: 1, 8, 256>}, {pipeline_mode = #tpu.pipeline_mode<synchronous>, transform_indices = @transform_1, window_bounds = array<i64: 32, 8>}, {pipeline_mode = #tpu.pipeline_mode<synchronous>, transform_indices = @transform_2, window_bounds = array<i64: 32, 1>}, {transform_indices = @transform_3, window_bounds = array<i64: 1, 32, 256>}]} {
    %c0 = arith.constant 0 : index
    %c0_0 = arith.constant 0 : index
    %0 = vector.load %arg2[%c0, %c0_0] : memref<32x8xbf16, #tpu.memory_space<vmem>>, vector<32x8xbf16>
    %c0_1 = arith.constant 0 : index
    %c0_2 = arith.constant 0 : index
    %c0_3 = arith.constant 0 : index
    %1 = vector.load %arg1[%c0_1, %c0_2, %c0_3] : memref<1x8x256xbf16, #tpu.memory_space<vmem>>, vector<1x8x256xbf16>
    %2 = vector.shape_cast %1 : vector<1x8x256xbf16> to vector<8x256xbf16>
    %cst = arith.constant dense<0.000000e+00> : vector<32x256xf32>
    %3 = tpu.matmul %0, %2, %cst {dimension_numbers = #tpu.dot_dimension_numbers<[1], [0], [0], [1], [0, 0, 1, 1], [], []>} : vector<32x8xbf16>, vector<8x256xbf16>, vector<32x256xf32> -> vector<32x256xf32>
    %c0_4 = arith.constant 0 : index
    %c0_5 = arith.constant 0 : index
    %4 = vector.load %arg3[%c0_4, %c0_5] : memref<32x1xf32, #tpu.memory_space<vmem>>, vector<32x1xf32>
    %5 = vector.broadcast %4 : vector<32x1xf32> to vector<32x256xf32>
    %6 = arith.addf %3, %5 : vector<32x256xf32>
    %7 = arith.truncf %6 : vector<32x256xf32> to vector<32x256xbf16>
    %c0_6 = arith.constant 0 : index
    %c0_7 = arith.constant 0 : index
    %c0_8 = arith.constant 0 : index
    %8 = vector.load %arg4[%c0_6, %c0_7, %c0_8] : memref<1x32x256xbf16, #tpu.memory_space<vmem>>, vector<1x32x256xbf16>
    %9 = vector.shape_cast %8 : vector<1x32x256xbf16> to vector<32x256xbf16>
    %10 = vector.shape_cast %7 : vector<32x256xbf16> to vector<1x32x256xbf16>
    tpu.vector_store %arg4[%c0_6, %c0_7, %c0_8], %10 {strides = array<i32>} : memref<1x32x256xbf16, #tpu.memory_space<vmem>>, vector<1x32x256xbf16>,
    return
  }
  func.func @transform_0(%arg0: i32) -> (i32, i32, i32) {
    %c0_i32 = arith.constant 0 : i32
    %c0_i32_0 = arith.constant 0 : i32
    %c0_i32_1 = arith.constant 0 : i32
    return %arg0, %c0_i32, %c0_i32_0 : i32, i32, i32
  }
  func.func @transform_1(%arg0: i32) -> (i32, i32) {
    %c0_i32 = arith.constant 0 : i32
    %c0_i32_0 = arith.constant 0 : i32
    %c0_i32_1 = arith.constant 0 : i32
    return %c0_i32, %c0_i32_0 : i32, i32
  }
  func.func @transform_2(%arg0: i32) -> (i32, i32) {
    %c0_i32 = arith.constant 0 : i32
    %c0_i32_0 = arith.constant 0 : i32
    %c0_i32_1 = arith.constant 0 : i32
    return %c0_i32, %c0_i32_0 : i32, i32
  }
  func.func @transform_3(%arg0: i32) -> (i32, i32, i32) {
    %c0_i32 = arith.constant 0 : i32
    %c0_i32_0 = arith.constant 0 : i32
    %c0_i32_1 = arith.constant 0 : i32
    return %arg0, %c0_i32, %c0_i32_0 : i32, i32, i32
  }
}

module attributes {stable_mosaic.version = 11 : i64} {
  func.func @_mix_kernel(%arg0: i32, %arg1: memref<1x8x1190xbf16, #tpu.memory_space<vmem>>, %arg2: memref<1x3x1190xbf16, #tpu.memory_space<vmem>>, %arg3: memref<9x8x8xbf16, #tpu.memory_space<vmem>>, %arg4: memref<9x8x3xbf16, #tpu.memory_space<vmem>>, %arg5: memref<8x1xf32, #tpu.memory_space<vmem>>, %arg6: memref<1x8x1088xbf16, #tpu.memory_space<vmem>>) attributes {dimension_semantics = [#tpu.dimension_semantics<parallel>], iteration_bounds = array<i64: 2>, scalar_prefetch = 0 : i64, scratch_operands = 0 : i64, tpu.core_type = #tpu.core_type<tc>, window_params = [{transform_indices = @transform_0, window_bounds = array<i64: 1, 8, 1190>}, {transform_indices = @transform_1, window_bounds = array<i64: 1, 3, 1190>}, {pipeline_mode = #tpu.pipeline_mode<synchronous>, transform_indices = @transform_2, window_bounds = array<i64: 9, 8, 8>}, {pipeline_mode = #tpu.pipeline_mode<synchronous>, transform_indices = @transform_3, window_bounds = array<i64: 9, 8, 3>}, {pipeline_mode = #tpu.pipeline_mode<synchronous>, transform_indices = @transform_4, window_bounds = array<i64: 8, 1>}, {transform_indices = @transform_5, window_bounds = array<i64: 1, 8, 1088>}]} {
    %cst = arith.constant 0.000000e+00 : f32
    %0 = vector.broadcast %cst : f32 to vector<8x1088xf32>
    %c0 = arith.constant 0 : index
    %c0_0 = arith.constant 0 : index
    %c0_1 = arith.constant 0 : index
    %1 = vector.load %arg3[%c0, %c0_0, %c0_1] : memref<9x8x8xbf16, #tpu.memory_space<vmem>>, vector<1x8x8xbf16>
    %2 = vector.shape_cast %1 : vector<1x8x8xbf16> to vector<8x8xbf16>
    %c0_2 = arith.constant 0 : index
    %c0_3 = arith.constant 0 : index
    %c0_4 = arith.constant 0 : index
    %3 = vector.load %arg1[%c0_2, %c0_3, %c0_4] : memref<1x8x1190xbf16, #tpu.memory_space<vmem>>, vector<1x8x1088xbf16>
    %4 = vector.shape_cast %3 : vector<1x8x1088xbf16> to vector<8x1088xbf16>
    %cst_5 = arith.constant dense<0.000000e+00> : vector<8x1088xf32>
    %5 = tpu.matmul %2, %4, %cst_5 {dimension_numbers = #tpu.dot_dimension_numbers<[1], [0], [0], [1], [0, 0, 1, 1], [], []>} : vector<8x8xbf16>, vector<8x1088xbf16>, vector<8x1088xf32> -> vector<8x1088xf32>
    %6 = arith.addf %0, %5 : vector<8x1088xf32>
    %c0_6 = arith.constant 0 : index
    %c0_7 = arith.constant 0 : index
    %c0_8 = arith.constant 0 : index
    %7 = vector.load %arg4[%c0_6, %c0_7, %c0_8] : memref<9x8x3xbf16, #tpu.memory_space<vmem>>, vector<1x8x3xbf16>
    %8 = vector.shape_cast %7 : vector<1x8x3xbf16> to vector<8x3xbf16>
    %c0_9 = arith.constant 0 : index
    %c0_10 = arith.constant 0 : index
    %c0_11 = arith.constant 0 : index
    %9 = vector.load %arg2[%c0_9, %c0_10, %c0_11] : memref<1x3x1190xbf16, #tpu.memory_space<vmem>>, vector<1x3x1088xbf16>
    %10 = vector.shape_cast %9 : vector<1x3x1088xbf16> to vector<3x1088xbf16>
    %cst_12 = arith.constant dense<0.000000e+00> : vector<8x1088xf32>
    %11 = tpu.matmul %8, %10, %cst_12 {dimension_numbers = #tpu.dot_dimension_numbers<[1], [0], [0], [1], [0, 0, 1, 1], [], []>} : vector<8x3xbf16>, vector<3x1088xbf16>, vector<8x1088xf32> -> vector<8x1088xf32>
    %12 = arith.addf %6, %11 : vector<8x1088xf32>
    %c1 = arith.constant 1 : index
    %c0_13 = arith.constant 0 : index
    %c0_14 = arith.constant 0 : index
    %13 = vector.load %arg3[%c1, %c0_13, %c0_14] : memref<9x8x8xbf16, #tpu.memory_space<vmem>>, vector<1x8x8xbf16>
    %14 = vector.shape_cast %13 : vector<1x8x8xbf16> to vector<8x8xbf16>
    %c0_15 = arith.constant 0 : index
    %c0_16 = arith.constant 0 : index
    %c1_17 = arith.constant 1 : index
    %15 = vector.load %arg1[%c0_15, %c0_16, %c1_17] : memref<1x8x1190xbf16, #tpu.memory_space<vmem>>, vector<1x8x1088xbf16>
    %16 = vector.shape_cast %15 : vector<1x8x1088xbf16> to vector<8x1088xbf16>
    %cst_18 = arith.constant dense<0.000000e+00> : vector<8x1088xf32>
    %17 = tpu.matmul %14, %16, %cst_18 {dimension_numbers = #tpu.dot_dimension_numbers<[1], [0], [0], [1], [0, 0, 1, 1], [], []>} : vector<8x8xbf16>, vector<8x1088xbf16>, vector<8x1088xf32> -> vector<8x1088xf32>
    %18 = arith.addf %12, %17 : vector<8x1088xf32>
    %c1_19 = arith.constant 1 : index
    %c0_20 = arith.constant 0 : index
    %c0_21 = arith.constant 0 : index
    %19 = vector.load %arg4[%c1_19, %c0_20, %c0_21] : memref<9x8x3xbf16, #tpu.memory_space<vmem>>, vector<1x8x3xbf16>
    %20 = vector.shape_cast %19 : vector<1x8x3xbf16> to vector<8x3xbf16>
    %c0_22 = arith.constant 0 : index
    %c0_23 = arith.constant 0 : index
    %c1_24 = arith.constant 1 : index
    %21 = vector.load %arg2[%c0_22, %c0_23, %c1_24] : memref<1x3x1190xbf16, #tpu.memory_space<vmem>>, vector<1x3x1088xbf16>
    %22 = vector.shape_cast %21 : vector<1x3x1088xbf16> to vector<3x1088xbf16>
    %cst_25 = arith.constant dense<0.000000e+00> : vector<8x1088xf32>
    %23 = tpu.matmul %20, %22, %cst_25 {dimension_numbers = #tpu.dot_dimension_numbers<[1], [0], [0], [1], [0, 0, 1, 1], [], []>} : vector<8x3xbf16>, vector<3x1088xbf16>, vector<8x1088xf32> -> vector<8x1088xf32>
    %24 = arith.addf %18, %23 : vector<8x1088xf32>
    %c2 = arith.constant 2 : index
    %c0_26 = arith.constant 0 : index
    %c0_27 = arith.constant 0 : index
    %25 = vector.load %arg3[%c2, %c0_26, %c0_27] : memref<9x8x8xbf16, #tpu.memory_space<vmem>>, vector<1x8x8xbf16>
    %26 = vector.shape_cast %25 : vector<1x8x8xbf16> to vector<8x8xbf16>
    %c0_28 = arith.constant 0 : index
    %c0_29 = arith.constant 0 : index
    %c2_30 = arith.constant 2 : index
    %27 = vector.load %arg1[%c0_28, %c0_29, %c2_30] : memref<1x8x1190xbf16, #tpu.memory_space<vmem>>, vector<1x8x1088xbf16>
    %28 = vector.shape_cast %27 : vector<1x8x1088xbf16> to vector<8x1088xbf16>
    %cst_31 = arith.constant dense<0.000000e+00> : vector<8x1088xf32>
    %29 = tpu.matmul %26, %28, %cst_31 {dimension_numbers = #tpu.dot_dimension_numbers<[1], [0], [0], [1], [0, 0, 1, 1], [], []>} : vector<8x8xbf16>, vector<8x1088xbf16>, vector<8x1088xf32> -> vector<8x1088xf32>
    %30 = arith.addf %24, %29 : vector<8x1088xf32>
    %c2_32 = arith.constant 2 : index
    %c0_33 = arith.constant 0 : index
    %c0_34 = arith.constant 0 : index
    %31 = vector.load %arg4[%c2_32, %c0_33, %c0_34] : memref<9x8x3xbf16, #tpu.memory_space<vmem>>, vector<1x8x3xbf16>
    %32 = vector.shape_cast %31 : vector<1x8x3xbf16> to vector<8x3xbf16>
    %c0_35 = arith.constant 0 : index
    %c0_36 = arith.constant 0 : index
    %c2_37 = arith.constant 2 : index
    %33 = vector.load %arg2[%c0_35, %c0_36, %c2_37] : memref<1x3x1190xbf16, #tpu.memory_space<vmem>>, vector<1x3x1088xbf16>
    %34 = vector.shape_cast %33 : vector<1x3x1088xbf16> to vector<3x1088xbf16>
    %cst_38 = arith.constant dense<0.000000e+00> : vector<8x1088xf32>
    %35 = tpu.matmul %32, %34, %cst_38 {dimension_numbers = #tpu.dot_dimension_numbers<[1], [0], [0], [1], [0, 0, 1, 1], [], []>} : vector<8x3xbf16>, vector<3x1088xbf16>, vector<8x1088xf32> -> vector<8x1088xf32>
    %36 = arith.addf %30, %35 : vector<8x1088xf32>
    %c3 = arith.constant 3 : index
    %c0_39 = arith.constant 0 : index
    %c0_40 = arith.constant 0 : index
    %37 = vector.load %arg3[%c3, %c0_39, %c0_40] : memref<9x8x8xbf16, #tpu.memory_space<vmem>>, vector<1x8x8xbf16>
    %38 = vector.shape_cast %37 : vector<1x8x8xbf16> to vector<8x8xbf16>
    %c0_41 = arith.constant 0 : index
    %c0_42 = arith.constant 0 : index
    %c34 = arith.constant 34 : index
    %39 = vector.load %arg1[%c0_41, %c0_42, %c34] : memref<1x8x1190xbf16, #tpu.memory_space<vmem>>, vector<1x8x1088xbf16>
    %40 = vector.shape_cast %39 : vector<1x8x1088xbf16> to vector<8x1088xbf16>
    %cst_43 = arith.constant dense<0.000000e+00> : vector<8x1088xf32>
    %41 = tpu.matmul %38, %40, %cst_43 {dimension_numbers = #tpu.dot_dimension_numbers<[1], [0], [0], [1], [0, 0, 1, 1], [], []>} : vector<8x8xbf16>, vector<8x1088xbf16>, vector<8x1088xf32> -> vector<8x1088xf32>
    %42 = arith.addf %36, %41 : vector<8x1088xf32>
    %c3_44 = arith.constant 3 : index
    %c0_45 = arith.constant 0 : index
    %c0_46 = arith.constant 0 : index
    %43 = vector.load %arg4[%c3_44, %c0_45, %c0_46] : memref<9x8x3xbf16, #tpu.memory_space<vmem>>, vector<1x8x3xbf16>
    %44 = vector.shape_cast %43 : vector<1x8x3xbf16> to vector<8x3xbf16>
    %c0_47 = arith.constant 0 : index
    %c0_48 = arith.constant 0 : index
    %c34_49 = arith.constant 34 : index
    %45 = vector.load %arg2[%c0_47, %c0_48, %c34_49] : memref<1x3x1190xbf16, #tpu.memory_space<vmem>>, vector<1x3x1088xbf16>
    %46 = vector.shape_cast %45 : vector<1x3x1088xbf16> to vector<3x1088xbf16>
    %cst_50 = arith.constant dense<0.000000e+00> : vector<8x1088xf32>
    %47 = tpu.matmul %44, %46, %cst_50 {dimension_numbers = #tpu.dot_dimension_numbers<[1], [0], [0], [1], [0, 0, 1, 1], [], []>} : vector<8x3xbf16>, vector<3x1088xbf16>, vector<8x1088xf32> -> vector<8x1088xf32>
    %48 = arith.addf %42, %47 : vector<8x1088xf32>
    %c4 = arith.constant 4 : index
    %c0_51 = arith.constant 0 : index
    %c0_52 = arith.constant 0 : index
    %49 = vector.load %arg3[%c4, %c0_51, %c0_52] : memref<9x8x8xbf16, #tpu.memory_space<vmem>>, vector<1x8x8xbf16>
    %50 = vector.shape_cast %49 : vector<1x8x8xbf16> to vector<8x8xbf16>
    %c0_53 = arith.constant 0 : index
    %c0_54 = arith.constant 0 : index
    %c35 = arith.constant 35 : index
    %51 = vector.load %arg1[%c0_53, %c0_54, %c35] : memref<1x8x1190xbf16, #tpu.memory_space<vmem>>, vector<1x8x1088xbf16>
    %52 = vector.shape_cast %51 : vector<1x8x1088xbf16> to vector<8x1088xbf16>
    %cst_55 = arith.constant dense<0.000000e+00> : vector<8x1088xf32>
    %53 = tpu.matmul %50, %52, %cst_55 {dimension_numbers = #tpu.dot_dimension_numbers<[1], [0], [0], [1], [0, 0, 1, 1], [], []>} : vector<8x8xbf16>, vector<8x1088xbf16>, vector<8x1088xf32> -> vector<8x1088xf32>
    %54 = arith.addf %48, %53 : vector<8x1088xf32>
    %c4_56 = arith.constant 4 : index
    %c0_57 = arith.constant 0 : index
    %c0_58 = arith.constant 0 : index
    %55 = vector.load %arg4[%c4_56, %c0_57, %c0_58] : memref<9x8x3xbf16, #tpu.memory_space<vmem>>, vector<1x8x3xbf16>
    %56 = vector.shape_cast %55 : vector<1x8x3xbf16> to vector<8x3xbf16>
    %c0_59 = arith.constant 0 : index
    %c0_60 = arith.constant 0 : index
    %c35_61 = arith.constant 35 : index
    %57 = vector.load %arg2[%c0_59, %c0_60, %c35_61] : memref<1x3x1190xbf16, #tpu.memory_space<vmem>>, vector<1x3x1088xbf16>
    %58 = vector.shape_cast %57 : vector<1x3x1088xbf16> to vector<3x1088xbf16>
    %cst_62 = arith.constant dense<0.000000e+00> : vector<8x1088xf32>
    %59 = tpu.matmul %56, %58, %cst_62 {dimension_numbers = #tpu.dot_dimension_numbers<[1], [0], [0], [1], [0, 0, 1, 1], [], []>} : vector<8x3xbf16>, vector<3x1088xbf16>, vector<8x1088xf32> -> vector<8x1088xf32>
    %60 = arith.addf %54, %59 : vector<8x1088xf32>
    %c5 = arith.constant 5 : index
    %c0_63 = arith.constant 0 : index
    %c0_64 = arith.constant 0 : index
    %61 = vector.load %arg3[%c5, %c0_63, %c0_64] : memref<9x8x8xbf16, #tpu.memory_space<vmem>>, vector<1x8x8xbf16>
    %62 = vector.shape_cast %61 : vector<1x8x8xbf16> to vector<8x8xbf16>
    %c0_65 = arith.constant 0 : index
    %c0_66 = arith.constant 0 : index
    %c36 = arith.constant 36 : index
    %63 = vector.load %arg1[%c0_65, %c0_66, %c36] : memref<1x8x1190xbf16, #tpu.memory_space<vmem>>, vector<1x8x1088xbf16>
    %64 = vector.shape_cast %63 : vector<1x8x1088xbf16> to vector<8x1088xbf16>
    %cst_67 = arith.constant dense<0.000000e+00> : vector<8x1088xf32>
    %65 = tpu.matmul %62, %64, %cst_67 {dimension_numbers = #tpu.dot_dimension_numbers<[1], [0], [0], [1], [0, 0, 1, 1], [], []>} : vector<8x8xbf16>, vector<8x1088xbf16>, vector<8x1088xf32> -> vector<8x1088xf32>
    %66 = arith.addf %60, %65 : vector<8x1088xf32>
    %c5_68 = arith.constant 5 : index
    %c0_69 = arith.constant 0 : index
    %c0_70 = arith.constant 0 : index
    %67 = vector.load %arg4[%c5_68, %c0_69, %c0_70] : memref<9x8x3xbf16, #tpu.memory_space<vmem>>, vector<1x8x3xbf16>
    %68 = vector.shape_cast %67 : vector<1x8x3xbf16> to vector<8x3xbf16>
    %c0_71 = arith.constant 0 : index
    %c0_72 = arith.constant 0 : index
    %c36_73 = arith.constant 36 : index
    %69 = vector.load %arg2[%c0_71, %c0_72, %c36_73] : memref<1x3x1190xbf16, #tpu.memory_space<vmem>>, vector<1x3x1088xbf16>
    %70 = vector.shape_cast %69 : vector<1x3x1088xbf16> to vector<3x1088xbf16>
    %cst_74 = arith.constant dense<0.000000e+00> : vector<8x1088xf32>
    %71 = tpu.matmul %68, %70, %cst_74 {dimension_numbers = #tpu.dot_dimension_numbers<[1], [0], [0], [1], [0, 0, 1, 1], [], []>} : vector<8x3xbf16>, vector<3x1088xbf16>, vector<8x1088xf32> -> vector<8x1088xf32>
    %72 = arith.addf %66, %71 : vector<8x1088xf32>
    %c6 = arith.constant 6 : index
    %c0_75 = arith.constant 0 : index
    %c0_76 = arith.constant 0 : index
    %73 = vector.load %arg3[%c6, %c0_75, %c0_76] : memref<9x8x8xbf16, #tpu.memory_space<vmem>>, vector<1x8x8xbf16>
    %74 = vector.shape_cast %73 : vector<1x8x8xbf16> to vector<8x8xbf16>
    %c0_77 = arith.constant 0 : index
    %c0_78 = arith.constant 0 : index
    %c68 = arith.constant 68 : index
    %75 = vector.load %arg1[%c0_77, %c0_78, %c68] : memref<1x8x1190xbf16, #tpu.memory_space<vmem>>, vector<1x8x1088xbf16>
    %76 = vector.shape_cast %75 : vector<1x8x1088xbf16> to vector<8x1088xbf16>
    %cst_79 = arith.constant dense<0.000000e+00> : vector<8x1088xf32>
    %77 = tpu.matmul %74, %76, %cst_79 {dimension_numbers = #tpu.dot_dimension_numbers<[1], [0], [0], [1], [0, 0, 1, 1], [], []>} : vector<8x8xbf16>, vector<8x1088xbf16>, vector<8x1088xf32> -> vector<8x1088xf32>
    %78 = arith.addf %72, %77 : vector<8x1088xf32>
    %c6_80 = arith.constant 6 : index
    %c0_81 = arith.constant 0 : index
    %c0_82 = arith.constant 0 : index
    %79 = vector.load %arg4[%c6_80, %c0_81, %c0_82] : memref<9x8x3xbf16, #tpu.memory_space<vmem>>, vector<1x8x3xbf16>
    %80 = vector.shape_cast %79 : vector<1x8x3xbf16> to vector<8x3xbf16>
    %c0_83 = arith.constant 0 : index
    %c0_84 = arith.constant 0 : index
    %c68_85 = arith.constant 68 : index
    %81 = vector.load %arg2[%c0_83, %c0_84, %c68_85] : memref<1x3x1190xbf16, #tpu.memory_space<vmem>>, vector<1x3x1088xbf16>
    %82 = vector.shape_cast %81 : vector<1x3x1088xbf16> to vector<3x1088xbf16>
    %cst_86 = arith.constant dense<0.000000e+00> : vector<8x1088xf32>
    %83 = tpu.matmul %80, %82, %cst_86 {dimension_numbers = #tpu.dot_dimension_numbers<[1], [0], [0], [1], [0, 0, 1, 1], [], []>} : vector<8x3xbf16>, vector<3x1088xbf16>, vector<8x1088xf32> -> vector<8x1088xf32>
    %84 = arith.addf %78, %83 : vector<8x1088xf32>
    %c7 = arith.constant 7 : index
    %c0_87 = arith.constant 0 : index
    %c0_88 = arith.constant 0 : index
    %85 = vector.load %arg3[%c7, %c0_87, %c0_88] : memref<9x8x8xbf16, #tpu.memory_space<vmem>>, vector<1x8x8xbf16>
    %86 = vector.shape_cast %85 : vector<1x8x8xbf16> to vector<8x8xbf16>
    %c0_89 = arith.constant 0 : index
    %c0_90 = arith.constant 0 : index
    %c69 = arith.constant 69 : index
    %87 = vector.load %arg1[%c0_89, %c0_90, %c69] : memref<1x8x1190xbf16, #tpu.memory_space<vmem>>, vector<1x8x1088xbf16>
    %88 = vector.shape_cast %87 : vector<1x8x1088xbf16> to vector<8x1088xbf16>
    %cst_91 = arith.constant dense<0.000000e+00> : vector<8x1088xf32>
    %89 = tpu.matmul %86, %88, %cst_91 {dimension_numbers = #tpu.dot_dimension_numbers<[1], [0], [0], [1], [0, 0, 1, 1], [], []>} : vector<8x8xbf16>, vector<8x1088xbf16>, vector<8x1088xf32> -> vector<8x1088xf32>
    %90 = arith.addf %84, %89 : vector<8x1088xf32>
    %c7_92 = arith.constant 7 : index
    %c0_93 = arith.constant 0 : index
    %c0_94 = arith.constant 0 : index
    %91 = vector.load %arg4[%c7_92, %c0_93, %c0_94] : memref<9x8x3xbf16, #tpu.memory_space<vmem>>, vector<1x8x3xbf16>
    %92 = vector.shape_cast %91 : vector<1x8x3xbf16> to vector<8x3xbf16>
    %c0_95 = arith.constant 0 : index
    %c0_96 = arith.constant 0 : index
    %c69_97 = arith.constant 69 : index
    %93 = vector.load %arg2[%c0_95, %c0_96, %c69_97] : memref<1x3x1190xbf16, #tpu.memory_space<vmem>>, vector<1x3x1088xbf16>
    %94 = vector.shape_cast %93 : vector<1x3x1088xbf16> to vector<3x1088xbf16>
    %cst_98 = arith.constant dense<0.000000e+00> : vector<8x1088xf32>
    %95 = tpu.matmul %92, %94, %cst_98 {dimension_numbers = #tpu.dot_dimension_numbers<[1], [0], [0], [1], [0, 0, 1, 1], [], []>} : vector<8x3xbf16>, vector<3x1088xbf16>, vector<8x1088xf32> -> vector<8x1088xf32>
    %96 = arith.addf %90, %95 : vector<8x1088xf32>
    %c8 = arith.constant 8 : index
    %c0_99 = arith.constant 0 : index
    %c0_100 = arith.constant 0 : index
    %97 = vector.load %arg3[%c8, %c0_99, %c0_100] : memref<9x8x8xbf16, #tpu.memory_space<vmem>>, vector<1x8x8xbf16>
    %98 = vector.shape_cast %97 : vector<1x8x8xbf16> to vector<8x8xbf16>
    %c0_101 = arith.constant 0 : index
    %c0_102 = arith.constant 0 : index
    %c70 = arith.constant 70 : index
    %99 = vector.load %arg1[%c0_101, %c0_102, %c70] : memref<1x8x1190xbf16, #tpu.memory_space<vmem>>, vector<1x8x1088xbf16>
    %100 = vector.shape_cast %99 : vector<1x8x1088xbf16> to vector<8x1088xbf16>
    %cst_103 = arith.constant dense<0.000000e+00> : vector<8x1088xf32>
    %101 = tpu.matmul %98, %100, %cst_103 {dimension_numbers = #tpu.dot_dimension_numbers<[1], [0], [0], [1], [0, 0, 1, 1], [], []>} : vector<8x8xbf16>, vector<8x1088xbf16>, vector<8x1088xf32> -> vector<8x1088xf32>
    %102 = arith.addf %96, %101 : vector<8x1088xf32>
    %c8_104 = arith.constant 8 : index
    %c0_105 = arith.constant 0 : index
    %c0_106 = arith.constant 0 : index
    %103 = vector.load %arg4[%c8_104, %c0_105, %c0_106] : memref<9x8x3xbf16, #tpu.memory_space<vmem>>, vector<1x8x3xbf16>
    %104 = vector.shape_cast %103 : vector<1x8x3xbf16> to vector<8x3xbf16>
    %c0_107 = arith.constant 0 : index
    %c0_108 = arith.constant 0 : index
    %c70_109 = arith.constant 70 : index
    %105 = vector.load %arg2[%c0_107, %c0_108, %c70_109] : memref<1x3x1190xbf16, #tpu.memory_space<vmem>>, vector<1x3x1088xbf16>
    %106 = vector.shape_cast %105 : vector<1x3x1088xbf16> to vector<3x1088xbf16>
    %cst_110 = arith.constant dense<0.000000e+00> : vector<8x1088xf32>
    %107 = tpu.matmul %104, %106, %cst_110 {dimension_numbers = #tpu.dot_dimension_numbers<[1], [0], [0], [1], [0, 0, 1, 1], [], []>} : vector<8x3xbf16>, vector<3x1088xbf16>, vector<8x1088xf32> -> vector<8x1088xf32>
    %108 = arith.addf %102, %107 : vector<8x1088xf32>
    %c0_111 = arith.constant 0 : index
    %c0_112 = arith.constant 0 : index
    %109 = vector.load %arg5[%c0_111, %c0_112] : memref<8x1xf32, #tpu.memory_space<vmem>>, vector<8x1xf32>
    %110 = vector.broadcast %109 : vector<8x1xf32> to vector<8x1088xf32>
    %111 = arith.addf %108, %110 : vector<8x1088xf32>
    %cst_113 = arith.constant 0.000000e+00 : f32
    %112 = vector.broadcast %cst_113 : f32 to vector<8x1088xf32>
    %113 = arith.maximumf %111, %112 : vector<8x1088xf32>
    %114 = arith.truncf %113 : vector<8x1088xf32> to vector<8x1088xbf16>
    %c0_114 = arith.constant 0 : index
    %c0_115 = arith.constant 0 : index
    %c0_116 = arith.constant 0 : index
    %115 = vector.load %arg6[%c0_114, %c0_115, %c0_116] : memref<1x8x1088xbf16, #tpu.memory_space<vmem>>, vector<1x8x1088xbf16>
    %116 = vector.shape_cast %115 : vector<1x8x1088xbf16> to vector<8x1088xbf16>
    %117 = vector.shape_cast %114 : vector<8x1088xbf16> to vector<1x8x1088xbf16>
    tpu.vector_store %arg6[%c0_114, %c0_115, %c0_116], %117 {strides = array<i32>} : memref<1x8x1088xbf16, #tpu.memory_space<vmem>>, vector<1x8x1088xbf16>,
    return
  }
  func.func @transform_0(%arg0: i32) -> (i32, i32, i32) {
    %c0_i32 = arith.constant 0 : i32
    %c0_i32_0 = arith.constant 0 : i32
    %c0_i32_1 = arith.constant 0 : i32
    return %arg0, %c0_i32, %c0_i32_0 : i32, i32, i32
  }
  func.func @transform_1(%arg0: i32) -> (i32, i32, i32) {
    %c0_i32 = arith.constant 0 : i32
    %c0_i32_0 = arith.constant 0 : i32
    %c0_i32_1 = arith.constant 0 : i32
    return %arg0, %c0_i32, %c0_i32_0 : i32, i32, i32
  }
  func.func @transform_2(%arg0: i32) -> (i32, i32, i32) {
    %c0_i32 = arith.constant 0 : i32
    %c0_i32_0 = arith.constant 0 : i32
    %c0_i32_1 = arith.constant 0 : i32
    %c0_i32_2 = arith.constant 0 : i32
    return %c0_i32, %c0_i32_0, %c0_i32_1 : i32, i32, i32
  }
  func.func @transform_3(%arg0: i32) -> (i32, i32, i32) {
    %c0_i32 = arith.constant 0 : i32
    %c0_i32_0 = arith.constant 0 : i32
    %c0_i32_1 = arith.constant 0 : i32
    %c0_i32_2 = arith.constant 0 : i32
    return %c0_i32, %c0_i32_0, %c0_i32_1 : i32, i32, i32
  }
  func.func @transform_4(%arg0: i32) -> (i32, i32) {
    %c0_i32 = arith.constant 0 : i32
    %c0_i32_0 = arith.constant 0 : i32
    %c0_i32_1 = arith.constant 0 : i32
    return %c0_i32, %c0_i32_0 : i32, i32
  }
  func.func @transform_5(%arg0: i32) -> (i32, i32, i32) {
    %c0_i32 = arith.constant 0 : i32
    %c0_i32_0 = arith.constant 0 : i32
    %c0_i32_1 = arith.constant 0 : i32
    return %arg0, %c0_i32, %c0_i32_0 : i32, i32, i32
  }
}

</mosaic_0001>

<llo_original>
// kernel: _lambda_.6
$region0: #{_lambda_.6}
  #allocation0 [shape = 'u32[]', space=smem, size = 0x4, offset = 0x4, fixed_abs, tag = 'smem constant byte address 0x4 - core index']
  #allocation1 [shape = 'u32[72,128]{1,0:T(1,128)}', space=vmem, size = 0x9000, scoped, tag = 'internal scratch']
  %s0 = inlined_call_operand.vmem [shape: bf16[2,16,64], index: 0, kind: input, shape index: {}]
  %s1 = inlined_call_operand.vmem [shape: bf16[64,16], index: 1, kind: input, shape index: {}]
  %s2 = inlined_call_operand.vmem [shape: f32[64,1], index: 2, kind: input, shape index: {}]
  %s3 = inlined_call_operand.vmem [shape: bf16[2,64,64], index: 3, kind: output, shape index: {}]
  %s4 = sld [smem:[#allocation0]]
  $region45: #{_lambda_.6} parent=0
    _
  %s6 = ssub.s32 1, %s4
  %s7 = scalar_select 0, %s6, %s4
  loop: start=0, step=1, limit=4
  $region2: #{_lambda_.6} parent=0 // loop_pre_header
    _
  $region3: #{_lambda_.6} parent=0 // loop_header
    %s9 = sphi 0, %s13
    %p10 = scmp.ge.s32.totalorder %s9, 4
    %s19 = sphi 0, %s21
    %s22 = sphi 0, %s19
    %s23 = sphi 0, %s22
    %s39 = sphi 0, %s23
    %s43 = sphi 0, %s43
    %s45 = sphi 0, %s43
    %s46 = sphi 0, %s45
    %s60 = sphi 0, %s46
    %s64 = sphi 0, %s64
    %s66 = sphi 0, %s64
    %s67 = sphi 0, %s66
    %s81 = sphi 0, %s67
    %s87 = sphi 0, %s89
    %s90 = sphi 0, %s87
    %s91 = sphi 0, %s90
    %s107 = sphi 0, %s91
  $region4: #{_lambda_.6} parent=0 // loop_header_branch
    %12 = sbr.rel (%p10) target = $region8
  $region5: #{_lambda_.6} parent=0 // loop_body
    %s14 = ssub.s32 %s9, 1
    %s15 = ssub.s32 %s9, 2
    %s16 = sadd.s32 %s9, 1
    %s17 = ssub.s32 %s9, %s16
    %p18 = scmp.eq.s32.totalorder %s17, 0
    %s20 = sadd.s32 %s19, 1
    %s21 = scalar_select %p18, %s19, %s20
    %p24 = pneg %p18
    %p25 = scmp.eq.s32.totalorder %s9, 1
    %p26 = por %p24, %p25
    %p27 = scmp.ne.s32.totalorder %s19, %s22
    %p28 = scmp.eq.s32.totalorder %s9, 0
    %p29 = por %p27, %p28
    %p30 = scmp.ne.s32.totalorder %s19, %s22
    %p31 = scmp.eq.s32.totalorder %s14, 1
    %p32 = por %p30, %p31
    %p33 = scmp.ne.s32.totalorder %s22, %s23
    %p34 = scmp.eq.s32.totalorder %s14, 0
    %p35 = por %p33, %p34
    %p36 = scmp.ne.s32.totalorder %s22, %s23
    %p37 = scmp.eq.s32.totalorder %s15, 1
    %p38 = por %p36, %p37
    %p40 = scmp.ne.s32.totalorder %s23, %s39
    %p41 = scmp.eq.s32.totalorder %s15, 0
    %p42 = por %p40, %p41
    %s44 = sadd.s32 %s43, 1
    %p47 = scmp.eq.s32.totalorder %s9, 1
    %p48 = scmp.ne.s32.totalorder %s43, %s45
    %p49 = scmp.eq.s32.totalorder %s9, 0
    %p50 = por %p48, %p49
    %p51 = scmp.ne.s32.totalorder %s43, %s45
    %p52 = scmp.eq.s32.totalorder %s14, 1
    %p53 = por %p51, %p52
    %p54 = scmp.ne.s32.totalorder %s45, %s46
    %p55 = scmp.eq.s32.totalorder %s14, 0
    %p56 = por %p54, %p55
    %p57 = scmp.ne.s32.totalorder %s45, %s46
    %p58 = scmp.eq.s32.totalorder %s15, 1
    %p59 = por %p57, %p58
    %p61 = scmp.ne.s32.totalorder %s46, %s60
    %p62 = scmp.eq.s32.totalorder %s15, 0
    %p63 = por %p61, %p62
    %s65 = sadd.s32 %s64, 1
    %p68 = scmp.eq.s32.totalorder %s9, 1
    %p69 = scmp.ne.s32.totalorder %s64, %s66
    %p70 = scmp.eq.s32.totalorder %s9, 0
    %p71 = por %p69, %p70
    %p72 = scmp.ne.s32.totalorder %s64, %s66
    %p73 = scmp.eq.s32.totalorder %s14, 1
    %p74 = por %p72, %p73
    %p75 = scmp.ne.s32.totalorder %s66, %s67
    %p76 = scmp.eq.s32.totalorder %s14, 0
    %p77 = por %p75, %p76
    %p78 = scmp.ne.s32.totalorder %s66, %s67
    %p79 = scmp.eq.s32.totalorder %s15, 1
    %p80 = por %p78, %p79
    %p82 = scmp.ne.s32.totalorder %s67, %s81
    %p83 = scmp.eq.s32.totalorder %s15, 0
    %p84 = por %p82, %p83
    %s85 = ssub.s32 %s9, %s16
    %p86 = scmp.eq.s32.totalorder %s85, 0
    %s88 = sadd.s32 %s87, 1
    %s89 = scalar_select %p86, %s87, %s88
    %p92 = pneg %p86
    %p93 = scmp.eq.s32.totalorder %s9, 1
    %p94 = por %p92, %p93
    %p95 = scmp.ne.s32.totalorder %s87, %s90
    %p96 = scmp.eq.s32.totalorder %s9, 0
    %p97 = por %p95, %p96
    %p98 = scmp.ne.s32.totalorder %s87, %s90
    %p99 = scmp.eq.s32.totalorder %s14, 1
    %p100 = por %p98, %p99
    %p101 = scmp.ne.s32.totalorder %s90, %s91
    %p102 = scmp.eq.s32.totalorder %s14, 0
    %p103 = por %p101, %p102
    %p104 = scmp.ne.s32.totalorder %s90, %s91
    %p105 = scmp.eq.s32.totalorder %s15, 1
    %p106 = por %p104, %p105
    %p108 = scmp.ne.s32.totalorder %s91, %s107
    %p109 = scmp.eq.s32.totalorder %s15, 0
    %p110 = por %p108, %p109
    %p111 = scmp.le.s32.totalorder 1, %s9
    %p112 = scmp.lt.s32.totalorder %s9, 3
    %p113 = pnand %p111, %p112
    %p114 = pneg %p113
    // Predicated region
    $region9: #{_lambda_.6} parent=5 // pred_check
      _
    $region10: #{_lambda_.6} parent=5 // pred_check_branch
      %116 = sbr.rel (%p113) target = $region12
    $region11: #{_lambda_.6} parent=5 // pred_region
      %s117 = ssub.s32 %s9, 1
      // Predicated region
      $region13: #{_lambda_.6} parent=11 // pred_check
        %p118 = pneg %p56
      $region14: #{_lambda_.6} parent=11 // pred_check_branch
        %120 = sbr.rel (%p118) target = $region16
      $region15: #{_lambda_.6} parent=11 // pred_region
        _
      $region16: #{_lambda_.6} parent=11 // pred_fallthru
        _
      // Predicated region
      $region17: #{_lambda_.6} parent=11 // pred_check
        %p121 = pneg %p77
      $region18: #{_lambda_.6} parent=11 // pred_check_branch
        %123 = sbr.rel (%p121) target = $region20
      $region19: #{_lambda_.6} parent=11 // pred_region
        _
      $region20: #{_lambda_.6} parent=11 // pred_fallthru
        _
    $region12: #{_lambda_.6} parent=5 // pred_fallthru
      _
    %p124 = scmp.lt.s32.totalorder %s9, 2
    // Predicated region
    $region21: #{_lambda_.6} parent=5 // pred_check
      %p125 = pneg %p124
    $region22: #{_lambda_.6} parent=5 // pred_check_branch
      %127 = sbr.rel (%p125) target = $region24
    $region23: #{_lambda_.6} parent=5 // pred_region
      // Predicated region
      $region25: #{_lambda_.6} parent=23 // pred_check
        %p128 = pneg %p29
      $region26: #{_lambda_.6} parent=23 // pred_check_branch
        %130 = sbr.rel (%p128) target = $region28
      $region27: #{_lambda_.6} parent=23 // pred_region
        %p131 = scmp.lt.s32.totalorder %s9, 1
        %s132 = scalar_select %p131, %s9, 1
        %s133 = smul.addr %s132, 2
        %s134 = smul.addr %s133, 4
        %s135 = scalar_lea.vmem %s0, %s134
      $region28: #{_lambda_.6} parent=23 // pred_fallthru
        _
    $region24: #{_lambda_.6} parent=5 // pred_fallthru
      _
    %p136 = scmp.le.s32.totalorder 1, %s9
    %p137 = scmp.lt.s32.totalorder %s9, 3
    %p138 = pnand %p136, %p137
    %p139 = pneg %p138
    // Predicated region
    $region29: #{_lambda_.6} parent=5 // pred_check
      _
    $region30: #{_lambda_.6} parent=5 // pred_check_branch
      %141 = sbr.rel (%p138) target = $region32
    $region31: #{_lambda_.6} parent=5 // pred_region
      %s142 = ssub.s32 %s9, 1
      %p143 = scmp.lt.s32.totalorder %s14, 1
      %s144 = scalar_select %p143, %s14, 1
      %s145 = smul.addr %s144, 2
      %s146 = smul.addr %s145, 4
      %s147 = scalar_lea.vmem %s0, %s146
      %p148 = pneg %p35
      %p149 = pneg %p32
      %p150 = pneg %p56
      %p151 = pneg %p53
      %p152 = pneg %p77
      %p153 = pneg %p74
      %p154 = pneg %p103
      %p155 = pneg %p100
      %p156 = scmp.lt.s32.totalorder %s14, 1
      %s157 = scalar_select %p156, %s14, 1
      %s158 = smul.addr %s157, 8
      %s159 = smul.addr %s158, 4
      %s160 = scalar_lea.vmem %s3, %s159
      %p161 = scmp.lt.s32.totalorder %s14, 1
      %s162 = scalar_select %p161, %s14, 1
      %s163 = smul.addr %s162, 2
      %s164 = smul.addr %s163, 4
      %s165 = scalar_lea.vmem %s0, %s164
      %p166 = scmp.lt.s32.totalorder %s14, 1
      %s167 = scalar_select %p166, %s14, 1
      %s168 = smul.addr %s167, 8
      %s169 = smul.addr %s168, 4
      %s170 = scalar_lea.vmem %s3, %s169
      %v172 = vld [vmem:[%s1] sm:$0xf]
      %v173 = vld [vmem:[%s1 + $0x4] sm:$0xf]
      %v174 = vld [vmem:[%s1 + $0x8] sm:$0xf]
      %v175 = vld [vmem:[%s1 + $0xc] sm:$0xf]
      %v176 = vld [vmem:[%s1 + $0x10] sm:$0xf]
      %v177 = vld [vmem:[%s1 + $0x14] sm:$0xf]
      %v178 = vld [vmem:[%s1 + $0x18] sm:$0xf]
      %v179 = vld [vmem:[%s1 + $0x1c] sm:$0xf]
      %v180 = vld [vmem:[%s165] sm:$0xf]
      %v181 = vld [vmem:[%s165 + $0x4] sm:$0xf]
      %v182 = vld [vmem:[%s2] sm:$0xff]
      %v183 = vld [vmem:[%s2 + $0x8] sm:$0xff]
      %v184 = vld [vmem:[%s2 + $0x10] sm:$0xff]
      %v185 = vld [vmem:[%s2 + $0x18] sm:$0xff]
      %v186 = vld [vmem:[%s2 + $0x20] sm:$0xff]
      %v187 = vld [vmem:[%s2 + $0x28] sm:$0xff]
      %v188 = vld [vmem:[%s2 + $0x30] sm:$0xff]
      %v189 = vld [vmem:[%s2 + $0x38] sm:$0xff]
      %191 = vset.pattern.permute.xlu0 0
      %192 = vperm.xlu0 %191, %v182
      %v193 = vpop.permute.xlu0 %192
      %196 = vset.pattern.permute.xlu0 0
      %197 = vperm.xlu0 %196, %v183
      %v198 = vpop.permute.xlu0 %197
      %201 = vset.pattern.permute.xlu0 0
      %202 = vperm.xlu0 %201, %v184
      %v203 = vpop.permute.xlu0 %202
      %206 = vset.pattern.permute.xlu0 0
      %207 = vperm.xlu0 %206, %v185
      %v208 = vpop.permute.xlu0 %207
      %211 = vset.pattern.permute.xlu0 0
      %212 = vperm.xlu0 %211, %v186
      %v213 = vpop.permute.xlu0 %212
      %216 = vset.pattern.permute.xlu0 0
      %217 = vperm.xlu0 %216, %v187
      %v218 = vpop.permute.xlu0 %217
      %221 = vset.pattern.permute.xlu0 0
      %222 = vperm.xlu0 %221, %v188
      %v223 = vpop.permute.xlu0 %222
      %226 = vset.pattern.permute.xlu0 0
      %227 = vperm.xlu0 %226, %v189
      %v228 = vpop.permute.xlu0 %227
      %v238 = vunpack.c.l.b16 %v172
      %v239 = vunpack.c.l.b16 %v173
      %v240 = vunpack.c.l.b16 %v174
      %v241 = vunpack.c.l.b16 %v175
      %v242 = vunpack.c.l.b16 %v176
      %v243 = vunpack.c.l.b16 %v177
      %v244 = vunpack.c.l.b16 %v178
      %v245 = vunpack.c.l.b16 %v179
      %v246 = vpack.c.b16 %v239, %v238
      %v247 = vpack.c.b16 %v241, %v240
      %v248 = vpack.c.b16 %v243, %v242
      %v249 = vpack.c.b16 %v245, %v244
      %v252 = vunpack.c.l.b16 %v180
      %v253 = vunpack.c.l.b16 %v181
      %v254 = vpack.c.b16 %v253, %v252
      %vm256 = vcmask 130048
      %v258 = vsel %vm256, %v246, 0
      %v261 = vsel %vm256, %v247, 0
      %v264 = vsel %vm256, %v248, 0
      %v267 = vsel %vm256, %v249, 0
      %269 = vmatpush.bf16.msra.mxu0 0
      %270 = vmatpush.bf16.msra.mxu0 0
      %271 = vmatpush.bf16.msra.mxu0 0
      %272 = vmatpush.bf16.msra.mxu0 0
      %273 = vmatpush.bf16.msra.mxu0 0
      %274 = vmatpush.bf16.msra.mxu0 0
      %275 = vmatpush.bf16.msra.mxu0 0
      %276 = vmatpush.bf16.msra.mxu0 %v254
      %277 = vmatmul.bf16.gmra.mxu0 %v258
      %v278 = vpop.f32.mrf.mxu0
      %v279 = vadd.f32 %v193, %v278
      %v280 = vpop.f32.mrf.mxu0
      %v281 = vadd.f32 %v198, %v280
      %282 = vmatmul.bf16.gmra.mxu0 %v261
      %v283 = vpop.f32.mrf.mxu0
      %v284 = vadd.f32 %v203, %v283
      %v285 = vpop.f32.mrf.mxu0
      %v286 = vadd.f32 %v208, %v285
      %287 = vmatmul.bf16.gmra.mxu0 %v264
      %v288 = vpop.f32.mrf.mxu0
      %v289 = vadd.f32 %v213, %v288
      %v290 = vpop.f32.mrf.mxu0
      %v291 = vadd.f32 %v218, %v290
      %292 = vmatmul.bf16.gmra.mxu0 %v267
      %v293 = vpop.f32.mrf.mxu0
      %v294 = vadd.f32 %v223, %v293
      %v295 = vpop.f32.mrf.mxu0
      %v296 = vadd.f32 %v228, %v295
      %297 = vdwg.mxu0
      %v298 = vpack.c.bf16 %v279, %v279
      %v299 = vpack.c.bf16 %v281, %v281
      %v300 = vpack.c.bf16 %v284, %v284
      %v301 = vpack.c.bf16 %v286, %v286
      %v302 = vpack.c.bf16 %v289, %v289
      %v303 = vpack.c.bf16 %v291, %v291
      %v304 = vpack.c.bf16 %v294, %v294
      %v305 = vpack.c.bf16 %v296, %v296
      %vm306 = vcmask 519168
      %307 = vst.msk [vmem:[%s170] sm:$0xf] %vm306, %v298
      %308 = vst.msk [vmem:[%s170 + $0x4] sm:$0xf] %vm306, %v299
      %309 = vst.msk [vmem:[%s170 + $0x8] sm:$0xf] %vm306, %v300
      %310 = vst.msk [vmem:[%s170 + $0xc] sm:$0xf] %vm306, %v301
      %311 = vst.msk [vmem:[%s170 + $0x10] sm:$0xf] %vm306, %v302
      %312 = vst.msk [vmem:[%s170 + $0x14] sm:$0xf] %vm306, %v303
      %313 = vst.msk [vmem:[%s170 + $0x18] sm:$0xf] %vm306, %v304
      %314 = vst.msk [vmem:[%s170 + $0x1c] sm:$0xf] %vm306, %v305
      %p315 = scmp.lt.s32.totalorder %s14, 1
      %s316 = scalar_select %p315, %s14, 1
      %s317 = smul.addr %s316, 8
      %s318 = smul.addr %s317, 4
      %s319 = scalar_lea.vmem %s3, %s318
      // Predicated region
      $region33: #{_lambda_.6} parent=31 // pred_check
        %p320 = pneg %p100
      $region34: #{_lambda_.6} parent=31 // pred_check_branch
        %322 = sbr.rel (%p320) target = $region36
      $region35: #{_lambda_.6} parent=31 // pred_region
        _
      $region36: #{_lambda_.6} parent=31 // pred_fallthru
        _
    $region32: #{_lambda_.6} parent=5 // pred_fallthru
      _
    %p323 = scmp.le.s32.totalorder 2, %s9
    // Predicated region
    $region37: #{_lambda_.6} parent=5 // pred_check
      %p324 = pneg %p323
    $region38: #{_lambda_.6} parent=5 // pred_check_branch
      %326 = sbr.rel (%p324) target = $region40
    $region39: #{_lambda_.6} parent=5 // pred_region
      %s327 = ssub.s32 %s9, 2
      // Predicated region
      $region41: #{_lambda_.6} parent=39 // pred_check
        %p328 = pneg %p106
      $region42: #{_lambda_.6} parent=39 // pred_check_branch
        %330 = sbr.rel (%p328) target = $region44
      $region43: #{_lambda_.6} parent=39 // pred_region
        %p331 = scmp.lt.s32.totalorder %s15, 1
        %s332 = scalar_select %p331, %s15, 1
        %s333 = smul.addr %s332, 8
        %s334 = smul.addr %s333, 4
        %s335 = scalar_lea.vmem %s3, %s334
      $region44: #{_lambda_.6} parent=39 // pred_fallthru
        _
    $region40: #{_lambda_.6} parent=5 // pred_fallthru
      _
  $region6: #{_lambda_.6} parent=0 // loop_footer
    %s13 = sadd.s32 1, %s9
  $region7: #{_lambda_.6} parent=0 // loop_footer_branch
    %8 = sbr.rel target = $region3
  $region8: #{_lambda_.6} parent=0 // loop_exit
    _

// kernel: _lambda_.5
$region0: #{_lambda_.5}
  #allocation0 [shape = 'u32[]', space=smem, size = 0x4, offset = 0x4, fixed_abs, tag = 'smem constant byte address 0x4 - core index']
  #allocation1 [shape = 'u32[72,128]{1,0:T(1,128)}', space=vmem, size = 0x9000, scoped, tag = 'internal scratch']
  %s0 = inlined_call_operand.vmem [shape: bf16[2,32,210], index: 0, kind: input, shape index: {}]
  %s1 = inlined_call_operand.vmem [shape: bf16[16,32], index: 1, kind: input, shape index: {}]
  %s2 = inlined_call_operand.vmem [shape: f32[16,1], index: 2, kind: input, shape index: {}]
  %s3 = inlined_call_operand.vmem [shape: bf16[9,16,32], index: 3, kind: input, shape index: {}]
  %s4 = inlined_call_operand.vmem [shape: f32[16,1], index: 4, kind: input, shape index: {}]
  %s5 = inlined_call_operand.vmem [shape: bf16[9,16,32], index: 5, kind: input, shape index: {}]
  %s6 = inlined_call_operand.vmem [shape: f32[16,1], index: 6, kind: input, shape index: {}]
  %s7 = inlined_call_operand.vmem [shape: bf16[3,16,16], index: 7, kind: input, shape index: {}]
  %s8 = inlined_call_operand.vmem [shape: f32[2,16,1], index: 8, kind: input, shape index: {}]
  %s9 = inlined_call_operand.vmem [shape: bf16[2,16,112], index: 9, kind: output, shape index: {}]
  %s10 = sld [smem:[#allocation0]]
  $region69: #{_lambda_.5} parent=0
    _
  %s12 = ssub.s32 1, %s10
  %s13 = scalar_select 0, %s12, %s10
  loop: start=0, step=1, limit=4
  $region2: #{_lambda_.5} parent=0 // loop_pre_header
    _
  $region3: #{_lambda_.5} parent=0 // loop_header
    %s15 = sphi 0, %s19
    %p16 = scmp.ge.s32.totalorder %s15, 4
    %s25 = sphi 0, %s27
    %s28 = sphi 0, %s25
    %s29 = sphi 0, %s28
    %s45 = sphi 0, %s29
    %s49 = sphi 0, %s49
    %s51 = sphi 0, %s49
    %s52 = sphi 0, %s51
    %s66 = sphi 0, %s52
    %s70 = sphi 0, %s70
    %s72 = sphi 0, %s70
    %s73 = sphi 0, %s72
    %s87 = sphi 0, %s73
    %s91 = sphi 0, %s91
    %s93 = sphi 0, %s91
    %s94 = sphi 0, %s93
    %s108 = sphi 0, %s94
    %s112 = sphi 0, %s112
    %s114 = sphi 0, %s112
    %s115 = sphi 0, %s114
    %s129 = sphi 0, %s115
    %s133 = sphi 0, %s133
    %s135 = sphi 0, %s133
    %s136 = sphi 0, %s135
    %s150 = sphi 0, %s136
    %s154 = sphi 0, %s154
    %s156 = sphi 0, %s154
    %s157 = sphi 0, %s156
    %s171 = sphi 0, %s157
    %s175 = sphi 0, %s175
    %s177 = sphi 0, %s175
    %s178 = sphi 0, %s177
    %s192 = sphi 0, %s178
    %s198 = sphi 0, %s200
    %s201 = sphi 0, %s198
    %s202 = sphi 0, %s201
    %s218 = sphi 0, %s202
    %s224 = sphi 0, %s226
    %s227 = sphi 0, %s224
    %s228 = sphi 0, %s227
    %s244 = sphi 0, %s228
  $region4: #{_lambda_.5} parent=0 // loop_header_branch
    %18 = sbr.rel (%p16) target = $region8
  $region5: #{_lambda_.5} parent=0 // loop_body
    %s20 = ssub.s32 %s15, 1
    %s21 = ssub.s32 %s15, 2
    %s22 = sadd.s32 %s15, 1
    %s23 = ssub.s32 %s15, %s22
    %p24 = scmp.eq.s32.totalorder %s23, 0
    %s26 = sadd.s32 %s25, 1
    %s27 = scalar_select %p24, %s25, %s26
    %p30 = pneg %p24
    %p31 = scmp.eq.s32.totalorder %s15, 1
    %p32 = por %p30, %p31
    %p33 = scmp.ne.s32.totalorder %s25, %s28
    %p34 = scmp.eq.s32.totalorder %s15, 0
    %p35 = por %p33, %p34
    %p36 = scmp.ne.s32.totalorder %s25, %s28
    %p37 = scmp.eq.s32.totalorder %s20, 1
    %p38 = por %p36, %p37
    %p39 = scmp.ne.s32.totalorder %s28, %s29
    %p40 = scmp.eq.s32.totalorder %s20, 0
    %p41 = por %p39, %p40
    %p42 = scmp.ne.s32.totalorder %s28, %s29
    %p43 = scmp.eq.s32.totalorder %s21, 1
    %p44 = por %p42, %p43
    %p46 = scmp.ne.s32.totalorder %s29, %s45
    %p47 = scmp.eq.s32.totalorder %s21, 0
    %p48 = por %p46, %p47
    %s50 = sadd.s32 %s49, 1
    %p53 = scmp.eq.s32.totalorder %s15, 1
    %p54 = scmp.ne.s32.totalorder %s49, %s51
    %p55 = scmp.eq.s32.totalorder %s15, 0
    %p56 = por %p54, %p55
    %p57 = scmp.ne.s32.totalorder %s49, %s51
    %p58 = scmp.eq.s32.totalorder %s20, 1
    %p59 = por %p57, %p58
    %p60 = scmp.ne.s32.totalorder %s51, %s52
    %p61 = scmp.eq.s32.totalorder %s20, 0
    %p62 = por %p60, %p61
    %p63 = scmp.ne.s32.totalorder %s51, %s52
    %p64 = scmp.eq.s32.totalorder %s21, 1
    %p65 = por %p63, %p64
    %p67 = scmp.ne.s32.totalorder %s52, %s66
    %p68 = scmp.eq.s32.totalorder %s21, 0
    %p69 = por %p67, %p68
    %s71 = sadd.s32 %s70, 1
    %p74 = scmp.eq.s32.totalorder %s15, 1
    %p75 = scmp.ne.s32.totalorder %s70, %s72
    %p76 = scmp.eq.s32.totalorder %s15, 0
    %p77 = por %p75, %p76
    %p78 = scmp.ne.s32.totalorder %s70, %s72
    %p79 = scmp.eq.s32.totalorder %s20, 1
    %p80 = por %p78, %p79
    %p81 = scmp.ne.s32.totalorder %s72, %s73
    %p82 = scmp.eq.s32.totalorder %s20, 0
    %p83 = por %p81, %p82
    %p84 = scmp.ne.s32.totalorder %s72, %s73
    %p85 = scmp.eq.s32.totalorder %s21, 1
    %p86 = por %p84, %p85
    %p88 = scmp.ne.s32.totalorder %s73, %s87
    %p89 = scmp.eq.s32.totalorder %s21, 0
    %p90 = por %p88, %p89
    %s92 = sadd.s32 %s91, 1
    %p95 = scmp.eq.s32.totalorder %s15, 1
    %p96 = scmp.ne.s32.totalorder %s91, %s93
    %p97 = scmp.eq.s32.totalorder %s15, 0
    %p98 = por %p96, %p97
    %p99 = scmp.ne.s32.totalorder %s91, %s93
    %p100 = scmp.eq.s32.totalorder %s20, 1
    %p101 = por %p99, %p100
    %p102 = scmp.ne.s32.totalorder %s93, %s94
    %p103 = scmp.eq.s32.totalorder %s20, 0
    %p104 = por %p102, %p103
    %p105 = scmp.ne.s32.totalorder %s93, %s94
    %p106 = scmp.eq.s32.totalorder %s21, 1
    %p107 = por %p105, %p106
    %p109 = scmp.ne.s32.totalorder %s94, %s108
    %p110 = scmp.eq.s32.totalorder %s21, 0
    %p111 = por %p109, %p110
    %s113 = sadd.s32 %s112, 1
    %p116 = scmp.eq.s32.totalorder %s15, 1
    %p117 = scmp.ne.s32.totalorder %s112, %s114
    %p118 = scmp.eq.s32.totalorder %s15, 0
    %p119 = por %p117, %p118
    %p120 = scmp.ne.s32.totalorder %s112, %s114
    %p121 = scmp.eq.s32.totalorder %s20, 1
    %p122 = por %p120, %p121
    %p123 = scmp.ne.s32.totalorder %s114, %s115
    %p124 = scmp.eq.s32.totalorder %s20, 0
    %p125 = por %p123, %p124
    %p126 = scmp.ne.s32.totalorder %s114, %s115
    %p127 = scmp.eq.s32.totalorder %s21, 1
    %p128 = por %p126, %p127
    %p130 = scmp.ne.s32.totalorder %s115, %s129
    %p131 = scmp.eq.s32.totalorder %s21, 0
    %p132 = por %p130, %p131
    %s134 = sadd.s32 %s133, 1
    %p137 = scmp.eq.s32.totalorder %s15, 1
    %p138 = scmp.ne.s32.totalorder %s133, %s135
    %p139 = scmp.eq.s32.totalorder %s15, 0
    %p140 = por %p138, %p139
    %p141 = scmp.ne.s32.totalorder %s133, %s135
    %p142 = scmp.eq.s32.totalorder %s20, 1
    %p143 = por %p141, %p142
    %p144 = scmp.ne.s32.totalorder %s135, %s136
    %p145 = scmp.eq.s32.totalorder %s20, 0
    %p146 = por %p144, %p145
    %p147 = scmp.ne.s32.totalorder %s135, %s136
    %p148 = scmp.eq.s32.totalorder %s21, 1
    %p149 = por %p147, %p148
    %p151 = scmp.ne.s32.totalorder %s136, %s150
    %p152 = scmp.eq.s32.totalorder %s21, 0
    %p153 = por %p151, %p152
    %s155 = sadd.s32 %s154, 1
    %p158 = scmp.eq.s32.totalorder %s15, 1
    %p159 = scmp.ne.s32.totalorder %s154, %s156
    %p160 = scmp.eq.s32.totalorder %s15, 0
    %p161 = por %p159, %p160
    %p162 = scmp.ne.s32.totalorder %s154, %s156
    %p163 = scmp.eq.s32.totalorder %s20, 1
    %p164 = por %p162, %p163
    %p165 = scmp.ne.s32.totalorder %s156, %s157
    %p166 = scmp.eq.s32.totalorder %s20, 0
    %p167 = por %p165, %p166
    %p168 = scmp.ne.s32.totalorder %s156, %s157
    %p169 = scmp.eq.s32.totalorder %s21, 1
    %p170 = por %p168, %p169
    %p172 = scmp.ne.s32.totalorder %s157, %s171
    %p173 = scmp.eq.s32.totalorder %s21, 0
    %p174 = por %p172, %p173
    %s176 = sadd.s32 %s175, 1
    %p179 = scmp.eq.s32.totalorder %s15, 1
    %p180 = scmp.ne.s32.totalorder %s175, %s177
    %p181 = scmp.eq.s32.totalorder %s15, 0
    %p182 = por %p180, %p181
    %p183 = scmp.ne.s32.totalorder %s175, %s177
    %p184 = scmp.eq.s32.totalorder %s20, 1
    %p185 = por %p183, %p184
    %p186 = scmp.ne.s32.totalorder %s177, %s178
    %p187 = scmp.eq.s32.totalorder %s20, 0
    %p188 = por %p186, %p187
    %p189 = scmp.ne.s32.totalorder %s177, %s178
    %p190 = scmp.eq.s32.totalorder %s21, 1
    %p191 = por %p189, %p190
    %p193 = scmp.ne.s32.totalorder %s178, %s192
    %p194 = scmp.eq.s32.totalorder %s21, 0
    %p195 = por %p193, %p194
    %s196 = ssub.s32 %s15, %s22
    %p197 = scmp.eq.s32.totalorder %s196, 0
    %s199 = sadd.s32 %s198, 1
    %s200 = scalar_select %p197, %s198, %s199
    %p203 = pneg %p197
    %p204 = scmp.eq.s32.totalorder %s15, 1
    %p205 = por %p203, %p204
    %p206 = scmp.ne.s32.totalorder %s198, %s201
    %p207 = scmp.eq.s32.totalorder %s15, 0
    %p208 = por %p206, %p207
    %p209 = scmp.ne.s32.totalorder %s198, %s201
    %p210 = scmp.eq.s32.totalorder %s20, 1
    %p211 = por %p209, %p210
    %p212 = scmp.ne.s32.totalorder %s201, %s202
    %p213 = scmp.eq.s32.totalorder %s20, 0
    %p214 = por %p212, %p213
    %p215 = scmp.ne.s32.totalorder %s201, %s202
    %p216 = scmp.eq.s32.totalorder %s21, 1
    %p217 = por %p215, %p216
    %p219 = scmp.ne.s32.totalorder %s202, %s218
    %p220 = scmp.eq.s32.totalorder %s21, 0
    %p221 = por %p219, %p220
    %s222 = ssub.s32 %s15, %s22
    %p223 = scmp.eq.s32.totalorder %s222, 0
    %s225 = sadd.s32 %s224, 1
    %s226 = scalar_select %p223, %s224, %s225
    %p229 = pneg %p223
    %p230 = scmp.eq.s32.totalorder %s15, 1
    %p231 = por %p229, %p230
    %p232 = scmp.ne.s32.totalorder %s224, %s227
    %p233 = scmp.eq.s32.totalorder %s15, 0
    %p234 = por %p232, %p233
    %p235 = scmp.ne.s32.totalorder %s224, %s227
    %p236 = scmp.eq.s32.totalorder %s20, 1
    %p237 = por %p235, %p236
    %p238 = scmp.ne.s32.totalorder %s227, %s228
    %p239 = scmp.eq.s32.totalorder %s20, 0
    %p240 = por %p238, %p239
    %p241 = scmp.ne.s32.totalorder %s227, %s228
    %p242 = scmp.eq.s32.totalorder %s21, 1
    %p243 = por %p241, %p242
    %p245 = scmp.ne.s32.totalorder %s228, %s244
    %p246 = scmp.eq.s32.totalorder %s21, 0
    %p247 = por %p245, %p246
    %p248 = scmp.le.s32.totalorder 1, %s15
    %p249 = scmp.lt.s32.totalorder %s15, 3
    %p250 = pnand %p248, %p249
    %p251 = pneg %p250
    // Predicated region
    $region9: #{_lambda_.5} parent=5 // pred_check
      _
    $region10: #{_lambda_.5} parent=5 // pred_check_branch
      %253 = sbr.rel (%p250) target = $region12
    $region11: #{_lambda_.5} parent=5 // pred_region
      %s254 = ssub.s32 %s15, 1
      // Predicated region
      $region13: #{_lambda_.5} parent=11 // pred_check
        %p255 = pneg %p62
      $region14: #{_lambda_.5} parent=11 // pred_check_branch
        %257 = sbr.rel (%p255) target = $region16
      $region15: #{_lambda_.5} parent=11 // pred_region
        _
      $region16: #{_lambda_.5} parent=11 // pred_fallthru
        _
      // Predicated region
      $region17: #{_lambda_.5} parent=11 // pred_check
        %p258 = pneg %p83
      $region18: #{_lambda_.5} parent=11 // pred_check_branch
        %260 = sbr.rel (%p258) target = $region20
      $region19: #{_lambda_.5} parent=11 // pred_region
        _
      $region20: #{_lambda_.5} parent=11 // pred_fallthru
        _
      // Predicated region
      $region21: #{_lambda_.5} parent=11 // pred_check
        %p261 = pneg %p104
      $region22: #{_lambda_.5} parent=11 // pred_check_branch
        %263 = sbr.rel (%p261) target = $region24
      $region23: #{_lambda_.5} parent=11 // pred_region
        _
      $region24: #{_lambda_.5} parent=11 // pred_fallthru
        _
      // Predicated region
      $region25: #{_lambda_.5} parent=11 // pred_check
        %p264 = pneg %p125
      $region26: #{_lambda_.5} parent=11 // pred_check_branch
        %266 = sbr.rel (%p264) target = $region28
      $region27: #{_lambda_.5} parent=11 // pred_region
        _
      $region28: #{_lambda_.5} parent=11 // pred_fallthru
        _
      // Predicated region
      $region29: #{_lambda_.5} parent=11 // pred_check
        %p267 = pneg %p146
      $region30: #{_lambda_.5} parent=11 // pred_check_branch
        %269 = sbr.rel (%p267) target = $region32
      $region31: #{_lambda_.5} parent=11 // pred_region
        _
      $region32: #{_lambda_.5} parent=11 // pred_fallthru
        _
      // Predicated region
      $region33: #{_lambda_.5} parent=11 // pred_check
        %p270 = pneg %p167
      $region34: #{_lambda_.5} parent=11 // pred_check_branch
        %272 = sbr.rel (%p270) target = $region36
      $region35: #{_lambda_.5} parent=11 // pred_region
        _
      $region36: #{_lambda_.5} parent=11 // pred_fallthru
        _
      // Predicated region
      $region37: #{_lambda_.5} parent=11 // pred_check
        %p273 = pneg %p188
      $region38: #{_lambda_.5} parent=11 // pred_check_branch
        %275 = sbr.rel (%p273) target = $region40
      $region39: #{_lambda_.5} parent=11 // pred_region
        _
      $region40: #{_lambda_.5} parent=11 // pred_fallthru
        _
    $region12: #{_lambda_.5} parent=5 // pred_fallthru
      _
    %p276 = scmp.lt.s32.totalorder %s15, 2
    // Predicated region
    $region41: #{_lambda_.5} parent=5 // pred_check
      %p277 = pneg %p276
    $region42: #{_lambda_.5} parent=5 // pred_check_branch
      %279 = sbr.rel (%p277) target = $region44
    $region43: #{_lambda_.5} parent=5 // pred_region
      // Predicated region
      $region45: #{_lambda_.5} parent=43 // pred_check
        %p280 = pneg %p35
      $region46: #{_lambda_.5} parent=43 // pred_check_branch
        %282 = sbr.rel (%p280) target = $region48
      $region47: #{_lambda_.5} parent=43 // pred_region
        %p283 = scmp.lt.s32.totalorder %s15, 1
        %s284 = scalar_select %p283, %s15, 1
        %s285 = smul.addr %s284, 8
        %s286 = smul.addr %s285, 4
        %s287 = scalar_lea.vmem %s0, %s286
      $region48: #{_lambda_.5} parent=43 // pred_fallthru
        _
      // Predicated region
      $region49: #{_lambda_.5} parent=43 // pred_check
        %p288 = pneg %p208
      $region50: #{_lambda_.5} parent=43 // pred_check_branch
        %290 = sbr.rel (%p288) target = $region52
      $region51: #{_lambda_.5} parent=43 // pred_region
        %p291 = scmp.lt.s32.totalorder %s15, 1
        %s292 = scalar_select %p291, %s15, 1
        %s293 = smul.addr %s292, 2
        %s294 = smul.addr %s293, 8
        %s295 = scalar_lea.vmem %s8, %s294
      $region52: #{_lambda_.5} parent=43 // pred_fallthru
        _
    $region44: #{_lambda_.5} parent=5 // pred_fallthru
      _
    %p296 = scmp.le.s32.totalorder 1, %s15
    %p297 = scmp.lt.s32.totalorder %s15, 3
    %p298 = pnand %p296, %p297
    %p299 = pneg %p298
    // Predicated region
    $region53: #{_lambda_.5} parent=5 // pred_check
      _
    $region54: #{_lambda_.5} parent=5 // pred_check_branch
      %301 = sbr.rel (%p298) target = $region56
    $region55: #{_lambda_.5} parent=5 // pred_region
      %s302 = ssub.s32 %s15, 1
      %p303 = scmp.lt.s32.totalorder %s20, 1
      %s304 = scalar_select %p303, %s20, 1
      %s305 = smul.addr %s304, 8
      %s306 = smul.addr %s305, 4
      %s307 = scalar_lea.vmem %s0, %s306
      %p308 = pneg %p41
      %p309 = pneg %p38
      %p310 = pneg %p62
      %p311 = pneg %p59
      %p312 = pneg %p83
      %p313 = pneg %p80
      %p314 = pneg %p104
      %p315 = pneg %p101
      %p316 = pneg %p125
      %p317 = pneg %p122
      %p318 = pneg %p146
      %p319 = pneg %p143
      %p320 = pneg %p167
      %p321 = pneg %p164
      %p322 = pneg %p188
      %p323 = pneg %p185
      %p324 = scmp.lt.s32.totalorder %s20, 1
      %s325 = scalar_select %p324, %s20, 1
      %s326 = smul.addr %s325, 2
      %s327 = smul.addr %s326, 8
      %s328 = scalar_lea.vmem %s8, %s327
      %p329 = pneg %p214
      %p330 = pneg %p211
      %p331 = pneg %p240
      %p332 = pneg %p237
      %p333 = scmp.lt.s32.totalorder %s20, 1
      %s334 = scalar_select %p333, %s20, 1
      %s335 = smul.addr %s334, 2
      %s336 = smul.addr %s335, 4
      %s337 = scalar_lea.vmem %s9, %s336
      %p338 = scmp.lt.s32.totalorder %s20, 1
      %s339 = scalar_select %p338, %s20, 1
      %s340 = smul.addr %s339, 8
      %s341 = smul.addr %s340, 4
      %s342 = scalar_lea.vmem %s0, %s341
      %p343 = scmp.lt.s32.totalorder %s20, 1
      %s344 = scalar_select %p343, %s20, 1
      %s345 = smul.addr %s344, 2
      %s346 = smul.addr %s345, 8
      %s347 = scalar_lea.vmem %s8, %s346
      %p348 = scmp.lt.s32.totalorder %s20, 1
      %s349 = scalar_select %p348, %s20, 1
      %s350 = smul.addr %s349, 2
      %s351 = smul.addr %s350, 4
      %s352 = scalar_lea.vmem %s9, %s351
      %v354 = vld [vmem:[%s342] sm:$0xff]
      %v355 = vld [vmem:[%s342 + $0x8] sm:$0xff]
      %v356 = vld [vmem:[%s342 + $0x10] sm:$0xff]
      %v357 = vld [vmem:[%s342 + $0x18] sm:$0xff]
      %v358 = vld [vmem:[%s1] sm:$0xf]
      %v359 = vld [vmem:[%s1 + $0x4] sm:$0xf]
      %v360 = vld [vmem:[%s2] sm:$0xff]
      %v361 = vld [vmem:[%s2 + $0x8] sm:$0xff]
      %363 = vset.pattern.permute.xlu0 0
      %364 = vperm.xlu0 %363, %v360
      %v365 = vpop.permute.xlu0 %364
      %368 = vset.pattern.permute.xlu0 0
      %369 = vperm.xlu0 %368, %v361
      %v370 = vpop.permute.xlu0 %369
      %v374 = vunpack.c.l.b16 %v358
      %v375 = vunpack.c.l.b16 %v359
      %v376 = vpack.c.b16 %v375, %v374
      %v381 = vunpack.c.l.b16 %v354
      %v382 = vunpack.c.h.b16 %v354
      %v383 = vunpack.c.l.b16 %v355
      %v384 = vunpack.c.h.b16 %v355
      %v385 = vunpack.c.l.b16 %v356
      %v386 = vunpack.c.h.b16 %v356
      %v387 = vunpack.c.l.b16 %v357
      %v388 = vunpack.c.h.b16 %v357
      %v389 = vpack.c.b16 %v383, %v381
      %v390 = vpack.c.b16 %v384, %v382
      %v391 = vpack.c.b16 %v387, %v385
      %v392 = vpack.c.b16 %v388, %v386
      %393 = vrot.lane.b32.xlu0 %v389, 83
      %v394 = vpop.permute.xlu0 %393
      %395 = vrot.lane.b32.xlu0 %v390, 83
      %v396 = vpop.permute.xlu0 %395
      %397 = vrot.lane.b32.xlu0 %v391, 83
      %v398 = vpop.permute.xlu0 %397
      %399 = vrot.lane.b32.xlu0 %v392, 83
      %v400 = vpop.permute.xlu0 %399
      %vm401 = vcmask 678912
      %v402 = vsel %vm401, %v394, %v396
      %v403 = vsel %vm401, %v398, %v400
      %vm406 = vcmask 261120
      %v408 = vsel %vm406, %v376, 0
      %410 = vmatpush.bf16.msra.mxu0 0
      %411 = vmatpush.bf16.msra.mxu0 0
      %412 = vmatpush.bf16.msra.mxu0 0
      %413 = vmatpush.bf16.msra.mxu0 0
      %414 = vmatpush.bf16.msra.mxu0 0
      %415 = vmatpush.bf16.msra.mxu0 0
      %416 = vmatpush.bf16.msra.mxu0 %v403
      %417 = vmatpush.bf16.msra.mxu0 %v402
      %418 = vmatmul.bf16.gmra.mxu0 %v408
      %v419 = vpop.f32.mrf.mxu0
      %v420 = vadd.f32 %v365, %v419
      %v421 = vpop.f32.mrf.mxu0
      %v422 = vadd.f32 %v370, %v421
      %423 = vdwg.mxu0
      %v424 = vmax.f32 %v420, 0.0
      %v425 = vmax.f32 %v422, 0.0
      %v426 = vld [vmem:[%s3] sm:$0xf]
      %v427 = vld [vmem:[%s3 + $0x4] sm:$0xf]
      %v428 = vld [vmem:[%s342] sm:$0xf]
      %v429 = vld [vmem:[%s342 + $0x8] sm:$0xf]
      %v430 = vld [vmem:[%s342 + $0x10] sm:$0xf]
      %v431 = vld [vmem:[%s342 + $0x18] sm:$0xf]
      %s432 = scalar_lea.vmem %s3, 8
      %v433 = vld [vmem:[%s432] sm:$0xf]
      %v434 = vld [vmem:[%s432 + $0x4] sm:$0xf]
      %v437 = vunpack.c.l.b16 %v433
      %v438 = vunpack.c.l.b16 %v434
      %v439 = vpack.c.b16 %v438, %v437
      %440 = vrot.lane.b32.xlu0 %v389, 111
      %v441 = vpop.permute.xlu0 %440
      %442 = vrot.lane.b32.xlu0 %v390, 111
      %v443 = vpop.permute.xlu0 %442
      %444 = vrot.lane.b32.xlu0 %v391, 111
      %v445 = vpop.permute.xlu0 %444
      %446 = vrot.lane.b32.xlu0 %v392, 111
      %v447 = vpop.permute.xlu0 %446
      %vm448 = vcmask 908288
      %v449 = vsel %vm448, %v441, %v443
      %v450 = vsel %vm448, %v445, %v447
      %v454 = vsel %vm406, %v439, 0
      %456 = vmatpush.bf16.msra.mxu0 0
      %457 = vmatpush.bf16.msra.mxu0 0
      %458 = vmatpush.bf16.msra.mxu0 0
      %459 = vmatpush.bf16.msra.mxu0 0
      %460 = vmatpush.bf16.msra.mxu0 0
      %461 = vmatpush.bf16.msra.mxu0 0
      %462 = vmatpush.bf16.msra.mxu0 %v450
      %463 = vmatpush.bf16.msra.mxu0 %v449
      %464 = vmatmul.bf16.gmra.mxu0 %v454
      %v465 = vpop.f32.mrf.mxu0
      %v466 = vadd.f32 0.0, %v465
      %v467 = vpop.f32.mrf.mxu0
      %v468 = vadd.f32 0.0, %v467
      %469 = vdwg.mxu0
      %v472 = vunpack.c.l.b16 %v426
      %v473 = vunpack.c.l.b16 %v427
      %v474 = vpack.c.b16 %v473, %v472
      %v479 = vunpack.c.l.b16 %v428
      %v480 = vunpack.c.l.b16 %v429
      %v481 = vunpack.c.l.b16 %v430
      %v482 = vunpack.c.l.b16 %v431
      %v483 = vpack.c.b16 %v480, %v479
      %v484 = vpack.c.b16 %v482, %v481
      %485 = vrot.lane.b32.xlu0 %v483, 113
      %v486 = vpop.permute.xlu0 %485
      %487 = vrot.lane.b32.xlu0 %v484, 113
      %v488 = vpop.permute.xlu0 %487
      %v492 = vsel %vm406, %v474, 0
      %494 = vmatpush.bf16.msra.mxu0 0
      %495 = vmatpush.bf16.msra.mxu0 0
      %496 = vmatpush.bf16.msra.mxu0 0
      %497 = vmatpush.bf16.msra.mxu0 0
      %498 = vmatpush.bf16.msra.mxu0 0
      %499 = vmatpush.bf16.msra.mxu0 0
      %500 = vmatpush.bf16.msra.mxu0 %v488
      %501 = vmatpush.bf16.msra.mxu0 %v486
      %502 = vmatmul.bf16.gmra.mxu0 %v492
      %v503 = vpop.f32.mrf.mxu0
      %v504 = vadd.f32 %v466, %v503
      %v505 = vpop.f32.mrf.mxu0
      %v506 = vadd.f32 %v468, %v505
      %507 = vdwg.mxu0
      %s508 = scalar_lea.vmem %s3, 16
      %v509 = vld [vmem:[%s508] sm:$0xf]
      %v510 = vld [vmem:[%s508 + $0x4] sm:$0xf]
      %v513 = vunpack.c.l.b16 %v509
      %v514 = vunpack.c.l.b16 %v510
      %v515 = vpack.c.b16 %v514, %v513
      %516 = vrot.lane.b32.xlu0 %v389, 109
      %v517 = vpop.permute.xlu0 %516
      %518 = vrot.lane.b32.xlu0 %v390, 109
      %v519 = vpop.permute.xlu0 %518
      %520 = vrot.lane.b32.xlu0 %v391, 109
      %v521 = vpop.permute.xlu0 %520
      %522 = vrot.lane.b32.xlu0 %v392, 109
      %v523 = vpop.permute.xlu0 %522
      %vm524 = vcmask 891904
      %v525 = vsel %vm524, %v517, %v519
      %v526 = vsel %vm524, %v521, %v523
      %v530 = vsel %vm406, %v515, 0
      %532 = vmatpush.bf16.msra.mxu0 0
      %533 = vmatpush.bf16.msra.mxu0 0
      %534 = vmatpush.bf16.msra.mxu0 0
      %535 = vmatpush.bf16.msra.mxu0 0
      %536 = vmatpush.bf16.msra.mxu0 0
      %537 = vmatpush.bf16.msra.mxu0 0
      %538 = vmatpush.bf16.msra.mxu0 %v526
      %539 = vmatpush.bf16.msra.mxu0 %v525
      %540 = vmatmul.bf16.gmra.mxu0 %v530
      %v541 = vpop.f32.mrf.mxu0
      %v542 = vadd.f32 0.0, %v541
      %v543 = vpop.f32.mrf.mxu0
      %v544 = vadd.f32 0.0, %v543
      %545 = vdwg.mxu0
      %v546 = vadd.f32 %v504, %v542
      %v547 = vadd.f32 %v506, %v544
      %s548 = scalar_lea.vmem %s3, 24
      %v549 = vld [vmem:[%s548] sm:$0xf]
      %v550 = vld [vmem:[%s548 + $0x4] sm:$0xf]
      %v553 = vunpack.c.l.b16 %v549
      %v554 = vunpack.c.l.b16 %v550
      %v555 = vpack.c.b16 %v554, %v553
      %556 = vrot.lane.b32.xlu0 %v389, 85
      %v557 = vpop.permute.xlu0 %556
      %558 = vrot.lane.b32.xlu0 %v390, 85
      %v559 = vpop.permute.xlu0 %558
      %560 = vrot.lane.b32.xlu0 %v391, 85
      %v561 = vpop.permute.xlu0 %560
      %562 = vrot.lane.b32.xlu0 %v392, 85
      %v563 = vpop.permute.xlu0 %562
      %vm564 = vcmask 695296
      %v565 = vsel %vm564, %v557, %v559
      %v566 = vsel %vm564, %v561, %v563
      %v570 = vsel %vm406, %v555, 0
      %572 = vmatpush.bf16.msra.mxu0 0
      %573 = vmatpush.bf16.msra.mxu0 0
      %574 = vmatpush.bf16.msra.mxu0 0
      %575 = vmatpush.bf16.msra.mxu0 0
      %576 = vmatpush.bf16.msra.mxu0 0
      %577 = vmatpush.bf16.msra.mxu0 0
      %578 = vmatpush.bf16.msra.mxu0 %v566
      %579 = vmatpush.bf16.msra.mxu0 %v565
      %580 = vmatmul.bf16.gmra.mxu0 %v570
      %v581 = vpop.f32.mrf.mxu0
      %v582 = vadd.f32 0.0, %v581
      %v583 = vpop.f32.mrf.mxu0
      %v584 = vadd.f32 0.0, %v583
      %585 = vdwg.mxu0
      %v586 = vadd.f32 %v546, %v582
      %v587 = vadd.f32 %v547, %v584
      %s588 = scalar_lea.vmem %s3, 32
      %v589 = vld [vmem:[%s588] sm:$0xf]
      %v590 = vld [vmem:[%s588 + $0x4] sm:$0xf]
      %v593 = vunpack.c.l.b16 %v589
      %v594 = vunpack.c.l.b16 %v590
      %v595 = vpack.c.b16 %v594, %v593
      %v597 = vsel %vm406, %v595, 0
      %599 = vmatpush.bf16.msra.mxu0 0
      %600 = vmatpush.bf16.msra.mxu0 0
      %601 = vmatpush.bf16.msra.mxu0 0
      %602 = vmatpush.bf16.msra.mxu0 0
      %603 = vmatpush.bf16.msra.mxu0 0
      %604 = vmatpush.bf16.msra.mxu0 0
      %605 = vmatpush.bf16.msra.mxu0 %v403
      %606 = vmatpush.bf16.msra.mxu0 %v402
      %607 = vmatmul.bf16.gmra.mxu0 %v597
      %v608 = vpop.f32.mrf.mxu0
      %v609 = vadd.f32 0.0, %v608
      %v610 = vpop.f32.mrf.mxu0
      %v611 = vadd.f32 0.0, %v610
      %612 = vdwg.mxu0
      %v613 = vadd.f32 %v586, %v609
      %v614 = vadd.f32 %v587, %v611
      %s615 = scalar_lea.vmem %s3, 40
      %v616 = vld [vmem:[%s615] sm:$0xf]
      %v617 = vld [vmem:[%s615 + $0x4] sm:$0xf]
      %v620 = vunpack.c.l.b16 %v616
      %v621 = vunpack.c.l.b16 %v617
      %v622 = vpack.c.b16 %v621, %v620
      %623 = vrot.lane.b32.xlu0 %v389, 81
      %v624 = vpop.permute.xlu0 %623
      %625 = vrot.lane.b32.xlu0 %v390, 81
      %v626 = vpop.permute.xlu0 %625
      %627 = vrot.lane.b32.xlu0 %v391, 81
      %v628 = vpop.permute.xlu0 %627
      %629 = vrot.lane.b32.xlu0 %v392, 81
      %v630 = vpop.permute.xlu0 %629
      %vm631 = vcmask 662528
      %v632 = vsel %vm631, %v624, %v626
      %v633 = vsel %vm631, %v628, %v630
      %v637 = vsel %vm406, %v622, 0
      %639 = vmatpush.bf16.msra.mxu0 0
      %640 = vmatpush.bf16.msra.mxu0 0
      %641 = vmatpush.bf16.msra.mxu0 0
      %642 = vmatpush.bf16.msra.mxu0 0
      %643 = vmatpush.bf16.msra.mxu0 0
      %644 = vmatpush.bf16.msra.mxu0 0
      %645 = vmatpush.bf16.msra.mxu0 %v633
      %646 = vmatpush.bf16.msra.mxu0 %v632
      %647 = vmatmul.bf16.gmra.mxu0 %v637
      %v648 = vpop.f32.mrf.mxu0
      %v649 = vadd.f32 0.0, %v648
      %v650 = vpop.f32.mrf.mxu0
      %v651 = vadd.f32 0.0, %v650
      %652 = vdwg.mxu0
      %v653 = vadd.f32 %v613, %v649
      %v654 = vadd.f32 %v614, %v651
      %s655 = scalar_lea.vmem %s3, 48
      %v656 = vld [vmem:[%s655] sm:$0xf]
      %v657 = vld [vmem:[%s655 + $0x4] sm:$0xf]
      %v660 = vunpack.c.l.b16 %v656
      %v661 = vunpack.c.l.b16 %v657
      %v662 = vpack.c.b16 %v661, %v660
      %663 = vrot.lane.b32.xlu0 %v389, 57
      %v664 = vpop.permute.xlu0 %663
      %665 = vrot.lane.b32.xlu0 %v390, 57
      %v666 = vpop.permute.xlu0 %665
      %667 = vrot.lane.b32.xlu0 %v391, 57
      %v668 = vpop.permute.xlu0 %667
      %669 = vrot.lane.b32.xlu0 %v392, 57
      %v670 = vpop.permute.xlu0 %669
      %vm671 = vcmask 465920
      %v672 = vsel %vm671, %v664, %v666
      %v673 = vsel %vm671, %v668, %v670
      %v677 = vsel %vm406, %v662, 0
      %679 = vmatpush.bf16.msra.mxu0 0
      %680 = vmatpush.bf16.msra.mxu0 0
      %681 = vmatpush.bf16.msra.mxu0 0
      %682 = vmatpush.bf16.msra.mxu0 0
      %683 = vmatpush.bf16.msra.mxu0 0
      %684 = vmatpush.bf16.msra.mxu0 0
      %685 = vmatpush.bf16.msra.mxu0 %v673
      %686 = vmatpush.bf16.msra.mxu0 %v672
      %687 = vmatmul.bf16.gmra.mxu0 %v677
      %v688 = vpop.f32.mrf.mxu0
      %v689 = vadd.f32 0.0, %v688
      %v690 = vpop.f32.mrf.mxu0
      %v691 = vadd.f32 0.0, %v690
      %692 = vdwg.mxu0
      %v693 = vadd.f32 %v653, %v689
      %v694 = vadd.f32 %v654, %v691
      %s695 = scalar_lea.vmem %s3, 56
      %v696 = vld [vmem:[%s695] sm:$0xf]
      %v697 = vld [vmem:[%s695 + $0x4] sm:$0xf]
      %v700 = vunpack.c.l.b16 %v696
      %v701 = vunpack.c.l.b16 %v697
      %v702 = vpack.c.b16 %v701, %v700
      %703 = vrot.lane.b32.xlu0 %v389, 55
      %v704 = vpop.permute.xlu0 %703
      %705 = vrot.lane.b32.xlu0 %v390, 55
      %v706 = vpop.permute.xlu0 %705
      %707 = vrot.lane.b32.xlu0 %v391, 55
      %v708 = vpop.permute.xlu0 %707
      %709 = vrot.lane.b32.xlu0 %v392, 55
      %v710 = vpop.permute.xlu0 %709
      %vm711 = vcmask 449536
      %v712 = vsel %vm711, %v704, %v706
      %v713 = vsel %vm711, %v708, %v710
      %v717 = vsel %vm406, %v702, 0
      %719 = vmatpush.bf16.msra.mxu0 0
      %720 = vmatpush.bf16.msra.mxu0 0
      %721 = vmatpush.bf16.msra.mxu0 0
      %722 = vmatpush.bf16.msra.mxu0 0
      %723 = vmatpush.bf16.msra.mxu0 0
      %724 = vmatpush.bf16.msra.mxu0 0
      %725 = vmatpush.bf16.msra.mxu0 %v713
      %726 = vmatpush.bf16.msra.mxu0 %v712
      %727 = vmatmul.bf16.gmra.mxu0 %v717
      %v728 = vpop.f32.mrf.mxu0
      %v729 = vadd.f32 0.0, %v728
      %v730 = vpop.f32.mrf.mxu0
      %v731 = vadd.f32 0.0, %v730
      %732 = vdwg.mxu0
      %v733 = vadd.f32 %v693, %v729
      %v734 = vadd.f32 %v694, %v731
      %s735 = scalar_lea.vmem %s3, 64
      %v736 = vld [vmem:[%s735] sm:$0xf]
      %v737 = vld [vmem:[%s735 + $0x4] sm:$0xf]
      %v740 = vunpack.c.l.b16 %v736
      %v741 = vunpack.c.l.b16 %v737
      %v742 = vpack.c.b16 %v741, %v740
      %743 = vrot.lane.b32.xlu0 %v389, 53
      %v744 = vpop.permute.xlu0 %743
      %745 = vrot.lane.b32.xlu0 %v390, 53
      %v746 = vpop.permute.xlu0 %745
      %747 = vrot.lane.b32.xlu0 %v391, 53
      %v748 = vpop.permute.xlu0 %747
      %749 = vrot.lane.b32.xlu0 %v392, 53
      %v750 = vpop.permute.xlu0 %749
      %vm751 = vcmask 433152
      %v752 = vsel %vm751, %v744, %v746
      %v753 = vsel %vm751, %v748, %v750
      %v757 = vsel %vm406, %v742, 0
      %759 = vmatpush.bf16.msra.mxu0 0
      %760 = vmatpush.bf16.msra.mxu0 0
      %761 = vmatpush.bf16.msra.mxu0 0
      %762 = vmatpush.bf16.msra.mxu0 0
      %763 = vmatpush.bf16.msra.mxu0 0
      %764 = vmatpush.bf16.msra.mxu0 0
      %765 = vmatpush.bf16.msra.mxu0 %v753
      %766 = vmatpush.bf16.msra.mxu0 %v752
      %767 = vmatmul.bf16.gmra.mxu0 %v757
      %v768 = vpop.f32.mrf.mxu0
      %v769 = vadd.f32 0.0, %v768
      %v770 = vpop.f32.mrf.mxu0
      %v771 = vadd.f32 0.0, %v770
      %772 = vdwg.mxu0
      %v773 = vadd.f32 %v733, %v769
      %v774 = vadd.f32 %v734, %v771
      %v775 = vld [vmem:[%s4] sm:$0xff]
      %v776 = vld [vmem:[%s4 + $0x8] sm:$0xff]
      %778 = vset.pattern.permute.xlu0 0
      %779 = vperm.xlu0 %778, %v775
      %v780 = vpop.permute.xlu0 %779
      %783 = vset.pattern.permute.xlu0 0
      %784 = vperm.xlu0 %783, %v776
      %v785 = vpop.permute.xlu0 %784
      %v787 = vadd.f32 %v773, %v780
      %v788 = vadd.f32 %v774, %v785
      %v789 = vmax.f32 %v787, 0.0
      %v790 = vmax.f32 %v788, 0.0
      %v791 = vld [vmem:[%s5] sm:$0xf]
      %v792 = vld [vmem:[%s5 + $0x4] sm:$0xf]
      %s793 = scalar_lea.vmem %s5, 8
      %v794 = vld [vmem:[%s793] sm:$0xf]
      %v795 = vld [vmem:[%s793 + $0x4] sm:$0xf]
      %v798 = vunpack.c.l.b16 %v794
      %v799 = vunpack.c.l.b16 %v795
      %v800 = vpack.c.b16 %v799, %v798
      %801 = vrot.lane.b32.xlu0 %v483, 125
      %v802 = vpop.permute.xlu0 %801
      %803 = vrot.lane.b32.xlu0 %v484, 125
      %v804 = vpop.permute.xlu0 %803
      %v808 = vsel %vm406, %v800, 0
      %810 = vmatpush.bf16.msra.mxu0 0
      %811 = vmatpush.bf16.msra.mxu0 0
      %812 = vmatpush.bf16.msra.mxu0 0
      %813 = vmatpush.bf16.msra.mxu0 0
      %814 = vmatpush.bf16.msra.mxu0 0
      %815 = vmatpush.bf16.msra.mxu0 0
      %816 = vmatpush.bf16.msra.mxu0 %v804
      %817 = vmatpush.bf16.msra.mxu0 %v802
      %818 = vmatmul.bf16.gmra.mxu0 %v808
      %v819 = vpop.f32.mrf.mxu0
      %v820 = vadd.f32 0.0, %v819
      %v821 = vpop.f32.mrf.mxu0
      %v822 = vadd.f32 0.0, %v821
      %823 = vdwg.mxu0
      %v826 = vunpack.c.l.b16 %v791
      %v827 = vunpack.c.l.b16 %v792
      %v828 = vpack.c.b16 %v827, %v826
      %v832 = vsel %vm406, %v828, 0
      %834 = vmatpush.bf16.msra.mxu0 0
      %835 = vmatpush.bf16.msra.mxu0 0
      %836 = vmatpush.bf16.msra.mxu0 0
      %837 = vmatpush.bf16.msra.mxu0 0
      %838 = vmatpush.bf16.msra.mxu0 0
      %839 = vmatpush.bf16.msra.mxu0 0
      %840 = vmatpush.bf16.msra.mxu0 %v484
      %841 = vmatpush.bf16.msra.mxu0 %v483
      %842 = vmatmul.bf16.gmra.mxu0 %v832
      %v843 = vpop.f32.mrf.mxu0
      %v844 = vadd.f32 %v820, %v843
      %v845 = vpop.f32.mrf.mxu0
      %v846 = vadd.f32 %v822, %v845
      %847 = vdwg.mxu0
      %s848 = scalar_lea.vmem %s5, 16
      %v849 = vld [vmem:[%s848] sm:$0xf]
      %v850 = vld [vmem:[%s848 + $0x4] sm:$0xf]
      %v853 = vunpack.c.l.b16 %v849
      %v854 = vunpack.c.l.b16 %v850
      %v855 = vpack.c.b16 %v854, %v853
      %856 = vrot.lane.b32.xlu0 %v483, 122
      %v857 = vpop.permute.xlu0 %856
      %858 = vrot.lane.b32.xlu0 %v484, 122
      %v859 = vpop.permute.xlu0 %858
      %v863 = vsel %vm406, %v855, 0
      %865 = vmatpush.bf16.msra.mxu0 0
      %866 = vmatpush.bf16.msra.mxu0 0
      %867 = vmatpush.bf16.msra.mxu0 0
      %868 = vmatpush.bf16.msra.mxu0 0
      %869 = vmatpush.bf16.msra.mxu0 0
      %870 = vmatpush.bf16.msra.mxu0 0
      %871 = vmatpush.bf16.msra.mxu0 %v859
      %872 = vmatpush.bf16.msra.mxu0 %v857
      %873 = vmatmul.bf16.gmra.mxu0 %v863
      %v874 = vpop.f32.mrf.mxu0
      %v875 = vadd.f32 0.0, %v874
      %v876 = vpop.f32.mrf.mxu0
      %v877 = vadd.f32 0.0, %v876
      %878 = vdwg.mxu0
      %v879 = vadd.f32 %v844, %v875
      %v880 = vadd.f32 %v846, %v877
      %s881 = scalar_lea.vmem %s5, 24
      %v882 = vld [vmem:[%s881] sm:$0xf]
      %v883 = vld [vmem:[%s881 + $0x4] sm:$0xf]
      %v886 = vunpack.c.l.b16 %v882
      %v887 = vunpack.c.l.b16 %v883
      %v888 = vpack.c.b16 %v887, %v886
      %889 = vrot.lane.b32.xlu0 %v389, 86
      %v890 = vpop.permute.xlu0 %889
      %891 = vrot.lane.b32.xlu0 %v390, 86
      %v892 = vpop.permute.xlu0 %891
      %893 = vrot.lane.b32.xlu0 %v391, 86
      %v894 = vpop.permute.xlu0 %893
      %895 = vrot.lane.b32.xlu0 %v392, 86
      %v896 = vpop.permute.xlu0 %895
      %vm897 = vcmask 703488
      %v898 = vsel %vm897, %v890, %v892
      %v899 = vsel %vm897, %v894, %v896
      %v903 = vsel %vm406, %v888, 0
      %905 = vmatpush.bf16.msra.mxu0 0
      %906 = vmatpush.bf16.msra.mxu0 0
      %907 = vmatpush.bf16.msra.mxu0 0
      %908 = vmatpush.bf16.msra.mxu0 0
      %909 = vmatpush.bf16.msra.mxu0 0
      %910 = vmatpush.bf16.msra.mxu0 0
      %911 = vmatpush.bf16.msra.mxu0 %v899
      %912 = vmatpush.bf16.msra.mxu0 %v898
      %913 = vmatmul.bf16.gmra.mxu0 %v903
      %v914 = vpop.f32.mrf.mxu0
      %v915 = vadd.f32 0.0, %v914
      %v916 = vpop.f32.mrf.mxu0
      %v917 = vadd.f32 0.0, %v916
      %918 = vdwg.mxu0
      %v919 = vadd.f32 %v879, %v915
      %v920 = vadd.f32 %v880, %v917
      %s921 = scalar_lea.vmem %s5, 32
      %v922 = vld [vmem:[%s921] sm:$0xf]
      %v923 = vld [vmem:[%s921 + $0x4] sm:$0xf]
      %v926 = vunpack.c.l.b16 %v922
      %v927 = vunpack.c.l.b16 %v923
      %v928 = vpack.c.b16 %v927, %v926
      %v930 = vsel %vm406, %v928, 0
      %932 = vmatpush.bf16.msra.mxu0 0
      %933 = vmatpush.bf16.msra.mxu0 0
      %934 = vmatpush.bf16.msra.mxu0 0
      %935 = vmatpush.bf16.msra.mxu0 0
      %936 = vmatpush.bf16.msra.mxu0 0
      %937 = vmatpush.bf16.msra.mxu0 0
      %938 = vmatpush.bf16.msra.mxu0 %v403
      %939 = vmatpush.bf16.msra.mxu0 %v402
      %940 = vmatmul.bf16.gmra.mxu0 %v930
      %v941 = vpop.f32.mrf.mxu0
      %v942 = vadd.f32 0.0, %v941
      %v943 = vpop.f32.mrf.mxu0
      %v944 = vadd.f32 0.0, %v943
      %945 = vdwg.mxu0
      %v946 = vadd.f32 %v919, %v942
      %v947 = vadd.f32 %v920, %v944
      %s948 = scalar_lea.vmem %s5, 40
      %v949 = vld [vmem:[%s948] sm:$0xf]
      %v950 = vld [vmem:[%s948 + $0x4] sm:$0xf]
      %v953 = vunpack.c.l.b16 %v949
      %v954 = vunpack.c.l.b16 %v950
      %v955 = vpack.c.b16 %v954, %v953
      %956 = vrot.lane.b32.xlu0 %v389, 80
      %v957 = vpop.permute.xlu0 %956
      %958 = vrot.lane.b32.xlu0 %v390, 80
      %v959 = vpop.permute.xlu0 %958
      %960 = vrot.lane.b32.xlu0 %v391, 80
      %v961 = vpop.permute.xlu0 %960
      %962 = vrot.lane.b32.xlu0 %v392, 80
      %v963 = vpop.permute.xlu0 %962
      %vm964 = vcmask 654336
      %v965 = vsel %vm964, %v957, %v959
      %v966 = vsel %vm964, %v961, %v963
      %v970 = vsel %vm406, %v955, 0
      %972 = vmatpush.bf16.msra.mxu0 0
      %973 = vmatpush.bf16.msra.mxu0 0
      %974 = vmatpush.bf16.msra.mxu0 0
      %975 = vmatpush.bf16.msra.mxu0 0
      %976 = vmatpush.bf16.msra.mxu0 0
      %977 = vmatpush.bf16.msra.mxu0 0
      %978 = vmatpush.bf16.msra.mxu0 %v966
      %979 = vmatpush.bf16.msra.mxu0 %v965
      %980 = vmatmul.bf16.gmra.mxu0 %v970
      %v981 = vpop.f32.mrf.mxu0
      %v982 = vadd.f32 0.0, %v981
      %v983 = vpop.f32.mrf.mxu0
      %v984 = vadd.f32 0.0, %v983
      %985 = vdwg.mxu0
      %v986 = vadd.f32 %v946, %v982
      %v987 = vadd.f32 %v947, %v984
      %s988 = scalar_lea.vmem %s5, 48
      %v989 = vld [vmem:[%s988] sm:$0xf]
      %v990 = vld [vmem:[%s988 + $0x4] sm:$0xf]
      %v993 = vunpack.c.l.b16 %v989
      %v994 = vunpack.c.l.b16 %v990
      %v995 = vpack.c.b16 %v994, %v993
      %996 = vrot.lane.b32.xlu0 %v389, 44
      %v997 = vpop.permute.xlu0 %996
      %998 = vrot.lane.b32.xlu0 %v390, 44
      %v999 = vpop.permute.xlu0 %998
      %1000 = vrot.lane.b32.xlu0 %v391, 44
      %v1001 = vpop.permute.xlu0 %1000
      %1002 = vrot.lane.b32.xlu0 %v392, 44
      %v1003 = vpop.permute.xlu0 %1002
      %vm1004 = vcmask 359424
      %v1005 = vsel %vm1004, %v997, %v999
      %v1006 = vsel %vm1004, %v1001, %v1003
      %v1010 = vsel %vm406, %v995, 0
      %1012 = vmatpush.bf16.msra.mxu0 0
      %1013 = vmatpush.bf16.msra.mxu0 0
      %1014 = vmatpush.bf16.msra.mxu0 0
      %1015 = vmatpush.bf16.msra.mxu0 0
      %1016 = vmatpush.bf16.msra.mxu0 0
      %1017 = vmatpush.bf16.msra.mxu0 0
      %1018 = vmatpush.bf16.msra.mxu0 %v1006
      %1019 = vmatpush.bf16.msra.mxu0 %v1005
      %1020 = vmatmul.bf16.gmra.mxu0 %v1010
      %v1021 = vpop.f32.mrf.mxu0
      %v1022 = vadd.f32 0.0, %v1021
      %v1023 = vpop.f32.mrf.mxu0
      %v1024 = vadd.f32 0.0, %v1023
      %1025 = vdwg.mxu0
      %v1026 = vadd.f32 %v986, %v1022
      %v1027 = vadd.f32 %v987, %v1024
      %s1028 = scalar_lea.vmem %s5, 56
      %v1029 = vld [vmem:[%s1028] sm:$0xf]
      %v1030 = vld [vmem:[%s1028 + $0x4] sm:$0xf]
      %v1033 = vunpack.c.l.b16 %v1029
      %v1034 = vunpack.c.l.b16 %v1030
      %v1035 = vpack.c.b16 %v1034, %v1033
      %1036 = vrot.lane.b32.xlu0 %v389, 41
      %v1037 = vpop.permute.xlu0 %1036
      %1038 = vrot.lane.b32.xlu0 %v390, 41
      %v1039 = vpop.permute.xlu0 %1038
      %1040 = vrot.lane.b32.xlu0 %v391, 41
      %v1041 = vpop.permute.xlu0 %1040
      %1042 = vrot.lane.b32.xlu0 %v392, 41
      %v1043 = vpop.permute.xlu0 %1042
      %vm1044 = vcmask 334848
      %v1045 = vsel %vm1044, %v1037, %v1039
      %v1046 = vsel %vm1044, %v1041, %v1043
      %v1050 = vsel %vm406, %v1035, 0
      %1052 = vmatpush.bf16.msra.mxu0 0
      %1053 = vmatpush.bf16.msra.mxu0 0
      %1054 = vmatpush.bf16.msra.mxu0 0
      %1055 = vmatpush.bf16.msra.mxu0 0
      %1056 = vmatpush.bf16.msra.mxu0 0
      %1057 = vmatpush.bf16.msra.mxu0 0
      %1058 = vmatpush.bf16.msra.mxu0 %v1046
      %1059 = vmatpush.bf16.msra.mxu0 %v1045
      %1060 = vmatmul.bf16.gmra.mxu0 %v1050
      %v1061 = vpop.f32.mrf.mxu0
      %v1062 = vadd.f32 0.0, %v1061
      %v1063 = vpop.f32.mrf.mxu0
      %v1064 = vadd.f32 0.0, %v1063
      %1065 = vdwg.mxu0
      %v1066 = vadd.f32 %v1026, %v1062
      %v1067 = vadd.f32 %v1027, %v1064
      %s1068 = scalar_lea.vmem %s5, 64
      %v1069 = vld [vmem:[%s1068] sm:$0xf]
      %v1070 = vld [vmem:[%s1068 + $0x4] sm:$0xf]
      %v1073 = vunpack.c.l.b16 %v1069
      %v1074 = vunpack.c.l.b16 %v1070
      %v1075 = vpack.c.b16 %v1074, %v1073
      %1076 = vrot.lane.b32.xlu0 %v389, 38
      %v1077 = vpop.permute.xlu0 %1076
      %1078 = vrot.lane.b32.xlu0 %v390, 38
      %v1079 = vpop.permute.xlu0 %1078
      %1080 = vrot.lane.b32.xlu0 %v391, 38
      %v1081 = vpop.permute.xlu0 %1080
      %1082 = vrot.lane.b32.xlu0 %v392, 38
      %v1083 = vpop.permute.xlu0 %1082
      %vm1084 = vcmask 310272
      %v1085 = vsel %vm1084, %v1077, %v1079
      %v1086 = vsel %vm1084, %v1081, %v1083
      %v1090 = vsel %vm406, %v1075, 0
      %1092 = vmatpush.bf16.msra.mxu0 0
      %1093 = vmatpush.bf16.msra.mxu0 0
      %1094 = vmatpush.bf16.msra.mxu0 0
      %1095 = vmatpush.bf16.msra.mxu0 0
      %1096 = vmatpush.bf16.msra.mxu0 0
      %1097 = vmatpush.bf16.msra.mxu0 0
      %1098 = vmatpush.bf16.msra.mxu0 %v1086
      %1099 = vmatpush.bf16.msra.mxu0 %v1085
      %1100 = vmatmul.bf16.gmra.mxu0 %v1090
      %v1101 = vpop.f32.mrf.mxu0
      %v1102 = vadd.f32 0.0, %v1101
      %v1103 = vpop.f32.mrf.mxu0
      %v1104 = vadd.f32 0.0, %v1103
      %1105 = vdwg.mxu0
      %v1106 = vadd.f32 %v1066, %v1102
      %v1107 = vadd.f32 %v1067, %v1104
      %v1108 = vld [vmem:[%s6] sm:$0xff]
      %v1109 = vld [vmem:[%s6 + $0x8] sm:$0xff]
      %1111 = vset.pattern.permute.xlu0 0
      %1112 = vperm.xlu0 %1111, %v1108
      %v1113 = vpop.permute.xlu0 %1112
      %1116 = vset.pattern.permute.xlu0 0
      %1117 = vperm.xlu0 %1116, %v1109
      %v1118 = vpop.permute.xlu0 %1117
      %v1120 = vadd.f32 %v1106, %v1113
      %v1121 = vadd.f32 %v1107, %v1118
      %v1122 = vmax.f32 %v1120, 0.0
      %v1123 = vmax.f32 %v1121, 0.0
      %v1124 = vld [vmem:[%s7] sm:$0xf]
      %v1125 = vld [vmem:[%s7 + $0x4] sm:$0xf]
      %v1126 = vpack.c.bf16 %v425, %v424
      %s1127 = scalar_lea.vmem %s7, 8
      %v1128 = vld [vmem:[%s1127] sm:$0xf]
      %v1129 = vld [vmem:[%s1127 + $0x4] sm:$0xf]
      %v1130 = vpack.c.bf16 %v790, %v789
      %v1133 = vunpack.c.l.b16 %v1128
      %v1134 = vunpack.c.l.b16 %v1129
      %v1135 = vpack.c.b16 %v1134, %v1133
      %vm1136 = vcmask 130048
      %v1138 = vsel %vm1136, %v1135, 0
      %1140 = vmatpush.bf16.msra.mxu0 0
      %1141 = vmatpush.bf16.msra.mxu0 0
      %1142 = vmatpush.bf16.msra.mxu0 0
      %1143 = vmatpush.bf16.msra.mxu0 0
      %1144 = vmatpush.bf16.msra.mxu0 0
      %1145 = vmatpush.bf16.msra.mxu0 0
      %1146 = vmatpush.bf16.msra.mxu0 0
      %1147 = vmatpush.bf16.msra.mxu0 %v1130
      %1148 = vmatmul.bf16.gmra.mxu0 %v1138
      %v1149 = vpop.f32.mrf.mxu0
      %v1150 = vadd.f32 0.0, %v1149
      %v1151 = vpop.f32.mrf.mxu0
      %v1152 = vadd.f32 0.0, %v1151
      %1153 = vdwg.mxu0
      %v1156 = vunpack.c.l.b16 %v1124
      %v1157 = vunpack.c.l.b16 %v1125
      %v1158 = vpack.c.b16 %v1157, %v1156
      %v1160 = vsel %vm1136, %v1158, 0
      %1162 = vmatpush.bf16.msra.mxu0 0
      %1163 = vmatpush.bf16.msra.mxu0 0
      %1164 = vmatpush.bf16.msra.mxu0 0
      %1165 = vmatpush.bf16.msra.mxu0 0
      %1166 = vmatpush.bf16.msra.mxu0 0
      %1167 = vmatpush.bf16.msra.mxu0 0
      %1168 = vmatpush.bf16.msra.mxu0 0
      %1169 = vmatpush.bf16.msra.mxu0 %v1126
      %1170 = vmatmul.bf16.gmra.mxu0 %v1160
      %v1171 = vpop.f32.mrf.mxu0
      %v1172 = vadd.f32 %v1150, %v1171
      %v1173 = vpop.f32.mrf.mxu0
      %v1174 = vadd.f32 %v1152, %v1173
      %1175 = vdwg.mxu0
      %s1176 = scalar_lea.vmem %s7, 16
      %v1177 = vld [vmem:[%s1176] sm:$0xf]
      %v1178 = vld [vmem:[%s1176 + $0x4] sm:$0xf]
      %v1179 = vpack.c.bf16 %v1123, %v1122
      %v1182 = vunpack.c.l.b16 %v1177
      %v1183 = vunpack.c.l.b16 %v1178
      %v1184 = vpack.c.b16 %v1183, %v1182
      %v1186 = vsel %vm1136, %v1184, 0
      %1188 = vmatpush.bf16.msra.mxu0 0
      %1189 = vmatpush.bf16.msra.mxu0 0
      %1190 = vmatpush.bf16.msra.mxu0 0
      %1191 = vmatpush.bf16.msra.mxu0 0
      %1192 = vmatpush.bf16.msra.mxu0 0
      %1193 = vmatpush.bf16.msra.mxu0 0
      %1194 = vmatpush.bf16.msra.mxu0 0
      %1195 = vmatpush.bf16.msra.mxu0 %v1179
      %1196 = vmatmul.bf16.gmra.mxu0 %v1186
      %v1197 = vpop.f32.mrf.mxu0
      %v1198 = vadd.f32 0.0, %v1197
      %v1199 = vpop.f32.mrf.mxu0
      %v1200 = vadd.f32 0.0, %v1199
      %1201 = vdwg.mxu0
      %v1202 = vadd.f32 %v1172, %v1198
      %v1203 = vadd.f32 %v1174, %v1200
      %v1204 = vld [vmem:[%s347] sm:$0xff]
      %v1205 = vld [vmem:[%s347 + $0x8] sm:$0xff]
      %1207 = vset.pattern.permute.xlu0 0
      %1208 = vperm.xlu0 %1207, %v1204
      %v1209 = vpop.permute.xlu0 %1208
      %1212 = vset.pattern.permute.xlu0 0
      %1213 = vperm.xlu0 %1212, %v1205
      %v1214 = vpop.permute.xlu0 %1213
      %v1216 = vadd.f32 %v1202, %v1209
      %v1217 = vadd.f32 %v1203, %v1214
      %v1218 = vmax.f32 %v1216, 0.0
      %v1219 = vmax.f32 %v1217, 0.0
      %v1220 = vpack.c.bf16 %v1218, %v1218
      %v1221 = vpack.c.bf16 %v1219, %v1219
      %vm1222 = vcmask 912384
      %1223 = vst.msk [vmem:[%s352] sm:$0xf] %vm1222, %v1220
      %1224 = vst.msk [vmem:[%s352 + $0x4] sm:$0xf] %vm1222, %v1221
      %p1225 = scmp.lt.s32.totalorder %s20, 1
      %s1226 = scalar_select %p1225, %s20, 1
      %s1227 = smul.addr %s1226, 2
      %s1228 = smul.addr %s1227, 4
      %s1229 = scalar_lea.vmem %s9, %s1228
      // Predicated region
      $region57: #{_lambda_.5} parent=55 // pred_check
        %p1230 = pneg %p237
      $region58: #{_lambda_.5} parent=55 // pred_check_branch
        %1232 = sbr.rel (%p1230) target = $region60
      $region59: #{_lambda_.5} parent=55 // pred_region
        _
      $region60: #{_lambda_.5} parent=55 // pred_fallthru
        _
    $region56: #{_lambda_.5} parent=5 // pred_fallthru
      _
    %p1233 = scmp.le.s32.totalorder 2, %s15
    // Predicated region
    $region61: #{_lambda_.5} parent=5 // pred_check
      %p1234 = pneg %p1233
    $region62: #{_lambda_.5} parent=5 // pred_check_branch
      %1236 = sbr.rel (%p1234) target = $region64
    $region63: #{_lambda_.5} parent=5 // pred_region
      %s1237 = ssub.s32 %s15, 2
      // Predicated region
      $region65: #{_lambda_.5} parent=63 // pred_check
        %p1238 = pneg %p243
      $region66: #{_lambda_.5} parent=63 // pred_check_branch
        %1240 = sbr.rel (%p1238) target = $region68
      $region67: #{_lambda_.5} parent=63 // pred_region
        %p1241 = scmp.lt.s32.totalorder %s21, 1
        %s1242 = scalar_select %p1241, %s21, 1
        %s1243 = smul.addr %s1242, 2
        %s1244 = smul.addr %s1243, 4
        %s1245 = scalar_lea.vmem %s9, %s1244
      $region68: #{_lambda_.5} parent=63 // pred_fallthru
        _
    $region64: #{_lambda_.5} parent=5 // pred_fallthru
      _
  $region6: #{_lambda_.5} parent=0 // loop_footer
    %s19 = sadd.s32 1, %s15
  $region7: #{_lambda_.5} parent=0 // loop_footer_branch
    %14 = sbr.rel target = $region3
  $region8: #{_lambda_.5} parent=0 // loop_exit
    _

// kernel: _lambda_.8
$region0: #{_lambda_.8}
  #allocation0 [shape = 'u32[]', space=smem, size = 0x4, offset = 0x4, fixed_abs, tag = 'smem constant byte address 0x4 - core index']
  #allocation1 [shape = 'u32[72,128]{1,0:T(1,128)}', space=vmem, size = 0x9000, scoped, tag = 'internal scratch']
  %s0 = inlined_call_operand.vmem [shape: bf16[2,8,256], index: 0, kind: input, shape index: {}]
  %s1 = inlined_call_operand.vmem [shape: bf16[32,8], index: 1, kind: input, shape index: {}]
  %s2 = inlined_call_operand.vmem [shape: f32[32,1], index: 2, kind: input, shape index: {}]
  %s3 = inlined_call_operand.vmem [shape: bf16[2,32,256], index: 3, kind: output, shape index: {}]
  %s4 = sld [smem:[#allocation0]]
  $region45: #{_lambda_.8} parent=0
    _
  %s6 = ssub.s32 1, %s4
  %s7 = scalar_select 0, %s6, %s4
  loop: start=0, step=1, limit=4
  $region2: #{_lambda_.8} parent=0 // loop_pre_header
    _
  $region3: #{_lambda_.8} parent=0 // loop_header
    %s9 = sphi 0, %s13
    %p10 = scmp.ge.s32.totalorder %s9, 4
    %s19 = sphi 0, %s21
    %s22 = sphi 0, %s19
    %s23 = sphi 0, %s22
    %s39 = sphi 0, %s23
    %s43 = sphi 0, %s43
    %s45 = sphi 0, %s43
    %s46 = sphi 0, %s45
    %s60 = sphi 0, %s46
    %s64 = sphi 0, %s64
    %s66 = sphi 0, %s64
    %s67 = sphi 0, %s66
    %s81 = sphi 0, %s67
    %s87 = sphi 0, %s89
    %s90 = sphi 0, %s87
    %s91 = sphi 0, %s90
    %s107 = sphi 0, %s91
  $region4: #{_lambda_.8} parent=0 // loop_header_branch
    %12 = sbr.rel (%p10) target = $region8
  $region5: #{_lambda_.8} parent=0 // loop_body
    %s14 = ssub.s32 %s9, 1
    %s15 = ssub.s32 %s9, 2
    %s16 = sadd.s32 %s9, 1
    %s17 = ssub.s32 %s9, %s16
    %p18 = scmp.eq.s32.totalorder %s17, 0
    %s20 = sadd.s32 %s19, 1
    %s21 = scalar_select %p18, %s19, %s20
    %p24 = pneg %p18
    %p25 = scmp.eq.s32.totalorder %s9, 1
    %p26 = por %p24, %p25
    %p27 = scmp.ne.s32.totalorder %s19, %s22
    %p28 = scmp.eq.s32.totalorder %s9, 0
    %p29 = por %p27, %p28
    %p30 = scmp.ne.s32.totalorder %s19, %s22
    %p31 = scmp.eq.s32.totalorder %s14, 1
    %p32 = por %p30, %p31
    %p33 = scmp.ne.s32.totalorder %s22, %s23
    %p34 = scmp.eq.s32.totalorder %s14, 0
    %p35 = por %p33, %p34
    %p36 = scmp.ne.s32.totalorder %s22, %s23
    %p37 = scmp.eq.s32.totalorder %s15, 1
    %p38 = por %p36, %p37
    %p40 = scmp.ne.s32.totalorder %s23, %s39
    %p41 = scmp.eq.s32.totalorder %s15, 0
    %p42 = por %p40, %p41
    %s44 = sadd.s32 %s43, 1
    %p47 = scmp.eq.s32.totalorder %s9, 1
    %p48 = scmp.ne.s32.totalorder %s43, %s45
    %p49 = scmp.eq.s32.totalorder %s9, 0
    %p50 = por %p48, %p49
    %p51 = scmp.ne.s32.totalorder %s43, %s45
    %p52 = scmp.eq.s32.totalorder %s14, 1
    %p53 = por %p51, %p52
    %p54 = scmp.ne.s32.totalorder %s45, %s46
    %p55 = scmp.eq.s32.totalorder %s14, 0
    %p56 = por %p54, %p55
    %p57 = scmp.ne.s32.totalorder %s45, %s46
    %p58 = scmp.eq.s32.totalorder %s15, 1
    %p59 = por %p57, %p58
    %p61 = scmp.ne.s32.totalorder %s46, %s60
    %p62 = scmp.eq.s32.totalorder %s15, 0
    %p63 = por %p61, %p62
    %s65 = sadd.s32 %s64, 1
    %p68 = scmp.eq.s32.totalorder %s9, 1
    %p69 = scmp.ne.s32.totalorder %s64, %s66
    %p70 = scmp.eq.s32.totalorder %s9, 0
    %p71 = por %p69, %p70
    %p72 = scmp.ne.s32.totalorder %s64, %s66
    %p73 = scmp.eq.s32.totalorder %s14, 1
    %p74 = por %p72, %p73
    %p75 = scmp.ne.s32.totalorder %s66, %s67
    %p76 = scmp.eq.s32.totalorder %s14, 0
    %p77 = por %p75, %p76
    %p78 = scmp.ne.s32.totalorder %s66, %s67
    %p79 = scmp.eq.s32.totalorder %s15, 1
    %p80 = por %p78, %p79
    %p82 = scmp.ne.s32.totalorder %s67, %s81
    %p83 = scmp.eq.s32.totalorder %s15, 0
    %p84 = por %p82, %p83
    %s85 = ssub.s32 %s9, %s16
    %p86 = scmp.eq.s32.totalorder %s85, 0
    %s88 = sadd.s32 %s87, 1
    %s89 = scalar_select %p86, %s87, %s88
    %p92 = pneg %p86
    %p93 = scmp.eq.s32.totalorder %s9, 1
    %p94 = por %p92, %p93
    %p95 = scmp.ne.s32.totalorder %s87, %s90
    %p96 = scmp.eq.s32.totalorder %s9, 0
    %p97 = por %p95, %p96
    %p98 = scmp.ne.s32.totalorder %s87, %s90
    %p99 = scmp.eq.s32.totalorder %s14, 1
    %p100 = por %p98, %p99
    %p101 = scmp.ne.s32.totalorder %s90, %s91
    %p102 = scmp.eq.s32.totalorder %s14, 0
    %p103 = por %p101, %p102
    %p104 = scmp.ne.s32.totalorder %s90, %s91
    %p105 = scmp.eq.s32.totalorder %s15, 1
    %p106 = por %p104, %p105
    %p108 = scmp.ne.s32.totalorder %s91, %s107
    %p109 = scmp.eq.s32.totalorder %s15, 0
    %p110 = por %p108, %p109
    %p111 = scmp.le.s32.totalorder 1, %s9
    %p112 = scmp.lt.s32.totalorder %s9, 3
    %p113 = pnand %p111, %p112
    %p114 = pneg %p113
    // Predicated region
    $region9: #{_lambda_.8} parent=5 // pred_check
      _
    $region10: #{_lambda_.8} parent=5 // pred_check_branch
      %116 = sbr.rel (%p113) target = $region12
    $region11: #{_lambda_.8} parent=5 // pred_region
      %s117 = ssub.s32 %s9, 1
      // Predicated region
      $region13: #{_lambda_.8} parent=11 // pred_check
        %p118 = pneg %p56
      $region14: #{_lambda_.8} parent=11 // pred_check_branch
        %120 = sbr.rel (%p118) target = $region16
      $region15: #{_lambda_.8} parent=11 // pred_region
        _
      $region16: #{_lambda_.8} parent=11 // pred_fallthru
        _
      // Predicated region
      $region17: #{_lambda_.8} parent=11 // pred_check
        %p121 = pneg %p77
      $region18: #{_lambda_.8} parent=11 // pred_check_branch
        %123 = sbr.rel (%p121) target = $region20
      $region19: #{_lambda_.8} parent=11 // pred_region
        _
      $region20: #{_lambda_.8} parent=11 // pred_fallthru
        _
    $region12: #{_lambda_.8} parent=5 // pred_fallthru
      _
    %p124 = scmp.lt.s32.totalorder %s9, 2
    // Predicated region
    $region21: #{_lambda_.8} parent=5 // pred_check
      %p125 = pneg %p124
    $region22: #{_lambda_.8} parent=5 // pred_check_branch
      %127 = sbr.rel (%p125) target = $region24
    $region23: #{_lambda_.8} parent=5 // pred_region
      // Predicated region
      $region25: #{_lambda_.8} parent=23 // pred_check
        %p128 = pneg %p29
      $region26: #{_lambda_.8} parent=23 // pred_check_branch
        %130 = sbr.rel (%p128) target = $region28
      $region27: #{_lambda_.8} parent=23 // pred_region
        %p131 = scmp.lt.s32.totalorder %s9, 1
        %s132 = scalar_select %p131, %s9, 1
        %s133 = smul.addr %s132, 2
        %s134 = smul.addr %s133, 4
        %s135 = scalar_lea.vmem %s0, %s134
      $region28: #{_lambda_.8} parent=23 // pred_fallthru
        _
    $region24: #{_lambda_.8} parent=5 // pred_fallthru
      _
    %p136 = scmp.le.s32.totalorder 1, %s9
    %p137 = scmp.lt.s32.totalorder %s9, 3
    %p138 = pnand %p136, %p137
    %p139 = pneg %p138
    // Predicated region
    $region29: #{_lambda_.8} parent=5 // pred_check
      _
    $region30: #{_lambda_.8} parent=5 // pred_check_branch
      %141 = sbr.rel (%p138) target = $region32
    $region31: #{_lambda_.8} parent=5 // pred_region
      %s142 = ssub.s32 %s9, 1
      %p143 = scmp.lt.s32.totalorder %s14, 1
      %s144 = scalar_select %p143, %s14, 1
      %s145 = smul.addr %s144, 2
      %s146 = smul.addr %s145, 4
      %s147 = scalar_lea.vmem %s0, %s146
      %p148 = pneg %p35
      %p149 = pneg %p32
      %p150 = pneg %p56
      %p151 = pneg %p53
      %p152 = pneg %p77
      %p153 = pneg %p74
      %p154 = pneg %p103
      %p155 = pneg %p100
      %p156 = scmp.lt.s32.totalorder %s14, 1
      %s157 = scalar_select %p156, %s14, 1
      %s158 = smul.addr %s157, 8
      %s159 = smul.addr %s158, 4
      %s160 = scalar_lea.vmem %s3, %s159
      %p161 = scmp.lt.s32.totalorder %s14, 1
      %s162 = scalar_select %p161, %s14, 1
      %s163 = smul.addr %s162, 2
      %s164 = smul.addr %s163, 4
      %s165 = scalar_lea.vmem %s0, %s164
      %p166 = scmp.lt.s32.totalorder %s14, 1
      %s167 = scalar_select %p166, %s14, 1
      %s168 = smul.addr %s167, 8
      %s169 = smul.addr %s168, 4
      %s170 = scalar_lea.vmem %s3, %s169
      %v172 = vld [vmem:[%s1] sm:$0xf]
      %v173 = vld [vmem:[%s1 + $0x4] sm:$0xf]
      %v174 = vld [vmem:[%s1 + $0x8] sm:$0xf]
      %v175 = vld [vmem:[%s1 + $0xc] sm:$0xf]
      %v176 = vld [vmem:[%s165] sm:$0xff]
      %v177 = vld [vmem:[%s2] sm:$0xff]
      %v178 = vld [vmem:[%s2 + $0x8] sm:$0xff]
      %v179 = vld [vmem:[%s2 + $0x10] sm:$0xff]
      %v180 = vld [vmem:[%s2 + $0x18] sm:$0xff]
      %182 = vset.pattern.permute.xlu0 0
      %183 = vperm.xlu0 %182, %v177
      %v184 = vpop.permute.xlu0 %183
      %187 = vset.pattern.permute.xlu0 0
      %188 = vperm.xlu0 %187, %v178
      %v189 = vpop.permute.xlu0 %188
      %192 = vset.pattern.permute.xlu0 0
      %193 = vperm.xlu0 %192, %v179
      %v194 = vpop.permute.xlu0 %193
      %197 = vset.pattern.permute.xlu0 0
      %198 = vperm.xlu0 %197, %v180
      %v199 = vpop.permute.xlu0 %198
      %v205 = vunpack.c.l.b16 %v172
      %v206 = vunpack.c.l.b16 %v173
      %v207 = vunpack.c.l.b16 %v174
      %v208 = vunpack.c.l.b16 %v175
      %v209 = vpack.c.b16 %v206, %v205
      %v210 = vpack.c.b16 %v208, %v207
      %v212 = vunpack.c.l.b16 %v176
      %v213 = vunpack.c.h.b16 %v176
      %v214 = vpack.c.b16 %v212, %v212
      %v215 = vpack.c.b16 %v213, %v213
      %vm216 = vcmask 64512
      %v218 = vsel %vm216, %v209, 0
      %v221 = vsel %vm216, %v210, 0
      %vm223 = vcmask 1043456
      %v225 = vsel %vm223, %v214, 0
      %v228 = vsel %vm223, %v215, 0
      %230 = vmatpush.bf16.msra.mxu0 0
      %231 = vmatpush.bf16.msra.mxu0 0
      %232 = vmatpush.bf16.msra.mxu0 0
      %233 = vmatpush.bf16.msra.mxu0 0
      %234 = vmatpush.bf16.msra.mxu0 0
      %235 = vmatpush.bf16.msra.mxu0 0
      %236 = vmatpush.bf16.msra.mxu0 0
      %237 = vmatpush.bf16.msra.mxu0 %v225
      %238 = vmatmul.bf16.gmra.mxu0 %v218
      %v239 = vpop.f32.mrf.mxu0
      %v240 = vadd.f32 %v184, %v239
      %v241 = vpop.f32.mrf.mxu0
      %v242 = vadd.f32 %v189, %v241
      %243 = vmatmul.bf16.gmra.mxu0 %v221
      %v244 = vpop.f32.mrf.mxu0
      %v245 = vadd.f32 %v194, %v244
      %v246 = vpop.f32.mrf.mxu0
      %v247 = vadd.f32 %v199, %v246
      %248 = vdwg.mxu0
      %249 = vmatpush.bf16.msra.mxu0 0
      %250 = vmatpush.bf16.msra.mxu0 0
      %251 = vmatpush.bf16.msra.mxu0 0
      %252 = vmatpush.bf16.msra.mxu0 0
      %253 = vmatpush.bf16.msra.mxu0 0
      %254 = vmatpush.bf16.msra.mxu0 0
      %255 = vmatpush.bf16.msra.mxu0 0
      %256 = vmatpush.bf16.msra.mxu0 %v228
      %257 = vmatmul.bf16.gmra.mxu0 %v218
      %v258 = vpop.f32.mrf.mxu0
      %v259 = vadd.f32 %v184, %v258
      %v260 = vpop.f32.mrf.mxu0
      %v261 = vadd.f32 %v189, %v260
      %262 = vmatmul.bf16.gmra.mxu0 %v221
      %v263 = vpop.f32.mrf.mxu0
      %v264 = vadd.f32 %v194, %v263
      %v265 = vpop.f32.mrf.mxu0
      %v266 = vadd.f32 %v199, %v265
      %267 = vdwg.mxu0
      %v268 = vpack.c.bf16 %v259, %v240
      %v269 = vpack.c.bf16 %v261, %v242
      %v270 = vpack.c.bf16 %v264, %v245
      %v271 = vpack.c.bf16 %v266, %v247
      %272 = vst [vmem:[%s170] sm:$0xff] %v268
      %273 = vst [vmem:[%s170 + $0x8] sm:$0xff] %v269
      %274 = vst [vmem:[%s170 + $0x10] sm:$0xff] %v270
      %275 = vst [vmem:[%s170 + $0x18] sm:$0xff] %v271
      %p276 = scmp.lt.s32.totalorder %s14, 1
      %s277 = scalar_select %p276, %s14, 1
      %s278 = smul.addr %s277, 8
      %s279 = smul.addr %s278, 4
      %s280 = scalar_lea.vmem %s3, %s279
      // Predicated region
      $region33: #{_lambda_.8} parent=31 // pred_check
        %p281 = pneg %p100
      $region34: #{_lambda_.8} parent=31 // pred_check_branch
        %283 = sbr.rel (%p281) target = $region36
      $region35: #{_lambda_.8} parent=31 // pred_region
        _
      $region36: #{_lambda_.8} parent=31 // pred_fallthru
        _
    $region32: #{_lambda_.8} parent=5 // pred_fallthru
      _
    %p284 = scmp.le.s32.totalorder 2, %s9
    // Predicated region
    $region37: #{_lambda_.8} parent=5 // pred_check
      %p285 = pneg %p284
    $region38: #{_lambda_.8} parent=5 // pred_check_branch
      %287 = sbr.rel (%p285) target = $region40
    $region39: #{_lambda_.8} parent=5 // pred_region
      %s288 = ssub.s32 %s9, 2
      // Predicated region
      $region41: #{_lambda_.8} parent=39 // pred_check
        %p289 = pneg %p106
      $region42: #{_lambda_.8} parent=39 // pred_check_branch
        %291 = sbr.rel (%p289) target = $region44
      $region43: #{_lambda_.8} parent=39 // pred_region
        %p292 = scmp.lt.s32.totalorder %s15, 1
        %s293 = scalar_select %p292, %s15, 1
        %s294 = smul.addr %s293, 8
        %s295 = smul.addr %s294, 4
        %s296 = scalar_lea.vmem %s3, %s295
      $region44: #{_lambda_.8} parent=39 // pred_fallthru
        _
    $region40: #{_lambda_.8} parent=5 // pred_fallthru
      _
  $region6: #{_lambda_.8} parent=0 // loop_footer
    %s13 = sadd.s32 1, %s9
  $region7: #{_lambda_.8} parent=0 // loop_footer_branch
    %8 = sbr.rel target = $region3
  $region8: #{_lambda_.8} parent=0 // loop_exit
    _

// kernel: _lambda_.7
$region0: #{_lambda_.7}
  #allocation0 [shape = 'u32[]', space=smem, size = 0x4, offset = 0x4, fixed_abs, tag = 'smem constant byte address 0x4 - core index']
  #allocation1 [shape = 'u32[72,128]{1,0:T(1,128)}', space=vmem, size = 0x9000, scoped, tag = 'internal scratch']
  %s0 = inlined_call_operand.vmem [shape: bf16[2,16,342], index: 0, kind: input, shape index: {}]
  %s1 = inlined_call_operand.vmem [shape: bf16[2,8,342], index: 1, kind: input, shape index: {}]
  %s2 = inlined_call_operand.vmem [shape: bf16[9,8,16], index: 2, kind: input, shape index: {}]
  %s3 = inlined_call_operand.vmem [shape: bf16[9,8,8], index: 3, kind: input, shape index: {}]
  %s4 = inlined_call_operand.vmem [shape: f32[8,1], index: 4, kind: input, shape index: {}]
  %s5 = inlined_call_operand.vmem [shape: bf16[2,8,288], index: 5, kind: output, shape index: {}]
  %s6 = sld [smem:[#allocation0]]
  $region53: #{_lambda_.7} parent=0
    _
  %s8 = ssub.s32 1, %s6
  %s9 = scalar_select 0, %s8, %s6
  loop: start=0, step=1, limit=4
  $region2: #{_lambda_.7} parent=0 // loop_pre_header
    _
  $region3: #{_lambda_.7} parent=0 // loop_header
    %s11 = sphi 0, %s15
    %p12 = scmp.ge.s32.totalorder %s11, 4
    %s21 = sphi 0, %s23
    %s24 = sphi 0, %s21
    %s25 = sphi 0, %s24
    %s41 = sphi 0, %s25
    %s47 = sphi 0, %s49
    %s50 = sphi 0, %s47
    %s51 = sphi 0, %s50
    %s67 = sphi 0, %s51
    %s71 = sphi 0, %s71
    %s73 = sphi 0, %s71
    %s74 = sphi 0, %s73
    %s88 = sphi 0, %s74
    %s92 = sphi 0, %s92
    %s94 = sphi 0, %s92
    %s95 = sphi 0, %s94
    %s109 = sphi 0, %s95
    %s113 = sphi 0, %s113
    %s115 = sphi 0, %s113
    %s116 = sphi 0, %s115
    %s130 = sphi 0, %s116
    %s136 = sphi 0, %s138
    %s139 = sphi 0, %s136
    %s140 = sphi 0, %s139
    %s156 = sphi 0, %s140
  $region4: #{_lambda_.7} parent=0 // loop_header_branch
    %14 = sbr.rel (%p12) target = $region8
  $region5: #{_lambda_.7} parent=0 // loop_body
    %s16 = ssub.s32 %s11, 1
    %s17 = ssub.s32 %s11, 2
    %s18 = sadd.s32 %s11, 1
    %s19 = ssub.s32 %s11, %s18
    %p20 = scmp.eq.s32.totalorder %s19, 0
    %s22 = sadd.s32 %s21, 1
    %s23 = scalar_select %p20, %s21, %s22
    %p26 = pneg %p20
    %p27 = scmp.eq.s32.totalorder %s11, 1
    %p28 = por %p26, %p27
    %p29 = scmp.ne.s32.totalorder %s21, %s24
    %p30 = scmp.eq.s32.totalorder %s11, 0
    %p31 = por %p29, %p30
    %p32 = scmp.ne.s32.totalorder %s21, %s24
    %p33 = scmp.eq.s32.totalorder %s16, 1
    %p34 = por %p32, %p33
    %p35 = scmp.ne.s32.totalorder %s24, %s25
    %p36 = scmp.eq.s32.totalorder %s16, 0
    %p37 = por %p35, %p36
    %p38 = scmp.ne.s32.totalorder %s24, %s25
    %p39 = scmp.eq.s32.totalorder %s17, 1
    %p40 = por %p38, %p39
    %p42 = scmp.ne.s32.totalorder %s25, %s41
    %p43 = scmp.eq.s32.totalorder %s17, 0
    %p44 = por %p42, %p43
    %s45 = ssub.s32 %s11, %s18
    %p46 = scmp.eq.s32.totalorder %s45, 0
    %s48 = sadd.s32 %s47, 1
    %s49 = scalar_select %p46, %s47, %s48
    %p52 = pneg %p46
    %p53 = scmp.eq.s32.totalorder %s11, 1
    %p54 = por %p52, %p53
    %p55 = scmp.ne.s32.totalorder %s47, %s50
    %p56 = scmp.eq.s32.totalorder %s11, 0
    %p57 = por %p55, %p56
    %p58 = scmp.ne.s32.totalorder %s47, %s50
    %p59 = scmp.eq.s32.totalorder %s16, 1
    %p60 = por %p58, %p59
    %p61 = scmp.ne.s32.totalorder %s50, %s51
    %p62 = scmp.eq.s32.totalorder %s16, 0
    %p63 = por %p61, %p62
    %p64 = scmp.ne.s32.totalorder %s50, %s51
    %p65 = scmp.eq.s32.totalorder %s17, 1
    %p66 = por %p64, %p65
    %p68 = scmp.ne.s32.totalorder %s51, %s67
    %p69 = scmp.eq.s32.totalorder %s17, 0
    %p70 = por %p68, %p69
    %s72 = sadd.s32 %s71, 1
    %p75 = scmp.eq.s32.totalorder %s11, 1
    %p76 = scmp.ne.s32.totalorder %s71, %s73
    %p77 = scmp.eq.s32.totalorder %s11, 0
    %p78 = por %p76, %p77
    %p79 = scmp.ne.s32.totalorder %s71, %s73
    %p80 = scmp.eq.s32.totalorder %s16, 1
    %p81 = por %p79, %p80
    %p82 = scmp.ne.s32.totalorder %s73, %s74
    %p83 = scmp.eq.s32.totalorder %s16, 0
    %p84 = por %p82, %p83
    %p85 = scmp.ne.s32.totalorder %s73, %s74
    %p86 = scmp.eq.s32.totalorder %s17, 1
    %p87 = por %p85, %p86
    %p89 = scmp.ne.s32.totalorder %s74, %s88
    %p90 = scmp.eq.s32.totalorder %s17, 0
    %p91 = por %p89, %p90
    %s93 = sadd.s32 %s92, 1
    %p96 = scmp.eq.s32.totalorder %s11, 1
    %p97 = scmp.ne.s32.totalorder %s92, %s94
    %p98 = scmp.eq.s32.totalorder %s11, 0
    %p99 = por %p97, %p98
    %p100 = scmp.ne.s32.totalorder %s92, %s94
    %p101 = scmp.eq.s32.totalorder %s16, 1
    %p102 = por %p100, %p101
    %p103 = scmp.ne.s32.totalorder %s94, %s95
    %p104 = scmp.eq.s32.totalorder %s16, 0
    %p105 = por %p103, %p104
    %p106 = scmp.ne.s32.totalorder %s94, %s95
    %p107 = scmp.eq.s32.totalorder %s17, 1
    %p108 = por %p106, %p107
    %p110 = scmp.ne.s32.totalorder %s95, %s109
    %p111 = scmp.eq.s32.totalorder %s17, 0
    %p112 = por %p110, %p111
    %s114 = sadd.s32 %s113, 1
    %p117 = scmp.eq.s32.totalorder %s11, 1
    %p118 = scmp.ne.s32.totalorder %s113, %s115
    %p119 = scmp.eq.s32.totalorder %s11, 0
    %p120 = por %p118, %p119
    %p121 = scmp.ne.s32.totalorder %s113, %s115
    %p122 = scmp.eq.s32.totalorder %s16, 1
    %p123 = por %p121, %p122
    %p124 = scmp.ne.s32.totalorder %s115, %s116
    %p125 = scmp.eq.s32.totalorder %s16, 0
    %p126 = por %p124, %p125
    %p127 = scmp.ne.s32.totalorder %s115, %s116
    %p128 = scmp.eq.s32.totalorder %s17, 1
    %p129 = por %p127, %p128
    %p131 = scmp.ne.s32.totalorder %s116, %s130
    %p132 = scmp.eq.s32.totalorder %s17, 0
    %p133 = por %p131, %p132
    %s134 = ssub.s32 %s11, %s18
    %p135 = scmp.eq.s32.totalorder %s134, 0
    %s137 = sadd.s32 %s136, 1
    %s138 = scalar_select %p135, %s136, %s137
    %p141 = pneg %p135
    %p142 = scmp.eq.s32.totalorder %s11, 1
    %p143 = por %p141, %p142
    %p144 = scmp.ne.s32.totalorder %s136, %s139
    %p145 = scmp.eq.s32.totalorder %s11, 0
    %p146 = por %p144, %p145
    %p147 = scmp.ne.s32.totalorder %s136, %s139
    %p148 = scmp.eq.s32.totalorder %s16, 1
    %p149 = por %p147, %p148
    %p150 = scmp.ne.s32.totalorder %s139, %s140
    %p151 = scmp.eq.s32.totalorder %s16, 0
    %p152 = por %p150, %p151
    %p153 = scmp.ne.s32.totalorder %s139, %s140
    %p154 = scmp.eq.s32.totalorder %s17, 1
    %p155 = por %p153, %p154
    %p157 = scmp.ne.s32.totalorder %s140, %s156
    %p158 = scmp.eq.s32.totalorder %s17, 0
    %p159 = por %p157, %p158
    %p160 = scmp.le.s32.totalorder 1, %s11
    %p161 = scmp.lt.s32.totalorder %s11, 3
    %p162 = pnand %p160, %p161
    %p163 = pneg %p162
    // Predicated region
    $region9: #{_lambda_.7} parent=5 // pred_check
      _
    $region10: #{_lambda_.7} parent=5 // pred_check_branch
      %165 = sbr.rel (%p162) target = $region12
    $region11: #{_lambda_.7} parent=5 // pred_region
      %s166 = ssub.s32 %s11, 1
      // Predicated region
      $region13: #{_lambda_.7} parent=11 // pred_check
        %p167 = pneg %p84
      $region14: #{_lambda_.7} parent=11 // pred_check_branch
        %169 = sbr.rel (%p167) target = $region16
      $region15: #{_lambda_.7} parent=11 // pred_region
        _
      $region16: #{_lambda_.7} parent=11 // pred_fallthru
        _
      // Predicated region
      $region17: #{_lambda_.7} parent=11 // pred_check
        %p170 = pneg %p105
      $region18: #{_lambda_.7} parent=11 // pred_check_branch
        %172 = sbr.rel (%p170) target = $region20
      $region19: #{_lambda_.7} parent=11 // pred_region
        _
      $region20: #{_lambda_.7} parent=11 // pred_fallthru
        _
      // Predicated region
      $region21: #{_lambda_.7} parent=11 // pred_check
        %p173 = pneg %p126
      $region22: #{_lambda_.7} parent=11 // pred_check_branch
        %175 = sbr.rel (%p173) target = $region24
      $region23: #{_lambda_.7} parent=11 // pred_region
        _
      $region24: #{_lambda_.7} parent=11 // pred_fallthru
        _
    $region12: #{_lambda_.7} parent=5 // pred_fallthru
      _
    %p176 = scmp.lt.s32.totalorder %s11, 2
    // Predicated region
    $region25: #{_lambda_.7} parent=5 // pred_check
      %p177 = pneg %p176
    $region26: #{_lambda_.7} parent=5 // pred_check_branch
      %179 = sbr.rel (%p177) target = $region28
    $region27: #{_lambda_.7} parent=5 // pred_region
      // Predicated region
      $region29: #{_lambda_.7} parent=27 // pred_check
        %p180 = pneg %p31
      $region30: #{_lambda_.7} parent=27 // pred_check_branch
        %182 = sbr.rel (%p180) target = $region32
      $region31: #{_lambda_.7} parent=27 // pred_region
        %p183 = scmp.lt.s32.totalorder %s11, 1
        %s184 = scalar_select %p183, %s11, 1
        %s185 = smul.addr %s184, 6
        %s186 = smul.addr %s185, 4
        %s187 = scalar_lea.vmem %s0, %s186
      $region32: #{_lambda_.7} parent=27 // pred_fallthru
        _
      // Predicated region
      $region33: #{_lambda_.7} parent=27 // pred_check
        %p188 = pneg %p57
      $region34: #{_lambda_.7} parent=27 // pred_check_branch
        %190 = sbr.rel (%p188) target = $region36
      $region35: #{_lambda_.7} parent=27 // pred_region
        %p191 = scmp.lt.s32.totalorder %s11, 1
        %s192 = scalar_select %p191, %s11, 1
        %s193 = smul.addr %s192, 3
        %s194 = smul.addr %s193, 4
        %s195 = scalar_lea.vmem %s1, %s194
      $region36: #{_lambda_.7} parent=27 // pred_fallthru
        _
    $region28: #{_lambda_.7} parent=5 // pred_fallthru
      _
    %p196 = scmp.le.s32.totalorder 1, %s11
    %p197 = scmp.lt.s32.totalorder %s11, 3
    %p198 = pnand %p196, %p197
    %p199 = pneg %p198
    // Predicated region
    $region37: #{_lambda_.7} parent=5 // pred_check
      _
    $region38: #{_lambda_.7} parent=5 // pred_check_branch
      %201 = sbr.rel (%p198) target = $region40
    $region39: #{_lambda_.7} parent=5 // pred_region
      %s202 = ssub.s32 %s11, 1
      %p203 = scmp.lt.s32.totalorder %s16, 1
      %s204 = scalar_select %p203, %s16, 1
      %s205 = smul.addr %s204, 6
      %s206 = smul.addr %s205, 4
      %s207 = scalar_lea.vmem %s0, %s206
      %p208 = pneg %p37
      %p209 = pneg %p34
      %p210 = scmp.lt.s32.totalorder %s16, 1
      %s211 = scalar_select %p210, %s16, 1
      %s212 = smul.addr %s211, 3
      %s213 = smul.addr %s212, 4
      %s214 = scalar_lea.vmem %s1, %s213
      %p215 = pneg %p63
      %p216 = pneg %p60
      %p217 = pneg %p84
      %p218 = pneg %p81
      %p219 = pneg %p105
      %p220 = pneg %p102
      %p221 = pneg %p126
      %p222 = pneg %p123
      %p223 = pneg %p152
      %p224 = pneg %p149
      %p225 = scmp.lt.s32.totalorder %s16, 1
      %s226 = scalar_select %p225, %s16, 1
      %s227 = smul.addr %s226, 3
      %s228 = smul.addr %s227, 4
      %s229 = scalar_lea.vmem %s5, %s228
      %p230 = scmp.lt.s32.totalorder %s16, 1
      %s231 = scalar_select %p230, %s16, 1
      %s232 = smul.addr %s231, 6
      %s233 = smul.addr %s232, 4
      %s234 = scalar_lea.vmem %s0, %s233
      %p235 = scmp.lt.s32.totalorder %s16, 1
      %s236 = scalar_select %p235, %s16, 1
      %s237 = smul.addr %s236, 3
      %s238 = smul.addr %s237, 4
      %s239 = scalar_lea.vmem %s1, %s238
      %p240 = scmp.lt.s32.totalorder %s16, 1
      %s241 = scalar_select %p240, %s16, 1
      %s242 = smul.addr %s241, 3
      %s243 = smul.addr %s242, 4
      %s244 = scalar_lea.vmem %s5, %s243
      %v246 = vld [vmem:[%s2] sm:$0xf]
      %v247 = vld [vmem:[%s234] sm:$0xff]
      %v248 = vld [vmem:[%s234 + $0x8] sm:$0xf]
      %v249 = vld [vmem:[%s234 + $0xc] sm:$0xff]
      %v250 = vld [vmem:[%s234 + $0x14] sm:$0xf]
      %v251 = vld [vmem:[%s3] sm:$0xf]
      %v252 = vld [vmem:[%s239] sm:$0xff]
      %v253 = vld [vmem:[%s239 + $0x8] sm:$0xf]
      %v256 = vunpack.c.l.b16 %v252
      %v257 = vunpack.c.h.b16 %v252
      %v258 = vunpack.c.l.b16 %v253
      %v259 = vpack.c.b16 %v256, %v256
      %v260 = vpack.c.b16 %v257, %v257
      %v261 = vpack.c.b16 %v258, %v258
      %vm262 = vcmask 64512
      %v264 = vsel %vm262, %v251, 0
      %vm266 = vcmask 1043456
      %v268 = vsel %vm266, %v259, 0
      %v271 = vsel %vm266, %v260, 0
      %v274 = vsel %vm266, %v261, 0
      %276 = vmatpush.bf16.msra.mxu0 0
      %277 = vmatpush.bf16.msra.mxu0 0
      %278 = vmatpush.bf16.msra.mxu0 0
      %279 = vmatpush.bf16.msra.mxu0 0
      %280 = vmatpush.bf16.msra.mxu0 0
      %281 = vmatpush.bf16.msra.mxu0 0
      %282 = vmatpush.bf16.msra.mxu0 0
      %283 = vmatpush.bf16.msra.mxu0 %v268
      %284 = vmatmul.bf16.gmra.mxu0 %v264
      %v285 = vpop.f32.mrf.mxu0
      %v286 = vadd.f32 0.0, %v285
      %v287 = vpop.f32.mrf.mxu0
      %288 = vdwg.mxu0
      %289 = vmatpush.bf16.msra.mxu0 0
      %290 = vmatpush.bf16.msra.mxu0 0
      %291 = vmatpush.bf16.msra.mxu0 0
      %292 = vmatpush.bf16.msra.mxu0 0
      %293 = vmatpush.bf16.msra.mxu0 0
      %294 = vmatpush.bf16.msra.mxu0 0
      %295 = vmatpush.bf16.msra.mxu0 0
      %296 = vmatpush.bf16.msra.mxu0 %v271
      %297 = vmatmul.bf16.gmra.mxu0 %v264
      %v298 = vpop.f32.mrf.mxu0
      %v299 = vadd.f32 0.0, %v298
      %v300 = vpop.f32.mrf.mxu0
      %301 = vdwg.mxu0
      %302 = vmatpush.bf16.msra.mxu0 0
      %303 = vmatpush.bf16.msra.mxu0 0
      %304 = vmatpush.bf16.msra.mxu0 0
      %305 = vmatpush.bf16.msra.mxu0 0
      %306 = vmatpush.bf16.msra.mxu0 0
      %307 = vmatpush.bf16.msra.mxu0 0
      %308 = vmatpush.bf16.msra.mxu0 0
      %309 = vmatpush.bf16.msra.mxu0 %v274
      %310 = vmatmul.bf16.gmra.mxu0 %v264
      %v311 = vpop.f32.mrf.mxu0
      %v312 = vadd.f32 0.0, %v311
      %v313 = vpop.f32.mrf.mxu0
      %314 = vdwg.mxu0
      %v319 = vunpack.c.l.b16 %v247
      %v320 = vunpack.c.h.b16 %v247
      %v321 = vunpack.c.l.b16 %v248
      %v322 = vunpack.c.l.b16 %v249
      %v323 = vunpack.c.h.b16 %v249
      %v324 = vunpack.c.l.b16 %v250
      %v325 = vpack.c.b16 %v322, %v319
      %v326 = vpack.c.b16 %v323, %v320
      %v327 = vpack.c.b16 %v324, %v321
      %vm331 = vcmask 130048
      %v333 = vsel %vm331, %v246, 0
      %335 = vmatpush.bf16.msra.mxu0 0
      %336 = vmatpush.bf16.msra.mxu0 0
      %337 = vmatpush.bf16.msra.mxu0 0
      %338 = vmatpush.bf16.msra.mxu0 0
      %339 = vmatpush.bf16.msra.mxu0 0
      %340 = vmatpush.bf16.msra.mxu0 0
      %341 = vmatpush.bf16.msra.mxu0 0
      %342 = vmatpush.bf16.msra.mxu0 %v325
      %343 = vmatmul.bf16.gmra.mxu0 %v333
      %v344 = vpop.f32.mrf.mxu0
      %v345 = vadd.f32 %v286, %v344
      %v346 = vpop.f32.mrf.mxu0
      %347 = vdwg.mxu0
      %348 = vmatpush.bf16.msra.mxu0 0
      %349 = vmatpush.bf16.msra.mxu0 0
      %350 = vmatpush.bf16.msra.mxu0 0
      %351 = vmatpush.bf16.msra.mxu0 0
      %352 = vmatpush.bf16.msra.mxu0 0
      %353 = vmatpush.bf16.msra.mxu0 0
      %354 = vmatpush.bf16.msra.mxu0 0
      %355 = vmatpush.bf16.msra.mxu0 %v326
      %356 = vmatmul.bf16.gmra.mxu0 %v333
      %v357 = vpop.f32.mrf.mxu0
      %v358 = vadd.f32 %v299, %v357
      %v359 = vpop.f32.mrf.mxu0
      %360 = vdwg.mxu0
      %361 = vmatpush.bf16.msra.mxu0 0
      %362 = vmatpush.bf16.msra.mxu0 0
      %363 = vmatpush.bf16.msra.mxu0 0
      %364 = vmatpush.bf16.msra.mxu0 0
      %365 = vmatpush.bf16.msra.mxu0 0
      %366 = vmatpush.bf16.msra.mxu0 0
      %367 = vmatpush.bf16.msra.mxu0 0
      %368 = vmatpush.bf16.msra.mxu0 %v327
      %369 = vmatmul.bf16.gmra.mxu0 %v333
      %v370 = vpop.f32.mrf.mxu0
      %v371 = vadd.f32 %v312, %v370
      %v372 = vpop.f32.mrf.mxu0
      %373 = vdwg.mxu0
      %s374 = scalar_lea.vmem %s2, 4
      %v375 = vld [vmem:[%s374] sm:$0xf]
      %376 = vrot.lane.b32.xlu0 %v325, 127
      %v377 = vpop.permute.xlu0 %376
      %378 = vrot.lane.b32.xlu0 %v326, 127
      %v379 = vpop.permute.xlu0 %378
      %380 = vrot.lane.b32.xlu0 %v327, 127
      %v381 = vpop.permute.xlu0 %380
      %vm382 = vcmask 1039360
      %v383 = vsel %vm382, %v377, %v379
      %v384 = vsel %vm382, %v379, %v381
      %v389 = vsel %vm331, %v375, 0
      %391 = vmatpush.bf16.msra.mxu0 0
      %392 = vmatpush.bf16.msra.mxu0 0
      %393 = vmatpush.bf16.msra.mxu0 0
      %394 = vmatpush.bf16.msra.mxu0 0
      %395 = vmatpush.bf16.msra.mxu0 0
      %396 = vmatpush.bf16.msra.mxu0 0
      %397 = vmatpush.bf16.msra.mxu0 0
      %398 = vmatpush.bf16.msra.mxu0 %v383
      %399 = vmatmul.bf16.gmra.mxu0 %v389
      %v400 = vpop.f32.mrf.mxu0
      %v401 = vadd.f32 0.0, %v400
      %v402 = vpop.f32.mrf.mxu0
      %403 = vdwg.mxu0
      %404 = vmatpush.bf16.msra.mxu0 0
      %405 = vmatpush.bf16.msra.mxu0 0
      %406 = vmatpush.bf16.msra.mxu0 0
      %407 = vmatpush.bf16.msra.mxu0 0
      %408 = vmatpush.bf16.msra.mxu0 0
      %409 = vmatpush.bf16.msra.mxu0 0
      %410 = vmatpush.bf16.msra.mxu0 0
      %411 = vmatpush.bf16.msra.mxu0 %v384
      %412 = vmatmul.bf16.gmra.mxu0 %v389
      %v413 = vpop.f32.mrf.mxu0
      %v414 = vadd.f32 0.0, %v413
      %v415 = vpop.f32.mrf.mxu0
      %416 = vdwg.mxu0
      %417 = vmatpush.bf16.msra.mxu0 0
      %418 = vmatpush.bf16.msra.mxu0 0
      %419 = vmatpush.bf16.msra.mxu0 0
      %420 = vmatpush.bf16.msra.mxu0 0
      %421 = vmatpush.bf16.msra.mxu0 0
      %422 = vmatpush.bf16.msra.mxu0 0
      %423 = vmatpush.bf16.msra.mxu0 0
      %424 = vmatpush.bf16.msra.mxu0 %v381
      %425 = vmatmul.bf16.gmra.mxu0 %v389
      %v426 = vpop.f32.mrf.mxu0
      %v427 = vadd.f32 0.0, %v426
      %v428 = vpop.f32.mrf.mxu0
      %429 = vdwg.mxu0
      %v430 = vadd.f32 %v345, %v401
      %v431 = vadd.f32 %v358, %v414
      %v432 = vadd.f32 %v371, %v427
      %s433 = scalar_lea.vmem %s3, 4
      %v434 = vld [vmem:[%s433] sm:$0xf]
      %435 = vrot.lane.b32.xlu0 %v259, 127
      %v436 = vpop.permute.xlu0 %435
      %437 = vrot.lane.b32.xlu0 %v260, 127
      %v438 = vpop.permute.xlu0 %437
      %439 = vrot.lane.b32.xlu0 %v261, 127
      %v440 = vpop.permute.xlu0 %439
      %v441 = vsel %vm382, %v436, %v438
      %v442 = vsel %vm382, %v438, %v440
      %v444 = vsel %vm262, %v434, 0
      %v447 = vsel %vm266, %v441, 0
      %v450 = vsel %vm266, %v442, 0
      %v453 = vsel %vm266, %v440, 0
      %455 = vmatpush.bf16.msra.mxu0 0
      %456 = vmatpush.bf16.msra.mxu0 0
      %457 = vmatpush.bf16.msra.mxu0 0
      %458 = vmatpush.bf16.msra.mxu0 0
      %459 = vmatpush.bf16.msra.mxu0 0
      %460 = vmatpush.bf16.msra.mxu0 0
      %461 = vmatpush.bf16.msra.mxu0 0
      %462 = vmatpush.bf16.msra.mxu0 %v447
      %463 = vmatmul.bf16.gmra.mxu0 %v444
      %v464 = vpop.f32.mrf.mxu0
      %v465 = vadd.f32 0.0, %v464
      %v466 = vpop.f32.mrf.mxu0
      %467 = vdwg.mxu0
      %468 = vmatpush.bf16.msra.mxu0 0
      %469 = vmatpush.bf16.msra.mxu0 0
      %470 = vmatpush.bf16.msra.mxu0 0
      %471 = vmatpush.bf16.msra.mxu0 0
      %472 = vmatpush.bf16.msra.mxu0 0
      %473 = vmatpush.bf16.msra.mxu0 0
      %474 = vmatpush.bf16.msra.mxu0 0
      %475 = vmatpush.bf16.msra.mxu0 %v450
      %476 = vmatmul.bf16.gmra.mxu0 %v444
      %v477 = vpop.f32.mrf.mxu0
      %v478 = vadd.f32 0.0, %v477
      %v479 = vpop.f32.mrf.mxu0
      %480 = vdwg.mxu0
      %481 = vmatpush.bf16.msra.mxu0 0
      %482 = vmatpush.bf16.msra.mxu0 0
      %483 = vmatpush.bf16.msra.mxu0 0
      %484 = vmatpush.bf16.msra.mxu0 0
      %485 = vmatpush.bf16.msra.mxu0 0
      %486 = vmatpush.bf16.msra.mxu0 0
      %487 = vmatpush.bf16.msra.mxu0 0
      %488 = vmatpush.bf16.msra.mxu0 %v453
      %489 = vmatmul.bf16.gmra.mxu0 %v444
      %v490 = vpop.f32.mrf.mxu0
      %v491 = vadd.f32 0.0, %v490
      %v492 = vpop.f32.mrf.mxu0
      %493 = vdwg.mxu0
      %v494 = vadd.f32 %v430, %v465
      %v495 = vadd.f32 %v431, %v478
      %v496 = vadd.f32 %v432, %v491
      %s497 = scalar_lea.vmem %s2, 8
      %v498 = vld [vmem:[%s497] sm:$0xf]
      %499 = vrot.lane.b32.xlu0 %v325, 126
      %v500 = vpop.permute.xlu0 %499
      %501 = vrot.lane.b32.xlu0 %v326, 126
      %v502 = vpop.permute.xlu0 %501
      %503 = vrot.lane.b32.xlu0 %v327, 126
      %v504 = vpop.permute.xlu0 %503
      %vm505 = vcmask 1031168
      %v506 = vsel %vm505, %v500, %v502
      %v507 = vsel %vm505, %v502, %v504
      %v512 = vsel %vm331, %v498, 0
      %514 = vmatpush.bf16.msra.mxu0 0
      %515 = vmatpush.bf16.msra.mxu0 0
      %516 = vmatpush.bf16.msra.mxu0 0
      %517 = vmatpush.bf16.msra.mxu0 0
      %518 = vmatpush.bf16.msra.mxu0 0
      %519 = vmatpush.bf16.msra.mxu0 0
      %520 = vmatpush.bf16.msra.mxu0 0
      %521 = vmatpush.bf16.msra.mxu0 %v506
      %522 = vmatmul.bf16.gmra.mxu0 %v512
      %v523 = vpop.f32.mrf.mxu0
      %v524 = vadd.f32 0.0, %v523
      %v525 = vpop.f32.mrf.mxu0
      %526 = vdwg.mxu0
      %527 = vmatpush.bf16.msra.mxu0 0
      %528 = vmatpush.bf16.msra.mxu0 0
      %529 = vmatpush.bf16.msra.mxu0 0
      %530 = vmatpush.bf16.msra.mxu0 0
      %531 = vmatpush.bf16.msra.mxu0 0
      %532 = vmatpush.bf16.msra.mxu0 0
      %533 = vmatpush.bf16.msra.mxu0 0
      %534 = vmatpush.bf16.msra.mxu0 %v507
      %535 = vmatmul.bf16.gmra.mxu0 %v512
      %v536 = vpop.f32.mrf.mxu0
      %v537 = vadd.f32 0.0, %v536
      %v538 = vpop.f32.mrf.mxu0
      %539 = vdwg.mxu0
      %540 = vmatpush.bf16.msra.mxu0 0
      %541 = vmatpush.bf16.msra.mxu0 0
      %542 = vmatpush.bf16.msra.mxu0 0
      %543 = vmatpush.bf16.msra.mxu0 0
      %544 = vmatpush.bf16.msra.mxu0 0
      %545 = vmatpush.bf16.msra.mxu0 0
      %546 = vmatpush.bf16.msra.mxu0 0
      %547 = vmatpush.bf16.msra.mxu0 %v504
      %548 = vmatmul.bf16.gmra.mxu0 %v512
      %v549 = vpop.f32.mrf.mxu0
      %v550 = vadd.f32 0.0, %v549
      %v551 = vpop.f32.mrf.mxu0
      %552 = vdwg.mxu0
      %v553 = vadd.f32 %v494, %v524
      %v554 = vadd.f32 %v495, %v537
      %v555 = vadd.f32 %v496, %v550
      %s556 = scalar_lea.vmem %s3, 8
      %v557 = vld [vmem:[%s556] sm:$0xf]
      %558 = vrot.lane.b32.xlu0 %v259, 126
      %v559 = vpop.permute.xlu0 %558
      %560 = vrot.lane.b32.xlu0 %v260, 126
      %v561 = vpop.permute.xlu0 %560
      %562 = vrot.lane.b32.xlu0 %v261, 126
      %v563 = vpop.permute.xlu0 %562
      %v564 = vsel %vm505, %v559, %v561
      %v565 = vsel %vm505, %v561, %v563
      %v567 = vsel %vm262, %v557, 0
      %v570 = vsel %vm266, %v564, 0
      %v573 = vsel %vm266, %v565, 0
      %v576 = vsel %vm266, %v563, 0
      %578 = vmatpush.bf16.msra.mxu0 0
      %579 = vmatpush.bf16.msra.mxu0 0
      %580 = vmatpush.bf16.msra.mxu0 0
      %581 = vmatpush.bf16.msra.mxu0 0
      %582 = vmatpush.bf16.msra.mxu0 0
      %583 = vmatpush.bf16.msra.mxu0 0
      %584 = vmatpush.bf16.msra.mxu0 0
      %585 = vmatpush.bf16.msra.mxu0 %v570
      %586 = vmatmul.bf16.gmra.mxu0 %v567
      %v587 = vpop.f32.mrf.mxu0
      %v588 = vadd.f32 0.0, %v587
      %v589 = vpop.f32.mrf.mxu0
      %590 = vdwg.mxu0
      %591 = vmatpush.bf16.msra.mxu0 0
      %592 = vmatpush.bf16.msra.mxu0 0
      %593 = vmatpush.bf16.msra.mxu0 0
      %594 = vmatpush.bf16.msra.mxu0 0
      %595 = vmatpush.bf16.msra.mxu0 0
      %596 = vmatpush.bf16.msra.mxu0 0
      %597 = vmatpush.bf16.msra.mxu0 0
      %598 = vmatpush.bf16.msra.mxu0 %v573
      %599 = vmatmul.bf16.gmra.mxu0 %v567
      %v600 = vpop.f32.mrf.mxu0
      %v601 = vadd.f32 0.0, %v600
      %v602 = vpop.f32.mrf.mxu0
      %603 = vdwg.mxu0
      %604 = vmatpush.bf16.msra.mxu0 0
      %605 = vmatpush.bf16.msra.mxu0 0
      %606 = vmatpush.bf16.msra.mxu0 0
      %607 = vmatpush.bf16.msra.mxu0 0
      %608 = vmatpush.bf16.msra.mxu0 0
      %609 = vmatpush.bf16.msra.mxu0 0
      %610 = vmatpush.bf16.msra.mxu0 0
      %611 = vmatpush.bf16.msra.mxu0 %v576
      %612 = vmatmul.bf16.gmra.mxu0 %v567
      %v613 = vpop.f32.mrf.mxu0
      %v614 = vadd.f32 0.0, %v613
      %v615 = vpop.f32.mrf.mxu0
      %616 = vdwg.mxu0
      %v617 = vadd.f32 %v553, %v588
      %v618 = vadd.f32 %v554, %v601
      %v619 = vadd.f32 %v555, %v614
      %s620 = scalar_lea.vmem %s2, 12
      %v621 = vld [vmem:[%s620] sm:$0xf]
      %622 = vrot.lane.b32.xlu0 %v325, 110
      %v623 = vpop.permute.xlu0 %622
      %624 = vrot.lane.b32.xlu0 %v326, 110
      %v625 = vpop.permute.xlu0 %624
      %626 = vrot.lane.b32.xlu0 %v327, 110
      %v627 = vpop.permute.xlu0 %626
      %vm628 = vcmask 900096
      %v629 = vsel %vm628, %v623, %v625
      %v630 = vsel %vm628, %v625, %v627
      %v635 = vsel %vm331, %v621, 0
      %637 = vmatpush.bf16.msra.mxu0 0
      %638 = vmatpush.bf16.msra.mxu0 0
      %639 = vmatpush.bf16.msra.mxu0 0
      %640 = vmatpush.bf16.msra.mxu0 0
      %641 = vmatpush.bf16.msra.mxu0 0
      %642 = vmatpush.bf16.msra.mxu0 0
      %643 = vmatpush.bf16.msra.mxu0 0
      %644 = vmatpush.bf16.msra.mxu0 %v629
      %645 = vmatmul.bf16.gmra.mxu0 %v635
      %v646 = vpop.f32.mrf.mxu0
      %v647 = vadd.f32 0.0, %v646
      %v648 = vpop.f32.mrf.mxu0
      %649 = vdwg.mxu0
      %650 = vmatpush.bf16.msra.mxu0 0
      %651 = vmatpush.bf16.msra.mxu0 0
      %652 = vmatpush.bf16.msra.mxu0 0
      %653 = vmatpush.bf16.msra.mxu0 0
      %654 = vmatpush.bf16.msra.mxu0 0
      %655 = vmatpush.bf16.msra.mxu0 0
      %656 = vmatpush.bf16.msra.mxu0 0
      %657 = vmatpush.bf16.msra.mxu0 %v630
      %658 = vmatmul.bf16.gmra.mxu0 %v635
      %v659 = vpop.f32.mrf.mxu0
      %v660 = vadd.f32 0.0, %v659
      %v661 = vpop.f32.mrf.mxu0
      %662 = vdwg.mxu0
      %663 = vmatpush.bf16.msra.mxu0 0
      %664 = vmatpush.bf16.msra.mxu0 0
      %665 = vmatpush.bf16.msra.mxu0 0
      %666 = vmatpush.bf16.msra.mxu0 0
      %667 = vmatpush.bf16.msra.mxu0 0
      %668 = vmatpush.bf16.msra.mxu0 0
      %669 = vmatpush.bf16.msra.mxu0 0
      %670 = vmatpush.bf16.msra.mxu0 %v627
      %671 = vmatmul.bf16.gmra.mxu0 %v635
      %v672 = vpop.f32.mrf.mxu0
      %v673 = vadd.f32 0.0, %v672
      %v674 = vpop.f32.mrf.mxu0
      %675 = vdwg.mxu0
      %v676 = vadd.f32 %v617, %v647
      %v677 = vadd.f32 %v618, %v660
      %v678 = vadd.f32 %v619, %v673
      %s679 = scalar_lea.vmem %s3, 12
      %v680 = vld [vmem:[%s679] sm:$0xf]
      %681 = vrot.lane.b32.xlu0 %v259, 110
      %v682 = vpop.permute.xlu0 %681
      %683 = vrot.lane.b32.xlu0 %v260, 110
      %v684 = vpop.permute.xlu0 %683
      %685 = vrot.lane.b32.xlu0 %v261, 110
      %v686 = vpop.permute.xlu0 %685
      %v687 = vsel %vm628, %v682, %v684
      %v688 = vsel %vm628, %v684, %v686
      %v690 = vsel %vm262, %v680, 0
      %v693 = vsel %vm266, %v687, 0
      %v696 = vsel %vm266, %v688, 0
      %v699 = vsel %vm266, %v686, 0
      %701 = vmatpush.bf16.msra.mxu0 0
      %702 = vmatpush.bf16.msra.mxu0 0
      %703 = vmatpush.bf16.msra.mxu0 0
      %704 = vmatpush.bf16.msra.mxu0 0
      %705 = vmatpush.bf16.msra.mxu0 0
      %706 = vmatpush.bf16.msra.mxu0 0
      %707 = vmatpush.bf16.msra.mxu0 0
      %708 = vmatpush.bf16.msra.mxu0 %v693
      %709 = vmatmul.bf16.gmra.mxu0 %v690
      %v710 = vpop.f32.mrf.mxu0
      %v711 = vadd.f32 0.0, %v710
      %v712 = vpop.f32.mrf.mxu0
      %713 = vdwg.mxu0
      %714 = vmatpush.bf16.msra.mxu0 0
      %715 = vmatpush.bf16.msra.mxu0 0
      %716 = vmatpush.bf16.msra.mxu0 0
      %717 = vmatpush.bf16.msra.mxu0 0
      %718 = vmatpush.bf16.msra.mxu0 0
      %719 = vmatpush.bf16.msra.mxu0 0
      %720 = vmatpush.bf16.msra.mxu0 0
      %721 = vmatpush.bf16.msra.mxu0 %v696
      %722 = vmatmul.bf16.gmra.mxu0 %v690
      %v723 = vpop.f32.mrf.mxu0
      %v724 = vadd.f32 0.0, %v723
      %v725 = vpop.f32.mrf.mxu0
      %726 = vdwg.mxu0
      %727 = vmatpush.bf16.msra.mxu0 0
      %728 = vmatpush.bf16.msra.mxu0 0
      %729 = vmatpush.bf16.msra.mxu0 0
      %730 = vmatpush.bf16.msra.mxu0 0
      %731 = vmatpush.bf16.msra.mxu0 0
      %732 = vmatpush.bf16.msra.mxu0 0
      %733 = vmatpush.bf16.msra.mxu0 0
      %734 = vmatpush.bf16.msra.mxu0 %v699
      %735 = vmatmul.bf16.gmra.mxu0 %v690
      %v736 = vpop.f32.mrf.mxu0
      %v737 = vadd.f32 0.0, %v736
      %v738 = vpop.f32.mrf.mxu0
      %739 = vdwg.mxu0
      %v740 = vadd.f32 %v676, %v711
      %v741 = vadd.f32 %v677, %v724
      %v742 = vadd.f32 %v678, %v737
      %s743 = scalar_lea.vmem %s2, 16
      %v744 = vld [vmem:[%s743] sm:$0xf]
      %745 = vrot.lane.b32.xlu0 %v325, 109
      %v746 = vpop.permute.xlu0 %745
      %747 = vrot.lane.b32.xlu0 %v326, 109
      %v748 = vpop.permute.xlu0 %747
      %749 = vrot.lane.b32.xlu0 %v327, 109
      %v750 = vpop.permute.xlu0 %749
      %vm751 = vcmask 891904
      %v752 = vsel %vm751, %v746, %v748
      %v753 = vsel %vm751, %v748, %v750
      %v758 = vsel %vm331, %v744, 0
      %760 = vmatpush.bf16.msra.mxu0 0
      %761 = vmatpush.bf16.msra.mxu0 0
      %762 = vmatpush.bf16.msra.mxu0 0
      %763 = vmatpush.bf16.msra.mxu0 0
      %764 = vmatpush.bf16.msra.mxu0 0
      %765 = vmatpush.bf16.msra.mxu0 0
      %766 = vmatpush.bf16.msra.mxu0 0
      %767 = vmatpush.bf16.msra.mxu0 %v752
      %768 = vmatmul.bf16.gmra.mxu0 %v758
      %v769 = vpop.f32.mrf.mxu0
      %v770 = vadd.f32 0.0, %v769
      %v771 = vpop.f32.mrf.mxu0
      %772 = vdwg.mxu0
      %773 = vmatpush.bf16.msra.mxu0 0
      %774 = vmatpush.bf16.msra.mxu0 0
      %775 = vmatpush.bf16.msra.mxu0 0
      %776 = vmatpush.bf16.msra.mxu0 0
      %777 = vmatpush.bf16.msra.mxu0 0
      %778 = vmatpush.bf16.msra.mxu0 0
      %779 = vmatpush.bf16.msra.mxu0 0
      %780 = vmatpush.bf16.msra.mxu0 %v753
      %781 = vmatmul.bf16.gmra.mxu0 %v758
      %v782 = vpop.f32.mrf.mxu0
      %v783 = vadd.f32 0.0, %v782
      %v784 = vpop.f32.mrf.mxu0
      %785 = vdwg.mxu0
      %786 = vmatpush.bf16.msra.mxu0 0
      %787 = vmatpush.bf16.msra.mxu0 0
      %788 = vmatpush.bf16.msra.mxu0 0
      %789 = vmatpush.bf16.msra.mxu0 0
      %790 = vmatpush.bf16.msra.mxu0 0
      %791 = vmatpush.bf16.msra.mxu0 0
      %792 = vmatpush.bf16.msra.mxu0 0
      %793 = vmatpush.bf16.msra.mxu0 %v750
      %794 = vmatmul.bf16.gmra.mxu0 %v758
      %v795 = vpop.f32.mrf.mxu0
      %v796 = vadd.f32 0.0, %v795
      %v797 = vpop.f32.mrf.mxu0
      %798 = vdwg.mxu0
      %v799 = vadd.f32 %v740, %v770
      %v800 = vadd.f32 %v741, %v783
      %v801 = vadd.f32 %v742, %v796
      %s802 = scalar_lea.vmem %s3, 16
      %v803 = vld [vmem:[%s802] sm:$0xf]
      %804 = vrot.lane.b32.xlu0 %v259, 109
      %v805 = vpop.permute.xlu0 %804
      %806 = vrot.lane.b32.xlu0 %v260, 109
      %v807 = vpop.permute.xlu0 %806
      %808 = vrot.lane.b32.xlu0 %v261, 109
      %v809 = vpop.permute.xlu0 %808
      %v810 = vsel %vm751, %v805, %v807
      %v811 = vsel %vm751, %v807, %v809
      %v813 = vsel %vm262, %v803, 0
      %v816 = vsel %vm266, %v810, 0
      %v819 = vsel %vm266, %v811, 0
      %v822 = vsel %vm266, %v809, 0
      %824 = vmatpush.bf16.msra.mxu0 0
      %825 = vmatpush.bf16.msra.mxu0 0
      %826 = vmatpush.bf16.msra.mxu0 0
      %827 = vmatpush.bf16.msra.mxu0 0
      %828 = vmatpush.bf16.msra.mxu0 0
      %829 = vmatpush.bf16.msra.mxu0 0
      %830 = vmatpush.bf16.msra.mxu0 0
      %831 = vmatpush.bf16.msra.mxu0 %v816
      %832 = vmatmul.bf16.gmra.mxu0 %v813
      %v833 = vpop.f32.mrf.mxu0
      %v834 = vadd.f32 0.0, %v833
      %v835 = vpop.f32.mrf.mxu0
      %836 = vdwg.mxu0
      %837 = vmatpush.bf16.msra.mxu0 0
      %838 = vmatpush.bf16.msra.mxu0 0
      %839 = vmatpush.bf16.msra.mxu0 0
      %840 = vmatpush.bf16.msra.mxu0 0
      %841 = vmatpush.bf16.msra.mxu0 0
      %842 = vmatpush.bf16.msra.mxu0 0
      %843 = vmatpush.bf16.msra.mxu0 0
      %844 = vmatpush.bf16.msra.mxu0 %v819
      %845 = vmatmul.bf16.gmra.mxu0 %v813
      %v846 = vpop.f32.mrf.mxu0
      %v847 = vadd.f32 0.0, %v846
      %v848 = vpop.f32.mrf.mxu0
      %849 = vdwg.mxu0
      %850 = vmatpush.bf16.msra.mxu0 0
      %851 = vmatpush.bf16.msra.mxu0 0
      %852 = vmatpush.bf16.msra.mxu0 0
      %853 = vmatpush.bf16.msra.mxu0 0
      %854 = vmatpush.bf16.msra.mxu0 0
      %855 = vmatpush.bf16.msra.mxu0 0
      %856 = vmatpush.bf16.msra.mxu0 0
      %857 = vmatpush.bf16.msra.mxu0 %v822
      %858 = vmatmul.bf16.gmra.mxu0 %v813
      %v859 = vpop.f32.mrf.mxu0
      %v860 = vadd.f32 0.0, %v859
      %v861 = vpop.f32.mrf.mxu0
      %862 = vdwg.mxu0
      %v863 = vadd.f32 %v799, %v834
      %v864 = vadd.f32 %v800, %v847
      %v865 = vadd.f32 %v801, %v860
      %s866 = scalar_lea.vmem %s2, 20
      %v867 = vld [vmem:[%s866] sm:$0xf]
      %868 = vrot.lane.b32.xlu0 %v325, 108
      %v869 = vpop.permute.xlu0 %868
      %870 = vrot.lane.b32.xlu0 %v326, 108
      %v871 = vpop.permute.xlu0 %870
      %872 = vrot.lane.b32.xlu0 %v327, 108
      %v873 = vpop.permute.xlu0 %872
      %vm874 = vcmask 883712
      %v875 = vsel %vm874, %v869, %v871
      %v876 = vsel %vm874, %v871, %v873
      %v881 = vsel %vm331, %v867, 0
      %883 = vmatpush.bf16.msra.mxu0 0
      %884 = vmatpush.bf16.msra.mxu0 0
      %885 = vmatpush.bf16.msra.mxu0 0
      %886 = vmatpush.bf16.msra.mxu0 0
      %887 = vmatpush.bf16.msra.mxu0 0
      %888 = vmatpush.bf16.msra.mxu0 0
      %889 = vmatpush.bf16.msra.mxu0 0
      %890 = vmatpush.bf16.msra.mxu0 %v875
      %891 = vmatmul.bf16.gmra.mxu0 %v881
      %v892 = vpop.f32.mrf.mxu0
      %v893 = vadd.f32 0.0, %v892
      %v894 = vpop.f32.mrf.mxu0
      %895 = vdwg.mxu0
      %896 = vmatpush.bf16.msra.mxu0 0
      %897 = vmatpush.bf16.msra.mxu0 0
      %898 = vmatpush.bf16.msra.mxu0 0
      %899 = vmatpush.bf16.msra.mxu0 0
      %900 = vmatpush.bf16.msra.mxu0 0
      %901 = vmatpush.bf16.msra.mxu0 0
      %902 = vmatpush.bf16.msra.mxu0 0
      %903 = vmatpush.bf16.msra.mxu0 %v876
      %904 = vmatmul.bf16.gmra.mxu0 %v881
      %v905 = vpop.f32.mrf.mxu0
      %v906 = vadd.f32 0.0, %v905
      %v907 = vpop.f32.mrf.mxu0
      %908 = vdwg.mxu0
      %909 = vmatpush.bf16.msra.mxu0 0
      %910 = vmatpush.bf16.msra.mxu0 0
      %911 = vmatpush.bf16.msra.mxu0 0
      %912 = vmatpush.bf16.msra.mxu0 0
      %913 = vmatpush.bf16.msra.mxu0 0
      %914 = vmatpush.bf16.msra.mxu0 0
      %915 = vmatpush.bf16.msra.mxu0 0
      %916 = vmatpush.bf16.msra.mxu0 %v873
      %917 = vmatmul.bf16.gmra.mxu0 %v881
      %v918 = vpop.f32.mrf.mxu0
      %v919 = vadd.f32 0.0, %v918
      %v920 = vpop.f32.mrf.mxu0
      %921 = vdwg.mxu0
      %v922 = vadd.f32 %v863, %v893
      %v923 = vadd.f32 %v864, %v906
      %v924 = vadd.f32 %v865, %v919
      %s925 = scalar_lea.vmem %s3, 20
      %v926 = vld [vmem:[%s925] sm:$0xf]
      %927 = vrot.lane.b32.xlu0 %v259, 108
      %v928 = vpop.permute.xlu0 %927
      %929 = vrot.lane.b32.xlu0 %v260, 108
      %v930 = vpop.permute.xlu0 %929
      %931 = vrot.lane.b32.xlu0 %v261, 108
      %v932 = vpop.permute.xlu0 %931
      %v933 = vsel %vm874, %v928, %v930
      %v934 = vsel %vm874, %v930, %v932
      %v936 = vsel %vm262, %v926, 0
      %v939 = vsel %vm266, %v933, 0
      %v942 = vsel %vm266, %v934, 0
      %v945 = vsel %vm266, %v932, 0
      %947 = vmatpush.bf16.msra.mxu0 0
      %948 = vmatpush.bf16.msra.mxu0 0
      %949 = vmatpush.bf16.msra.mxu0 0
      %950 = vmatpush.bf16.msra.mxu0 0
      %951 = vmatpush.bf16.msra.mxu0 0
      %952 = vmatpush.bf16.msra.mxu0 0
      %953 = vmatpush.bf16.msra.mxu0 0
      %954 = vmatpush.bf16.msra.mxu0 %v939
      %955 = vmatmul.bf16.gmra.mxu0 %v936
      %v956 = vpop.f32.mrf.mxu0
      %v957 = vadd.f32 0.0, %v956
      %v958 = vpop.f32.mrf.mxu0
      %959 = vdwg.mxu0
      %960 = vmatpush.bf16.msra.mxu0 0
      %961 = vmatpush.bf16.msra.mxu0 0
      %962 = vmatpush.bf16.msra.mxu0 0
      %963 = vmatpush.bf16.msra.mxu0 0
      %964 = vmatpush.bf16.msra.mxu0 0
      %965 = vmatpush.bf16.msra.mxu0 0
      %966 = vmatpush.bf16.msra.mxu0 0
      %967 = vmatpush.bf16.msra.mxu0 %v942
      %968 = vmatmul.bf16.gmra.mxu0 %v936
      %v969 = vpop.f32.mrf.mxu0
      %v970 = vadd.f32 0.0, %v969
      %v971 = vpop.f32.mrf.mxu0
      %972 = vdwg.mxu0
      %973 = vmatpush.bf16.msra.mxu0 0
      %974 = vmatpush.bf16.msra.mxu0 0
      %975 = vmatpush.bf16.msra.mxu0 0
      %976 = vmatpush.bf16.msra.mxu0 0
      %977 = vmatpush.bf16.msra.mxu0 0
      %978 = vmatpush.bf16.msra.mxu0 0
      %979 = vmatpush.bf16.msra.mxu0 0
      %980 = vmatpush.bf16.msra.mxu0 %v945
      %981 = vmatmul.bf16.gmra.mxu0 %v936
      %v982 = vpop.f32.mrf.mxu0
      %v983 = vadd.f32 0.0, %v982
      %v984 = vpop.f32.mrf.mxu0
      %985 = vdwg.mxu0
      %v986 = vadd.f32 %v922, %v957
      %v987 = vadd.f32 %v923, %v970
      %v988 = vadd.f32 %v924, %v983
      %s989 = scalar_lea.vmem %s2, 24
      %v990 = vld [vmem:[%s989] sm:$0xf]
      %991 = vrot.lane.b32.xlu0 %v325, 92
      %v992 = vpop.permute.xlu0 %991
      %993 = vrot.lane.b32.xlu0 %v326, 92
      %v994 = vpop.permute.xlu0 %993
      %995 = vrot.lane.b32.xlu0 %v327, 92
      %v996 = vpop.permute.xlu0 %995
      %vm997 = vcmask 752640
      %v998 = vsel %vm997, %v992, %v994
      %v999 = vsel %vm997, %v994, %v996
      %v1004 = vsel %vm331, %v990, 0
      %1006 = vmatpush.bf16.msra.mxu0 0
      %1007 = vmatpush.bf16.msra.mxu0 0
      %1008 = vmatpush.bf16.msra.mxu0 0
      %1009 = vmatpush.bf16.msra.mxu0 0
      %1010 = vmatpush.bf16.msra.mxu0 0
      %1011 = vmatpush.bf16.msra.mxu0 0
      %1012 = vmatpush.bf16.msra.mxu0 0
      %1013 = vmatpush.bf16.msra.mxu0 %v998
      %1014 = vmatmul.bf16.gmra.mxu0 %v1004
      %v1015 = vpop.f32.mrf.mxu0
      %v1016 = vadd.f32 0.0, %v1015
      %v1017 = vpop.f32.mrf.mxu0
      %1018 = vdwg.mxu0
      %1019 = vmatpush.bf16.msra.mxu0 0
      %1020 = vmatpush.bf16.msra.mxu0 0
      %1021 = vmatpush.bf16.msra.mxu0 0
      %1022 = vmatpush.bf16.msra.mxu0 0
      %1023 = vmatpush.bf16.msra.mxu0 0
      %1024 = vmatpush.bf16.msra.mxu0 0
      %1025 = vmatpush.bf16.msra.mxu0 0
      %1026 = vmatpush.bf16.msra.mxu0 %v999
      %1027 = vmatmul.bf16.gmra.mxu0 %v1004
      %v1028 = vpop.f32.mrf.mxu0
      %v1029 = vadd.f32 0.0, %v1028
      %v1030 = vpop.f32.mrf.mxu0
      %1031 = vdwg.mxu0
      %1032 = vmatpush.bf16.msra.mxu0 0
      %1033 = vmatpush.bf16.msra.mxu0 0
      %1034 = vmatpush.bf16.msra.mxu0 0
      %1035 = vmatpush.bf16.msra.mxu0 0
      %1036 = vmatpush.bf16.msra.mxu0 0
      %1037 = vmatpush.bf16.msra.mxu0 0
      %1038 = vmatpush.bf16.msra.mxu0 0
      %1039 = vmatpush.bf16.msra.mxu0 %v996
      %1040 = vmatmul.bf16.gmra.mxu0 %v1004
      %v1041 = vpop.f32.mrf.mxu0
      %v1042 = vadd.f32 0.0, %v1041
      %v1043 = vpop.f32.mrf.mxu0
      %1044 = vdwg.mxu0
      %v1045 = vadd.f32 %v986, %v1016
      %v1046 = vadd.f32 %v987, %v1029
      %v1047 = vadd.f32 %v988, %v1042
      %s1048 = scalar_lea.vmem %s3, 24
      %v1049 = vld [vmem:[%s1048] sm:$0xf]
      %1050 = vrot.lane.b32.xlu0 %v259, 92
      %v1051 = vpop.permute.xlu0 %1050
      %1052 = vrot.lane.b32.xlu0 %v260, 92
      %v1053 = vpop.permute.xlu0 %1052
      %1054 = vrot.lane.b32.xlu0 %v261, 92
      %v1055 = vpop.permute.xlu0 %1054
      %v1056 = vsel %vm997, %v1051, %v1053
      %v1057 = vsel %vm997, %v1053, %v1055
      %v1059 = vsel %vm262, %v1049, 0
      %v1062 = vsel %vm266, %v1056, 0
      %v1065 = vsel %vm266, %v1057, 0
      %v1068 = vsel %vm266, %v1055, 0
      %1070 = vmatpush.bf16.msra.mxu0 0
      %1071 = vmatpush.bf16.msra.mxu0 0
      %1072 = vmatpush.bf16.msra.mxu0 0
      %1073 = vmatpush.bf16.msra.mxu0 0
      %1074 = vmatpush.bf16.msra.mxu0 0
      %1075 = vmatpush.bf16.msra.mxu0 0
      %1076 = vmatpush.bf16.msra.mxu0 0
      %1077 = vmatpush.bf16.msra.mxu0 %v1062
      %1078 = vmatmul.bf16.gmra.mxu0 %v1059
      %v1079 = vpop.f32.mrf.mxu0
      %v1080 = vadd.f32 0.0, %v1079
      %v1081 = vpop.f32.mrf.mxu0
      %1082 = vdwg.mxu0
      %1083 = vmatpush.bf16.msra.mxu0 0
      %1084 = vmatpush.bf16.msra.mxu0 0
      %1085 = vmatpush.bf16.msra.mxu0 0
      %1086 = vmatpush.bf16.msra.mxu0 0
      %1087 = vmatpush.bf16.msra.mxu0 0
      %1088 = vmatpush.bf16.msra.mxu0 0
      %1089 = vmatpush.bf16.msra.mxu0 0
      %1090 = vmatpush.bf16.msra.mxu0 %v1065
      %1091 = vmatmul.bf16.gmra.mxu0 %v1059
      %v1092 = vpop.f32.mrf.mxu0
      %v1093 = vadd.f32 0.0, %v1092
      %v1094 = vpop.f32.mrf.mxu0
      %1095 = vdwg.mxu0
      %1096 = vmatpush.bf16.msra.mxu0 0
      %1097 = vmatpush.bf16.msra.mxu0 0
      %1098 = vmatpush.bf16.msra.mxu0 0
      %1099 = vmatpush.bf16.msra.mxu0 0
      %1100 = vmatpush.bf16.msra.mxu0 0
      %1101 = vmatpush.bf16.msra.mxu0 0
      %1102 = vmatpush.bf16.msra.mxu0 0
      %1103 = vmatpush.bf16.msra.mxu0 %v1068
      %1104 = vmatmul.bf16.gmra.mxu0 %v1059
      %v1105 = vpop.f32.mrf.mxu0
      %v1106 = vadd.f32 0.0, %v1105
      %v1107 = vpop.f32.mrf.mxu0
      %1108 = vdwg.mxu0
      %v1109 = vadd.f32 %v1045, %v1080
      %v1110 = vadd.f32 %v1046, %v1093
      %v1111 = vadd.f32 %v1047, %v1106
      %s1112 = scalar_lea.vmem %s2, 28
      %v1113 = vld [vmem:[%s1112] sm:$0xf]
      %1114 = vrot.lane.b32.xlu0 %v325, 91
      %v1115 = vpop.permute.xlu0 %1114
      %1116 = vrot.lane.b32.xlu0 %v326, 91
      %v1117 = vpop.permute.xlu0 %1116
      %1118 = vrot.lane.b32.xlu0 %v327, 91
      %v1119 = vpop.permute.xlu0 %1118
      %vm1120 = vcmask 744448
      %v1121 = vsel %vm1120, %v1115, %v1117
      %v1122 = vsel %vm1120, %v1117, %v1119
      %v1127 = vsel %vm331, %v1113, 0
      %1129 = vmatpush.bf16.msra.mxu0 0
      %1130 = vmatpush.bf16.msra.mxu0 0
      %1131 = vmatpush.bf16.msra.mxu0 0
      %1132 = vmatpush.bf16.msra.mxu0 0
      %1133 = vmatpush.bf16.msra.mxu0 0
      %1134 = vmatpush.bf16.msra.mxu0 0
      %1135 = vmatpush.bf16.msra.mxu0 0
      %1136 = vmatpush.bf16.msra.mxu0 %v1121
      %1137 = vmatmul.bf16.gmra.mxu0 %v1127
      %v1138 = vpop.f32.mrf.mxu0
      %v1139 = vadd.f32 0.0, %v1138
      %v1140 = vpop.f32.mrf.mxu0
      %1141 = vdwg.mxu0
      %1142 = vmatpush.bf16.msra.mxu0 0
      %1143 = vmatpush.bf16.msra.mxu0 0
      %1144 = vmatpush.bf16.msra.mxu0 0
      %1145 = vmatpush.bf16.msra.mxu0 0
      %1146 = vmatpush.bf16.msra.mxu0 0
      %1147 = vmatpush.bf16.msra.mxu0 0
      %1148 = vmatpush.bf16.msra.mxu0 0
      %1149 = vmatpush.bf16.msra.mxu0 %v1122
      %1150 = vmatmul.bf16.gmra.mxu0 %v1127
      %v1151 = vpop.f32.mrf.mxu0
      %v1152 = vadd.f32 0.0, %v1151
      %v1153 = vpop.f32.mrf.mxu0
      %1154 = vdwg.mxu0
      %1155 = vmatpush.bf16.msra.mxu0 0
      %1156 = vmatpush.bf16.msra.mxu0 0
      %1157 = vmatpush.bf16.msra.mxu0 0
      %1158 = vmatpush.bf16.msra.mxu0 0
      %1159 = vmatpush.bf16.msra.mxu0 0
      %1160 = vmatpush.bf16.msra.mxu0 0
      %1161 = vmatpush.bf16.msra.mxu0 0
      %1162 = vmatpush.bf16.msra.mxu0 %v1119
      %1163 = vmatmul.bf16.gmra.mxu0 %v1127
      %v1164 = vpop.f32.mrf.mxu0
      %v1165 = vadd.f32 0.0, %v1164
      %v1166 = vpop.f32.mrf.mxu0
      %1167 = vdwg.mxu0
      %v1168 = vadd.f32 %v1109, %v1139
      %v1169 = vadd.f32 %v1110, %v1152
      %v1170 = vadd.f32 %v1111, %v1165
      %s1171 = scalar_lea.vmem %s3, 28
      %v1172 = vld [vmem:[%s1171] sm:$0xf]
      %1173 = vrot.lane.b32.xlu0 %v259, 91
      %v1174 = vpop.permute.xlu0 %1173
      %1175 = vrot.lane.b32.xlu0 %v260, 91
      %v1176 = vpop.permute.xlu0 %1175
      %1177 = vrot.lane.b32.xlu0 %v261, 91
      %v1178 = vpop.permute.xlu0 %1177
      %v1179 = vsel %vm1120, %v1174, %v1176
      %v1180 = vsel %vm1120, %v1176, %v1178
      %v1182 = vsel %vm262, %v1172, 0
      %v1185 = vsel %vm266, %v1179, 0
      %v1188 = vsel %vm266, %v1180, 0
      %v1191 = vsel %vm266, %v1178, 0
      %1193 = vmatpush.bf16.msra.mxu0 0
      %1194 = vmatpush.bf16.msra.mxu0 0
      %1195 = vmatpush.bf16.msra.mxu0 0
      %1196 = vmatpush.bf16.msra.mxu0 0
      %1197 = vmatpush.bf16.msra.mxu0 0
      %1198 = vmatpush.bf16.msra.mxu0 0
      %1199 = vmatpush.bf16.msra.mxu0 0
      %1200 = vmatpush.bf16.msra.mxu0 %v1185
      %1201 = vmatmul.bf16.gmra.mxu0 %v1182
      %v1202 = vpop.f32.mrf.mxu0
      %v1203 = vadd.f32 0.0, %v1202
      %v1204 = vpop.f32.mrf.mxu0
      %1205 = vdwg.mxu0
      %1206 = vmatpush.bf16.msra.mxu0 0
      %1207 = vmatpush.bf16.msra.mxu0 0
      %1208 = vmatpush.bf16.msra.mxu0 0
      %1209 = vmatpush.bf16.msra.mxu0 0
      %1210 = vmatpush.bf16.msra.mxu0 0
      %1211 = vmatpush.bf16.msra.mxu0 0
      %1212 = vmatpush.bf16.msra.mxu0 0
      %1213 = vmatpush.bf16.msra.mxu0 %v1188
      %1214 = vmatmul.bf16.gmra.mxu0 %v1182
      %v1215 = vpop.f32.mrf.mxu0
      %v1216 = vadd.f32 0.0, %v1215
      %v1217 = vpop.f32.mrf.mxu0
      %1218 = vdwg.mxu0
      %1219 = vmatpush.bf16.msra.mxu0 0
      %1220 = vmatpush.bf16.msra.mxu0 0
      %1221 = vmatpush.bf16.msra.mxu0 0
      %1222 = vmatpush.bf16.msra.mxu0 0
      %1223 = vmatpush.bf16.msra.mxu0 0
      %1224 = vmatpush.bf16.msra.mxu0 0
      %1225 = vmatpush.bf16.msra.mxu0 0
      %1226 = vmatpush.bf16.msra.mxu0 %v1191
      %1227 = vmatmul.bf16.gmra.mxu0 %v1182
      %v1228 = vpop.f32.mrf.mxu0
      %v1229 = vadd.f32 0.0, %v1228
      %v1230 = vpop.f32.mrf.mxu0
      %1231 = vdwg.mxu0
      %v1232 = vadd.f32 %v1168, %v1203
      %v1233 = vadd.f32 %v1169, %v1216
      %v1234 = vadd.f32 %v1170, %v1229
      %s1235 = scalar_lea.vmem %s2, 32
      %v1236 = vld [vmem:[%s1235] sm:$0xf]
      %1237 = vrot.lane.b32.xlu0 %v325, 90
      %v1238 = vpop.permute.xlu0 %1237
      %1239 = vrot.lane.b32.xlu0 %v326, 90
      %v1240 = vpop.permute.xlu0 %1239
      %1241 = vrot.lane.b32.xlu0 %v327, 90
      %v1242 = vpop.permute.xlu0 %1241
      %vm1243 = vcmask 736256
      %v1244 = vsel %vm1243, %v1238, %v1240
      %v1245 = vsel %vm1243, %v1240, %v1242
      %v1250 = vsel %vm331, %v1236, 0
      %1252 = vmatpush.bf16.msra.mxu0 0
      %1253 = vmatpush.bf16.msra.mxu0 0
      %1254 = vmatpush.bf16.msra.mxu0 0
      %1255 = vmatpush.bf16.msra.mxu0 0
      %1256 = vmatpush.bf16.msra.mxu0 0
      %1257 = vmatpush.bf16.msra.mxu0 0
      %1258 = vmatpush.bf16.msra.mxu0 0
      %1259 = vmatpush.bf16.msra.mxu0 %v1244
      %1260 = vmatmul.bf16.gmra.mxu0 %v1250
      %v1261 = vpop.f32.mrf.mxu0
      %v1262 = vadd.f32 0.0, %v1261
      %v1263 = vpop.f32.mrf.mxu0
      %1264 = vdwg.mxu0
      %1265 = vmatpush.bf16.msra.mxu0 0
      %1266 = vmatpush.bf16.msra.mxu0 0
      %1267 = vmatpush.bf16.msra.mxu0 0
      %1268 = vmatpush.bf16.msra.mxu0 0
      %1269 = vmatpush.bf16.msra.mxu0 0
      %1270 = vmatpush.bf16.msra.mxu0 0
      %1271 = vmatpush.bf16.msra.mxu0 0
      %1272 = vmatpush.bf16.msra.mxu0 %v1245
      %1273 = vmatmul.bf16.gmra.mxu0 %v1250
      %v1274 = vpop.f32.mrf.mxu0
      %v1275 = vadd.f32 0.0, %v1274
      %v1276 = vpop.f32.mrf.mxu0
      %1277 = vdwg.mxu0
      %1278 = vmatpush.bf16.msra.mxu0 0
      %1279 = vmatpush.bf16.msra.mxu0 0
      %1280 = vmatpush.bf16.msra.mxu0 0
      %1281 = vmatpush.bf16.msra.mxu0 0
      %1282 = vmatpush.bf16.msra.mxu0 0
      %1283 = vmatpush.bf16.msra.mxu0 0
      %1284 = vmatpush.bf16.msra.mxu0 0
      %1285 = vmatpush.bf16.msra.mxu0 %v1242
      %1286 = vmatmul.bf16.gmra.mxu0 %v1250
      %v1287 = vpop.f32.mrf.mxu0
      %v1288 = vadd.f32 0.0, %v1287
      %v1289 = vpop.f32.mrf.mxu0
      %1290 = vdwg.mxu0
      %v1291 = vadd.f32 %v1232, %v1262
      %v1292 = vadd.f32 %v1233, %v1275
      %v1293 = vadd.f32 %v1234, %v1288
      %s1294 = scalar_lea.vmem %s3, 32
      %v1295 = vld [vmem:[%s1294] sm:$0xf]
      %1296 = vrot.lane.b32.xlu0 %v259, 90
      %v1297 = vpop.permute.xlu0 %1296
      %1298 = vrot.lane.b32.xlu0 %v260, 90
      %v1299 = vpop.permute.xlu0 %1298
      %1300 = vrot.lane.b32.xlu0 %v261, 90
      %v1301 = vpop.permute.xlu0 %1300
      %v1302 = vsel %vm1243, %v1297, %v1299
      %v1303 = vsel %vm1243, %v1299, %v1301
      %v1305 = vsel %vm262, %v1295, 0
      %v1308 = vsel %vm266, %v1302, 0
      %v1311 = vsel %vm266, %v1303, 0
      %v1314 = vsel %vm266, %v1301, 0
      %1316 = vmatpush.bf16.msra.mxu0 0
      %1317 = vmatpush.bf16.msra.mxu0 0
      %1318 = vmatpush.bf16.msra.mxu0 0
      %1319 = vmatpush.bf16.msra.mxu0 0
      %1320 = vmatpush.bf16.msra.mxu0 0
      %1321 = vmatpush.bf16.msra.mxu0 0
      %1322 = vmatpush.bf16.msra.mxu0 0
      %1323 = vmatpush.bf16.msra.mxu0 %v1308
      %1324 = vmatmul.bf16.gmra.mxu0 %v1305
      %v1325 = vpop.f32.mrf.mxu0
      %v1326 = vadd.f32 0.0, %v1325
      %v1327 = vpop.f32.mrf.mxu0
      %1328 = vdwg.mxu0
      %1329 = vmatpush.bf16.msra.mxu0 0
      %1330 = vmatpush.bf16.msra.mxu0 0
      %1331 = vmatpush.bf16.msra.mxu0 0
      %1332 = vmatpush.bf16.msra.mxu0 0
      %1333 = vmatpush.bf16.msra.mxu0 0
      %1334 = vmatpush.bf16.msra.mxu0 0
      %1335 = vmatpush.bf16.msra.mxu0 0
      %1336 = vmatpush.bf16.msra.mxu0 %v1311
      %1337 = vmatmul.bf16.gmra.mxu0 %v1305
      %v1338 = vpop.f32.mrf.mxu0
      %v1339 = vadd.f32 0.0, %v1338
      %v1340 = vpop.f32.mrf.mxu0
      %1341 = vdwg.mxu0
      %1342 = vmatpush.bf16.msra.mxu0 0
      %1343 = vmatpush.bf16.msra.mxu0 0
      %1344 = vmatpush.bf16.msra.mxu0 0
      %1345 = vmatpush.bf16.msra.mxu0 0
      %1346 = vmatpush.bf16.msra.mxu0 0
      %1347 = vmatpush.bf16.msra.mxu0 0
      %1348 = vmatpush.bf16.msra.mxu0 0
      %1349 = vmatpush.bf16.msra.mxu0 %v1314
      %1350 = vmatmul.bf16.gmra.mxu0 %v1305
      %v1351 = vpop.f32.mrf.mxu0
      %v1352 = vadd.f32 0.0, %v1351
      %v1353 = vpop.f32.mrf.mxu0
      %1354 = vdwg.mxu0
      %v1355 = vadd.f32 %v1291, %v1326
      %v1356 = vadd.f32 %v1292, %v1339
      %v1357 = vadd.f32 %v1293, %v1352
      %v1358 = vld [vmem:[%s4] sm:$0xff]
      %1360 = vset.pattern.permute.xlu0 0
      %1361 = vperm.xlu0 %1360, %v1358
      %v1362 = vpop.permute.xlu0 %1361
      %v1364 = vadd.f32 %v1355, %v1362
      %v1365 = vadd.f32 %v1356, %v1362
      %v1366 = vadd.f32 %v1357, %v1362
      %v1367 = vmax.f32 %v1364, 0.0
      %v1368 = vmax.f32 %v1365, 0.0
      %v1369 = vmax.f32 %v1366, 0.0
      %v1370 = vpack.c.bf16 %v1368, %v1367
      %v1371 = vpack.c.bf16 %v1369, %v1369
      %1372 = vst [vmem:[%s244] sm:$0xff] %v1370
      %vm1373 = vcmask 257024
      %1374 = vst.msk [vmem:[%s244 + $0x8] sm:$0xf] %vm1373, %v1371
      %p1375 = scmp.lt.s32.totalorder %s16, 1
      %s1376 = scalar_select %p1375, %s16, 1
      %s1377 = smul.addr %s1376, 3
      %s1378 = smul.addr %s1377, 4
      %s1379 = scalar_lea.vmem %s5, %s1378
      // Predicated region
      $region41: #{_lambda_.7} parent=39 // pred_check
        %p1380 = pneg %p149
      $region42: #{_lambda_.7} parent=39 // pred_check_branch
        %1382 = sbr.rel (%p1380) target = $region44
      $region43: #{_lambda_.7} parent=39 // pred_region
        _
      $region44: #{_lambda_.7} parent=39 // pred_fallthru
        _
    $region40: #{_lambda_.7} parent=5 // pred_fallthru
      _
    %p1383 = scmp.le.s32.totalorder 2, %s11
    // Predicated region
    $region45: #{_lambda_.7} parent=5 // pred_check
      %p1384 = pneg %p1383
    $region46: #{_lambda_.7} parent=5 // pred_check_branch
      %1386 = sbr.rel (%p1384) target = $region48
    $region47: #{_lambda_.7} parent=5 // pred_region
      %s1387 = ssub.s32 %s11, 2
      // Predicated region
      $region49: #{_lambda_.7} parent=47 // pred_check
        %p1388 = pneg %p155
      $region50: #{_lambda_.7} parent=47 // pred_check_branch
        %1390 = sbr.rel (%p1388) target = $region52
      $region51: #{_lambda_.7} parent=47 // pred_region
        %p1391 = scmp.lt.s32.totalorder %s17, 1
        %s1392 = scalar_select %p1391, %s17, 1
        %s1393 = smul.addr %s1392, 3
        %s1394 = smul.addr %s1393, 4
        %s1395 = scalar_lea.vmem %s5, %s1394
      $region52: #{_lambda_.7} parent=47 // pred_fallthru
        _
    $region48: #{_lambda_.7} parent=5 // pred_fallthru
      _
  $region6: #{_lambda_.7} parent=0 // loop_footer
    %s15 = sadd.s32 1, %s11
  $region7: #{_lambda_.7} parent=0 // loop_footer_branch
    %10 = sbr.rel target = $region3
  $region8: #{_lambda_.7} parent=0 // loop_exit
    _

// kernel: _lambda_.9
$region0: #{_lambda_.9}
  #allocation0 [shape = 'u32[]', space=smem, size = 0x4, offset = 0x4, fixed_abs, tag = 'smem constant byte address 0x4 - core index']
  #allocation1 [shape = 'u32[72,128]{1,0:T(1,128)}', space=vmem, size = 0x9000, scoped, tag = 'internal scratch']
  %s0 = inlined_call_operand.vmem [shape: bf16[2,8,1190], index: 0, kind: input, shape index: {}]
  %s1 = inlined_call_operand.vmem [shape: bf16[2,3,1190], index: 1, kind: input, shape index: {}]
  %s2 = inlined_call_operand.vmem [shape: bf16[9,8,8], index: 2, kind: input, shape index: {}]
  %s3 = inlined_call_operand.vmem [shape: bf16[9,8,3], index: 3, kind: input, shape index: {}]
  %s4 = inlined_call_operand.vmem [shape: f32[8,1], index: 4, kind: input, shape index: {}]
  %s5 = inlined_call_operand.vmem [shape: bf16[2,8,1088], index: 5, kind: output, shape index: {}]
  %s6 = sld [smem:[#allocation0]]
  $region53: #{_lambda_.9} parent=0
    _
  %s8 = ssub.s32 1, %s6
  %s9 = scalar_select 0, %s8, %s6
  loop: start=0, step=1, limit=4
  $region2: #{_lambda_.9} parent=0 // loop_pre_header
    _
  $region3: #{_lambda_.9} parent=0 // loop_header
    %s11 = sphi 0, %s15
    %p12 = scmp.ge.s32.totalorder %s11, 4
    %s21 = sphi 0, %s23
    %s24 = sphi 0, %s21
    %s25 = sphi 0, %s24
    %s41 = sphi 0, %s25
    %s47 = sphi 0, %s49
    %s50 = sphi 0, %s47
    %s51 = sphi 0, %s50
    %s67 = sphi 0, %s51
    %s71 = sphi 0, %s71
    %s73 = sphi 0, %s71
    %s74 = sphi 0, %s73
    %s88 = sphi 0, %s74
    %s92 = sphi 0, %s92
    %s94 = sphi 0, %s92
    %s95 = sphi 0, %s94
    %s109 = sphi 0, %s95
    %s113 = sphi 0, %s113
    %s115 = sphi 0, %s113
    %s116 = sphi 0, %s115
    %s130 = sphi 0, %s116
    %s136 = sphi 0, %s138
    %s139 = sphi 0, %s136
    %s140 = sphi 0, %s139
    %s156 = sphi 0, %s140
  $region4: #{_lambda_.9} parent=0 // loop_header_branch
    %14 = sbr.rel (%p12) target = $region8
  $region5: #{_lambda_.9} parent=0 // loop_body
    %s16 = ssub.s32 %s11, 1
    %s17 = ssub.s32 %s11, 2
    %s18 = sadd.s32 %s11, 1
    %s19 = ssub.s32 %s11, %s18
    %p20 = scmp.eq.s32.totalorder %s19, 0
    %s22 = sadd.s32 %s21, 1
    %s23 = scalar_select %p20, %s21, %s22
    %p26 = pneg %p20
    %p27 = scmp.eq.s32.totalorder %s11, 1
    %p28 = por %p26, %p27
    %p29 = scmp.ne.s32.totalorder %s21, %s24
    %p30 = scmp.eq.s32.totalorder %s11, 0
    %p31 = por %p29, %p30
    %p32 = scmp.ne.s32.totalorder %s21, %s24
    %p33 = scmp.eq.s32.totalorder %s16, 1
    %p34 = por %p32, %p33
    %p35 = scmp.ne.s32.totalorder %s24, %s25
    %p36 = scmp.eq.s32.totalorder %s16, 0
    %p37 = por %p35, %p36
    %p38 = scmp.ne.s32.totalorder %s24, %s25
    %p39 = scmp.eq.s32.totalorder %s17, 1
    %p40 = por %p38, %p39
    %p42 = scmp.ne.s32.totalorder %s25, %s41
    %p43 = scmp.eq.s32.totalorder %s17, 0
    %p44 = por %p42, %p43
    %s45 = ssub.s32 %s11, %s18
    %p46 = scmp.eq.s32.totalorder %s45, 0
    %s48 = sadd.s32 %s47, 1
    %s49 = scalar_select %p46, %s47, %s48
    %p52 = pneg %p46
    %p53 = scmp.eq.s32.totalorder %s11, 1
    %p54 = por %p52, %p53
    %p55 = scmp.ne.s32.totalorder %s47, %s50
    %p56 = scmp.eq.s32.totalorder %s11, 0
    %p57 = por %p55, %p56
    %p58 = scmp.ne.s32.totalorder %s47, %s50
    %p59 = scmp.eq.s32.totalorder %s16, 1
    %p60 = por %p58, %p59
    %p61 = scmp.ne.s32.totalorder %s50, %s51
    %p62 = scmp.eq.s32.totalorder %s16, 0
    %p63 = por %p61, %p62
    %p64 = scmp.ne.s32.totalorder %s50, %s51
    %p65 = scmp.eq.s32.totalorder %s17, 1
    %p66 = por %p64, %p65
    %p68 = scmp.ne.s32.totalorder %s51, %s67
    %p69 = scmp.eq.s32.totalorder %s17, 0
    %p70 = por %p68, %p69
    %s72 = sadd.s32 %s71, 1
    %p75 = scmp.eq.s32.totalorder %s11, 1
    %p76 = scmp.ne.s32.totalorder %s71, %s73
    %p77 = scmp.eq.s32.totalorder %s11, 0
    %p78 = por %p76, %p77
    %p79 = scmp.ne.s32.totalorder %s71, %s73
    %p80 = scmp.eq.s32.totalorder %s16, 1
    %p81 = por %p79, %p80
    %p82 = scmp.ne.s32.totalorder %s73, %s74
    %p83 = scmp.eq.s32.totalorder %s16, 0
    %p84 = por %p82, %p83
    %p85 = scmp.ne.s32.totalorder %s73, %s74
    %p86 = scmp.eq.s32.totalorder %s17, 1
    %p87 = por %p85, %p86
    %p89 = scmp.ne.s32.totalorder %s74, %s88
    %p90 = scmp.eq.s32.totalorder %s17, 0
    %p91 = por %p89, %p90
    %s93 = sadd.s32 %s92, 1
    %p96 = scmp.eq.s32.totalorder %s11, 1
    %p97 = scmp.ne.s32.totalorder %s92, %s94
    %p98 = scmp.eq.s32.totalorder %s11, 0
    %p99 = por %p97, %p98
    %p100 = scmp.ne.s32.totalorder %s92, %s94
    %p101 = scmp.eq.s32.totalorder %s16, 1
    %p102 = por %p100, %p101
    %p103 = scmp.ne.s32.totalorder %s94, %s95
    %p104 = scmp.eq.s32.totalorder %s16, 0
    %p105 = por %p103, %p104
    %p106 = scmp.ne.s32.totalorder %s94, %s95
    %p107 = scmp.eq.s32.totalorder %s17, 1
    %p108 = por %p106, %p107
    %p110 = scmp.ne.s32.totalorder %s95, %s109
    %p111 = scmp.eq.s32.totalorder %s17, 0
    %p112 = por %p110, %p111
    %s114 = sadd.s32 %s113, 1
    %p117 = scmp.eq.s32.totalorder %s11, 1
    %p118 = scmp.ne.s32.totalorder %s113, %s115
    %p119 = scmp.eq.s32.totalorder %s11, 0
    %p120 = por %p118, %p119
    %p121 = scmp.ne.s32.totalorder %s113, %s115
    %p122 = scmp.eq.s32.totalorder %s16, 1
    %p123 = por %p121, %p122
    %p124 = scmp.ne.s32.totalorder %s115, %s116
    %p125 = scmp.eq.s32.totalorder %s16, 0
    %p126 = por %p124, %p125
    %p127 = scmp.ne.s32.totalorder %s115, %s116
    %p128 = scmp.eq.s32.totalorder %s17, 1
    %p129 = por %p127, %p128
    %p131 = scmp.ne.s32.totalorder %s116, %s130
    %p132 = scmp.eq.s32.totalorder %s17, 0
    %p133 = por %p131, %p132
    %s134 = ssub.s32 %s11, %s18
    %p135 = scmp.eq.s32.totalorder %s134, 0
    %s137 = sadd.s32 %s136, 1
    %s138 = scalar_select %p135, %s136, %s137
    %p141 = pneg %p135
    %p142 = scmp.eq.s32.totalorder %s11, 1
    %p143 = por %p141, %p142
    %p144 = scmp.ne.s32.totalorder %s136, %s139
    %p145 = scmp.eq.s32.totalorder %s11, 0
    %p146 = por %p144, %p145
    %p147 = scmp.ne.s32.totalorder %s136, %s139
    %p148 = scmp.eq.s32.totalorder %s16, 1
    %p149 = por %p147, %p148
    %p150 = scmp.ne.s32.totalorder %s139, %s140
    %p151 = scmp.eq.s32.totalorder %s16, 0
    %p152 = por %p150, %p151
    %p153 = scmp.ne.s32.totalorder %s139, %s140
    %p154 = scmp.eq.s32.totalorder %s17, 1
    %p155 = por %p153, %p154
    %p157 = scmp.ne.s32.totalorder %s140, %s156
    %p158 = scmp.eq.s32.totalorder %s17, 0
    %p159 = por %p157, %p158
    %p160 = scmp.le.s32.totalorder 1, %s11
    %p161 = scmp.lt.s32.totalorder %s11, 3
    %p162 = pnand %p160, %p161
    %p163 = pneg %p162
    // Predicated region
    $region9: #{_lambda_.9} parent=5 // pred_check
      _
    $region10: #{_lambda_.9} parent=5 // pred_check_branch
      %165 = sbr.rel (%p162) target = $region12
    $region11: #{_lambda_.9} parent=5 // pred_region
      %s166 = ssub.s32 %s11, 1
      // Predicated region
      $region13: #{_lambda_.9} parent=11 // pred_check
        %p167 = pneg %p84
      $region14: #{_lambda_.9} parent=11 // pred_check_branch
        %169 = sbr.rel (%p167) target = $region16
      $region15: #{_lambda_.9} parent=11 // pred_region
        _
      $region16: #{_lambda_.9} parent=11 // pred_fallthru
        _
      // Predicated region
      $region17: #{_lambda_.9} parent=11 // pred_check
        %p170 = pneg %p105
      $region18: #{_lambda_.9} parent=11 // pred_check_branch
        %172 = sbr.rel (%p170) target = $region20
      $region19: #{_lambda_.9} parent=11 // pred_region
        _
      $region20: #{_lambda_.9} parent=11 // pred_fallthru
        _
      // Predicated region
      $region21: #{_lambda_.9} parent=11 // pred_check
        %p173 = pneg %p126
      $region22: #{_lambda_.9} parent=11 // pred_check_branch
        %175 = sbr.rel (%p173) target = $region24
      $region23: #{_lambda_.9} parent=11 // pred_region
        _
      $region24: #{_lambda_.9} parent=11 // pred_fallthru
        _
    $region12: #{_lambda_.9} parent=5 // pred_fallthru
      _
    %p176 = scmp.lt.s32.totalorder %s11, 2
    // Predicated region
    $region25: #{_lambda_.9} parent=5 // pred_check
      %p177 = pneg %p176
    $region26: #{_lambda_.9} parent=5 // pred_check_branch
      %179 = sbr.rel (%p177) target = $region28
    $region27: #{_lambda_.9} parent=5 // pred_region
      // Predicated region
      $region29: #{_lambda_.9} parent=27 // pred_check
        %p180 = pneg %p31
      $region30: #{_lambda_.9} parent=27 // pred_check_branch
        %182 = sbr.rel (%p180) target = $region32
      $region31: #{_lambda_.9} parent=27 // pred_region
        %p183 = scmp.lt.s32.totalorder %s11, 1
        %s184 = scalar_select %p183, %s11, 1
        %s185 = smul.addr %s184, 10
        %s186 = smul.addr %s185, 4
        %s187 = scalar_lea.vmem %s0, %s186
      $region32: #{_lambda_.9} parent=27 // pred_fallthru
        _
      // Predicated region
      $region33: #{_lambda_.9} parent=27 // pred_check
        %p188 = pneg %p57
      $region34: #{_lambda_.9} parent=27 // pred_check_branch
        %190 = sbr.rel (%p188) target = $region36
      $region35: #{_lambda_.9} parent=27 // pred_region
        %p191 = scmp.lt.s32.totalorder %s11, 1
        %s192 = scalar_select %p191, %s11, 1
        %s193 = smul.addr %s192, 10
        %s194 = smul.addr %s193, 2
        %s195 = scalar_lea.vmem %s1, %s194
      $region36: #{_lambda_.9} parent=27 // pred_fallthru
        _
    $region28: #{_lambda_.9} parent=5 // pred_fallthru
      _
    %p196 = scmp.le.s32.totalorder 1, %s11
    %p197 = scmp.lt.s32.totalorder %s11, 3
    %p198 = pnand %p196, %p197
    %p199 = pneg %p198
    // Predicated region
    $region37: #{_lambda_.9} parent=5 // pred_check
      _
    $region38: #{_lambda_.9} parent=5 // pred_check_branch
      %201 = sbr.rel (%p198) target = $region40
    $region39: #{_lambda_.9} parent=5 // pred_region
      %s202 = ssub.s32 %s11, 1
      %p203 = scmp.lt.s32.totalorder %s16, 1
      %s204 = scalar_select %p203, %s16, 1
      %s205 = smul.addr %s204, 10
      %s206 = smul.addr %s205, 4
      %s207 = scalar_lea.vmem %s0, %s206
      %p208 = pneg %p37
      %p209 = pneg %p34
      %p210 = scmp.lt.s32.totalorder %s16, 1
      %s211 = scalar_select %p210, %s16, 1
      %s212 = smul.addr %s211, 10
      %s213 = smul.addr %s212, 2
      %s214 = scalar_lea.vmem %s1, %s213
      %p215 = pneg %p63
      %p216 = pneg %p60
      %p217 = pneg %p84
      %p218 = pneg %p81
      %p219 = pneg %p105
      %p220 = pneg %p102
      %p221 = pneg %p126
      %p222 = pneg %p123
      %p223 = pneg %p152
      %p224 = pneg %p149
      %p225 = scmp.lt.s32.totalorder %s16, 1
      %s226 = scalar_select %p225, %s16, 1
      %s227 = smul.addr %s226, 9
      %s228 = smul.addr %s227, 4
      %s229 = scalar_lea.vmem %s5, %s228
      %p230 = scmp.lt.s32.totalorder %s16, 1
      %s231 = scalar_select %p230, %s16, 1
      %s232 = smul.addr %s231, 10
      %s233 = smul.addr %s232, 4
      %s234 = scalar_lea.vmem %s0, %s233
      %p235 = scmp.lt.s32.totalorder %s16, 1
      %s236 = scalar_select %p235, %s16, 1
      %s237 = smul.addr %s236, 10
      %s238 = smul.addr %s237, 2
      %s239 = scalar_lea.vmem %s1, %s238
      %p240 = scmp.lt.s32.totalorder %s16, 1
      %s241 = scalar_select %p240, %s16, 1
      %s242 = smul.addr %s241, 9
      %s243 = smul.addr %s242, 4
      %s244 = scalar_lea.vmem %s5, %s243
      %v246 = vld [vmem:[%s2] sm:$0xf]
      %v247 = vld [vmem:[%s234] sm:$0xff]
      %v248 = vld [vmem:[%s234 + $0x8] sm:$0xff]
      %v249 = vld [vmem:[%s234 + $0x10] sm:$0xff]
      %v250 = vld [vmem:[%s234 + $0x18] sm:$0xff]
      %v251 = vld [vmem:[%s234 + $0x20] sm:$0xf]
      %v252 = vld [vmem:[%s3] sm:$0xf]
      %v253 = vld [vmem:[%s239] sm:$0xff]
      %v254 = vld [vmem:[%s239 + $0x8] sm:$0xff]
      %v255 = vld [vmem:[%s239 + $0x10] sm:$0x3]
      %257 = vst [vmem:[#allocation1] ss:$4 sm:$0xff] %v253
      %s259 = scalar_lea.vmem [#allocation1], 32
      %260 = vst [vmem:[%s259] ss:$4 sm:$0xff] %v254
      %v261 = vld.sshfl [vmem:[#allocation1] sm:$0xff pattern:$0x73625140]
      %v262 = vld.sshfl [vmem:[#allocation1 + $0x8] sm:$0xff pattern:$0x73625140]
      %v263 = vld.sshfl [vmem:[#allocation1 + $0x10] sm:$0xff pattern:$0x73625140]
      %v264 = vld.sshfl [vmem:[#allocation1 + $0x18] sm:$0xff pattern:$0x73625140]
      %v265 = vld.sshfl [vmem:[#allocation1 + $0x20] sm:$0xff pattern:$0x73625140]
      %v266 = vld.sshfl [vmem:[#allocation1 + $0x28] sm:$0xff pattern:$0x73625140]
      %v267 = vld.sshfl [vmem:[#allocation1 + $0x30] sm:$0xff pattern:$0x73625140]
      %v268 = vld.sshfl [vmem:[#allocation1 + $0x38] sm:$0xff pattern:$0x73625140]
      %270 = vst [vmem:[#allocation1] ss:$4 sm:$0xff] %v255
      %v271 = vld.sshfl [vmem:[#allocation1] sm:$0xff pattern:$0x73625140]
      %vm272 = vcmask 23552
      %v274 = vsel %vm272, %v252, 0
      %vm276 = vcmask 1040384
      %vm277 = vcmask 1041408
      %v278 = vsel %vm276, 4294967295, 65535
      %v279 = vsel %vm277, %v278, 0
      %v280 = vand.u32 %v261, %v279
      %v282 = vand.u32 %v262, %v279
      %v284 = vand.u32 %v263, %v279
      %v286 = vand.u32 %v264, %v279
      %v288 = vand.u32 %v265, %v279
      %v290 = vand.u32 %v266, %v279
      %v292 = vand.u32 %v267, %v279
      %v294 = vand.u32 %v268, %v279
      %v296 = vand.u32 %v271, %v279
      %298 = vmatpush.bf16.msra.mxu0 0
      %299 = vmatpush.bf16.msra.mxu0 0
      %300 = vmatpush.bf16.msra.mxu0 0
      %301 = vmatpush.bf16.msra.mxu0 0
      %302 = vmatpush.bf16.msra.mxu0 0
      %303 = vmatpush.bf16.msra.mxu0 0
      %304 = vmatpush.bf16.msra.mxu0 0
      %305 = vmatpush.bf16.msra.mxu0 %v280
      %306 = vmatmul.bf16.gmra.mxu0 %v274
      %v307 = vpop.f32.mrf.mxu0
      %v308 = vadd.f32 0.0, %v307
      %v309 = vpop.f32.mrf.mxu0
      %310 = vdwg.mxu0
      %311 = vmatpush.bf16.msra.mxu0 0
      %312 = vmatpush.bf16.msra.mxu0 0
      %313 = vmatpush.bf16.msra.mxu0 0
      %314 = vmatpush.bf16.msra.mxu0 0
      %315 = vmatpush.bf16.msra.mxu0 0
      %316 = vmatpush.bf16.msra.mxu0 0
      %317 = vmatpush.bf16.msra.mxu0 0
      %318 = vmatpush.bf16.msra.mxu0 %v282
      %319 = vmatmul.bf16.gmra.mxu0 %v274
      %v320 = vpop.f32.mrf.mxu0
      %v321 = vadd.f32 0.0, %v320
      %v322 = vpop.f32.mrf.mxu0
      %323 = vdwg.mxu0
      %324 = vmatpush.bf16.msra.mxu0 0
      %325 = vmatpush.bf16.msra.mxu0 0
      %326 = vmatpush.bf16.msra.mxu0 0
      %327 = vmatpush.bf16.msra.mxu0 0
      %328 = vmatpush.bf16.msra.mxu0 0
      %329 = vmatpush.bf16.msra.mxu0 0
      %330 = vmatpush.bf16.msra.mxu0 0
      %331 = vmatpush.bf16.msra.mxu0 %v284
      %332 = vmatmul.bf16.gmra.mxu0 %v274
      %v333 = vpop.f32.mrf.mxu0
      %v334 = vadd.f32 0.0, %v333
      %v335 = vpop.f32.mrf.mxu0
      %336 = vdwg.mxu0
      %337 = vmatpush.bf16.msra.mxu0 0
      %338 = vmatpush.bf16.msra.mxu0 0
      %339 = vmatpush.bf16.msra.mxu0 0
      %340 = vmatpush.bf16.msra.mxu0 0
      %341 = vmatpush.bf16.msra.mxu0 0
      %342 = vmatpush.bf16.msra.mxu0 0
      %343 = vmatpush.bf16.msra.mxu0 0
      %344 = vmatpush.bf16.msra.mxu0 %v286
      %345 = vmatmul.bf16.gmra.mxu0 %v274
      %v346 = vpop.f32.mrf.mxu0
      %v347 = vadd.f32 0.0, %v346
      %v348 = vpop.f32.mrf.mxu0
      %349 = vdwg.mxu0
      %350 = vmatpush.bf16.msra.mxu0 0
      %351 = vmatpush.bf16.msra.mxu0 0
      %352 = vmatpush.bf16.msra.mxu0 0
      %353 = vmatpush.bf16.msra.mxu0 0
      %354 = vmatpush.bf16.msra.mxu0 0
      %355 = vmatpush.bf16.msra.mxu0 0
      %356 = vmatpush.bf16.msra.mxu0 0
      %357 = vmatpush.bf16.msra.mxu0 %v288
      %358 = vmatmul.bf16.gmra.mxu0 %v274
      %v359 = vpop.f32.mrf.mxu0
      %v360 = vadd.f32 0.0, %v359
      %v361 = vpop.f32.mrf.mxu0
      %362 = vdwg.mxu0
      %363 = vmatpush.bf16.msra.mxu0 0
      %364 = vmatpush.bf16.msra.mxu0 0
      %365 = vmatpush.bf16.msra.mxu0 0
      %366 = vmatpush.bf16.msra.mxu0 0
      %367 = vmatpush.bf16.msra.mxu0 0
      %368 = vmatpush.bf16.msra.mxu0 0
      %369 = vmatpush.bf16.msra.mxu0 0
      %370 = vmatpush.bf16.msra.mxu0 %v290
      %371 = vmatmul.bf16.gmra.mxu0 %v274
      %v372 = vpop.f32.mrf.mxu0
      %v373 = vadd.f32 0.0, %v372
      %v374 = vpop.f32.mrf.mxu0
      %375 = vdwg.mxu0
      %376 = vmatpush.bf16.msra.mxu0 0
      %377 = vmatpush.bf16.msra.mxu0 0
      %378 = vmatpush.bf16.msra.mxu0 0
      %379 = vmatpush.bf16.msra.mxu0 0
      %380 = vmatpush.bf16.msra.mxu0 0
      %381 = vmatpush.bf16.msra.mxu0 0
      %382 = vmatpush.bf16.msra.mxu0 0
      %383 = vmatpush.bf16.msra.mxu0 %v292
      %384 = vmatmul.bf16.gmra.mxu0 %v274
      %v385 = vpop.f32.mrf.mxu0
      %v386 = vadd.f32 0.0, %v385
      %v387 = vpop.f32.mrf.mxu0
      %388 = vdwg.mxu0
      %389 = vmatpush.bf16.msra.mxu0 0
      %390 = vmatpush.bf16.msra.mxu0 0
      %391 = vmatpush.bf16.msra.mxu0 0
      %392 = vmatpush.bf16.msra.mxu0 0
      %393 = vmatpush.bf16.msra.mxu0 0
      %394 = vmatpush.bf16.msra.mxu0 0
      %395 = vmatpush.bf16.msra.mxu0 0
      %396 = vmatpush.bf16.msra.mxu0 %v294
      %397 = vmatmul.bf16.gmra.mxu0 %v274
      %v398 = vpop.f32.mrf.mxu0
      %v399 = vadd.f32 0.0, %v398
      %v400 = vpop.f32.mrf.mxu0
      %401 = vdwg.mxu0
      %402 = vmatpush.bf16.msra.mxu0 0
      %403 = vmatpush.bf16.msra.mxu0 0
      %404 = vmatpush.bf16.msra.mxu0 0
      %405 = vmatpush.bf16.msra.mxu0 0
      %406 = vmatpush.bf16.msra.mxu0 0
      %407 = vmatpush.bf16.msra.mxu0 0
      %408 = vmatpush.bf16.msra.mxu0 0
      %409 = vmatpush.bf16.msra.mxu0 %v296
      %410 = vmatmul.bf16.gmra.mxu0 %v274
      %v411 = vpop.f32.mrf.mxu0
      %v412 = vadd.f32 0.0, %v411
      %v413 = vpop.f32.mrf.mxu0
      %414 = vdwg.mxu0
      %v420 = vunpack.c.l.b16 %v247
      %v421 = vunpack.c.h.b16 %v247
      %v422 = vunpack.c.l.b16 %v248
      %v423 = vunpack.c.h.b16 %v248
      %v424 = vunpack.c.l.b16 %v249
      %v425 = vunpack.c.h.b16 %v249
      %v426 = vunpack.c.l.b16 %v250
      %v427 = vunpack.c.h.b16 %v250
      %v428 = vunpack.c.l.b16 %v251
      %v429 = vpack.c.b16 %v420, %v420
      %v430 = vpack.c.b16 %v421, %v421
      %v431 = vpack.c.b16 %v422, %v422
      %v432 = vpack.c.b16 %v423, %v423
      %v433 = vpack.c.b16 %v424, %v424
      %v434 = vpack.c.b16 %v425, %v425
      %v435 = vpack.c.b16 %v426, %v426
      %v436 = vpack.c.b16 %v427, %v427
      %v437 = vpack.c.b16 %v428, %v428
      %vm438 = vcmask 64512
      %v440 = vsel %vm438, %v246, 0
      %vm442 = vcmask 1043456
      %v444 = vsel %vm442, %v429, 0
      %v447 = vsel %vm442, %v430, 0
      %v450 = vsel %vm442, %v431, 0
      %v453 = vsel %vm442, %v432, 0
      %v456 = vsel %vm442, %v433, 0
      %v459 = vsel %vm442, %v434, 0
      %v462 = vsel %vm442, %v435, 0
      %v465 = vsel %vm442, %v436, 0
      %v468 = vsel %vm442, %v437, 0
      %470 = vmatpush.bf16.msra.mxu0 0
      %471 = vmatpush.bf16.msra.mxu0 0
      %472 = vmatpush.bf16.msra.mxu0 0
      %473 = vmatpush.bf16.msra.mxu0 0
      %474 = vmatpush.bf16.msra.mxu0 0
      %475 = vmatpush.bf16.msra.mxu0 0
      %476 = vmatpush.bf16.msra.mxu0 0
      %477 = vmatpush.bf16.msra.mxu0 %v444
      %478 = vmatmul.bf16.gmra.mxu0 %v440
      %v479 = vpop.f32.mrf.mxu0
      %v480 = vadd.f32 %v308, %v479
      %v481 = vpop.f32.mrf.mxu0
      %482 = vdwg.mxu0
      %483 = vmatpush.bf16.msra.mxu0 0
      %484 = vmatpush.bf16.msra.mxu0 0
      %485 = vmatpush.bf16.msra.mxu0 0
      %486 = vmatpush.bf16.msra.mxu0 0
      %487 = vmatpush.bf16.msra.mxu0 0
      %488 = vmatpush.bf16.msra.mxu0 0
      %489 = vmatpush.bf16.msra.mxu0 0
      %490 = vmatpush.bf16.msra.mxu0 %v447
      %491 = vmatmul.bf16.gmra.mxu0 %v440
      %v492 = vpop.f32.mrf.mxu0
      %v493 = vadd.f32 %v321, %v492
      %v494 = vpop.f32.mrf.mxu0
      %495 = vdwg.mxu0
      %496 = vmatpush.bf16.msra.mxu0 0
      %497 = vmatpush.bf16.msra.mxu0 0
      %498 = vmatpush.bf16.msra.mxu0 0
      %499 = vmatpush.bf16.msra.mxu0 0
      %500 = vmatpush.bf16.msra.mxu0 0
      %501 = vmatpush.bf16.msra.mxu0 0
      %502 = vmatpush.bf16.msra.mxu0 0
      %503 = vmatpush.bf16.msra.mxu0 %v450
      %504 = vmatmul.bf16.gmra.mxu0 %v440
      %v505 = vpop.f32.mrf.mxu0
      %v506 = vadd.f32 %v334, %v505
      %v507 = vpop.f32.mrf.mxu0
      %508 = vdwg.mxu0
      %509 = vmatpush.bf16.msra.mxu0 0
      %510 = vmatpush.bf16.msra.mxu0 0
      %511 = vmatpush.bf16.msra.mxu0 0
      %512 = vmatpush.bf16.msra.mxu0 0
      %513 = vmatpush.bf16.msra.mxu0 0
      %514 = vmatpush.bf16.msra.mxu0 0
      %515 = vmatpush.bf16.msra.mxu0 0
      %516 = vmatpush.bf16.msra.mxu0 %v453
      %517 = vmatmul.bf16.gmra.mxu0 %v440
      %v518 = vpop.f32.mrf.mxu0
      %v519 = vadd.f32 %v347, %v518
      %v520 = vpop.f32.mrf.mxu0
      %521 = vdwg.mxu0
      %522 = vmatpush.bf16.msra.mxu0 0
      %523 = vmatpush.bf16.msra.mxu0 0
      %524 = vmatpush.bf16.msra.mxu0 0
      %525 = vmatpush.bf16.msra.mxu0 0
      %526 = vmatpush.bf16.msra.mxu0 0
      %527 = vmatpush.bf16.msra.mxu0 0
      %528 = vmatpush.bf16.msra.mxu0 0
      %529 = vmatpush.bf16.msra.mxu0 %v456
      %530 = vmatmul.bf16.gmra.mxu0 %v440
      %v531 = vpop.f32.mrf.mxu0
      %v532 = vadd.f32 %v360, %v531
      %v533 = vpop.f32.mrf.mxu0
      %534 = vdwg.mxu0
      %535 = vmatpush.bf16.msra.mxu0 0
      %536 = vmatpush.bf16.msra.mxu0 0
      %537 = vmatpush.bf16.msra.mxu0 0
      %538 = vmatpush.bf16.msra.mxu0 0
      %539 = vmatpush.bf16.msra.mxu0 0
      %540 = vmatpush.bf16.msra.mxu0 0
      %541 = vmatpush.bf16.msra.mxu0 0
      %542 = vmatpush.bf16.msra.mxu0 %v459
      %543 = vmatmul.bf16.gmra.mxu0 %v440
      %v544 = vpop.f32.mrf.mxu0
      %v545 = vadd.f32 %v373, %v544
      %v546 = vpop.f32.mrf.mxu0
      %547 = vdwg.mxu0
      %548 = vmatpush.bf16.msra.mxu0 0
      %549 = vmatpush.bf16.msra.mxu0 0
      %550 = vmatpush.bf16.msra.mxu0 0
      %551 = vmatpush.bf16.msra.mxu0 0
      %552 = vmatpush.bf16.msra.mxu0 0
      %553 = vmatpush.bf16.msra.mxu0 0
      %554 = vmatpush.bf16.msra.mxu0 0
      %555 = vmatpush.bf16.msra.mxu0 %v462
      %556 = vmatmul.bf16.gmra.mxu0 %v440
      %v557 = vpop.f32.mrf.mxu0
      %v558 = vadd.f32 %v386, %v557
      %v559 = vpop.f32.mrf.mxu0
      %560 = vdwg.mxu0
      %561 = vmatpush.bf16.msra.mxu0 0
      %562 = vmatpush.bf16.msra.mxu0 0
      %563 = vmatpush.bf16.msra.mxu0 0
      %564 = vmatpush.bf16.msra.mxu0 0
      %565 = vmatpush.bf16.msra.mxu0 0
      %566 = vmatpush.bf16.msra.mxu0 0
      %567 = vmatpush.bf16.msra.mxu0 0
      %568 = vmatpush.bf16.msra.mxu0 %v465
      %569 = vmatmul.bf16.gmra.mxu0 %v440
      %v570 = vpop.f32.mrf.mxu0
      %v571 = vadd.f32 %v399, %v570
      %v572 = vpop.f32.mrf.mxu0
      %573 = vdwg.mxu0
      %574 = vmatpush.bf16.msra.mxu0 0
      %575 = vmatpush.bf16.msra.mxu0 0
      %576 = vmatpush.bf16.msra.mxu0 0
      %577 = vmatpush.bf16.msra.mxu0 0
      %578 = vmatpush.bf16.msra.mxu0 0
      %579 = vmatpush.bf16.msra.mxu0 0
      %580 = vmatpush.bf16.msra.mxu0 0
      %581 = vmatpush.bf16.msra.mxu0 %v468
      %582 = vmatmul.bf16.gmra.mxu0 %v440
      %v583 = vpop.f32.mrf.mxu0
      %v584 = vadd.f32 %v412, %v583
      %v585 = vpop.f32.mrf.mxu0
      %586 = vdwg.mxu0
      %s587 = scalar_lea.vmem %s2, 4
      %v588 = vld [vmem:[%s587] sm:$0xf]
      %v589 = vld [vmem:[%s234] sm:$0xff]
      %v590 = vld [vmem:[%s234 + $0x8] sm:$0xff]
      %v591 = vld [vmem:[%s234 + $0x10] sm:$0xff]
      %v592 = vld [vmem:[%s234 + $0x18] sm:$0xff]
      %v593 = vld [vmem:[%s234 + $0x20] sm:$0xf]
      %v599 = vunpack.c.l.b16 %v589
      %v600 = vunpack.c.h.b16 %v589
      %v601 = vunpack.c.l.b16 %v590
      %v602 = vunpack.c.h.b16 %v590
      %v603 = vunpack.c.l.b16 %v591
      %v604 = vunpack.c.h.b16 %v591
      %v605 = vunpack.c.l.b16 %v592
      %v606 = vunpack.c.h.b16 %v592
      %v607 = vunpack.c.l.b16 %v593
      %v608 = vpack.c.b16 %v599, %v599
      %v609 = vpack.c.b16 %v600, %v600
      %v610 = vpack.c.b16 %v601, %v601
      %v611 = vpack.c.b16 %v602, %v602
      %v612 = vpack.c.b16 %v603, %v603
      %v613 = vpack.c.b16 %v604, %v604
      %v614 = vpack.c.b16 %v605, %v605
      %v615 = vpack.c.b16 %v606, %v606
      %v616 = vpack.c.b16 %v607, %v607
      %617 = vrot.lane.b32.xlu0 %v608, 127
      %v618 = vpop.permute.xlu0 %617
      %619 = vrot.lane.b32.xlu0 %v609, 127
      %v620 = vpop.permute.xlu0 %619
      %621 = vrot.lane.b32.xlu0 %v610, 127
      %v622 = vpop.permute.xlu0 %621
      %623 = vrot.lane.b32.xlu0 %v611, 127
      %v624 = vpop.permute.xlu0 %623
      %625 = vrot.lane.b32.xlu0 %v612, 127
      %v626 = vpop.permute.xlu0 %625
      %627 = vrot.lane.b32.xlu0 %v613, 127
      %v628 = vpop.permute.xlu0 %627
      %629 = vrot.lane.b32.xlu0 %v614, 127
      %v630 = vpop.permute.xlu0 %629
      %631 = vrot.lane.b32.xlu0 %v615, 127
      %v632 = vpop.permute.xlu0 %631
      %633 = vrot.lane.b32.xlu0 %v616, 127
      %v634 = vpop.permute.xlu0 %633
      %vm635 = vcmask 1039360
      %v636 = vsel %vm635, %v618, %v620
      %v637 = vsel %vm635, %v620, %v622
      %v638 = vsel %vm635, %v622, %v624
      %v639 = vsel %vm635, %v624, %v626
      %v640 = vsel %vm635, %v626, %v628
      %v641 = vsel %vm635, %v628, %v630
      %v642 = vsel %vm635, %v630, %v632
      %v643 = vsel %vm635, %v632, %v634
      %v645 = vsel %vm438, %v588, 0
      %v648 = vsel %vm442, %v636, 0
      %v651 = vsel %vm442, %v637, 0
      %v654 = vsel %vm442, %v638, 0
      %v657 = vsel %vm442, %v639, 0
      %v660 = vsel %vm442, %v640, 0
      %v663 = vsel %vm442, %v641, 0
      %v666 = vsel %vm442, %v642, 0
      %v669 = vsel %vm442, %v643, 0
      %v672 = vsel %vm442, %v634, 0
      %674 = vmatpush.bf16.msra.mxu0 0
      %675 = vmatpush.bf16.msra.mxu0 0
      %676 = vmatpush.bf16.msra.mxu0 0
      %677 = vmatpush.bf16.msra.mxu0 0
      %678 = vmatpush.bf16.msra.mxu0 0
      %679 = vmatpush.bf16.msra.mxu0 0
      %680 = vmatpush.bf16.msra.mxu0 0
      %681 = vmatpush.bf16.msra.mxu0 %v648
      %682 = vmatmul.bf16.gmra.mxu0 %v645
      %v683 = vpop.f32.mrf.mxu0
      %v684 = vadd.f32 0.0, %v683
      %v685 = vpop.f32.mrf.mxu0
      %686 = vdwg.mxu0
      %687 = vmatpush.bf16.msra.mxu0 0
      %688 = vmatpush.bf16.msra.mxu0 0
      %689 = vmatpush.bf16.msra.mxu0 0
      %690 = vmatpush.bf16.msra.mxu0 0
      %691 = vmatpush.bf16.msra.mxu0 0
      %692 = vmatpush.bf16.msra.mxu0 0
      %693 = vmatpush.bf16.msra.mxu0 0
      %694 = vmatpush.bf16.msra.mxu0 %v651
      %695 = vmatmul.bf16.gmra.mxu0 %v645
      %v696 = vpop.f32.mrf.mxu0
      %v697 = vadd.f32 0.0, %v696
      %v698 = vpop.f32.mrf.mxu0
      %699 = vdwg.mxu0
      %700 = vmatpush.bf16.msra.mxu0 0
      %701 = vmatpush.bf16.msra.mxu0 0
      %702 = vmatpush.bf16.msra.mxu0 0
      %703 = vmatpush.bf16.msra.mxu0 0
      %704 = vmatpush.bf16.msra.mxu0 0
      %705 = vmatpush.bf16.msra.mxu0 0
      %706 = vmatpush.bf16.msra.mxu0 0
      %707 = vmatpush.bf16.msra.mxu0 %v654
      %708 = vmatmul.bf16.gmra.mxu0 %v645
      %v709 = vpop.f32.mrf.mxu0
      %v710 = vadd.f32 0.0, %v709
      %v711 = vpop.f32.mrf.mxu0
      %712 = vdwg.mxu0
      %713 = vmatpush.bf16.msra.mxu0 0
      %714 = vmatpush.bf16.msra.mxu0 0
      %715 = vmatpush.bf16.msra.mxu0 0
      %716 = vmatpush.bf16.msra.mxu0 0
      %717 = vmatpush.bf16.msra.mxu0 0
      %718 = vmatpush.bf16.msra.mxu0 0
      %719 = vmatpush.bf16.msra.mxu0 0
      %720 = vmatpush.bf16.msra.mxu0 %v657
      %721 = vmatmul.bf16.gmra.mxu0 %v645
      %v722 = vpop.f32.mrf.mxu0
      %v723 = vadd.f32 0.0, %v722
      %v724 = vpop.f32.mrf.mxu0
      %725 = vdwg.mxu0
      %726 = vmatpush.bf16.msra.mxu0 0
      %727 = vmatpush.bf16.msra.mxu0 0
      %728 = vmatpush.bf16.msra.mxu0 0
      %729 = vmatpush.bf16.msra.mxu0 0
      %730 = vmatpush.bf16.msra.mxu0 0
      %731 = vmatpush.bf16.msra.mxu0 0
      %732 = vmatpush.bf16.msra.mxu0 0
      %733 = vmatpush.bf16.msra.mxu0 %v660
      %734 = vmatmul.bf16.gmra.mxu0 %v645
      %v735 = vpop.f32.mrf.mxu0
      %v736 = vadd.f32 0.0, %v735
      %v737 = vpop.f32.mrf.mxu0
      %738 = vdwg.mxu0
      %739 = vmatpush.bf16.msra.mxu0 0
      %740 = vmatpush.bf16.msra.mxu0 0
      %741 = vmatpush.bf16.msra.mxu0 0
      %742 = vmatpush.bf16.msra.mxu0 0
      %743 = vmatpush.bf16.msra.mxu0 0
      %744 = vmatpush.bf16.msra.mxu0 0
      %745 = vmatpush.bf16.msra.mxu0 0
      %746 = vmatpush.bf16.msra.mxu0 %v663
      %747 = vmatmul.bf16.gmra.mxu0 %v645
      %v748 = vpop.f32.mrf.mxu0
      %v749 = vadd.f32 0.0, %v748
      %v750 = vpop.f32.mrf.mxu0
      %751 = vdwg.mxu0
      %752 = vmatpush.bf16.msra.mxu0 0
      %753 = vmatpush.bf16.msra.mxu0 0
      %754 = vmatpush.bf16.msra.mxu0 0
      %755 = vmatpush.bf16.msra.mxu0 0
      %756 = vmatpush.bf16.msra.mxu0 0
      %757 = vmatpush.bf16.msra.mxu0 0
      %758 = vmatpush.bf16.msra.mxu0 0
      %759 = vmatpush.bf16.msra.mxu0 %v666
      %760 = vmatmul.bf16.gmra.mxu0 %v645
      %v761 = vpop.f32.mrf.mxu0
      %v762 = vadd.f32 0.0, %v761
      %v763 = vpop.f32.mrf.mxu0
      %764 = vdwg.mxu0
      %765 = vmatpush.bf16.msra.mxu0 0
      %766 = vmatpush.bf16.msra.mxu0 0
      %767 = vmatpush.bf16.msra.mxu0 0
      %768 = vmatpush.bf16.msra.mxu0 0
      %769 = vmatpush.bf16.msra.mxu0 0
      %770 = vmatpush.bf16.msra.mxu0 0
      %771 = vmatpush.bf16.msra.mxu0 0
      %772 = vmatpush.bf16.msra.mxu0 %v669
      %773 = vmatmul.bf16.gmra.mxu0 %v645
      %v774 = vpop.f32.mrf.mxu0
      %v775 = vadd.f32 0.0, %v774
      %v776 = vpop.f32.mrf.mxu0
      %777 = vdwg.mxu0
      %778 = vmatpush.bf16.msra.mxu0 0
      %779 = vmatpush.bf16.msra.mxu0 0
      %780 = vmatpush.bf16.msra.mxu0 0
      %781 = vmatpush.bf16.msra.mxu0 0
      %782 = vmatpush.bf16.msra.mxu0 0
      %783 = vmatpush.bf16.msra.mxu0 0
      %784 = vmatpush.bf16.msra.mxu0 0
      %785 = vmatpush.bf16.msra.mxu0 %v672
      %786 = vmatmul.bf16.gmra.mxu0 %v645
      %v787 = vpop.f32.mrf.mxu0
      %v788 = vadd.f32 0.0, %v787
      %v789 = vpop.f32.mrf.mxu0
      %790 = vdwg.mxu0
      %v791 = vadd.f32 %v480, %v684
      %v792 = vadd.f32 %v493, %v697
      %v793 = vadd.f32 %v506, %v710
      %v794 = vadd.f32 %v519, %v723
      %v795 = vadd.f32 %v532, %v736
      %v796 = vadd.f32 %v545, %v749
      %v797 = vadd.f32 %v558, %v762
      %v798 = vadd.f32 %v571, %v775
      %v799 = vadd.f32 %v584, %v788
      %s800 = scalar_lea.vmem %s3, 4
      %v801 = vld [vmem:[%s800] sm:$0xf]
      %v802 = vld [vmem:[%s239] sm:$0xff]
      %v803 = vld [vmem:[%s239 + $0x8] sm:$0xff]
      %v804 = vld [vmem:[%s239 + $0x10] sm:$0x3]
      %806 = vst [vmem:[#allocation1] ss:$4 sm:$0xff] %v802
      %s808 = scalar_lea.vmem [#allocation1], 32
      %809 = vst [vmem:[%s808] ss:$4 sm:$0xff] %v803
      %v810 = vld.sshfl [vmem:[#allocation1] sm:$0xff pattern:$0x73625140]
      %v812 = vld.sshfl [vmem:[#allocation1 + $0x8] sm:$0xff pattern:$0x73625140]
      %v814 = vld.sshfl [vmem:[#allocation1 + $0x10] sm:$0xff pattern:$0x73625140]
      %v816 = vld.sshfl [vmem:[#allocation1 + $0x18] sm:$0xff pattern:$0x73625140]
      %v818 = vld.sshfl [vmem:[#allocation1 + $0x20] sm:$0xff pattern:$0x73625140]
      %v820 = vld.sshfl [vmem:[#allocation1 + $0x28] sm:$0xff pattern:$0x73625140]
      %v822 = vld.sshfl [vmem:[#allocation1 + $0x30] sm:$0xff pattern:$0x73625140]
      %v824 = vld.sshfl [vmem:[#allocation1 + $0x38] sm:$0xff pattern:$0x73625140]
      %827 = vst [vmem:[#allocation1] ss:$4 sm:$0xff] %v804
      %v828 = vld.sshfl [vmem:[#allocation1] sm:$0xff pattern:$0x73625140]
      %830 = vrot.lane.b32.xlu0 %v810, 127
      %v831 = vpop.permute.xlu0 %830
      %832 = vrot.lane.b32.xlu0 %v812, 127
      %v833 = vpop.permute.xlu0 %832
      %834 = vrot.lane.b32.xlu0 %v814, 127
      %v835 = vpop.permute.xlu0 %834
      %836 = vrot.lane.b32.xlu0 %v816, 127
      %v837 = vpop.permute.xlu0 %836
      %838 = vrot.lane.b32.xlu0 %v818, 127
      %v839 = vpop.permute.xlu0 %838
      %840 = vrot.lane.b32.xlu0 %v820, 127
      %v841 = vpop.permute.xlu0 %840
      %842 = vrot.lane.b32.xlu0 %v822, 127
      %v843 = vpop.permute.xlu0 %842
      %844 = vrot.lane.b32.xlu0 %v824, 127
      %v845 = vpop.permute.xlu0 %844
      %846 = vrot.lane.b32.xlu0 %v828, 127
      %v847 = vpop.permute.xlu0 %846
      %v848 = vsel %vm635, %v831, %v833
      %v849 = vsel %vm635, %v833, %v835
      %v850 = vsel %vm635, %v835, %v837
      %v851 = vsel %vm635, %v837, %v839
      %v852 = vsel %vm635, %v839, %v841
      %v853 = vsel %vm635, %v841, %v843
      %v854 = vsel %vm635, %v843, %v845
      %v855 = vsel %vm635, %v845, %v847
      %v857 = vsel %vm272, %v801, 0
      %v860 = vand.u32 %v848, %v279
      %v863 = vand.u32 %v849, %v279
      %v866 = vand.u32 %v850, %v279
      %v869 = vand.u32 %v851, %v279
      %v872 = vand.u32 %v852, %v279
      %v875 = vand.u32 %v853, %v279
      %v878 = vand.u32 %v854, %v279
      %v881 = vand.u32 %v855, %v279
      %v884 = vand.u32 %v847, %v279
      %886 = vmatpush.bf16.msra.mxu0 0
      %887 = vmatpush.bf16.msra.mxu0 0
      %888 = vmatpush.bf16.msra.mxu0 0
      %889 = vmatpush.bf16.msra.mxu0 0
      %890 = vmatpush.bf16.msra.mxu0 0
      %891 = vmatpush.bf16.msra.mxu0 0
      %892 = vmatpush.bf16.msra.mxu0 0
      %893 = vmatpush.bf16.msra.mxu0 %v860
      %894 = vmatmul.bf16.gmra.mxu0 %v857
      %v895 = vpop.f32.mrf.mxu0
      %v896 = vadd.f32 0.0, %v895
      %v897 = vpop.f32.mrf.mxu0
      %898 = vdwg.mxu0
      %899 = vmatpush.bf16.msra.mxu0 0
      %900 = vmatpush.bf16.msra.mxu0 0
      %901 = vmatpush.bf16.msra.mxu0 0
      %902 = vmatpush.bf16.msra.mxu0 0
      %903 = vmatpush.bf16.msra.mxu0 0
      %904 = vmatpush.bf16.msra.mxu0 0
      %905 = vmatpush.bf16.msra.mxu0 0
      %906 = vmatpush.bf16.msra.mxu0 %v863
      %907 = vmatmul.bf16.gmra.mxu0 %v857
      %v908 = vpop.f32.mrf.mxu0
      %v909 = vadd.f32 0.0, %v908
      %v910 = vpop.f32.mrf.mxu0
      %911 = vdwg.mxu0
      %912 = vmatpush.bf16.msra.mxu0 0
      %913 = vmatpush.bf16.msra.mxu0 0
      %914 = vmatpush.bf16.msra.mxu0 0
      %915 = vmatpush.bf16.msra.mxu0 0
      %916 = vmatpush.bf16.msra.mxu0 0
      %917 = vmatpush.bf16.msra.mxu0 0
      %918 = vmatpush.bf16.msra.mxu0 0
      %919 = vmatpush.bf16.msra.mxu0 %v866
      %920 = vmatmul.bf16.gmra.mxu0 %v857
      %v921 = vpop.f32.mrf.mxu0
      %v922 = vadd.f32 0.0, %v921
      %v923 = vpop.f32.mrf.mxu0
      %924 = vdwg.mxu0
      %925 = vmatpush.bf16.msra.mxu0 0
      %926 = vmatpush.bf16.msra.mxu0 0
      %927 = vmatpush.bf16.msra.mxu0 0
      %928 = vmatpush.bf16.msra.mxu0 0
      %929 = vmatpush.bf16.msra.mxu0 0
      %930 = vmatpush.bf16.msra.mxu0 0
      %931 = vmatpush.bf16.msra.mxu0 0
      %932 = vmatpush.bf16.msra.mxu0 %v869
      %933 = vmatmul.bf16.gmra.mxu0 %v857
      %v934 = vpop.f32.mrf.mxu0
      %v935 = vadd.f32 0.0, %v934
      %v936 = vpop.f32.mrf.mxu0
      %937 = vdwg.mxu0
      %938 = vmatpush.bf16.msra.mxu0 0
      %939 = vmatpush.bf16.msra.mxu0 0
      %940 = vmatpush.bf16.msra.mxu0 0
      %941 = vmatpush.bf16.msra.mxu0 0
      %942 = vmatpush.bf16.msra.mxu0 0
      %943 = vmatpush.bf16.msra.mxu0 0
      %944 = vmatpush.bf16.msra.mxu0 0
      %945 = vmatpush.bf16.msra.mxu0 %v872
      %946 = vmatmul.bf16.gmra.mxu0 %v857
      %v947 = vpop.f32.mrf.mxu0
      %v948 = vadd.f32 0.0, %v947
      %v949 = vpop.f32.mrf.mxu0
      %950 = vdwg.mxu0
      %951 = vmatpush.bf16.msra.mxu0 0
      %952 = vmatpush.bf16.msra.mxu0 0
      %953 = vmatpush.bf16.msra.mxu0 0
      %954 = vmatpush.bf16.msra.mxu0 0
      %955 = vmatpush.bf16.msra.mxu0 0
      %956 = vmatpush.bf16.msra.mxu0 0
      %957 = vmatpush.bf16.msra.mxu0 0
      %958 = vmatpush.bf16.msra.mxu0 %v875
      %959 = vmatmul.bf16.gmra.mxu0 %v857
      %v960 = vpop.f32.mrf.mxu0
      %v961 = vadd.f32 0.0, %v960
      %v962 = vpop.f32.mrf.mxu0
      %963 = vdwg.mxu0
      %964 = vmatpush.bf16.msra.mxu0 0
      %965 = vmatpush.bf16.msra.mxu0 0
      %966 = vmatpush.bf16.msra.mxu0 0
      %967 = vmatpush.bf16.msra.mxu0 0
      %968 = vmatpush.bf16.msra.mxu0 0
      %969 = vmatpush.bf16.msra.mxu0 0
      %970 = vmatpush.bf16.msra.mxu0 0
      %971 = vmatpush.bf16.msra.mxu0 %v878
      %972 = vmatmul.bf16.gmra.mxu0 %v857
      %v973 = vpop.f32.mrf.mxu0
      %v974 = vadd.f32 0.0, %v973
      %v975 = vpop.f32.mrf.mxu0
      %976 = vdwg.mxu0
      %977 = vmatpush.bf16.msra.mxu0 0
      %978 = vmatpush.bf16.msra.mxu0 0
      %979 = vmatpush.bf16.msra.mxu0 0
      %980 = vmatpush.bf16.msra.mxu0 0
      %981 = vmatpush.bf16.msra.mxu0 0
      %982 = vmatpush.bf16.msra.mxu0 0
      %983 = vmatpush.bf16.msra.mxu0 0
      %984 = vmatpush.bf16.msra.mxu0 %v881
      %985 = vmatmul.bf16.gmra.mxu0 %v857
      %v986 = vpop.f32.mrf.mxu0
      %v987 = vadd.f32 0.0, %v986
      %v988 = vpop.f32.mrf.mxu0
      %989 = vdwg.mxu0
      %990 = vmatpush.bf16.msra.mxu0 0
      %991 = vmatpush.bf16.msra.mxu0 0
      %992 = vmatpush.bf16.msra.mxu0 0
      %993 = vmatpush.bf16.msra.mxu0 0
      %994 = vmatpush.bf16.msra.mxu0 0
      %995 = vmatpush.bf16.msra.mxu0 0
      %996 = vmatpush.bf16.msra.mxu0 0
      %997 = vmatpush.bf16.msra.mxu0 %v884
      %998 = vmatmul.bf16.gmra.mxu0 %v857
      %v999 = vpop.f32.mrf.mxu0
      %v1000 = vadd.f32 0.0, %v999
      %v1001 = vpop.f32.mrf.mxu0
      %1002 = vdwg.mxu0
      %v1003 = vadd.f32 %v791, %v896
      %v1004 = vadd.f32 %v792, %v909
      %v1005 = vadd.f32 %v793, %v922
      %v1006 = vadd.f32 %v794, %v935
      %v1007 = vadd.f32 %v795, %v948
      %v1008 = vadd.f32 %v796, %v961
      %v1009 = vadd.f32 %v797, %v974
      %v1010 = vadd.f32 %v798, %v987
      %v1011 = vadd.f32 %v799, %v1000
      %s1012 = scalar_lea.vmem %s2, 8
      %v1013 = vld [vmem:[%s1012] sm:$0xf]
      %v1014 = vld [vmem:[%s234] sm:$0xff]
      %v1015 = vld [vmem:[%s234 + $0x8] sm:$0xff]
      %v1016 = vld [vmem:[%s234 + $0x10] sm:$0xff]
      %v1017 = vld [vmem:[%s234 + $0x18] sm:$0xff]
      %v1018 = vld [vmem:[%s234 + $0x20] sm:$0xf]
      %v1024 = vunpack.c.l.b16 %v1014
      %v1025 = vunpack.c.h.b16 %v1014
      %v1026 = vunpack.c.l.b16 %v1015
      %v1027 = vunpack.c.h.b16 %v1015
      %v1028 = vunpack.c.l.b16 %v1016
      %v1029 = vunpack.c.h.b16 %v1016
      %v1030 = vunpack.c.l.b16 %v1017
      %v1031 = vunpack.c.h.b16 %v1017
      %v1032 = vunpack.c.l.b16 %v1018
      %v1033 = vpack.c.b16 %v1024, %v1024
      %v1034 = vpack.c.b16 %v1025, %v1025
      %v1035 = vpack.c.b16 %v1026, %v1026
      %v1036 = vpack.c.b16 %v1027, %v1027
      %v1037 = vpack.c.b16 %v1028, %v1028
      %v1038 = vpack.c.b16 %v1029, %v1029
      %v1039 = vpack.c.b16 %v1030, %v1030
      %v1040 = vpack.c.b16 %v1031, %v1031
      %v1041 = vpack.c.b16 %v1032, %v1032
      %1042 = vrot.lane.b32.xlu0 %v1033, 126
      %v1043 = vpop.permute.xlu0 %1042
      %1044 = vrot.lane.b32.xlu0 %v1034, 126
      %v1045 = vpop.permute.xlu0 %1044
      %1046 = vrot.lane.b32.xlu0 %v1035, 126
      %v1047 = vpop.permute.xlu0 %1046
      %1048 = vrot.lane.b32.xlu0 %v1036, 126
      %v1049 = vpop.permute.xlu0 %1048
      %1050 = vrot.lane.b32.xlu0 %v1037, 126
      %v1051 = vpop.permute.xlu0 %1050
      %1052 = vrot.lane.b32.xlu0 %v1038, 126
      %v1053 = vpop.permute.xlu0 %1052
      %1054 = vrot.lane.b32.xlu0 %v1039, 126
      %v1055 = vpop.permute.xlu0 %1054
      %1056 = vrot.lane.b32.xlu0 %v1040, 126
      %v1057 = vpop.permute.xlu0 %1056
      %1058 = vrot.lane.b32.xlu0 %v1041, 126
      %v1059 = vpop.permute.xlu0 %1058
      %vm1060 = vcmask 1031168
      %v1061 = vsel %vm1060, %v1043, %v1045
      %v1062 = vsel %vm1060, %v1045, %v1047
      %v1063 = vsel %vm1060, %v1047, %v1049
      %v1064 = vsel %vm1060, %v1049, %v1051
      %v1065 = vsel %vm1060, %v1051, %v1053
      %v1066 = vsel %vm1060, %v1053, %v1055
      %v1067 = vsel %vm1060, %v1055, %v1057
      %v1068 = vsel %vm1060, %v1057, %v1059
      %v1070 = vsel %vm438, %v1013, 0
      %v1073 = vsel %vm442, %v1061, 0
      %v1076 = vsel %vm442, %v1062, 0
      %v1079 = vsel %vm442, %v1063, 0
      %v1082 = vsel %vm442, %v1064, 0
      %v1085 = vsel %vm442, %v1065, 0
      %v1088 = vsel %vm442, %v1066, 0
      %v1091 = vsel %vm442, %v1067, 0
      %v1094 = vsel %vm442, %v1068, 0
      %v1097 = vsel %vm442, %v1059, 0
      %1099 = vmatpush.bf16.msra.mxu0 0
      %1100 = vmatpush.bf16.msra.mxu0 0
      %1101 = vmatpush.bf16.msra.mxu0 0
      %1102 = vmatpush.bf16.msra.mxu0 0
      %1103 = vmatpush.bf16.msra.mxu0 0
      %1104 = vmatpush.bf16.msra.mxu0 0
      %1105 = vmatpush.bf16.msra.mxu0 0
      %1106 = vmatpush.bf16.msra.mxu0 %v1073
      %1107 = vmatmul.bf16.gmra.mxu0 %v1070
      %v1108 = vpop.f32.mrf.mxu0
      %v1109 = vadd.f32 0.0, %v1108
      %v1110 = vpop.f32.mrf.mxu0
      %1111 = vdwg.mxu0
      %1112 = vmatpush.bf16.msra.mxu0 0
      %1113 = vmatpush.bf16.msra.mxu0 0
      %1114 = vmatpush.bf16.msra.mxu0 0
      %1115 = vmatpush.bf16.msra.mxu0 0
      %1116 = vmatpush.bf16.msra.mxu0 0
      %1117 = vmatpush.bf16.msra.mxu0 0
      %1118 = vmatpush.bf16.msra.mxu0 0
      %1119 = vmatpush.bf16.msra.mxu0 %v1076
      %1120 = vmatmul.bf16.gmra.mxu0 %v1070
      %v1121 = vpop.f32.mrf.mxu0
      %v1122 = vadd.f32 0.0, %v1121
      %v1123 = vpop.f32.mrf.mxu0
      %1124 = vdwg.mxu0
      %1125 = vmatpush.bf16.msra.mxu0 0
      %1126 = vmatpush.bf16.msra.mxu0 0
      %1127 = vmatpush.bf16.msra.mxu0 0
      %1128 = vmatpush.bf16.msra.mxu0 0
      %1129 = vmatpush.bf16.msra.mxu0 0
      %1130 = vmatpush.bf16.msra.mxu0 0
      %1131 = vmatpush.bf16.msra.mxu0 0
      %1132 = vmatpush.bf16.msra.mxu0 %v1079
      %1133 = vmatmul.bf16.gmra.mxu0 %v1070
      %v1134 = vpop.f32.mrf.mxu0
      %v1135 = vadd.f32 0.0, %v1134
      %v1136 = vpop.f32.mrf.mxu0
      %1137 = vdwg.mxu0
      %1138 = vmatpush.bf16.msra.mxu0 0
      %1139 = vmatpush.bf16.msra.mxu0 0
      %1140 = vmatpush.bf16.msra.mxu0 0
      %1141 = vmatpush.bf16.msra.mxu0 0
      %1142 = vmatpush.bf16.msra.mxu0 0
      %1143 = vmatpush.bf16.msra.mxu0 0
      %1144 = vmatpush.bf16.msra.mxu0 0
      %1145 = vmatpush.bf16.msra.mxu0 %v1082
      %1146 = vmatmul.bf16.gmra.mxu0 %v1070
      %v1147 = vpop.f32.mrf.mxu0
      %v1148 = vadd.f32 0.0, %v1147
      %v1149 = vpop.f32.mrf.mxu0
      %1150 = vdwg.mxu0
      %1151 = vmatpush.bf16.msra.mxu0 0
      %1152 = vmatpush.bf16.msra.mxu0 0
      %1153 = vmatpush.bf16.msra.mxu0 0
      %1154 = vmatpush.bf16.msra.mxu0 0
      %1155 = vmatpush.bf16.msra.mxu0 0
      %1156 = vmatpush.bf16.msra.mxu0 0
      %1157 = vmatpush.bf16.msra.mxu0 0
      %1158 = vmatpush.bf16.msra.mxu0 %v1085
      %1159 = vmatmul.bf16.gmra.mxu0 %v1070
      %v1160 = vpop.f32.mrf.mxu0
      %v1161 = vadd.f32 0.0, %v1160
      %v1162 = vpop.f32.mrf.mxu0
      %1163 = vdwg.mxu0
      %1164 = vmatpush.bf16.msra.mxu0 0
      %1165 = vmatpush.bf16.msra.mxu0 0
      %1166 = vmatpush.bf16.msra.mxu0 0
      %1167 = vmatpush.bf16.msra.mxu0 0
      %1168 = vmatpush.bf16.msra.mxu0 0
      %1169 = vmatpush.bf16.msra.mxu0 0
      %1170 = vmatpush.bf16.msra.mxu0 0
      %1171 = vmatpush.bf16.msra.mxu0 %v1088
      %1172 = vmatmul.bf16.gmra.mxu0 %v1070
      %v1173 = vpop.f32.mrf.mxu0
      %v1174 = vadd.f32 0.0, %v1173
      %v1175 = vpop.f32.mrf.mxu0
      %1176 = vdwg.mxu0
      %1177 = vmatpush.bf16.msra.mxu0 0
      %1178 = vmatpush.bf16.msra.mxu0 0
      %1179 = vmatpush.bf16.msra.mxu0 0
      %1180 = vmatpush.bf16.msra.mxu0 0
      %1181 = vmatpush.bf16.msra.mxu0 0
      %1182 = vmatpush.bf16.msra.mxu0 0
      %1183 = vmatpush.bf16.msra.mxu0 0
      %1184 = vmatpush.bf16.msra.mxu0 %v1091
      %1185 = vmatmul.bf16.gmra.mxu0 %v1070
      %v1186 = vpop.f32.mrf.mxu0
      %v1187 = vadd.f32 0.0, %v1186
      %v1188 = vpop.f32.mrf.mxu0
      %1189 = vdwg.mxu0
      %1190 = vmatpush.bf16.msra.mxu0 0
      %1191 = vmatpush.bf16.msra.mxu0 0
      %1192 = vmatpush.bf16.msra.mxu0 0
      %1193 = vmatpush.bf16.msra.mxu0 0
      %1194 = vmatpush.bf16.msra.mxu0 0
      %1195 = vmatpush.bf16.msra.mxu0 0
      %1196 = vmatpush.bf16.msra.mxu0 0
      %1197 = vmatpush.bf16.msra.mxu0 %v1094
      %1198 = vmatmul.bf16.gmra.mxu0 %v1070
      %v1199 = vpop.f32.mrf.mxu0
      %v1200 = vadd.f32 0.0, %v1199
      %v1201 = vpop.f32.mrf.mxu0
      %1202 = vdwg.mxu0
      %1203 = vmatpush.bf16.msra.mxu0 0
      %1204 = vmatpush.bf16.msra.mxu0 0
      %1205 = vmatpush.bf16.msra.mxu0 0
      %1206 = vmatpush.bf16.msra.mxu0 0
      %1207 = vmatpush.bf16.msra.mxu0 0
      %1208 = vmatpush.bf16.msra.mxu0 0
      %1209 = vmatpush.bf16.msra.mxu0 0
      %1210 = vmatpush.bf16.msra.mxu0 %v1097
      %1211 = vmatmul.bf16.gmra.mxu0 %v1070
      %v1212 = vpop.f32.mrf.mxu0
      %v1213 = vadd.f32 0.0, %v1212
      %v1214 = vpop.f32.mrf.mxu0
      %1215 = vdwg.mxu0
      %v1216 = vadd.f32 %v1003, %v1109
      %v1217 = vadd.f32 %v1004, %v1122
      %v1218 = vadd.f32 %v1005, %v1135
      %v1219 = vadd.f32 %v1006, %v1148
      %v1220 = vadd.f32 %v1007, %v1161
      %v1221 = vadd.f32 %v1008, %v1174
      %v1222 = vadd.f32 %v1009, %v1187
      %v1223 = vadd.f32 %v1010, %v1200
      %v1224 = vadd.f32 %v1011, %v1213
      %s1225 = scalar_lea.vmem %s3, 8
      %v1226 = vld [vmem:[%s1225] sm:$0xf]
      %v1227 = vld [vmem:[%s239] sm:$0xff]
      %v1228 = vld [vmem:[%s239 + $0x8] sm:$0xff]
      %v1229 = vld [vmem:[%s239 + $0x10] sm:$0x3]
      %1231 = vst [vmem:[#allocation1] ss:$4 sm:$0xff] %v1227
      %s1233 = scalar_lea.vmem [#allocation1], 32
      %1234 = vst [vmem:[%s1233] ss:$4 sm:$0xff] %v1228
      %v1235 = vld.sshfl [vmem:[#allocation1] sm:$0xff pattern:$0x73625140]
      %v1237 = vld.sshfl [vmem:[#allocation1 + $0x8] sm:$0xff pattern:$0x73625140]
      %v1239 = vld.sshfl [vmem:[#allocation1 + $0x10] sm:$0xff pattern:$0x73625140]
      %v1241 = vld.sshfl [vmem:[#allocation1 + $0x18] sm:$0xff pattern:$0x73625140]
      %v1243 = vld.sshfl [vmem:[#allocation1 + $0x20] sm:$0xff pattern:$0x73625140]
      %v1245 = vld.sshfl [vmem:[#allocation1 + $0x28] sm:$0xff pattern:$0x73625140]
      %v1247 = vld.sshfl [vmem:[#allocation1 + $0x30] sm:$0xff pattern:$0x73625140]
      %v1249 = vld.sshfl [vmem:[#allocation1 + $0x38] sm:$0xff pattern:$0x73625140]
      %1252 = vst [vmem:[#allocation1] ss:$4 sm:$0xff] %v1229
      %v1253 = vld.sshfl [vmem:[#allocation1] sm:$0xff pattern:$0x73625140]
      %1255 = vrot.lane.b32.xlu0 %v1235, 126
      %v1256 = vpop.permute.xlu0 %1255
      %1257 = vrot.lane.b32.xlu0 %v1237, 126
      %v1258 = vpop.permute.xlu0 %1257
      %1259 = vrot.lane.b32.xlu0 %v1239, 126
      %v1260 = vpop.permute.xlu0 %1259
      %1261 = vrot.lane.b32.xlu0 %v1241, 126
      %v1262 = vpop.permute.xlu0 %1261
      %1263 = vrot.lane.b32.xlu0 %v1243, 126
      %v1264 = vpop.permute.xlu0 %1263
      %1265 = vrot.lane.b32.xlu0 %v1245, 126
      %v1266 = vpop.permute.xlu0 %1265
      %1267 = vrot.lane.b32.xlu0 %v1247, 126
      %v1268 = vpop.permute.xlu0 %1267
      %1269 = vrot.lane.b32.xlu0 %v1249, 126
      %v1270 = vpop.permute.xlu0 %1269
      %1271 = vrot.lane.b32.xlu0 %v1253, 126
      %v1272 = vpop.permute.xlu0 %1271
      %v1273 = vsel %vm1060, %v1256, %v1258
      %v1274 = vsel %vm1060, %v1258, %v1260
      %v1275 = vsel %vm1060, %v1260, %v1262
      %v1276 = vsel %vm1060, %v1262, %v1264
      %v1277 = vsel %vm1060, %v1264, %v1266
      %v1278 = vsel %vm1060, %v1266, %v1268
      %v1279 = vsel %vm1060, %v1268, %v1270
      %v1280 = vsel %vm1060, %v1270, %v1272
      %v1282 = vsel %vm272, %v1226, 0
      %v1285 = vand.u32 %v1273, %v279
      %v1288 = vand.u32 %v1274, %v279
      %v1291 = vand.u32 %v1275, %v279
      %v1294 = vand.u32 %v1276, %v279
      %v1297 = vand.u32 %v1277, %v279
      %v1300 = vand.u32 %v1278, %v279
      %v1303 = vand.u32 %v1279, %v279
      %v1306 = vand.u32 %v1280, %v279
      %v1309 = vand.u32 %v1272, %v279
      %1311 = vmatpush.bf16.msra.mxu0 0
      %1312 = vmatpush.bf16.msra.mxu0 0
      %1313 = vmatpush.bf16.msra.mxu0 0
      %1314 = vmatpush.bf16.msra.mxu0 0
      %1315 = vmatpush.bf16.msra.mxu0 0
      %1316 = vmatpush.bf16.msra.mxu0 0
      %1317 = vmatpush.bf16.msra.mxu0 0
      %1318 = vmatpush.bf16.msra.mxu0 %v1285
      %1319 = vmatmul.bf16.gmra.mxu0 %v1282
      %v1320 = vpop.f32.mrf.mxu0
      %v1321 = vadd.f32 0.0, %v1320
      %v1322 = vpop.f32.mrf.mxu0
      %1323 = vdwg.mxu0
      %1324 = vmatpush.bf16.msra.mxu0 0
      %1325 = vmatpush.bf16.msra.mxu0 0
      %1326 = vmatpush.bf16.msra.mxu0 0
      %1327 = vmatpush.bf16.msra.mxu0 0
      %1328 = vmatpush.bf16.msra.mxu0 0
      %1329 = vmatpush.bf16.msra.mxu0 0
      %1330 = vmatpush.bf16.msra.mxu0 0
      %1331 = vmatpush.bf16.msra.mxu0 %v1288
      %1332 = vmatmul.bf16.gmra.mxu0 %v1282
      %v1333 = vpop.f32.mrf.mxu0
      %v1334 = vadd.f32 0.0, %v1333
      %v1335 = vpop.f32.mrf.mxu0
      %1336 = vdwg.mxu0
      %1337 = vmatpush.bf16.msra.mxu0 0
      %1338 = vmatpush.bf16.msra.mxu0 0
      %1339 = vmatpush.bf16.msra.mxu0 0
      %1340 = vmatpush.bf16.msra.mxu0 0
      %1341 = vmatpush.bf16.msra.mxu0 0
      %1342 = vmatpush.bf16.msra.mxu0 0
      %1343 = vmatpush.bf16.msra.mxu0 0
      %1344 = vmatpush.bf16.msra.mxu0 %v1291
      %1345 = vmatmul.bf16.gmra.mxu0 %v1282
      %v1346 = vpop.f32.mrf.mxu0
      %v1347 = vadd.f32 0.0, %v1346
      %v1348 = vpop.f32.mrf.mxu0
      %1349 = vdwg.mxu0
      %1350 = vmatpush.bf16.msra.mxu0 0
      %1351 = vmatpush.bf16.msra.mxu0 0
      %1352 = vmatpush.bf16.msra.mxu0 0
      %1353 = vmatpush.bf16.msra.mxu0 0
      %1354 = vmatpush.bf16.msra.mxu0 0
      %1355 = vmatpush.bf16.msra.mxu0 0
      %1356 = vmatpush.bf16.msra.mxu0 0
      %1357 = vmatpush.bf16.msra.mxu0 %v1294
      %1358 = vmatmul.bf16.gmra.mxu0 %v1282
      %v1359 = vpop.f32.mrf.mxu0
      %v1360 = vadd.f32 0.0, %v1359
      %v1361 = vpop.f32.mrf.mxu0
      %1362 = vdwg.mxu0
      %1363 = vmatpush.bf16.msra.mxu0 0
      %1364 = vmatpush.bf16.msra.mxu0 0
      %1365 = vmatpush.bf16.msra.mxu0 0
      %1366 = vmatpush.bf16.msra.mxu0 0
      %1367 = vmatpush.bf16.msra.mxu0 0
      %1368 = vmatpush.bf16.msra.mxu0 0
      %1369 = vmatpush.bf16.msra.mxu0 0
      %1370 = vmatpush.bf16.msra.mxu0 %v1297
      %1371 = vmatmul.bf16.gmra.mxu0 %v1282
      %v1372 = vpop.f32.mrf.mxu0
      %v1373 = vadd.f32 0.0, %v1372
      %v1374 = vpop.f32.mrf.mxu0
      %1375 = vdwg.mxu0
      %1376 = vmatpush.bf16.msra.mxu0 0
      %1377 = vmatpush.bf16.msra.mxu0 0
      %1378 = vmatpush.bf16.msra.mxu0 0
      %1379 = vmatpush.bf16.msra.mxu0 0
      %1380 = vmatpush.bf16.msra.mxu0 0
      %1381 = vmatpush.bf16.msra.mxu0 0
      %1382 = vmatpush.bf16.msra.mxu0 0
      %1383 = vmatpush.bf16.msra.mxu0 %v1300
      %1384 = vmatmul.bf16.gmra.mxu0 %v1282
      %v1385 = vpop.f32.mrf.mxu0
      %v1386 = vadd.f32 0.0, %v1385
      %v1387 = vpop.f32.mrf.mxu0
      %1388 = vdwg.mxu0
      %1389 = vmatpush.bf16.msra.mxu0 0
      %1390 = vmatpush.bf16.msra.mxu0 0
      %1391 = vmatpush.bf16.msra.mxu0 0
      %1392 = vmatpush.bf16.msra.mxu0 0
      %1393 = vmatpush.bf16.msra.mxu0 0
      %1394 = vmatpush.bf16.msra.mxu0 0
      %1395 = vmatpush.bf16.msra.mxu0 0
      %1396 = vmatpush.bf16.msra.mxu0 %v1303
      %1397 = vmatmul.bf16.gmra.mxu0 %v1282
      %v1398 = vpop.f32.mrf.mxu0
      %v1399 = vadd.f32 0.0, %v1398
      %v1400 = vpop.f32.mrf.mxu0
      %1401 = vdwg.mxu0
      %1402 = vmatpush.bf16.msra.mxu0 0
      %1403 = vmatpush.bf16.msra.mxu0 0
      %1404 = vmatpush.bf16.msra.mxu0 0
      %1405 = vmatpush.bf16.msra.mxu0 0
      %1406 = vmatpush.bf16.msra.mxu0 0
      %1407 = vmatpush.bf16.msra.mxu0 0
      %1408 = vmatpush.bf16.msra.mxu0 0
      %1409 = vmatpush.bf16.msra.mxu0 %v1306
      %1410 = vmatmul.bf16.gmra.mxu0 %v1282
      %v1411 = vpop.f32.mrf.mxu0
      %v1412 = vadd.f32 0.0, %v1411
      %v1413 = vpop.f32.mrf.mxu0
      %1414 = vdwg.mxu0
      %1415 = vmatpush.bf16.msra.mxu0 0
      %1416 = vmatpush.bf16.msra.mxu0 0
      %1417 = vmatpush.bf16.msra.mxu0 0
      %1418 = vmatpush.bf16.msra.mxu0 0
      %1419 = vmatpush.bf16.msra.mxu0 0
      %1420 = vmatpush.bf16.msra.mxu0 0
      %1421 = vmatpush.bf16.msra.mxu0 0
      %1422 = vmatpush.bf16.msra.mxu0 %v1309
      %1423 = vmatmul.bf16.gmra.mxu0 %v1282
      %v1424 = vpop.f32.mrf.mxu0
      %v1425 = vadd.f32 0.0, %v1424
      %v1426 = vpop.f32.mrf.mxu0
      %1427 = vdwg.mxu0
      %v1428 = vadd.f32 %v1216, %v1321
      %v1429 = vadd.f32 %v1217, %v1334
      %v1430 = vadd.f32 %v1218, %v1347
      %v1431 = vadd.f32 %v1219, %v1360
      %v1432 = vadd.f32 %v1220, %v1373
      %v1433 = vadd.f32 %v1221, %v1386
      %v1434 = vadd.f32 %v1222, %v1399
      %v1435 = vadd.f32 %v1223, %v1412
      %v1436 = vadd.f32 %v1224, %v1425
      %s1437 = scalar_lea.vmem %s2, 12
      %v1438 = vld [vmem:[%s1437] sm:$0xf]
      %v1439 = vld [vmem:[%s234] sm:$0xff]
      %v1440 = vld [vmem:[%s234 + $0x8] sm:$0xff]
      %v1441 = vld [vmem:[%s234 + $0x10] sm:$0xff]
      %v1442 = vld [vmem:[%s234 + $0x18] sm:$0xff]
      %v1443 = vld [vmem:[%s234 + $0x20] sm:$0xf]
      %v1449 = vunpack.c.l.b16 %v1439
      %v1450 = vunpack.c.h.b16 %v1439
      %v1451 = vunpack.c.l.b16 %v1440
      %v1452 = vunpack.c.h.b16 %v1440
      %v1453 = vunpack.c.l.b16 %v1441
      %v1454 = vunpack.c.h.b16 %v1441
      %v1455 = vunpack.c.l.b16 %v1442
      %v1456 = vunpack.c.h.b16 %v1442
      %v1457 = vunpack.c.l.b16 %v1443
      %v1458 = vpack.c.b16 %v1449, %v1449
      %v1459 = vpack.c.b16 %v1450, %v1450
      %v1460 = vpack.c.b16 %v1451, %v1451
      %v1461 = vpack.c.b16 %v1452, %v1452
      %v1462 = vpack.c.b16 %v1453, %v1453
      %v1463 = vpack.c.b16 %v1454, %v1454
      %v1464 = vpack.c.b16 %v1455, %v1455
      %v1465 = vpack.c.b16 %v1456, %v1456
      %v1466 = vpack.c.b16 %v1457, %v1457
      %1467 = vrot.lane.b32.xlu0 %v1458, 94
      %v1468 = vpop.permute.xlu0 %1467
      %1469 = vrot.lane.b32.xlu0 %v1459, 94
      %v1470 = vpop.permute.xlu0 %1469
      %1471 = vrot.lane.b32.xlu0 %v1460, 94
      %v1472 = vpop.permute.xlu0 %1471
      %1473 = vrot.lane.b32.xlu0 %v1461, 94
      %v1474 = vpop.permute.xlu0 %1473
      %1475 = vrot.lane.b32.xlu0 %v1462, 94
      %v1476 = vpop.permute.xlu0 %1475
      %1477 = vrot.lane.b32.xlu0 %v1463, 94
      %v1478 = vpop.permute.xlu0 %1477
      %1479 = vrot.lane.b32.xlu0 %v1464, 94
      %v1480 = vpop.permute.xlu0 %1479
      %1481 = vrot.lane.b32.xlu0 %v1465, 94
      %v1482 = vpop.permute.xlu0 %1481
      %1483 = vrot.lane.b32.xlu0 %v1466, 94
      %v1484 = vpop.permute.xlu0 %1483
      %vm1485 = vcmask 769024
      %v1486 = vsel %vm1485, %v1468, %v1470
      %v1487 = vsel %vm1485, %v1470, %v1472
      %v1488 = vsel %vm1485, %v1472, %v1474
      %v1489 = vsel %vm1485, %v1474, %v1476
      %v1490 = vsel %vm1485, %v1476, %v1478
      %v1491 = vsel %vm1485, %v1478, %v1480
      %v1492 = vsel %vm1485, %v1480, %v1482
      %v1493 = vsel %vm1485, %v1482, %v1484
      %v1495 = vsel %vm438, %v1438, 0
      %v1498 = vsel %vm442, %v1486, 0
      %v1501 = vsel %vm442, %v1487, 0
      %v1504 = vsel %vm442, %v1488, 0
      %v1507 = vsel %vm442, %v1489, 0
      %v1510 = vsel %vm442, %v1490, 0
      %v1513 = vsel %vm442, %v1491, 0
      %v1516 = vsel %vm442, %v1492, 0
      %v1519 = vsel %vm442, %v1493, 0
      %v1522 = vsel %vm442, %v1484, 0
      %1524 = vmatpush.bf16.msra.mxu0 0
      %1525 = vmatpush.bf16.msra.mxu0 0
      %1526 = vmatpush.bf16.msra.mxu0 0
      %1527 = vmatpush.bf16.msra.mxu0 0
      %1528 = vmatpush.bf16.msra.mxu0 0
      %1529 = vmatpush.bf16.msra.mxu0 0
      %1530 = vmatpush.bf16.msra.mxu0 0
      %1531 = vmatpush.bf16.msra.mxu0 %v1498
      %1532 = vmatmul.bf16.gmra.mxu0 %v1495
      %v1533 = vpop.f32.mrf.mxu0
      %v1534 = vadd.f32 0.0, %v1533
      %v1535 = vpop.f32.mrf.mxu0
      %1536 = vdwg.mxu0
      %1537 = vmatpush.bf16.msra.mxu0 0
      %1538 = vmatpush.bf16.msra.mxu0 0
      %1539 = vmatpush.bf16.msra.mxu0 0
      %1540 = vmatpush.bf16.msra.mxu0 0
      %1541 = vmatpush.bf16.msra.mxu0 0
      %1542 = vmatpush.bf16.msra.mxu0 0
      %1543 = vmatpush.bf16.msra.mxu0 0
      %1544 = vmatpush.bf16.msra.mxu0 %v1501
      %1545 = vmatmul.bf16.gmra.mxu0 %v1495
      %v1546 = vpop.f32.mrf.mxu0
      %v1547 = vadd.f32 0.0, %v1546
      %v1548 = vpop.f32.mrf.mxu0
      %1549 = vdwg.mxu0
      %1550 = vmatpush.bf16.msra.mxu0 0
      %1551 = vmatpush.bf16.msra.mxu0 0
      %1552 = vmatpush.bf16.msra.mxu0 0
      %1553 = vmatpush.bf16.msra.mxu0 0
      %1554 = vmatpush.bf16.msra.mxu0 0
      %1555 = vmatpush.bf16.msra.mxu0 0
      %1556 = vmatpush.bf16.msra.mxu0 0
      %1557 = vmatpush.bf16.msra.mxu0 %v1504
      %1558 = vmatmul.bf16.gmra.mxu0 %v1495
      %v1559 = vpop.f32.mrf.mxu0
      %v1560 = vadd.f32 0.0, %v1559
      %v1561 = vpop.f32.mrf.mxu0
      %1562 = vdwg.mxu0
      %1563 = vmatpush.bf16.msra.mxu0 0
      %1564 = vmatpush.bf16.msra.mxu0 0
      %1565 = vmatpush.bf16.msra.mxu0 0
      %1566 = vmatpush.bf16.msra.mxu0 0
      %1567 = vmatpush.bf16.msra.mxu0 0
      %1568 = vmatpush.bf16.msra.mxu0 0
      %1569 = vmatpush.bf16.msra.mxu0 0
      %1570 = vmatpush.bf16.msra.mxu0 %v1507
      %1571 = vmatmul.bf16.gmra.mxu0 %v1495
      %v1572 = vpop.f32.mrf.mxu0
      %v1573 = vadd.f32 0.0, %v1572
      %v1574 = vpop.f32.mrf.mxu0
      %1575 = vdwg.mxu0
      %1576 = vmatpush.bf16.msra.mxu0 0
      %1577 = vmatpush.bf16.msra.mxu0 0
      %1578 = vmatpush.bf16.msra.mxu0 0
      %1579 = vmatpush.bf16.msra.mxu0 0
      %1580 = vmatpush.bf16.msra.mxu0 0
      %1581 = vmatpush.bf16.msra.mxu0 0
      %1582 = vmatpush.bf16.msra.mxu0 0
      %1583 = vmatpush.bf16.msra.mxu0 %v1510
      %1584 = vmatmul.bf16.gmra.mxu0 %v1495
      %v1585 = vpop.f32.mrf.mxu0
      %v1586 = vadd.f32 0.0, %v1585
      %v1587 = vpop.f32.mrf.mxu0
      %1588 = vdwg.mxu0
      %1589 = vmatpush.bf16.msra.mxu0 0
      %1590 = vmatpush.bf16.msra.mxu0 0
      %1591 = vmatpush.bf16.msra.mxu0 0
      %1592 = vmatpush.bf16.msra.mxu0 0
      %1593 = vmatpush.bf16.msra.mxu0 0
      %1594 = vmatpush.bf16.msra.mxu0 0
      %1595 = vmatpush.bf16.msra.mxu0 0
      %1596 = vmatpush.bf16.msra.mxu0 %v1513
      %1597 = vmatmul.bf16.gmra.mxu0 %v1495
      %v1598 = vpop.f32.mrf.mxu0
      %v1599 = vadd.f32 0.0, %v1598
      %v1600 = vpop.f32.mrf.mxu0
      %1601 = vdwg.mxu0
      %1602 = vmatpush.bf16.msra.mxu0 0
      %1603 = vmatpush.bf16.msra.mxu0 0
      %1604 = vmatpush.bf16.msra.mxu0 0
      %1605 = vmatpush.bf16.msra.mxu0 0
      %1606 = vmatpush.bf16.msra.mxu0 0
      %1607 = vmatpush.bf16.msra.mxu0 0
      %1608 = vmatpush.bf16.msra.mxu0 0
      %1609 = vmatpush.bf16.msra.mxu0 %v1516
      %1610 = vmatmul.bf16.gmra.mxu0 %v1495
      %v1611 = vpop.f32.mrf.mxu0
      %v1612 = vadd.f32 0.0, %v1611
      %v1613 = vpop.f32.mrf.mxu0
      %1614 = vdwg.mxu0
      %1615 = vmatpush.bf16.msra.mxu0 0
      %1616 = vmatpush.bf16.msra.mxu0 0
      %1617 = vmatpush.bf16.msra.mxu0 0
      %1618 = vmatpush.bf16.msra.mxu0 0
      %1619 = vmatpush.bf16.msra.mxu0 0
      %1620 = vmatpush.bf16.msra.mxu0 0
      %1621 = vmatpush.bf16.msra.mxu0 0
      %1622 = vmatpush.bf16.msra.mxu0 %v1519
      %1623 = vmatmul.bf16.gmra.mxu0 %v1495
      %v1624 = vpop.f32.mrf.mxu0
      %v1625 = vadd.f32 0.0, %v1624
      %v1626 = vpop.f32.mrf.mxu0
      %1627 = vdwg.mxu0
      %1628 = vmatpush.bf16.msra.mxu0 0
      %1629 = vmatpush.bf16.msra.mxu0 0
      %1630 = vmatpush.bf16.msra.mxu0 0
      %1631 = vmatpush.bf16.msra.mxu0 0
      %1632 = vmatpush.bf16.msra.mxu0 0
      %1633 = vmatpush.bf16.msra.mxu0 0
      %1634 = vmatpush.bf16.msra.mxu0 0
      %1635 = vmatpush.bf16.msra.mxu0 %v1522
      %1636 = vmatmul.bf16.gmra.mxu0 %v1495
      %v1637 = vpop.f32.mrf.mxu0
      %v1638 = vadd.f32 0.0, %v1637
      %v1639 = vpop.f32.mrf.mxu0
      %1640 = vdwg.mxu0
      %v1641 = vadd.f32 %v1428, %v1534
      %v1642 = vadd.f32 %v1429, %v1547
      %v1643 = vadd.f32 %v1430, %v1560
      %v1644 = vadd.f32 %v1431, %v1573
      %v1645 = vadd.f32 %v1432, %v1586
      %v1646 = vadd.f32 %v1433, %v1599
      %v1647 = vadd.f32 %v1434, %v1612
      %v1648 = vadd.f32 %v1435, %v1625
      %v1649 = vadd.f32 %v1436, %v1638
      %s1650 = scalar_lea.vmem %s3, 12
      %v1651 = vld [vmem:[%s1650] sm:$0xf]
      %v1652 = vld [vmem:[%s239] sm:$0xff]
      %v1653 = vld [vmem:[%s239 + $0x8] sm:$0xff]
      %v1654 = vld [vmem:[%s239 + $0x10] sm:$0x3]
      %1656 = vst [vmem:[#allocation1] ss:$4 sm:$0xff] %v1652
      %s1658 = scalar_lea.vmem [#allocation1], 32
      %1659 = vst [vmem:[%s1658] ss:$4 sm:$0xff] %v1653
      %v1660 = vld.sshfl [vmem:[#allocation1] sm:$0xff pattern:$0x73625140]
      %v1662 = vld.sshfl [vmem:[#allocation1 + $0x8] sm:$0xff pattern:$0x73625140]
      %v1664 = vld.sshfl [vmem:[#allocation1 + $0x10] sm:$0xff pattern:$0x73625140]
      %v1666 = vld.sshfl [vmem:[#allocation1 + $0x18] sm:$0xff pattern:$0x73625140]
      %v1668 = vld.sshfl [vmem:[#allocation1 + $0x20] sm:$0xff pattern:$0x73625140]
      %v1670 = vld.sshfl [vmem:[#allocation1 + $0x28] sm:$0xff pattern:$0x73625140]
      %v1672 = vld.sshfl [vmem:[#allocation1 + $0x30] sm:$0xff pattern:$0x73625140]
      %v1674 = vld.sshfl [vmem:[#allocation1 + $0x38] sm:$0xff pattern:$0x73625140]
      %1677 = vst [vmem:[#allocation1] ss:$4 sm:$0xff] %v1654
      %v1678 = vld.sshfl [vmem:[#allocation1] sm:$0xff pattern:$0x73625140]
      %1680 = vrot.lane.b32.xlu0 %v1660, 94
      %v1681 = vpop.permute.xlu0 %1680
      %1682 = vrot.lane.b32.xlu0 %v1662, 94
      %v1683 = vpop.permute.xlu0 %1682
      %1684 = vrot.lane.b32.xlu0 %v1664, 94
      %v1685 = vpop.permute.xlu0 %1684
      %1686 = vrot.lane.b32.xlu0 %v1666, 94
      %v1687 = vpop.permute.xlu0 %1686
      %1688 = vrot.lane.b32.xlu0 %v1668, 94
      %v1689 = vpop.permute.xlu0 %1688
      %1690 = vrot.lane.b32.xlu0 %v1670, 94
      %v1691 = vpop.permute.xlu0 %1690
      %1692 = vrot.lane.b32.xlu0 %v1672, 94
      %v1693 = vpop.permute.xlu0 %1692
      %1694 = vrot.lane.b32.xlu0 %v1674, 94
      %v1695 = vpop.permute.xlu0 %1694
      %1696 = vrot.lane.b32.xlu0 %v1678, 94
      %v1697 = vpop.permute.xlu0 %1696
      %v1698 = vsel %vm1485, %v1681, %v1683
      %v1699 = vsel %vm1485, %v1683, %v1685
      %v1700 = vsel %vm1485, %v1685, %v1687
      %v1701 = vsel %vm1485, %v1687, %v1689
      %v1702 = vsel %vm1485, %v1689, %v1691
      %v1703 = vsel %vm1485, %v1691, %v1693
      %v1704 = vsel %vm1485, %v1693, %v1695
      %v1705 = vsel %vm1485, %v1695, %v1697
      %v1707 = vsel %vm272, %v1651, 0
      %v1710 = vand.u32 %v1698, %v279
      %v1713 = vand.u32 %v1699, %v279
      %v1716 = vand.u32 %v1700, %v279
      %v1719 = vand.u32 %v1701, %v279
      %v1722 = vand.u32 %v1702, %v279
      %v1725 = vand.u32 %v1703, %v279
      %v1728 = vand.u32 %v1704, %v279
      %v1731 = vand.u32 %v1705, %v279
      %v1734 = vand.u32 %v1697, %v279
      %1736 = vmatpush.bf16.msra.mxu0 0
      %1737 = vmatpush.bf16.msra.mxu0 0
      %1738 = vmatpush.bf16.msra.mxu0 0
      %1739 = vmatpush.bf16.msra.mxu0 0
      %1740 = vmatpush.bf16.msra.mxu0 0
      %1741 = vmatpush.bf16.msra.mxu0 0
      %1742 = vmatpush.bf16.msra.mxu0 0
      %1743 = vmatpush.bf16.msra.mxu0 %v1710
      %1744 = vmatmul.bf16.gmra.mxu0 %v1707
      %v1745 = vpop.f32.mrf.mxu0
      %v1746 = vadd.f32 0.0, %v1745
      %v1747 = vpop.f32.mrf.mxu0
      %1748 = vdwg.mxu0
      %1749 = vmatpush.bf16.msra.mxu0 0
      %1750 = vmatpush.bf16.msra.mxu0 0
      %1751 = vmatpush.bf16.msra.mxu0 0
      %1752 = vmatpush.bf16.msra.mxu0 0
      %1753 = vmatpush.bf16.msra.mxu0 0
      %1754 = vmatpush.bf16.msra.mxu0 0
      %1755 = vmatpush.bf16.msra.mxu0 0
      %1756 = vmatpush.bf16.msra.mxu0 %v1713
      %1757 = vmatmul.bf16.gmra.mxu0 %v1707
      %v1758 = vpop.f32.mrf.mxu0
      %v1759 = vadd.f32 0.0, %v1758
      %v1760 = vpop.f32.mrf.mxu0
      %1761 = vdwg.mxu0
      %1762 = vmatpush.bf16.msra.mxu0 0
      %1763 = vmatpush.bf16.msra.mxu0 0
      %1764 = vmatpush.bf16.msra.mxu0 0
      %1765 = vmatpush.bf16.msra.mxu0 0
      %1766 = vmatpush.bf16.msra.mxu0 0
      %1767 = vmatpush.bf16.msra.mxu0 0
      %1768 = vmatpush.bf16.msra.mxu0 0
      %1769 = vmatpush.bf16.msra.mxu0 %v1716
      %1770 = vmatmul.bf16.gmra.mxu0 %v1707
      %v1771 = vpop.f32.mrf.mxu0
      %v1772 = vadd.f32 0.0, %v1771
      %v1773 = vpop.f32.mrf.mxu0
      %1774 = vdwg.mxu0
      %1775 = vmatpush.bf16.msra.mxu0 0
      %1776 = vmatpush.bf16.msra.mxu0 0
      %1777 = vmatpush.bf16.msra.mxu0 0
      %1778 = vmatpush.bf16.msra.mxu0 0
      %1779 = vmatpush.bf16.msra.mxu0 0
      %1780 = vmatpush.bf16.msra.mxu0 0
      %1781 = vmatpush.bf16.msra.mxu0 0
      %1782 = vmatpush.bf16.msra.mxu0 %v1719
      %1783 = vmatmul.bf16.gmra.mxu0 %v1707
      %v1784 = vpop.f32.mrf.mxu0
      %v1785 = vadd.f32 0.0, %v1784
      %v1786 = vpop.f32.mrf.mxu0
      %1787 = vdwg.mxu0
      %1788 = vmatpush.bf16.msra.mxu0 0
      %1789 = vmatpush.bf16.msra.mxu0 0
      %1790 = vmatpush.bf16.msra.mxu0 0
      %1791 = vmatpush.bf16.msra.mxu0 0
      %1792 = vmatpush.bf16.msra.mxu0 0
      %1793 = vmatpush.bf16.msra.mxu0 0
      %1794 = vmatpush.bf16.msra.mxu0 0
      %1795 = vmatpush.bf16.msra.mxu0 %v1722
      %1796 = vmatmul.bf16.gmra.mxu0 %v1707
      %v1797 = vpop.f32.mrf.mxu0
      %v1798 = vadd.f32 0.0, %v1797
      %v1799 = vpop.f32.mrf.mxu0
      %1800 = vdwg.mxu0
      %1801 = vmatpush.bf16.msra.mxu0 0
      %1802 = vmatpush.bf16.msra.mxu0 0
      %1803 = vmatpush.bf16.msra.mxu0 0
      %1804 = vmatpush.bf16.msra.mxu0 0
      %1805 = vmatpush.bf16.msra.mxu0 0
      %1806 = vmatpush.bf16.msra.mxu0 0
      %1807 = vmatpush.bf16.msra.mxu0 0
      %1808 = vmatpush.bf16.msra.mxu0 %v1725
      %1809 = vmatmul.bf16.gmra.mxu0 %v1707
      %v1810 = vpop.f32.mrf.mxu0
      %v1811 = vadd.f32 0.0, %v1810
      %v1812 = vpop.f32.mrf.mxu0
      %1813 = vdwg.mxu0
      %1814 = vmatpush.bf16.msra.mxu0 0
      %1815 = vmatpush.bf16.msra.mxu0 0
      %1816 = vmatpush.bf16.msra.mxu0 0
      %1817 = vmatpush.bf16.msra.mxu0 0
      %1818 = vmatpush.bf16.msra.mxu0 0
      %1819 = vmatpush.bf16.msra.mxu0 0
      %1820 = vmatpush.bf16.msra.mxu0 0
      %1821 = vmatpush.bf16.msra.mxu0 %v1728
      %1822 = vmatmul.bf16.gmra.mxu0 %v1707
      %v1823 = vpop.f32.mrf.mxu0
      %v1824 = vadd.f32 0.0, %v1823
      %v1825 = vpop.f32.mrf.mxu0
      %1826 = vdwg.mxu0
      %1827 = vmatpush.bf16.msra.mxu0 0
      %1828 = vmatpush.bf16.msra.mxu0 0
      %1829 = vmatpush.bf16.msra.mxu0 0
      %1830 = vmatpush.bf16.msra.mxu0 0
      %1831 = vmatpush.bf16.msra.mxu0 0
      %1832 = vmatpush.bf16.msra.mxu0 0
      %1833 = vmatpush.bf16.msra.mxu0 0
      %1834 = vmatpush.bf16.msra.mxu0 %v1731
      %1835 = vmatmul.bf16.gmra.mxu0 %v1707
      %v1836 = vpop.f32.mrf.mxu0
      %v1837 = vadd.f32 0.0, %v1836
      %v1838 = vpop.f32.mrf.mxu0
      %1839 = vdwg.mxu0
      %1840 = vmatpush.bf16.msra.mxu0 0
      %1841 = vmatpush.bf16.msra.mxu0 0
      %1842 = vmatpush.bf16.msra.mxu0 0
      %1843 = vmatpush.bf16.msra.mxu0 0
      %1844 = vmatpush.bf16.msra.mxu0 0
      %1845 = vmatpush.bf16.msra.mxu0 0
      %1846 = vmatpush.bf16.msra.mxu0 0
      %1847 = vmatpush.bf16.msra.mxu0 %v1734
      %1848 = vmatmul.bf16.gmra.mxu0 %v1707
      %v1849 = vpop.f32.mrf.mxu0
      %v1850 = vadd.f32 0.0, %v1849
      %v1851 = vpop.f32.mrf.mxu0
      %1852 = vdwg.mxu0
      %v1853 = vadd.f32 %v1641, %v1746
      %v1854 = vadd.f32 %v1642, %v1759
      %v1855 = vadd.f32 %v1643, %v1772
      %v1856 = vadd.f32 %v1644, %v1785
      %v1857 = vadd.f32 %v1645, %v1798
      %v1858 = vadd.f32 %v1646, %v1811
      %v1859 = vadd.f32 %v1647, %v1824
      %v1860 = vadd.f32 %v1648, %v1837
      %v1861 = vadd.f32 %v1649, %v1850
      %s1862 = scalar_lea.vmem %s2, 16
      %v1863 = vld [vmem:[%s1862] sm:$0xf]
      %v1864 = vld [vmem:[%s234] sm:$0xff]
      %v1865 = vld [vmem:[%s234 + $0x8] sm:$0xff]
      %v1866 = vld [vmem:[%s234 + $0x10] sm:$0xff]
      %v1867 = vld [vmem:[%s234 + $0x18] sm:$0xff]
      %v1868 = vld [vmem:[%s234 + $0x20] sm:$0xf]
      %v1874 = vunpack.c.l.b16 %v1864
      %v1875 = vunpack.c.h.b16 %v1864
      %v1876 = vunpack.c.l.b16 %v1865
      %v1877 = vunpack.c.h.b16 %v1865
      %v1878 = vunpack.c.l.b16 %v1866
      %v1879 = vunpack.c.h.b16 %v1866
      %v1880 = vunpack.c.l.b16 %v1867
      %v1881 = vunpack.c.h.b16 %v1867
      %v1882 = vunpack.c.l.b16 %v1868
      %v1883 = vpack.c.b16 %v1874, %v1874
      %v1884 = vpack.c.b16 %v1875, %v1875
      %v1885 = vpack.c.b16 %v1876, %v1876
      %v1886 = vpack.c.b16 %v1877, %v1877
      %v1887 = vpack.c.b16 %v1878, %v1878
      %v1888 = vpack.c.b16 %v1879, %v1879
      %v1889 = vpack.c.b16 %v1880, %v1880
      %v1890 = vpack.c.b16 %v1881, %v1881
      %v1891 = vpack.c.b16 %v1882, %v1882
      %1892 = vrot.lane.b32.xlu0 %v1883, 93
      %v1893 = vpop.permute.xlu0 %1892
      %1894 = vrot.lane.b32.xlu0 %v1884, 93
      %v1895 = vpop.permute.xlu0 %1894
      %1896 = vrot.lane.b32.xlu0 %v1885, 93
      %v1897 = vpop.permute.xlu0 %1896
      %1898 = vrot.lane.b32.xlu0 %v1886, 93
      %v1899 = vpop.permute.xlu0 %1898
      %1900 = vrot.lane.b32.xlu0 %v1887, 93
      %v1901 = vpop.permute.xlu0 %1900
      %1902 = vrot.lane.b32.xlu0 %v1888, 93
      %v1903 = vpop.permute.xlu0 %1902
      %1904 = vrot.lane.b32.xlu0 %v1889, 93
      %v1905 = vpop.permute.xlu0 %1904
      %1906 = vrot.lane.b32.xlu0 %v1890, 93
      %v1907 = vpop.permute.xlu0 %1906
      %1908 = vrot.lane.b32.xlu0 %v1891, 93
      %v1909 = vpop.permute.xlu0 %1908
      %vm1910 = vcmask 760832
      %v1911 = vsel %vm1910, %v1893, %v1895
      %v1912 = vsel %vm1910, %v1895, %v1897
      %v1913 = vsel %vm1910, %v1897, %v1899
      %v1914 = vsel %vm1910, %v1899, %v1901
      %v1915 = vsel %vm1910, %v1901, %v1903
      %v1916 = vsel %vm1910, %v1903, %v1905
      %v1917 = vsel %vm1910, %v1905, %v1907
      %v1918 = vsel %vm1910, %v1907, %v1909
      %v1920 = vsel %vm438, %v1863, 0
      %v1923 = vsel %vm442, %v1911, 0
      %v1926 = vsel %vm442, %v1912, 0
      %v1929 = vsel %vm442, %v1913, 0
      %v1932 = vsel %vm442, %v1914, 0
      %v1935 = vsel %vm442, %v1915, 0
      %v1938 = vsel %vm442, %v1916, 0
      %v1941 = vsel %vm442, %v1917, 0
      %v1944 = vsel %vm442, %v1918, 0
      %v1947 = vsel %vm442, %v1909, 0
      %1949 = vmatpush.bf16.msra.mxu0 0
      %1950 = vmatpush.bf16.msra.mxu0 0
      %1951 = vmatpush.bf16.msra.mxu0 0
      %1952 = vmatpush.bf16.msra.mxu0 0
      %1953 = vmatpush.bf16.msra.mxu0 0
      %1954 = vmatpush.bf16.msra.mxu0 0
      %1955 = vmatpush.bf16.msra.mxu0 0
      %1956 = vmatpush.bf16.msra.mxu0 %v1923
      %1957 = vmatmul.bf16.gmra.mxu0 %v1920
      %v1958 = vpop.f32.mrf.mxu0
      %v1959 = vadd.f32 0.0, %v1958
      %v1960 = vpop.f32.mrf.mxu0
      %1961 = vdwg.mxu0
      %1962 = vmatpush.bf16.msra.mxu0 0
      %1963 = vmatpush.bf16.msra.mxu0 0
      %1964 = vmatpush.bf16.msra.mxu0 0
      %1965 = vmatpush.bf16.msra.mxu0 0
      %1966 = vmatpush.bf16.msra.mxu0 0
      %1967 = vmatpush.bf16.msra.mxu0 0
      %1968 = vmatpush.bf16.msra.mxu0 0
      %1969 = vmatpush.bf16.msra.mxu0 %v1926
      %1970 = vmatmul.bf16.gmra.mxu0 %v1920
      %v1971 = vpop.f32.mrf.mxu0
      %v1972 = vadd.f32 0.0, %v1971
      %v1973 = vpop.f32.mrf.mxu0
      %1974 = vdwg.mxu0
      %1975 = vmatpush.bf16.msra.mxu0 0
      %1976 = vmatpush.bf16.msra.mxu0 0
      %1977 = vmatpush.bf16.msra.mxu0 0
      %1978 = vmatpush.bf16.msra.mxu0 0
      %1979 = vmatpush.bf16.msra.mxu0 0
      %1980 = vmatpush.bf16.msra.mxu0 0
      %1981 = vmatpush.bf16.msra.mxu0 0
      %1982 = vmatpush.bf16.msra.mxu0 %v1929
      %1983 = vmatmul.bf16.gmra.mxu0 %v1920
      %v1984 = vpop.f32.mrf.mxu0
      %v1985 = vadd.f32 0.0, %v1984
      %v1986 = vpop.f32.mrf.mxu0
      %1987 = vdwg.mxu0
      %1988 = vmatpush.bf16.msra.mxu0 0
      %1989 = vmatpush.bf16.msra.mxu0 0
      %1990 = vmatpush.bf16.msra.mxu0 0
      %1991 = vmatpush.bf16.msra.mxu0 0
      %1992 = vmatpush.bf16.msra.mxu0 0
      %1993 = vmatpush.bf16.msra.mxu0 0
      %1994 = vmatpush.bf16.msra.mxu0 0
      %1995 = vmatpush.bf16.msra.mxu0 %v1932
      %1996 = vmatmul.bf16.gmra.mxu0 %v1920
      %v1997 = vpop.f32.mrf.mxu0
      %v1998 = vadd.f32 0.0, %v1997
      %v1999 = vpop.f32.mrf.mxu0
      %2000 = vdwg.mxu0
      %2001 = vmatpush.bf16.msra.mxu0 0
      %2002 = vmatpush.bf16.msra.mxu0 0
      %2003 = vmatpush.bf16.msra.mxu0 0
      %2004 = vmatpush.bf16.msra.mxu0 0
      %2005 = vmatpush.bf16.msra.mxu0 0
      %2006 = vmatpush.bf16.msra.mxu0 0
      %2007 = vmatpush.bf16.msra.mxu0 0
      %2008 = vmatpush.bf16.msra.mxu0 %v1935
      %2009 = vmatmul.bf16.gmra.mxu0 %v1920
      %v2010 = vpop.f32.mrf.mxu0
      %v2011 = vadd.f32 0.0, %v2010
      %v2012 = vpop.f32.mrf.mxu0
      %2013 = vdwg.mxu0
      %2014 = vmatpush.bf16.msra.mxu0 0
      %2015 = vmatpush.bf16.msra.mxu0 0
      %2016 = vmatpush.bf16.msra.mxu0 0
      %2017 = vmatpush.bf16.msra.mxu0 0
      %2018 = vmatpush.bf16.msra.mxu0 0
      %2019 = vmatpush.bf16.msra.mxu0 0
      %2020 = vmatpush.bf16.msra.mxu0 0
      %2021 = vmatpush.bf16.msra.mxu0 %v1938
      %2022 = vmatmul.bf16.gmra.mxu0 %v1920
      %v2023 = vpop.f32.mrf.mxu0
      %v2024 = vadd.f32 0.0, %v2023
      %v2025 = vpop.f32.mrf.mxu0
      %2026 = vdwg.mxu0
      %2027 = vmatpush.bf16.msra.mxu0 0
      %2028 = vmatpush.bf16.msra.mxu0 0
      %2029 = vmatpush.bf16.msra.mxu0 0
      %2030 = vmatpush.bf16.msra.mxu0 0
      %2031 = vmatpush.bf16.msra.mxu0 0
      %2032 = vmatpush.bf16.msra.mxu0 0
      %2033 = vmatpush.bf16.msra.mxu0 0
      %2034 = vmatpush.bf16.msra.mxu0 %v1941
      %2035 = vmatmul.bf16.gmra.mxu0 %v1920
      %v2036 = vpop.f32.mrf.mxu0
      %v2037 = vadd.f32 0.0, %v2036
      %v2038 = vpop.f32.mrf.mxu0
      %2039 = vdwg.mxu0
      %2040 = vmatpush.bf16.msra.mxu0 0
      %2041 = vmatpush.bf16.msra.mxu0 0
      %2042 = vmatpush.bf16.msra.mxu0 0
      %2043 = vmatpush.bf16.msra.mxu0 0
      %2044 = vmatpush.bf16.msra.mxu0 0
      %2045 = vmatpush.bf16.msra.mxu0 0
      %2046 = vmatpush.bf16.msra.mxu0 0
      %2047 = vmatpush.bf16.msra.mxu0 %v1944
      %2048 = vmatmul.bf16.gmra.mxu0 %v1920
      %v2049 = vpop.f32.mrf.mxu0
      %v2050 = vadd.f32 0.0, %v2049
      %v2051 = vpop.f32.mrf.mxu0
      %2052 = vdwg.mxu0
      %2053 = vmatpush.bf16.msra.mxu0 0
      %2054 = vmatpush.bf16.msra.mxu0 0
      %2055 = vmatpush.bf16.msra.mxu0 0
      %2056 = vmatpush.bf16.msra.mxu0 0
      %2057 = vmatpush.bf16.msra.mxu0 0
      %2058 = vmatpush.bf16.msra.mxu0 0
      %2059 = vmatpush.bf16.msra.mxu0 0
      %2060 = vmatpush.bf16.msra.mxu0 %v1947
      %2061 = vmatmul.bf16.gmra.mxu0 %v1920
      %v2062 = vpop.f32.mrf.mxu0
      %v2063 = vadd.f32 0.0, %v2062
      %v2064 = vpop.f32.mrf.mxu0
      %2065 = vdwg.mxu0
      %v2066 = vadd.f32 %v1853, %v1959
      %v2067 = vadd.f32 %v1854, %v1972
      %v2068 = vadd.f32 %v1855, %v1985
      %v2069 = vadd.f32 %v1856, %v1998
      %v2070 = vadd.f32 %v1857, %v2011
      %v2071 = vadd.f32 %v1858, %v2024
      %v2072 = vadd.f32 %v1859, %v2037
      %v2073 = vadd.f32 %v1860, %v2050
      %v2074 = vadd.f32 %v1861, %v2063
      %s2075 = scalar_lea.vmem %s3, 16
      %v2076 = vld [vmem:[%s2075] sm:$0xf]
      %v2077 = vld [vmem:[%s239] sm:$0xff]
      %v2078 = vld [vmem:[%s239 + $0x8] sm:$0xff]
      %v2079 = vld [vmem:[%s239 + $0x10] sm:$0x3]
      %2081 = vst [vmem:[#allocation1] ss:$4 sm:$0xff] %v2077
      %s2083 = scalar_lea.vmem [#allocation1], 32
      %2084 = vst [vmem:[%s2083] ss:$4 sm:$0xff] %v2078
      %v2085 = vld.sshfl [vmem:[#allocation1] sm:$0xff pattern:$0x73625140]
      %v2087 = vld.sshfl [vmem:[#allocation1 + $0x8] sm:$0xff pattern:$0x73625140]
      %v2089 = vld.sshfl [vmem:[#allocation1 + $0x10] sm:$0xff pattern:$0x73625140]
      %v2091 = vld.sshfl [vmem:[#allocation1 + $0x18] sm:$0xff pattern:$0x73625140]
      %v2093 = vld.sshfl [vmem:[#allocation1 + $0x20] sm:$0xff pattern:$0x73625140]
      %v2095 = vld.sshfl [vmem:[#allocation1 + $0x28] sm:$0xff pattern:$0x73625140]
      %v2097 = vld.sshfl [vmem:[#allocation1 + $0x30] sm:$0xff pattern:$0x73625140]
      %v2099 = vld.sshfl [vmem:[#allocation1 + $0x38] sm:$0xff pattern:$0x73625140]
      %2102 = vst [vmem:[#allocation1] ss:$4 sm:$0xff] %v2079
      %v2103 = vld.sshfl [vmem:[#allocation1] sm:$0xff pattern:$0x73625140]
      %2105 = vrot.lane.b32.xlu0 %v2085, 93
      %v2106 = vpop.permute.xlu0 %2105
      %2107 = vrot.lane.b32.xlu0 %v2087, 93
      %v2108 = vpop.permute.xlu0 %2107
      %2109 = vrot.lane.b32.xlu0 %v2089, 93
      %v2110 = vpop.permute.xlu0 %2109
      %2111 = vrot.lane.b32.xlu0 %v2091, 93
      %v2112 = vpop.permute.xlu0 %2111
      %2113 = vrot.lane.b32.xlu0 %v2093, 93
      %v2114 = vpop.permute.xlu0 %2113
      %2115 = vrot.lane.b32.xlu0 %v2095, 93
      %v2116 = vpop.permute.xlu0 %2115
      %2117 = vrot.lane.b32.xlu0 %v2097, 93
      %v2118 = vpop.permute.xlu0 %2117
      %2119 = vrot.lane.b32.xlu0 %v2099, 93
      %v2120 = vpop.permute.xlu0 %2119
      %2121 = vrot.lane.b32.xlu0 %v2103, 93
      %v2122 = vpop.permute.xlu0 %2121
      %v2123 = vsel %vm1910, %v2106, %v2108
      %v2124 = vsel %vm1910, %v2108, %v2110
      %v2125 = vsel %vm1910, %v2110, %v2112
      %v2126 = vsel %vm1910, %v2112, %v2114
      %v2127 = vsel %vm1910, %v2114, %v2116
      %v2128 = vsel %vm1910, %v2116, %v2118
      %v2129 = vsel %vm1910, %v2118, %v2120
      %v2130 = vsel %vm1910, %v2120, %v2122
      %v2132 = vsel %vm272, %v2076, 0
      %v2135 = vand.u32 %v2123, %v279
      %v2138 = vand.u32 %v2124, %v279
      %v2141 = vand.u32 %v2125, %v279
      %v2144 = vand.u32 %v2126, %v279
      %v2147 = vand.u32 %v2127, %v279
      %v2150 = vand.u32 %v2128, %v279
      %v2153 = vand.u32 %v2129, %v279
      %v2156 = vand.u32 %v2130, %v279
      %v2159 = vand.u32 %v2122, %v279
      %2161 = vmatpush.bf16.msra.mxu0 0
      %2162 = vmatpush.bf16.msra.mxu0 0
      %2163 = vmatpush.bf16.msra.mxu0 0
      %2164 = vmatpush.bf16.msra.mxu0 0
      %2165 = vmatpush.bf16.msra.mxu0 0
      %2166 = vmatpush.bf16.msra.mxu0 0
      %2167 = vmatpush.bf16.msra.mxu0 0
      %2168 = vmatpush.bf16.msra.mxu0 %v2135
      %2169 = vmatmul.bf16.gmra.mxu0 %v2132
      %v2170 = vpop.f32.mrf.mxu0
      %v2171 = vadd.f32 0.0, %v2170
      %v2172 = vpop.f32.mrf.mxu0
      %2173 = vdwg.mxu0
      %2174 = vmatpush.bf16.msra.mxu0 0
      %2175 = vmatpush.bf16.msra.mxu0 0
      %2176 = vmatpush.bf16.msra.mxu0 0
      %2177 = vmatpush.bf16.msra.mxu0 0
      %2178 = vmatpush.bf16.msra.mxu0 0
      %2179 = vmatpush.bf16.msra.mxu0 0
      %2180 = vmatpush.bf16.msra.mxu0 0
      %2181 = vmatpush.bf16.msra.mxu0 %v2138
      %2182 = vmatmul.bf16.gmra.mxu0 %v2132
      %v2183 = vpop.f32.mrf.mxu0
      %v2184 = vadd.f32 0.0, %v2183
      %v2185 = vpop.f32.mrf.mxu0
      %2186 = vdwg.mxu0
      %2187 = vmatpush.bf16.msra.mxu0 0
      %2188 = vmatpush.bf16.msra.mxu0 0
      %2189 = vmatpush.bf16.msra.mxu0 0
      %2190 = vmatpush.bf16.msra.mxu0 0
      %2191 = vmatpush.bf16.msra.mxu0 0
      %2192 = vmatpush.bf16.msra.mxu0 0
      %2193 = vmatpush.bf16.msra.mxu0 0
      %2194 = vmatpush.bf16.msra.mxu0 %v2141
      %2195 = vmatmul.bf16.gmra.mxu0 %v2132
      %v2196 = vpop.f32.mrf.mxu0
      %v2197 = vadd.f32 0.0, %v2196
      %v2198 = vpop.f32.mrf.mxu0
      %2199 = vdwg.mxu0
      %2200 = vmatpush.bf16.msra.mxu0 0
      %2201 = vmatpush.bf16.msra.mxu0 0
      %2202 = vmatpush.bf16.msra.mxu0 0
      %2203 = vmatpush.bf16.msra.mxu0 0
      %2204 = vmatpush.bf16.msra.mxu0 0
      %2205 = vmatpush.bf16.msra.mxu0 0
      %2206 = vmatpush.bf16.msra.mxu0 0
      %2207 = vmatpush.bf16.msra.mxu0 %v2144
      %2208 = vmatmul.bf16.gmra.mxu0 %v2132
      %v2209 = vpop.f32.mrf.mxu0
      %v2210 = vadd.f32 0.0, %v2209
      %v2211 = vpop.f32.mrf.mxu0
      %2212 = vdwg.mxu0
      %2213 = vmatpush.bf16.msra.mxu0 0
      %2214 = vmatpush.bf16.msra.mxu0 0
      %2215 = vmatpush.bf16.msra.mxu0 0
      %2216 = vmatpush.bf16.msra.mxu0 0
      %2217 = vmatpush.bf16.msra.mxu0 0
      %2218 = vmatpush.bf16.msra.mxu0 0
      %2219 = vmatpush.bf16.msra.mxu0 0
      %2220 = vmatpush.bf16.msra.mxu0 %v2147
      %2221 = vmatmul.bf16.gmra.mxu0 %v2132
      %v2222 = vpop.f32.mrf.mxu0
      %v2223 = vadd.f32 0.0, %v2222
      %v2224 = vpop.f32.mrf.mxu0
      %2225 = vdwg.mxu0
      %2226 = vmatpush.bf16.msra.mxu0 0
      %2227 = vmatpush.bf16.msra.mxu0 0
      %2228 = vmatpush.bf16.msra.mxu0 0
      %2229 = vmatpush.bf16.msra.mxu0 0
      %2230 = vmatpush.bf16.msra.mxu0 0
      %2231 = vmatpush.bf16.msra.mxu0 0
      %2232 = vmatpush.bf16.msra.mxu0 0
      %2233 = vmatpush.bf16.msra.mxu0 %v2150
      %2234 = vmatmul.bf16.gmra.mxu0 %v2132
      %v2235 = vpop.f32.mrf.mxu0
      %v2236 = vadd.f32 0.0, %v2235
      %v2237 = vpop.f32.mrf.mxu0
      %2238 = vdwg.mxu0
      %2239 = vmatpush.bf16.msra.mxu0 0
      %2240 = vmatpush.bf16.msra.mxu0 0
      %2241 = vmatpush.bf16.msra.mxu0 0
      %2242 = vmatpush.bf16.msra.mxu0 0
      %2243 = vmatpush.bf16.msra.mxu0 0
      %2244 = vmatpush.bf16.msra.mxu0 0
      %2245 = vmatpush.bf16.msra.mxu0 0
      %2246 = vmatpush.bf16.msra.mxu0 %v2153
      %2247 = vmatmul.bf16.gmra.mxu0 %v2132
      %v2248 = vpop.f32.mrf.mxu0
      %v2249 = vadd.f32 0.0, %v2248
      %v2250 = vpop.f32.mrf.mxu0
      %2251 = vdwg.mxu0
      %2252 = vmatpush.bf16.msra.mxu0 0
      %2253 = vmatpush.bf16.msra.mxu0 0
      %2254 = vmatpush.bf16.msra.mxu0 0
      %2255 = vmatpush.bf16.msra.mxu0 0
      %2256 = vmatpush.bf16.msra.mxu0 0
      %2257 = vmatpush.bf16.msra.mxu0 0
      %2258 = vmatpush.bf16.msra.mxu0 0
      %2259 = vmatpush.bf16.msra.mxu0 %v2156
      %2260 = vmatmul.bf16.gmra.mxu0 %v2132
      %v2261 = vpop.f32.mrf.mxu0
      %v2262 = vadd.f32 0.0, %v2261
      %v2263 = vpop.f32.mrf.mxu0
      %2264 = vdwg.mxu0
      %2265 = vmatpush.bf16.msra.mxu0 0
      %2266 = vmatpush.bf16.msra.mxu0 0
      %2267 = vmatpush.bf16.msra.mxu0 0
      %2268 = vmatpush.bf16.msra.mxu0 0
      %2269 = vmatpush.bf16.msra.mxu0 0
      %2270 = vmatpush.bf16.msra.mxu0 0
      %2271 = vmatpush.bf16.msra.mxu0 0
      %2272 = vmatpush.bf16.msra.mxu0 %v2159
      %2273 = vmatmul.bf16.gmra.mxu0 %v2132
      %v2274 = vpop.f32.mrf.mxu0
      %v2275 = vadd.f32 0.0, %v2274
      %v2276 = vpop.f32.mrf.mxu0
      %2277 = vdwg.mxu0
      %v2278 = vadd.f32 %v2066, %v2171
      %v2279 = vadd.f32 %v2067, %v2184
      %v2280 = vadd.f32 %v2068, %v2197
      %v2281 = vadd.f32 %v2069, %v2210
      %v2282 = vadd.f32 %v2070, %v2223
      %v2283 = vadd.f32 %v2071, %v2236
      %v2284 = vadd.f32 %v2072, %v2249
      %v2285 = vadd.f32 %v2073, %v2262
      %v2286 = vadd.f32 %v2074, %v2275
      %s2287 = scalar_lea.vmem %s2, 20
      %v2288 = vld [vmem:[%s2287] sm:$0xf]
      %v2289 = vld [vmem:[%s234] sm:$0xff]
      %v2290 = vld [vmem:[%s234 + $0x8] sm:$0xff]
      %v2291 = vld [vmem:[%s234 + $0x10] sm:$0xff]
      %v2292 = vld [vmem:[%s234 + $0x18] sm:$0xff]
      %v2293 = vld [vmem:[%s234 + $0x20] sm:$0xf]
      %v2299 = vunpack.c.l.b16 %v2289
      %v2300 = vunpack.c.h.b16 %v2289
      %v2301 = vunpack.c.l.b16 %v2290
      %v2302 = vunpack.c.h.b16 %v2290
      %v2303 = vunpack.c.l.b16 %v2291
      %v2304 = vunpack.c.h.b16 %v2291
      %v2305 = vunpack.c.l.b16 %v2292
      %v2306 = vunpack.c.h.b16 %v2292
      %v2307 = vunpack.c.l.b16 %v2293
      %v2308 = vpack.c.b16 %v2299, %v2299
      %v2309 = vpack.c.b16 %v2300, %v2300
      %v2310 = vpack.c.b16 %v2301, %v2301
      %v2311 = vpack.c.b16 %v2302, %v2302
      %v2312 = vpack.c.b16 %v2303, %v2303
      %v2313 = vpack.c.b16 %v2304, %v2304
      %v2314 = vpack.c.b16 %v2305, %v2305
      %v2315 = vpack.c.b16 %v2306, %v2306
      %v2316 = vpack.c.b16 %v2307, %v2307
      %2317 = vrot.lane.b32.xlu0 %v2308, 92
      %v2318 = vpop.permute.xlu0 %2317
      %2319 = vrot.lane.b32.xlu0 %v2309, 92
      %v2320 = vpop.permute.xlu0 %2319
      %2321 = vrot.lane.b32.xlu0 %v2310, 92
      %v2322 = vpop.permute.xlu0 %2321
      %2323 = vrot.lane.b32.xlu0 %v2311, 92
      %v2324 = vpop.permute.xlu0 %2323
      %2325 = vrot.lane.b32.xlu0 %v2312, 92
      %v2326 = vpop.permute.xlu0 %2325
      %2327 = vrot.lane.b32.xlu0 %v2313, 92
      %v2328 = vpop.permute.xlu0 %2327
      %2329 = vrot.lane.b32.xlu0 %v2314, 92
      %v2330 = vpop.permute.xlu0 %2329
      %2331 = vrot.lane.b32.xlu0 %v2315, 92
      %v2332 = vpop.permute.xlu0 %2331
      %2333 = vrot.lane.b32.xlu0 %v2316, 92
      %v2334 = vpop.permute.xlu0 %2333
      %vm2335 = vcmask 752640
      %v2336 = vsel %vm2335, %v2318, %v2320
      %v2337 = vsel %vm2335, %v2320, %v2322
      %v2338 = vsel %vm2335, %v2322, %v2324
      %v2339 = vsel %vm2335, %v2324, %v2326
      %v2340 = vsel %vm2335, %v2326, %v2328
      %v2341 = vsel %vm2335, %v2328, %v2330
      %v2342 = vsel %vm2335, %v2330, %v2332
      %v2343 = vsel %vm2335, %v2332, %v2334
      %v2345 = vsel %vm438, %v2288, 0
      %v2348 = vsel %vm442, %v2336, 0
      %v2351 = vsel %vm442, %v2337, 0
      %v2354 = vsel %vm442, %v2338, 0
      %v2357 = vsel %vm442, %v2339, 0
      %v2360 = vsel %vm442, %v2340, 0
      %v2363 = vsel %vm442, %v2341, 0
      %v2366 = vsel %vm442, %v2342, 0
      %v2369 = vsel %vm442, %v2343, 0
      %v2372 = vsel %vm442, %v2334, 0
      %2374 = vmatpush.bf16.msra.mxu0 0
      %2375 = vmatpush.bf16.msra.mxu0 0
      %2376 = vmatpush.bf16.msra.mxu0 0
      %2377 = vmatpush.bf16.msra.mxu0 0
      %2378 = vmatpush.bf16.msra.mxu0 0
      %2379 = vmatpush.bf16.msra.mxu0 0
      %2380 = vmatpush.bf16.msra.mxu0 0
      %2381 = vmatpush.bf16.msra.mxu0 %v2348
      %2382 = vmatmul.bf16.gmra.mxu0 %v2345
      %v2383 = vpop.f32.mrf.mxu0
      %v2384 = vadd.f32 0.0, %v2383
      %v2385 = vpop.f32.mrf.mxu0
      %2386 = vdwg.mxu0
      %2387 = vmatpush.bf16.msra.mxu0 0
      %2388 = vmatpush.bf16.msra.mxu0 0
      %2389 = vmatpush.bf16.msra.mxu0 0
      %2390 = vmatpush.bf16.msra.mxu0 0
      %2391 = vmatpush.bf16.msra.mxu0 0
      %2392 = vmatpush.bf16.msra.mxu0 0
      %2393 = vmatpush.bf16.msra.mxu0 0
      %2394 = vmatpush.bf16.msra.mxu0 %v2351
      %2395 = vmatmul.bf16.gmra.mxu0 %v2345
      %v2396 = vpop.f32.mrf.mxu0
      %v2397 = vadd.f32 0.0, %v2396
      %v2398 = vpop.f32.mrf.mxu0
      %2399 = vdwg.mxu0
      %2400 = vmatpush.bf16.msra.mxu0 0
      %2401 = vmatpush.bf16.msra.mxu0 0
      %2402 = vmatpush.bf16.msra.mxu0 0
      %2403 = vmatpush.bf16.msra.mxu0 0
      %2404 = vmatpush.bf16.msra.mxu0 0
      %2405 = vmatpush.bf16.msra.mxu0 0
      %2406 = vmatpush.bf16.msra.mxu0 0
      %2407 = vmatpush.bf16.msra.mxu0 %v2354
      %2408 = vmatmul.bf16.gmra.mxu0 %v2345
      %v2409 = vpop.f32.mrf.mxu0
      %v2410 = vadd.f32 0.0, %v2409
      %v2411 = vpop.f32.mrf.mxu0
      %2412 = vdwg.mxu0
      %2413 = vmatpush.bf16.msra.mxu0 0
      %2414 = vmatpush.bf16.msra.mxu0 0
      %2415 = vmatpush.bf16.msra.mxu0 0
      %2416 = vmatpush.bf16.msra.mxu0 0
      %2417 = vmatpush.bf16.msra.mxu0 0
      %2418 = vmatpush.bf16.msra.mxu0 0
      %2419 = vmatpush.bf16.msra.mxu0 0
      %2420 = vmatpush.bf16.msra.mxu0 %v2357
      %2421 = vmatmul.bf16.gmra.mxu0 %v2345
      %v2422 = vpop.f32.mrf.mxu0
      %v2423 = vadd.f32 0.0, %v2422
      %v2424 = vpop.f32.mrf.mxu0
      %2425 = vdwg.mxu0
      %2426 = vmatpush.bf16.msra.mxu0 0
      %2427 = vmatpush.bf16.msra.mxu0 0
      %2428 = vmatpush.bf16.msra.mxu0 0
      %2429 = vmatpush.bf16.msra.mxu0 0
      %2430 = vmatpush.bf16.msra.mxu0 0
      %2431 = vmatpush.bf16.msra.mxu0 0
      %2432 = vmatpush.bf16.msra.mxu0 0
      %2433 = vmatpush.bf16.msra.mxu0 %v2360
      %2434 = vmatmul.bf16.gmra.mxu0 %v2345
      %v2435 = vpop.f32.mrf.mxu0
      %v2436 = vadd.f32 0.0, %v2435
      %v2437 = vpop.f32.mrf.mxu0
      %2438 = vdwg.mxu0
      %2439 = vmatpush.bf16.msra.mxu0 0
      %2440 = vmatpush.bf16.msra.mxu0 0
      %2441 = vmatpush.bf16.msra.mxu0 0
      %2442 = vmatpush.bf16.msra.mxu0 0
      %2443 = vmatpush.bf16.msra.mxu0 0
      %2444 = vmatpush.bf16.msra.mxu0 0
      %2445 = vmatpush.bf16.msra.mxu0 0
      %2446 = vmatpush.bf16.msra.mxu0 %v2363
      %2447 = vmatmul.bf16.gmra.mxu0 %v2345
      %v2448 = vpop.f32.mrf.mxu0
      %v2449 = vadd.f32 0.0, %v2448
      %v2450 = vpop.f32.mrf.mxu0
      %2451 = vdwg.mxu0
      %2452 = vmatpush.bf16.msra.mxu0 0
      %2453 = vmatpush.bf16.msra.mxu0 0
      %2454 = vmatpush.bf16.msra.mxu0 0
      %2455 = vmatpush.bf16.msra.mxu0 0
      %2456 = vmatpush.bf16.msra.mxu0 0
      %2457 = vmatpush.bf16.msra.mxu0 0
      %2458 = vmatpush.bf16.msra.mxu0 0
      %2459 = vmatpush.bf16.msra.mxu0 %v2366
      %2460 = vmatmul.bf16.gmra.mxu0 %v2345
      %v2461 = vpop.f32.mrf.mxu0
      %v2462 = vadd.f32 0.0, %v2461
      %v2463 = vpop.f32.mrf.mxu0
      %2464 = vdwg.mxu0
      %2465 = vmatpush.bf16.msra.mxu0 0
      %2466 = vmatpush.bf16.msra.mxu0 0
      %2467 = vmatpush.bf16.msra.mxu0 0
      %2468 = vmatpush.bf16.msra.mxu0 0
      %2469 = vmatpush.bf16.msra.mxu0 0
      %2470 = vmatpush.bf16.msra.mxu0 0
      %2471 = vmatpush.bf16.msra.mxu0 0
      %2472 = vmatpush.bf16.msra.mxu0 %v2369
      %2473 = vmatmul.bf16.gmra.mxu0 %v2345
      %v2474 = vpop.f32.mrf.mxu0
      %v2475 = vadd.f32 0.0, %v2474
      %v2476 = vpop.f32.mrf.mxu0
      %2477 = vdwg.mxu0
      %2478 = vmatpush.bf16.msra.mxu0 0
      %2479 = vmatpush.bf16.msra.mxu0 0
      %2480 = vmatpush.bf16.msra.mxu0 0
      %2481 = vmatpush.bf16.msra.mxu0 0
      %2482 = vmatpush.bf16.msra.mxu0 0
      %2483 = vmatpush.bf16.msra.mxu0 0
      %2484 = vmatpush.bf16.msra.mxu0 0
      %2485 = vmatpush.bf16.msra.mxu0 %v2372
      %2486 = vmatmul.bf16.gmra.mxu0 %v2345
      %v2487 = vpop.f32.mrf.mxu0
      %v2488 = vadd.f32 0.0, %v2487
      %v2489 = vpop.f32.mrf.mxu0
      %2490 = vdwg.mxu0
      %v2491 = vadd.f32 %v2278, %v2384
      %v2492 = vadd.f32 %v2279, %v2397
      %v2493 = vadd.f32 %v2280, %v2410
      %v2494 = vadd.f32 %v2281, %v2423
      %v2495 = vadd.f32 %v2282, %v2436
      %v2496 = vadd.f32 %v2283, %v2449
      %v2497 = vadd.f32 %v2284, %v2462
      %v2498 = vadd.f32 %v2285, %v2475
      %v2499 = vadd.f32 %v2286, %v2488
      %s2500 = scalar_lea.vmem %s3, 20
      %v2501 = vld [vmem:[%s2500] sm:$0xf]
      %v2502 = vld [vmem:[%s239] sm:$0xff]
      %v2503 = vld [vmem:[%s239 + $0x8] sm:$0xff]
      %v2504 = vld [vmem:[%s239 + $0x10] sm:$0x3]
      %2506 = vst [vmem:[#allocation1] ss:$4 sm:$0xff] %v2502
      %s2508 = scalar_lea.vmem [#allocation1], 32
      %2509 = vst [vmem:[%s2508] ss:$4 sm:$0xff] %v2503
      %v2510 = vld.sshfl [vmem:[#allocation1] sm:$0xff pattern:$0x73625140]
      %v2512 = vld.sshfl [vmem:[#allocation1 + $0x8] sm:$0xff pattern:$0x73625140]
      %v2514 = vld.sshfl [vmem:[#allocation1 + $0x10] sm:$0xff pattern:$0x73625140]
      %v2516 = vld.sshfl [vmem:[#allocation1 + $0x18] sm:$0xff pattern:$0x73625140]
      %v2518 = vld.sshfl [vmem:[#allocation1 + $0x20] sm:$0xff pattern:$0x73625140]
      %v2520 = vld.sshfl [vmem:[#allocation1 + $0x28] sm:$0xff pattern:$0x73625140]
      %v2522 = vld.sshfl [vmem:[#allocation1 + $0x30] sm:$0xff pattern:$0x73625140]
      %v2524 = vld.sshfl [vmem:[#allocation1 + $0x38] sm:$0xff pattern:$0x73625140]
      %2527 = vst [vmem:[#allocation1] ss:$4 sm:$0xff] %v2504
      %v2528 = vld.sshfl [vmem:[#allocation1] sm:$0xff pattern:$0x73625140]
      %2530 = vrot.lane.b32.xlu0 %v2510, 92
      %v2531 = vpop.permute.xlu0 %2530
      %2532 = vrot.lane.b32.xlu0 %v2512, 92
      %v2533 = vpop.permute.xlu0 %2532
      %2534 = vrot.lane.b32.xlu0 %v2514, 92
      %v2535 = vpop.permute.xlu0 %2534
      %2536 = vrot.lane.b32.xlu0 %v2516, 92
      %v2537 = vpop.permute.xlu0 %2536
      %2538 = vrot.lane.b32.xlu0 %v2518, 92
      %v2539 = vpop.permute.xlu0 %2538
      %2540 = vrot.lane.b32.xlu0 %v2520, 92
      %v2541 = vpop.permute.xlu0 %2540
      %2542 = vrot.lane.b32.xlu0 %v2522, 92
      %v2543 = vpop.permute.xlu0 %2542
      %2544 = vrot.lane.b32.xlu0 %v2524, 92
      %v2545 = vpop.permute.xlu0 %2544
      %2546 = vrot.lane.b32.xlu0 %v2528, 92
      %v2547 = vpop.permute.xlu0 %2546
      %v2548 = vsel %vm2335, %v2531, %v2533
      %v2549 = vsel %vm2335, %v2533, %v2535
      %v2550 = vsel %vm2335, %v2535, %v2537
      %v2551 = vsel %vm2335, %v2537, %v2539
      %v2552 = vsel %vm2335, %v2539, %v2541
      %v2553 = vsel %vm2335, %v2541, %v2543
      %v2554 = vsel %vm2335, %v2543, %v2545
      %v2555 = vsel %vm2335, %v2545, %v2547
      %v2557 = vsel %vm272, %v2501, 0
      %v2560 = vand.u32 %v2548, %v279
      %v2563 = vand.u32 %v2549, %v279
      %v2566 = vand.u32 %v2550, %v279
      %v2569 = vand.u32 %v2551, %v279
      %v2572 = vand.u32 %v2552, %v279
      %v2575 = vand.u32 %v2553, %v279
      %v2578 = vand.u32 %v2554, %v279
      %v2581 = vand.u32 %v2555, %v279
      %v2584 = vand.u32 %v2547, %v279
      %2586 = vmatpush.bf16.msra.mxu0 0
      %2587 = vmatpush.bf16.msra.mxu0 0
      %2588 = vmatpush.bf16.msra.mxu0 0
      %2589 = vmatpush.bf16.msra.mxu0 0
      %2590 = vmatpush.bf16.msra.mxu0 0
      %2591 = vmatpush.bf16.msra.mxu0 0
      %2592 = vmatpush.bf16.msra.mxu0 0
      %2593 = vmatpush.bf16.msra.mxu0 %v2560
      %2594 = vmatmul.bf16.gmra.mxu0 %v2557
      %v2595 = vpop.f32.mrf.mxu0
      %v2596 = vadd.f32 0.0, %v2595
      %v2597 = vpop.f32.mrf.mxu0
      %2598 = vdwg.mxu0
      %2599 = vmatpush.bf16.msra.mxu0 0
      %2600 = vmatpush.bf16.msra.mxu0 0
      %2601 = vmatpush.bf16.msra.mxu0 0
      %2602 = vmatpush.bf16.msra.mxu0 0
      %2603 = vmatpush.bf16.msra.mxu0 0
      %2604 = vmatpush.bf16.msra.mxu0 0
      %2605 = vmatpush.bf16.msra.mxu0 0
      %2606 = vmatpush.bf16.msra.mxu0 %v2563
      %2607 = vmatmul.bf16.gmra.mxu0 %v2557
      %v2608 = vpop.f32.mrf.mxu0
      %v2609 = vadd.f32 0.0, %v2608
      %v2610 = vpop.f32.mrf.mxu0
      %2611 = vdwg.mxu0
      %2612 = vmatpush.bf16.msra.mxu0 0
      %2613 = vmatpush.bf16.msra.mxu0 0
      %2614 = vmatpush.bf16.msra.mxu0 0
      %2615 = vmatpush.bf16.msra.mxu0 0
      %2616 = vmatpush.bf16.msra.mxu0 0
      %2617 = vmatpush.bf16.msra.mxu0 0
      %2618 = vmatpush.bf16.msra.mxu0 0
      %2619 = vmatpush.bf16.msra.mxu0 %v2566
      %2620 = vmatmul.bf16.gmra.mxu0 %v2557
      %v2621 = vpop.f32.mrf.mxu0
      %v2622 = vadd.f32 0.0, %v2621
      %v2623 = vpop.f32.mrf.mxu0
      %2624 = vdwg.mxu0
      %2625 = vmatpush.bf16.msra.mxu0 0
      %2626 = vmatpush.bf16.msra.mxu0 0
      %2627 = vmatpush.bf16.msra.mxu0 0
      %2628 = vmatpush.bf16.msra.mxu0 0
      %2629 = vmatpush.bf16.msra.mxu0 0
      %2630 = vmatpush.bf16.msra.mxu0 0
      %2631 = vmatpush.bf16.msra.mxu0 0
      %2632 = vmatpush.bf16.msra.mxu0 %v2569
      %2633 = vmatmul.bf16.gmra.mxu0 %v2557
      %v2634 = vpop.f32.mrf.mxu0
      %v2635 = vadd.f32 0.0, %v2634
      %v2636 = vpop.f32.mrf.mxu0
      %2637 = vdwg.mxu0
      %2638 = vmatpush.bf16.msra.mxu0 0
      %2639 = vmatpush.bf16.msra.mxu0 0
      %2640 = vmatpush.bf16.msra.mxu0 0
      %2641 = vmatpush.bf16.msra.mxu0 0
      %2642 = vmatpush.bf16.msra.mxu0 0
      %2643 = vmatpush.bf16.msra.mxu0 0
      %2644 = vmatpush.bf16.msra.mxu0 0
      %2645 = vmatpush.bf16.msra.mxu0 %v2572
      %2646 = vmatmul.bf16.gmra.mxu0 %v2557
      %v2647 = vpop.f32.mrf.mxu0
      %v2648 = vadd.f32 0.0, %v2647
      %v2649 = vpop.f32.mrf.mxu0
      %2650 = vdwg.mxu0
      %2651 = vmatpush.bf16.msra.mxu0 0
      %2652 = vmatpush.bf16.msra.mxu0 0
      %2653 = vmatpush.bf16.msra.mxu0 0
      %2654 = vmatpush.bf16.msra.mxu0 0
      %2655 = vmatpush.bf16.msra.mxu0 0
      %2656 = vmatpush.bf16.msra.mxu0 0
      %2657 = vmatpush.bf16.msra.mxu0 0
      %2658 = vmatpush.bf16.msra.mxu0 %v2575
      %2659 = vmatmul.bf16.gmra.mxu0 %v2557
      %v2660 = vpop.f32.mrf.mxu0
      %v2661 = vadd.f32 0.0, %v2660
      %v2662 = vpop.f32.mrf.mxu0
      %2663 = vdwg.mxu0
      %2664 = vmatpush.bf16.msra.mxu0 0
      %2665 = vmatpush.bf16.msra.mxu0 0
      %2666 = vmatpush.bf16.msra.mxu0 0
      %2667 = vmatpush.bf16.msra.mxu0 0
      %2668 = vmatpush.bf16.msra.mxu0 0
      %2669 = vmatpush.bf16.msra.mxu0 0
      %2670 = vmatpush.bf16.msra.mxu0 0
      %2671 = vmatpush.bf16.msra.mxu0 %v2578
      %2672 = vmatmul.bf16.gmra.mxu0 %v2557
      %v2673 = vpop.f32.mrf.mxu0
      %v2674 = vadd.f32 0.0, %v2673
      %v2675 = vpop.f32.mrf.mxu0
      %2676 = vdwg.mxu0
      %2677 = vmatpush.bf16.msra.mxu0 0
      %2678 = vmatpush.bf16.msra.mxu0 0
      %2679 = vmatpush.bf16.msra.mxu0 0
      %2680 = vmatpush.bf16.msra.mxu0 0
      %2681 = vmatpush.bf16.msra.mxu0 0
      %2682 = vmatpush.bf16.msra.mxu0 0
      %2683 = vmatpush.bf16.msra.mxu0 0
      %2684 = vmatpush.bf16.msra.mxu0 %v2581
      %2685 = vmatmul.bf16.gmra.mxu0 %v2557
      %v2686 = vpop.f32.mrf.mxu0
      %v2687 = vadd.f32 0.0, %v2686
      %v2688 = vpop.f32.mrf.mxu0
      %2689 = vdwg.mxu0
      %2690 = vmatpush.bf16.msra.mxu0 0
      %2691 = vmatpush.bf16.msra.mxu0 0
      %2692 = vmatpush.bf16.msra.mxu0 0
      %2693 = vmatpush.bf16.msra.mxu0 0
      %2694 = vmatpush.bf16.msra.mxu0 0
      %2695 = vmatpush.bf16.msra.mxu0 0
      %2696 = vmatpush.bf16.msra.mxu0 0
      %2697 = vmatpush.bf16.msra.mxu0 %v2584
      %2698 = vmatmul.bf16.gmra.mxu0 %v2557
      %v2699 = vpop.f32.mrf.mxu0
      %v2700 = vadd.f32 0.0, %v2699
      %v2701 = vpop.f32.mrf.mxu0
      %2702 = vdwg.mxu0
      %v2703 = vadd.f32 %v2491, %v2596
      %v2704 = vadd.f32 %v2492, %v2609
      %v2705 = vadd.f32 %v2493, %v2622
      %v2706 = vadd.f32 %v2494, %v2635
      %v2707 = vadd.f32 %v2495, %v2648
      %v2708 = vadd.f32 %v2496, %v2661
      %v2709 = vadd.f32 %v2497, %v2674
      %v2710 = vadd.f32 %v2498, %v2687
      %v2711 = vadd.f32 %v2499, %v2700
      %s2712 = scalar_lea.vmem %s2, 24
      %v2713 = vld [vmem:[%s2712] sm:$0xf]
      %v2714 = vld [vmem:[%s234] sm:$0xff]
      %v2715 = vld [vmem:[%s234 + $0x8] sm:$0xff]
      %v2716 = vld [vmem:[%s234 + $0x10] sm:$0xff]
      %v2717 = vld [vmem:[%s234 + $0x18] sm:$0xff]
      %v2718 = vld [vmem:[%s234 + $0x20] sm:$0xff]
      %v2724 = vunpack.c.l.b16 %v2714
      %v2725 = vunpack.c.h.b16 %v2714
      %v2726 = vunpack.c.l.b16 %v2715
      %v2727 = vunpack.c.h.b16 %v2715
      %v2728 = vunpack.c.l.b16 %v2716
      %v2729 = vunpack.c.h.b16 %v2716
      %v2730 = vunpack.c.l.b16 %v2717
      %v2731 = vunpack.c.h.b16 %v2717
      %v2732 = vunpack.c.l.b16 %v2718
      %v2733 = vunpack.c.h.b16 %v2718
      %v2734 = vpack.c.b16 %v2724, %v2724
      %v2735 = vpack.c.b16 %v2725, %v2725
      %v2736 = vpack.c.b16 %v2726, %v2726
      %v2737 = vpack.c.b16 %v2727, %v2727
      %v2738 = vpack.c.b16 %v2728, %v2728
      %v2739 = vpack.c.b16 %v2729, %v2729
      %v2740 = vpack.c.b16 %v2730, %v2730
      %v2741 = vpack.c.b16 %v2731, %v2731
      %v2742 = vpack.c.b16 %v2732, %v2732
      %v2743 = vpack.c.b16 %v2733, %v2733
      %2744 = vrot.lane.b32.xlu0 %v2734, 60
      %v2745 = vpop.permute.xlu0 %2744
      %2746 = vrot.lane.b32.xlu0 %v2735, 60
      %v2747 = vpop.permute.xlu0 %2746
      %2748 = vrot.lane.b32.xlu0 %v2736, 60
      %v2749 = vpop.permute.xlu0 %2748
      %2750 = vrot.lane.b32.xlu0 %v2737, 60
      %v2751 = vpop.permute.xlu0 %2750
      %2752 = vrot.lane.b32.xlu0 %v2738, 60
      %v2753 = vpop.permute.xlu0 %2752
      %2754 = vrot.lane.b32.xlu0 %v2739, 60
      %v2755 = vpop.permute.xlu0 %2754
      %2756 = vrot.lane.b32.xlu0 %v2740, 60
      %v2757 = vpop.permute.xlu0 %2756
      %2758 = vrot.lane.b32.xlu0 %v2741, 60
      %v2759 = vpop.permute.xlu0 %2758
      %2760 = vrot.lane.b32.xlu0 %v2742, 60
      %v2761 = vpop.permute.xlu0 %2760
      %2762 = vrot.lane.b32.xlu0 %v2743, 60
      %v2763 = vpop.permute.xlu0 %2762
      %vm2764 = vcmask 490496
      %v2765 = vsel %vm2764, %v2745, %v2747
      %v2766 = vsel %vm2764, %v2747, %v2749
      %v2767 = vsel %vm2764, %v2749, %v2751
      %v2768 = vsel %vm2764, %v2751, %v2753
      %v2769 = vsel %vm2764, %v2753, %v2755
      %v2770 = vsel %vm2764, %v2755, %v2757
      %v2771 = vsel %vm2764, %v2757, %v2759
      %v2772 = vsel %vm2764, %v2759, %v2761
      %v2773 = vsel %vm2764, %v2761, %v2763
      %v2775 = vsel %vm438, %v2713, 0
      %v2778 = vsel %vm442, %v2765, 0
      %v2781 = vsel %vm442, %v2766, 0
      %v2784 = vsel %vm442, %v2767, 0
      %v2787 = vsel %vm442, %v2768, 0
      %v2790 = vsel %vm442, %v2769, 0
      %v2793 = vsel %vm442, %v2770, 0
      %v2796 = vsel %vm442, %v2771, 0
      %v2799 = vsel %vm442, %v2772, 0
      %v2802 = vsel %vm442, %v2773, 0
      %2804 = vmatpush.bf16.msra.mxu0 0
      %2805 = vmatpush.bf16.msra.mxu0 0
      %2806 = vmatpush.bf16.msra.mxu0 0
      %2807 = vmatpush.bf16.msra.mxu0 0
      %2808 = vmatpush.bf16.msra.mxu0 0
      %2809 = vmatpush.bf16.msra.mxu0 0
      %2810 = vmatpush.bf16.msra.mxu0 0
      %2811 = vmatpush.bf16.msra.mxu0 %v2778
      %2812 = vmatmul.bf16.gmra.mxu0 %v2775
      %v2813 = vpop.f32.mrf.mxu0
      %v2814 = vadd.f32 0.0, %v2813
      %v2815 = vpop.f32.mrf.mxu0
      %2816 = vdwg.mxu0
      %2817 = vmatpush.bf16.msra.mxu0 0
      %2818 = vmatpush.bf16.msra.mxu0 0
      %2819 = vmatpush.bf16.msra.mxu0 0
      %2820 = vmatpush.bf16.msra.mxu0 0
      %2821 = vmatpush.bf16.msra.mxu0 0
      %2822 = vmatpush.bf16.msra.mxu0 0
      %2823 = vmatpush.bf16.msra.mxu0 0
      %2824 = vmatpush.bf16.msra.mxu0 %v2781
      %2825 = vmatmul.bf16.gmra.mxu0 %v2775
      %v2826 = vpop.f32.mrf.mxu0
      %v2827 = vadd.f32 0.0, %v2826
      %v2828 = vpop.f32.mrf.mxu0
      %2829 = vdwg.mxu0
      %2830 = vmatpush.bf16.msra.mxu0 0
      %2831 = vmatpush.bf16.msra.mxu0 0
      %2832 = vmatpush.bf16.msra.mxu0 0
      %2833 = vmatpush.bf16.msra.mxu0 0
      %2834 = vmatpush.bf16.msra.mxu0 0
      %2835 = vmatpush.bf16.msra.mxu0 0
      %2836 = vmatpush.bf16.msra.mxu0 0
      %2837 = vmatpush.bf16.msra.mxu0 %v2784
      %2838 = vmatmul.bf16.gmra.mxu0 %v2775
      %v2839 = vpop.f32.mrf.mxu0
      %v2840 = vadd.f32 0.0, %v2839
      %v2841 = vpop.f32.mrf.mxu0
      %2842 = vdwg.mxu0
      %2843 = vmatpush.bf16.msra.mxu0 0
      %2844 = vmatpush.bf16.msra.mxu0 0
      %2845 = vmatpush.bf16.msra.mxu0 0
      %2846 = vmatpush.bf16.msra.mxu0 0
      %2847 = vmatpush.bf16.msra.mxu0 0
      %2848 = vmatpush.bf16.msra.mxu0 0
      %2849 = vmatpush.bf16.msra.mxu0 0
      %2850 = vmatpush.bf16.msra.mxu0 %v2787
      %2851 = vmatmul.bf16.gmra.mxu0 %v2775
      %v2852 = vpop.f32.mrf.mxu0
      %v2853 = vadd.f32 0.0, %v2852
      %v2854 = vpop.f32.mrf.mxu0
      %2855 = vdwg.mxu0
      %2856 = vmatpush.bf16.msra.mxu0 0
      %2857 = vmatpush.bf16.msra.mxu0 0
      %2858 = vmatpush.bf16.msra.mxu0 0
      %2859 = vmatpush.bf16.msra.mxu0 0
      %2860 = vmatpush.bf16.msra.mxu0 0
      %2861 = vmatpush.bf16.msra.mxu0 0
      %2862 = vmatpush.bf16.msra.mxu0 0
      %2863 = vmatpush.bf16.msra.mxu0 %v2790
      %2864 = vmatmul.bf16.gmra.mxu0 %v2775
      %v2865 = vpop.f32.mrf.mxu0
      %v2866 = vadd.f32 0.0, %v2865
      %v2867 = vpop.f32.mrf.mxu0
      %2868 = vdwg.mxu0
      %2869 = vmatpush.bf16.msra.mxu0 0
      %2870 = vmatpush.bf16.msra.mxu0 0
      %2871 = vmatpush.bf16.msra.mxu0 0
      %2872 = vmatpush.bf16.msra.mxu0 0
      %2873 = vmatpush.bf16.msra.mxu0 0
      %2874 = vmatpush.bf16.msra.mxu0 0
      %2875 = vmatpush.bf16.msra.mxu0 0
      %2876 = vmatpush.bf16.msra.mxu0 %v2793
      %2877 = vmatmul.bf16.gmra.mxu0 %v2775
      %v2878 = vpop.f32.mrf.mxu0
      %v2879 = vadd.f32 0.0, %v2878
      %v2880 = vpop.f32.mrf.mxu0
      %2881 = vdwg.mxu0
      %2882 = vmatpush.bf16.msra.mxu0 0
      %2883 = vmatpush.bf16.msra.mxu0 0
      %2884 = vmatpush.bf16.msra.mxu0 0
      %2885 = vmatpush.bf16.msra.mxu0 0
      %2886 = vmatpush.bf16.msra.mxu0 0
      %2887 = vmatpush.bf16.msra.mxu0 0
      %2888 = vmatpush.bf16.msra.mxu0 0
      %2889 = vmatpush.bf16.msra.mxu0 %v2796
      %2890 = vmatmul.bf16.gmra.mxu0 %v2775
      %v2891 = vpop.f32.mrf.mxu0
      %v2892 = vadd.f32 0.0, %v2891
      %v2893 = vpop.f32.mrf.mxu0
      %2894 = vdwg.mxu0
      %2895 = vmatpush.bf16.msra.mxu0 0
      %2896 = vmatpush.bf16.msra.mxu0 0
      %2897 = vmatpush.bf16.msra.mxu0 0
      %2898 = vmatpush.bf16.msra.mxu0 0
      %2899 = vmatpush.bf16.msra.mxu0 0
      %2900 = vmatpush.bf16.msra.mxu0 0
      %2901 = vmatpush.bf16.msra.mxu0 0
      %2902 = vmatpush.bf16.msra.mxu0 %v2799
      %2903 = vmatmul.bf16.gmra.mxu0 %v2775
      %v2904 = vpop.f32.mrf.mxu0
      %v2905 = vadd.f32 0.0, %v2904
      %v2906 = vpop.f32.mrf.mxu0
      %2907 = vdwg.mxu0
      %2908 = vmatpush.bf16.msra.mxu0 0
      %2909 = vmatpush.bf16.msra.mxu0 0
      %2910 = vmatpush.bf16.msra.mxu0 0
      %2911 = vmatpush.bf16.msra.mxu0 0
      %2912 = vmatpush.bf16.msra.mxu0 0
      %2913 = vmatpush.bf16.msra.mxu0 0
      %2914 = vmatpush.bf16.msra.mxu0 0
      %2915 = vmatpush.bf16.msra.mxu0 %v2802
      %2916 = vmatmul.bf16.gmra.mxu0 %v2775
      %v2917 = vpop.f32.mrf.mxu0
      %v2918 = vadd.f32 0.0, %v2917
      %v2919 = vpop.f32.mrf.mxu0
      %2920 = vdwg.mxu0
      %v2921 = vadd.f32 %v2703, %v2814
      %v2922 = vadd.f32 %v2704, %v2827
      %v2923 = vadd.f32 %v2705, %v2840
      %v2924 = vadd.f32 %v2706, %v2853
      %v2925 = vadd.f32 %v2707, %v2866
      %v2926 = vadd.f32 %v2708, %v2879
      %v2927 = vadd.f32 %v2709, %v2892
      %v2928 = vadd.f32 %v2710, %v2905
      %v2929 = vadd.f32 %v2711, %v2918
      %s2930 = scalar_lea.vmem %s3, 24
      %v2931 = vld [vmem:[%s2930] sm:$0xf]
      %v2932 = vld [vmem:[%s239] sm:$0xff]
      %v2933 = vld [vmem:[%s239 + $0x8] sm:$0xff]
      %v2934 = vld [vmem:[%s239 + $0x10] sm:$0xf]
      %2936 = vst [vmem:[#allocation1] ss:$4 sm:$0xff] %v2932
      %s2938 = scalar_lea.vmem [#allocation1], 32
      %2939 = vst [vmem:[%s2938] ss:$4 sm:$0xff] %v2933
      %v2940 = vld.sshfl [vmem:[#allocation1] sm:$0xff pattern:$0x73625140]
      %v2942 = vld.sshfl [vmem:[#allocation1 + $0x8] sm:$0xff pattern:$0x73625140]
      %v2944 = vld.sshfl [vmem:[#allocation1 + $0x10] sm:$0xff pattern:$0x73625140]
      %v2946 = vld.sshfl [vmem:[#allocation1 + $0x18] sm:$0xff pattern:$0x73625140]
      %v2948 = vld.sshfl [vmem:[#allocation1 + $0x20] sm:$0xff pattern:$0x73625140]
      %v2950 = vld.sshfl [vmem:[#allocation1 + $0x28] sm:$0xff pattern:$0x73625140]
      %v2952 = vld.sshfl [vmem:[#allocation1 + $0x30] sm:$0xff pattern:$0x73625140]
      %v2954 = vld.sshfl [vmem:[#allocation1 + $0x38] sm:$0xff pattern:$0x73625140]
      %2957 = vst [vmem:[#allocation1] ss:$4 sm:$0xff] %v2934
      %v2958 = vld.sshfl [vmem:[#allocation1] sm:$0xff pattern:$0x73625140]
      %v2960 = vld.sshfl [vmem:[#allocation1 + $0x8] sm:$0xff pattern:$0x73625140]
      %2962 = vrot.lane.b32.xlu0 %v2940, 60
      %v2963 = vpop.permute.xlu0 %2962
      %2964 = vrot.lane.b32.xlu0 %v2942, 60
      %v2965 = vpop.permute.xlu0 %2964
      %2966 = vrot.lane.b32.xlu0 %v2944, 60
      %v2967 = vpop.permute.xlu0 %2966
      %2968 = vrot.lane.b32.xlu0 %v2946, 60
      %v2969 = vpop.permute.xlu0 %2968
      %2970 = vrot.lane.b32.xlu0 %v2948, 60
      %v2971 = vpop.permute.xlu0 %2970
      %2972 = vrot.lane.b32.xlu0 %v2950, 60
      %v2973 = vpop.permute.xlu0 %2972
      %2974 = vrot.lane.b32.xlu0 %v2952, 60
      %v2975 = vpop.permute.xlu0 %2974
      %2976 = vrot.lane.b32.xlu0 %v2954, 60
      %v2977 = vpop.permute.xlu0 %2976
      %2978 = vrot.lane.b32.xlu0 %v2958, 60
      %v2979 = vpop.permute.xlu0 %2978
      %2980 = vrot.lane.b32.xlu0 %v2960, 60
      %v2981 = vpop.permute.xlu0 %2980
      %v2982 = vsel %vm2764, %v2963, %v2965
      %v2983 = vsel %vm2764, %v2965, %v2967
      %v2984 = vsel %vm2764, %v2967, %v2969
      %v2985 = vsel %vm2764, %v2969, %v2971
      %v2986 = vsel %vm2764, %v2971, %v2973
      %v2987 = vsel %vm2764, %v2973, %v2975
      %v2988 = vsel %vm2764, %v2975, %v2977
      %v2989 = vsel %vm2764, %v2977, %v2979
      %v2990 = vsel %vm2764, %v2979, %v2981
      %v2992 = vsel %vm272, %v2931, 0
      %v2995 = vand.u32 %v2982, %v279
      %v2998 = vand.u32 %v2983, %v279
      %v3001 = vand.u32 %v2984, %v279
      %v3004 = vand.u32 %v2985, %v279
      %v3007 = vand.u32 %v2986, %v279
      %v3010 = vand.u32 %v2987, %v279
      %v3013 = vand.u32 %v2988, %v279
      %v3016 = vand.u32 %v2989, %v279
      %v3019 = vand.u32 %v2990, %v279
      %3021 = vmatpush.bf16.msra.mxu0 0
      %3022 = vmatpush.bf16.msra.mxu0 0
      %3023 = vmatpush.bf16.msra.mxu0 0
      %3024 = vmatpush.bf16.msra.mxu0 0
      %3025 = vmatpush.bf16.msra.mxu0 0
      %3026 = vmatpush.bf16.msra.mxu0 0
      %3027 = vmatpush.bf16.msra.mxu0 0
      %3028 = vmatpush.bf16.msra.mxu0 %v2995
      %3029 = vmatmul.bf16.gmra.mxu0 %v2992
      %v3030 = vpop.f32.mrf.mxu0
      %v3031 = vadd.f32 0.0, %v3030
      %v3032 = vpop.f32.mrf.mxu0
      %3033 = vdwg.mxu0
      %3034 = vmatpush.bf16.msra.mxu0 0
      %3035 = vmatpush.bf16.msra.mxu0 0
      %3036 = vmatpush.bf16.msra.mxu0 0
      %3037 = vmatpush.bf16.msra.mxu0 0
      %3038 = vmatpush.bf16.msra.mxu0 0
      %3039 = vmatpush.bf16.msra.mxu0 0
      %3040 = vmatpush.bf16.msra.mxu0 0
      %3041 = vmatpush.bf16.msra.mxu0 %v2998
      %3042 = vmatmul.bf16.gmra.mxu0 %v2992
      %v3043 = vpop.f32.mrf.mxu0
      %v3044 = vadd.f32 0.0, %v3043
      %v3045 = vpop.f32.mrf.mxu0
      %3046 = vdwg.mxu0
      %3047 = vmatpush.bf16.msra.mxu0 0
      %3048 = vmatpush.bf16.msra.mxu0 0
      %3049 = vmatpush.bf16.msra.mxu0 0
      %3050 = vmatpush.bf16.msra.mxu0 0
      %3051 = vmatpush.bf16.msra.mxu0 0
      %3052 = vmatpush.bf16.msra.mxu0 0
      %3053 = vmatpush.bf16.msra.mxu0 0
      %3054 = vmatpush.bf16.msra.mxu0 %v3001
      %3055 = vmatmul.bf16.gmra.mxu0 %v2992
      %v3056 = vpop.f32.mrf.mxu0
      %v3057 = vadd.f32 0.0, %v3056
      %v3058 = vpop.f32.mrf.mxu0
      %3059 = vdwg.mxu0
      %3060 = vmatpush.bf16.msra.mxu0 0
      %3061 = vmatpush.bf16.msra.mxu0 0
      %3062 = vmatpush.bf16.msra.mxu0 0
      %3063 = vmatpush.bf16.msra.mxu0 0
      %3064 = vmatpush.bf16.msra.mxu0 0
      %3065 = vmatpush.bf16.msra.mxu0 0
      %3066 = vmatpush.bf16.msra.mxu0 0
      %3067 = vmatpush.bf16.msra.mxu0 %v3004
      %3068 = vmatmul.bf16.gmra.mxu0 %v2992
      %v3069 = vpop.f32.mrf.mxu0
      %v3070 = vadd.f32 0.0, %v3069
      %v3071 = vpop.f32.mrf.mxu0
      %3072 = vdwg.mxu0
      %3073 = vmatpush.bf16.msra.mxu0 0
      %3074 = vmatpush.bf16.msra.mxu0 0
      %3075 = vmatpush.bf16.msra.mxu0 0
      %3076 = vmatpush.bf16.msra.mxu0 0
      %3077 = vmatpush.bf16.msra.mxu0 0
      %3078 = vmatpush.bf16.msra.mxu0 0
      %3079 = vmatpush.bf16.msra.mxu0 0
      %3080 = vmatpush.bf16.msra.mxu0 %v3007
      %3081 = vmatmul.bf16.gmra.mxu0 %v2992
      %v3082 = vpop.f32.mrf.mxu0
      %v3083 = vadd.f32 0.0, %v3082
      %v3084 = vpop.f32.mrf.mxu0
      %3085 = vdwg.mxu0
      %3086 = vmatpush.bf16.msra.mxu0 0
      %3087 = vmatpush.bf16.msra.mxu0 0
      %3088 = vmatpush.bf16.msra.mxu0 0
      %3089 = vmatpush.bf16.msra.mxu0 0
      %3090 = vmatpush.bf16.msra.mxu0 0
      %3091 = vmatpush.bf16.msra.mxu0 0
      %3092 = vmatpush.bf16.msra.mxu0 0
      %3093 = vmatpush.bf16.msra.mxu0 %v3010
      %3094 = vmatmul.bf16.gmra.mxu0 %v2992
      %v3095 = vpop.f32.mrf.mxu0
      %v3096 = vadd.f32 0.0, %v3095
      %v3097 = vpop.f32.mrf.mxu0
      %3098 = vdwg.mxu0
      %3099 = vmatpush.bf16.msra.mxu0 0
      %3100 = vmatpush.bf16.msra.mxu0 0
      %3101 = vmatpush.bf16.msra.mxu0 0
      %3102 = vmatpush.bf16.msra.mxu0 0
      %3103 = vmatpush.bf16.msra.mxu0 0
      %3104 = vmatpush.bf16.msra.mxu0 0
      %3105 = vmatpush.bf16.msra.mxu0 0
      %3106 = vmatpush.bf16.msra.mxu0 %v3013
      %3107 = vmatmul.bf16.gmra.mxu0 %v2992
      %v3108 = vpop.f32.mrf.mxu0
      %v3109 = vadd.f32 0.0, %v3108
      %v3110 = vpop.f32.mrf.mxu0
      %3111 = vdwg.mxu0
      %3112 = vmatpush.bf16.msra.mxu0 0
      %3113 = vmatpush.bf16.msra.mxu0 0
      %3114 = vmatpush.bf16.msra.mxu0 0
      %3115 = vmatpush.bf16.msra.mxu0 0
      %3116 = vmatpush.bf16.msra.mxu0 0
      %3117 = vmatpush.bf16.msra.mxu0 0
      %3118 = vmatpush.bf16.msra.mxu0 0
      %3119 = vmatpush.bf16.msra.mxu0 %v3016
      %3120 = vmatmul.bf16.gmra.mxu0 %v2992
      %v3121 = vpop.f32.mrf.mxu0
      %v3122 = vadd.f32 0.0, %v3121
      %v3123 = vpop.f32.mrf.mxu0
      %3124 = vdwg.mxu0
      %3125 = vmatpush.bf16.msra.mxu0 0
      %3126 = vmatpush.bf16.msra.mxu0 0
      %3127 = vmatpush.bf16.msra.mxu0 0
      %3128 = vmatpush.bf16.msra.mxu0 0
      %3129 = vmatpush.bf16.msra.mxu0 0
      %3130 = vmatpush.bf16.msra.mxu0 0
      %3131 = vmatpush.bf16.msra.mxu0 0
      %3132 = vmatpush.bf16.msra.mxu0 %v3019
      %3133 = vmatmul.bf16.gmra.mxu0 %v2992
      %v3134 = vpop.f32.mrf.mxu0
      %v3135 = vadd.f32 0.0, %v3134
      %v3136 = vpop.f32.mrf.mxu0
      %3137 = vdwg.mxu0
      %v3138 = vadd.f32 %v2921, %v3031
      %v3139 = vadd.f32 %v2922, %v3044
      %v3140 = vadd.f32 %v2923, %v3057
      %v3141 = vadd.f32 %v2924, %v3070
      %v3142 = vadd.f32 %v2925, %v3083
      %v3143 = vadd.f32 %v2926, %v3096
      %v3144 = vadd.f32 %v2927, %v3109
      %v3145 = vadd.f32 %v2928, %v3122
      %v3146 = vadd.f32 %v2929, %v3135
      %s3147 = scalar_lea.vmem %s2, 28
      %v3148 = vld [vmem:[%s3147] sm:$0xf]
      %v3149 = vld [vmem:[%s234] sm:$0xff]
      %v3150 = vld [vmem:[%s234 + $0x8] sm:$0xff]
      %v3151 = vld [vmem:[%s234 + $0x10] sm:$0xff]
      %v3152 = vld [vmem:[%s234 + $0x18] sm:$0xff]
      %v3153 = vld [vmem:[%s234 + $0x20] sm:$0xff]
      %v3159 = vunpack.c.l.b16 %v3149
      %v3160 = vunpack.c.h.b16 %v3149
      %v3161 = vunpack.c.l.b16 %v3150
      %v3162 = vunpack.c.h.b16 %v3150
      %v3163 = vunpack.c.l.b16 %v3151
      %v3164 = vunpack.c.h.b16 %v3151
      %v3165 = vunpack.c.l.b16 %v3152
      %v3166 = vunpack.c.h.b16 %v3152
      %v3167 = vunpack.c.l.b16 %v3153
      %v3168 = vunpack.c.h.b16 %v3153
      %v3169 = vpack.c.b16 %v3159, %v3159
      %v3170 = vpack.c.b16 %v3160, %v3160
      %v3171 = vpack.c.b16 %v3161, %v3161
      %v3172 = vpack.c.b16 %v3162, %v3162
      %v3173 = vpack.c.b16 %v3163, %v3163
      %v3174 = vpack.c.b16 %v3164, %v3164
      %v3175 = vpack.c.b16 %v3165, %v3165
      %v3176 = vpack.c.b16 %v3166, %v3166
      %v3177 = vpack.c.b16 %v3167, %v3167
      %v3178 = vpack.c.b16 %v3168, %v3168
      %3179 = vrot.lane.b32.xlu0 %v3169, 59
      %v3180 = vpop.permute.xlu0 %3179
      %3181 = vrot.lane.b32.xlu0 %v3170, 59
      %v3182 = vpop.permute.xlu0 %3181
      %3183 = vrot.lane.b32.xlu0 %v3171, 59
      %v3184 = vpop.permute.xlu0 %3183
      %3185 = vrot.lane.b32.xlu0 %v3172, 59
      %v3186 = vpop.permute.xlu0 %3185
      %3187 = vrot.lane.b32.xlu0 %v3173, 59
      %v3188 = vpop.permute.xlu0 %3187
      %3189 = vrot.lane.b32.xlu0 %v3174, 59
      %v3190 = vpop.permute.xlu0 %3189
      %3191 = vrot.lane.b32.xlu0 %v3175, 59
      %v3192 = vpop.permute.xlu0 %3191
      %3193 = vrot.lane.b32.xlu0 %v3176, 59
      %v3194 = vpop.permute.xlu0 %3193
      %3195 = vrot.lane.b32.xlu0 %v3177, 59
      %v3196 = vpop.permute.xlu0 %3195
      %3197 = vrot.lane.b32.xlu0 %v3178, 59
      %v3198 = vpop.permute.xlu0 %3197
      %vm3199 = vcmask 482304
      %v3200 = vsel %vm3199, %v3180, %v3182
      %v3201 = vsel %vm3199, %v3182, %v3184
      %v3202 = vsel %vm3199, %v3184, %v3186
      %v3203 = vsel %vm3199, %v3186, %v3188
      %v3204 = vsel %vm3199, %v3188, %v3190
      %v3205 = vsel %vm3199, %v3190, %v3192
      %v3206 = vsel %vm3199, %v3192, %v3194
      %v3207 = vsel %vm3199, %v3194, %v3196
      %v3208 = vsel %vm3199, %v3196, %v3198
      %v3210 = vsel %vm438, %v3148, 0
      %v3213 = vsel %vm442, %v3200, 0
      %v3216 = vsel %vm442, %v3201, 0
      %v3219 = vsel %vm442, %v3202, 0
      %v3222 = vsel %vm442, %v3203, 0
      %v3225 = vsel %vm442, %v3204, 0
      %v3228 = vsel %vm442, %v3205, 0
      %v3231 = vsel %vm442, %v3206, 0
      %v3234 = vsel %vm442, %v3207, 0
      %v3237 = vsel %vm442, %v3208, 0
      %3239 = vmatpush.bf16.msra.mxu0 0
      %3240 = vmatpush.bf16.msra.mxu0 0
      %3241 = vmatpush.bf16.msra.mxu0 0
      %3242 = vmatpush.bf16.msra.mxu0 0
      %3243 = vmatpush.bf16.msra.mxu0 0
      %3244 = vmatpush.bf16.msra.mxu0 0
      %3245 = vmatpush.bf16.msra.mxu0 0
      %3246 = vmatpush.bf16.msra.mxu0 %v3213
      %3247 = vmatmul.bf16.gmra.mxu0 %v3210
      %v3248 = vpop.f32.mrf.mxu0
      %v3249 = vadd.f32 0.0, %v3248
      %v3250 = vpop.f32.mrf.mxu0
      %3251 = vdwg.mxu0
      %3252 = vmatpush.bf16.msra.mxu0 0
      %3253 = vmatpush.bf16.msra.mxu0 0
      %3254 = vmatpush.bf16.msra.mxu0 0
      %3255 = vmatpush.bf16.msra.mxu0 0
      %3256 = vmatpush.bf16.msra.mxu0 0
      %3257 = vmatpush.bf16.msra.mxu0 0
      %3258 = vmatpush.bf16.msra.mxu0 0
      %3259 = vmatpush.bf16.msra.mxu0 %v3216
      %3260 = vmatmul.bf16.gmra.mxu0 %v3210
      %v3261 = vpop.f32.mrf.mxu0
      %v3262 = vadd.f32 0.0, %v3261
      %v3263 = vpop.f32.mrf.mxu0
      %3264 = vdwg.mxu0
      %3265 = vmatpush.bf16.msra.mxu0 0
      %3266 = vmatpush.bf16.msra.mxu0 0
      %3267 = vmatpush.bf16.msra.mxu0 0
      %3268 = vmatpush.bf16.msra.mxu0 0
      %3269 = vmatpush.bf16.msra.mxu0 0
      %3270 = vmatpush.bf16.msra.mxu0 0
      %3271 = vmatpush.bf16.msra.mxu0 0
      %3272 = vmatpush.bf16.msra.mxu0 %v3219
      %3273 = vmatmul.bf16.gmra.mxu0 %v3210
      %v3274 = vpop.f32.mrf.mxu0
      %v3275 = vadd.f32 0.0, %v3274
      %v3276 = vpop.f32.mrf.mxu0
      %3277 = vdwg.mxu0
      %3278 = vmatpush.bf16.msra.mxu0 0
      %3279 = vmatpush.bf16.msra.mxu0 0
      %3280 = vmatpush.bf16.msra.mxu0 0
      %3281 = vmatpush.bf16.msra.mxu0 0
      %3282 = vmatpush.bf16.msra.mxu0 0
      %3283 = vmatpush.bf16.msra.mxu0 0
      %3284 = vmatpush.bf16.msra.mxu0 0
      %3285 = vmatpush.bf16.msra.mxu0 %v3222
      %3286 = vmatmul.bf16.gmra.mxu0 %v3210
      %v3287 = vpop.f32.mrf.mxu0
      %v3288 = vadd.f32 0.0, %v3287
      %v3289 = vpop.f32.mrf.mxu0
      %3290 = vdwg.mxu0
      %3291 = vmatpush.bf16.msra.mxu0 0
      %3292 = vmatpush.bf16.msra.mxu0 0
      %3293 = vmatpush.bf16.msra.mxu0 0
      %3294 = vmatpush.bf16.msra.mxu0 0
      %3295 = vmatpush.bf16.msra.mxu0 0
      %3296 = vmatpush.bf16.msra.mxu0 0
      %3297 = vmatpush.bf16.msra.mxu0 0
      %3298 = vmatpush.bf16.msra.mxu0 %v3225
      %3299 = vmatmul.bf16.gmra.mxu0 %v3210
      %v3300 = vpop.f32.mrf.mxu0
      %v3301 = vadd.f32 0.0, %v3300
      %v3302 = vpop.f32.mrf.mxu0
      %3303 = vdwg.mxu0
      %3304 = vmatpush.bf16.msra.mxu0 0
      %3305 = vmatpush.bf16.msra.mxu0 0
      %3306 = vmatpush.bf16.msra.mxu0 0
      %3307 = vmatpush.bf16.msra.mxu0 0
      %3308 = vmatpush.bf16.msra.mxu0 0
      %3309 = vmatpush.bf16.msra.mxu0 0
      %3310 = vmatpush.bf16.msra.mxu0 0
      %3311 = vmatpush.bf16.msra.mxu0 %v3228
      %3312 = vmatmul.bf16.gmra.mxu0 %v3210
      %v3313 = vpop.f32.mrf.mxu0
      %v3314 = vadd.f32 0.0, %v3313
      %v3315 = vpop.f32.mrf.mxu0
      %3316 = vdwg.mxu0
      %3317 = vmatpush.bf16.msra.mxu0 0
      %3318 = vmatpush.bf16.msra.mxu0 0
      %3319 = vmatpush.bf16.msra.mxu0 0
      %3320 = vmatpush.bf16.msra.mxu0 0
      %3321 = vmatpush.bf16.msra.mxu0 0
      %3322 = vmatpush.bf16.msra.mxu0 0
      %3323 = vmatpush.bf16.msra.mxu0 0
      %3324 = vmatpush.bf16.msra.mxu0 %v3231
      %3325 = vmatmul.bf16.gmra.mxu0 %v3210
      %v3326 = vpop.f32.mrf.mxu0
      %v3327 = vadd.f32 0.0, %v3326
      %v3328 = vpop.f32.mrf.mxu0
      %3329 = vdwg.mxu0
      %3330 = vmatpush.bf16.msra.mxu0 0
      %3331 = vmatpush.bf16.msra.mxu0 0
      %3332 = vmatpush.bf16.msra.mxu0 0
      %3333 = vmatpush.bf16.msra.mxu0 0
      %3334 = vmatpush.bf16.msra.mxu0 0
      %3335 = vmatpush.bf16.msra.mxu0 0
      %3336 = vmatpush.bf16.msra.mxu0 0
      %3337 = vmatpush.bf16.msra.mxu0 %v3234
      %3338 = vmatmul.bf16.gmra.mxu0 %v3210
      %v3339 = vpop.f32.mrf.mxu0
      %v3340 = vadd.f32 0.0, %v3339
      %v3341 = vpop.f32.mrf.mxu0
      %3342 = vdwg.mxu0
      %3343 = vmatpush.bf16.msra.mxu0 0
      %3344 = vmatpush.bf16.msra.mxu0 0
      %3345 = vmatpush.bf16.msra.mxu0 0
      %3346 = vmatpush.bf16.msra.mxu0 0
      %3347 = vmatpush.bf16.msra.mxu0 0
      %3348 = vmatpush.bf16.msra.mxu0 0
      %3349 = vmatpush.bf16.msra.mxu0 0
      %3350 = vmatpush.bf16.msra.mxu0 %v3237
      %3351 = vmatmul.bf16.gmra.mxu0 %v3210
      %v3352 = vpop.f32.mrf.mxu0
      %v3353 = vadd.f32 0.0, %v3352
      %v3354 = vpop.f32.mrf.mxu0
      %3355 = vdwg.mxu0
      %v3356 = vadd.f32 %v3138, %v3249
      %v3357 = vadd.f32 %v3139, %v3262
      %v3358 = vadd.f32 %v3140, %v3275
      %v3359 = vadd.f32 %v3141, %v3288
      %v3360 = vadd.f32 %v3142, %v3301
      %v3361 = vadd.f32 %v3143, %v3314
      %v3362 = vadd.f32 %v3144, %v3327
      %v3363 = vadd.f32 %v3145, %v3340
      %v3364 = vadd.f32 %v3146, %v3353
      %s3365 = scalar_lea.vmem %s3, 28
      %v3366 = vld [vmem:[%s3365] sm:$0xf]
      %v3367 = vld [vmem:[%s239] sm:$0xff]
      %v3368 = vld [vmem:[%s239 + $0x8] sm:$0xff]
      %v3369 = vld [vmem:[%s239 + $0x10] sm:$0xf]
      %3371 = vst [vmem:[#allocation1] ss:$4 sm:$0xff] %v3367
      %s3373 = scalar_lea.vmem [#allocation1], 32
      %3374 = vst [vmem:[%s3373] ss:$4 sm:$0xff] %v3368
      %v3375 = vld.sshfl [vmem:[#allocation1] sm:$0xff pattern:$0x73625140]
      %v3377 = vld.sshfl [vmem:[#allocation1 + $0x8] sm:$0xff pattern:$0x73625140]
      %v3379 = vld.sshfl [vmem:[#allocation1 + $0x10] sm:$0xff pattern:$0x73625140]
      %v3381 = vld.sshfl [vmem:[#allocation1 + $0x18] sm:$0xff pattern:$0x73625140]
      %v3383 = vld.sshfl [vmem:[#allocation1 + $0x20] sm:$0xff pattern:$0x73625140]
      %v3385 = vld.sshfl [vmem:[#allocation1 + $0x28] sm:$0xff pattern:$0x73625140]
      %v3387 = vld.sshfl [vmem:[#allocation1 + $0x30] sm:$0xff pattern:$0x73625140]
      %v3389 = vld.sshfl [vmem:[#allocation1 + $0x38] sm:$0xff pattern:$0x73625140]
      %3392 = vst [vmem:[#allocation1] ss:$4 sm:$0xff] %v3369
      %v3393 = vld.sshfl [vmem:[#allocation1] sm:$0xff pattern:$0x73625140]
      %v3395 = vld.sshfl [vmem:[#allocation1 + $0x8] sm:$0xff pattern:$0x73625140]
      %3397 = vrot.lane.b32.xlu0 %v3375, 59
      %v3398 = vpop.permute.xlu0 %3397
      %3399 = vrot.lane.b32.xlu0 %v3377, 59
      %v3400 = vpop.permute.xlu0 %3399
      %3401 = vrot.lane.b32.xlu0 %v3379, 59
      %v3402 = vpop.permute.xlu0 %3401
      %3403 = vrot.lane.b32.xlu0 %v3381, 59
      %v3404 = vpop.permute.xlu0 %3403
      %3405 = vrot.lane.b32.xlu0 %v3383, 59
      %v3406 = vpop.permute.xlu0 %3405
      %3407 = vrot.lane.b32.xlu0 %v3385, 59
      %v3408 = vpop.permute.xlu0 %3407
      %3409 = vrot.lane.b32.xlu0 %v3387, 59
      %v3410 = vpop.permute.xlu0 %3409
      %3411 = vrot.lane.b32.xlu0 %v3389, 59
      %v3412 = vpop.permute.xlu0 %3411
      %3413 = vrot.lane.b32.xlu0 %v3393, 59
      %v3414 = vpop.permute.xlu0 %3413
      %3415 = vrot.lane.b32.xlu0 %v3395, 59
      %v3416 = vpop.permute.xlu0 %3415
      %v3417 = vsel %vm3199, %v3398, %v3400
      %v3418 = vsel %vm3199, %v3400, %v3402
      %v3419 = vsel %vm3199, %v3402, %v3404
      %v3420 = vsel %vm3199, %v3404, %v3406
      %v3421 = vsel %vm3199, %v3406, %v3408
      %v3422 = vsel %vm3199, %v3408, %v3410
      %v3423 = vsel %vm3199, %v3410, %v3412
      %v3424 = vsel %vm3199, %v3412, %v3414
      %v3425 = vsel %vm3199, %v3414, %v3416
      %v3427 = vsel %vm272, %v3366, 0
      %v3430 = vand.u32 %v3417, %v279
      %v3433 = vand.u32 %v3418, %v279
      %v3436 = vand.u32 %v3419, %v279
      %v3439 = vand.u32 %v3420, %v279
      %v3442 = vand.u32 %v3421, %v279
      %v3445 = vand.u32 %v3422, %v279
      %v3448 = vand.u32 %v3423, %v279
      %v3451 = vand.u32 %v3424, %v279
      %v3454 = vand.u32 %v3425, %v279
      %3456 = vmatpush.bf16.msra.mxu0 0
      %3457 = vmatpush.bf16.msra.mxu0 0
      %3458 = vmatpush.bf16.msra.mxu0 0
      %3459 = vmatpush.bf16.msra.mxu0 0
      %3460 = vmatpush.bf16.msra.mxu0 0
      %3461 = vmatpush.bf16.msra.mxu0 0
      %3462 = vmatpush.bf16.msra.mxu0 0
      %3463 = vmatpush.bf16.msra.mxu0 %v3430
      %3464 = vmatmul.bf16.gmra.mxu0 %v3427
      %v3465 = vpop.f32.mrf.mxu0
      %v3466 = vadd.f32 0.0, %v3465
      %v3467 = vpop.f32.mrf.mxu0
      %3468 = vdwg.mxu0
      %3469 = vmatpush.bf16.msra.mxu0 0
      %3470 = vmatpush.bf16.msra.mxu0 0
      %3471 = vmatpush.bf16.msra.mxu0 0
      %3472 = vmatpush.bf16.msra.mxu0 0
      %3473 = vmatpush.bf16.msra.mxu0 0
      %3474 = vmatpush.bf16.msra.mxu0 0
      %3475 = vmatpush.bf16.msra.mxu0 0
      %3476 = vmatpush.bf16.msra.mxu0 %v3433
      %3477 = vmatmul.bf16.gmra.mxu0 %v3427
      %v3478 = vpop.f32.mrf.mxu0
      %v3479 = vadd.f32 0.0, %v3478
      %v3480 = vpop.f32.mrf.mxu0
      %3481 = vdwg.mxu0
      %3482 = vmatpush.bf16.msra.mxu0 0
      %3483 = vmatpush.bf16.msra.mxu0 0
      %3484 = vmatpush.bf16.msra.mxu0 0
      %3485 = vmatpush.bf16.msra.mxu0 0
      %3486 = vmatpush.bf16.msra.mxu0 0
      %3487 = vmatpush.bf16.msra.mxu0 0
      %3488 = vmatpush.bf16.msra.mxu0 0
      %3489 = vmatpush.bf16.msra.mxu0 %v3436
      %3490 = vmatmul.bf16.gmra.mxu0 %v3427
      %v3491 = vpop.f32.mrf.mxu0
      %v3492 = vadd.f32 0.0, %v3491
      %v3493 = vpop.f32.mrf.mxu0
      %3494 = vdwg.mxu0
      %3495 = vmatpush.bf16.msra.mxu0 0
      %3496 = vmatpush.bf16.msra.mxu0 0
      %3497 = vmatpush.bf16.msra.mxu0 0
      %3498 = vmatpush.bf16.msra.mxu0 0
      %3499 = vmatpush.bf16.msra.mxu0 0
      %3500 = vmatpush.bf16.msra.mxu0 0
      %3501 = vmatpush.bf16.msra.mxu0 0
      %3502 = vmatpush.bf16.msra.mxu0 %v3439
      %3503 = vmatmul.bf16.gmra.mxu0 %v3427
      %v3504 = vpop.f32.mrf.mxu0
      %v3505 = vadd.f32 0.0, %v3504
      %v3506 = vpop.f32.mrf.mxu0
      %3507 = vdwg.mxu0
      %3508 = vmatpush.bf16.msra.mxu0 0
      %3509 = vmatpush.bf16.msra.mxu0 0
      %3510 = vmatpush.bf16.msra.mxu0 0
      %3511 = vmatpush.bf16.msra.mxu0 0
      %3512 = vmatpush.bf16.msra.mxu0 0
      %3513 = vmatpush.bf16.msra.mxu0 0
      %3514 = vmatpush.bf16.msra.mxu0 0
      %3515 = vmatpush.bf16.msra.mxu0 %v3442
      %3516 = vmatmul.bf16.gmra.mxu0 %v3427
      %v3517 = vpop.f32.mrf.mxu0
      %v3518 = vadd.f32 0.0, %v3517
      %v3519 = vpop.f32.mrf.mxu0
      %3520 = vdwg.mxu0
      %3521 = vmatpush.bf16.msra.mxu0 0
      %3522 = vmatpush.bf16.msra.mxu0 0
      %3523 = vmatpush.bf16.msra.mxu0 0
      %3524 = vmatpush.bf16.msra.mxu0 0
      %3525 = vmatpush.bf16.msra.mxu0 0
      %3526 = vmatpush.bf16.msra.mxu0 0
      %3527 = vmatpush.bf16.msra.mxu0 0
      %3528 = vmatpush.bf16.msra.mxu0 %v3445
      %3529 = vmatmul.bf16.gmra.mxu0 %v3427
      %v3530 = vpop.f32.mrf.mxu0
      %v3531 = vadd.f32 0.0, %v3530
      %v3532 = vpop.f32.mrf.mxu0
      %3533 = vdwg.mxu0
      %3534 = vmatpush.bf16.msra.mxu0 0
      %3535 = vmatpush.bf16.msra.mxu0 0
      %3536 = vmatpush.bf16.msra.mxu0 0
      %3537 = vmatpush.bf16.msra.mxu0 0
      %3538 = vmatpush.bf16.msra.mxu0 0
      %3539 = vmatpush.bf16.msra.mxu0 0
      %3540 = vmatpush.bf16.msra.mxu0 0
      %3541 = vmatpush.bf16.msra.mxu0 %v3448
      %3542 = vmatmul.bf16.gmra.mxu0 %v3427
      %v3543 = vpop.f32.mrf.mxu0
      %v3544 = vadd.f32 0.0, %v3543
      %v3545 = vpop.f32.mrf.mxu0
      %3546 = vdwg.mxu0
      %3547 = vmatpush.bf16.msra.mxu0 0
      %3548 = vmatpush.bf16.msra.mxu0 0
      %3549 = vmatpush.bf16.msra.mxu0 0
      %3550 = vmatpush.bf16.msra.mxu0 0
      %3551 = vmatpush.bf16.msra.mxu0 0
      %3552 = vmatpush.bf16.msra.mxu0 0
      %3553 = vmatpush.bf16.msra.mxu0 0
      %3554 = vmatpush.bf16.msra.mxu0 %v3451
      %3555 = vmatmul.bf16.gmra.mxu0 %v3427
      %v3556 = vpop.f32.mrf.mxu0
      %v3557 = vadd.f32 0.0, %v3556
      %v3558 = vpop.f32.mrf.mxu0
      %3559 = vdwg.mxu0
      %3560 = vmatpush.bf16.msra.mxu0 0
      %3561 = vmatpush.bf16.msra.mxu0 0
      %3562 = vmatpush.bf16.msra.mxu0 0
      %3563 = vmatpush.bf16.msra.mxu0 0
      %3564 = vmatpush.bf16.msra.mxu0 0
      %3565 = vmatpush.bf16.msra.mxu0 0
      %3566 = vmatpush.bf16.msra.mxu0 0
      %3567 = vmatpush.bf16.msra.mxu0 %v3454
      %3568 = vmatmul.bf16.gmra.mxu0 %v3427
      %v3569 = vpop.f32.mrf.mxu0
      %v3570 = vadd.f32 0.0, %v3569
      %v3571 = vpop.f32.mrf.mxu0
      %3572 = vdwg.mxu0
      %v3573 = vadd.f32 %v3356, %v3466
      %v3574 = vadd.f32 %v3357, %v3479
      %v3575 = vadd.f32 %v3358, %v3492
      %v3576 = vadd.f32 %v3359, %v3505
      %v3577 = vadd.f32 %v3360, %v3518
      %v3578 = vadd.f32 %v3361, %v3531
      %v3579 = vadd.f32 %v3362, %v3544
      %v3580 = vadd.f32 %v3363, %v3557
      %v3581 = vadd.f32 %v3364, %v3570
      %s3582 = scalar_lea.vmem %s2, 32
      %v3583 = vld [vmem:[%s3582] sm:$0xf]
      %v3584 = vld [vmem:[%s234] sm:$0xff]
      %v3585 = vld [vmem:[%s234 + $0x8] sm:$0xff]
      %v3586 = vld [vmem:[%s234 + $0x10] sm:$0xff]
      %v3587 = vld [vmem:[%s234 + $0x18] sm:$0xff]
      %v3588 = vld [vmem:[%s234 + $0x20] sm:$0xff]
      %v3594 = vunpack.c.l.b16 %v3584
      %v3595 = vunpack.c.h.b16 %v3584
      %v3596 = vunpack.c.l.b16 %v3585
      %v3597 = vunpack.c.h.b16 %v3585
      %v3598 = vunpack.c.l.b16 %v3586
      %v3599 = vunpack.c.h.b16 %v3586
      %v3600 = vunpack.c.l.b16 %v3587
      %v3601 = vunpack.c.h.b16 %v3587
      %v3602 = vunpack.c.l.b16 %v3588
      %v3603 = vunpack.c.h.b16 %v3588
      %v3604 = vpack.c.b16 %v3594, %v3594
      %v3605 = vpack.c.b16 %v3595, %v3595
      %v3606 = vpack.c.b16 %v3596, %v3596
      %v3607 = vpack.c.b16 %v3597, %v3597
      %v3608 = vpack.c.b16 %v3598, %v3598
      %v3609 = vpack.c.b16 %v3599, %v3599
      %v3610 = vpack.c.b16 %v3600, %v3600
      %v3611 = vpack.c.b16 %v3601, %v3601
      %v3612 = vpack.c.b16 %v3602, %v3602
      %v3613 = vpack.c.b16 %v3603, %v3603
      %3614 = vrot.lane.b32.xlu0 %v3604, 58
      %v3615 = vpop.permute.xlu0 %3614
      %3616 = vrot.lane.b32.xlu0 %v3605, 58
      %v3617 = vpop.permute.xlu0 %3616
      %3618 = vrot.lane.b32.xlu0 %v3606, 58
      %v3619 = vpop.permute.xlu0 %3618
      %3620 = vrot.lane.b32.xlu0 %v3607, 58
      %v3621 = vpop.permute.xlu0 %3620
      %3622 = vrot.lane.b32.xlu0 %v3608, 58
      %v3623 = vpop.permute.xlu0 %3622
      %3624 = vrot.lane.b32.xlu0 %v3609, 58
      %v3625 = vpop.permute.xlu0 %3624
      %3626 = vrot.lane.b32.xlu0 %v3610, 58
      %v3627 = vpop.permute.xlu0 %3626
      %3628 = vrot.lane.b32.xlu0 %v3611, 58
      %v3629 = vpop.permute.xlu0 %3628
      %3630 = vrot.lane.b32.xlu0 %v3612, 58
      %v3631 = vpop.permute.xlu0 %3630
      %3632 = vrot.lane.b32.xlu0 %v3613, 58
      %v3633 = vpop.permute.xlu0 %3632
      %vm3634 = vcmask 474112
      %v3635 = vsel %vm3634, %v3615, %v3617
      %v3636 = vsel %vm3634, %v3617, %v3619
      %v3637 = vsel %vm3634, %v3619, %v3621
      %v3638 = vsel %vm3634, %v3621, %v3623
      %v3639 = vsel %vm3634, %v3623, %v3625
      %v3640 = vsel %vm3634, %v3625, %v3627
      %v3641 = vsel %vm3634, %v3627, %v3629
      %v3642 = vsel %vm3634, %v3629, %v3631
      %v3643 = vsel %vm3634, %v3631, %v3633
      %v3645 = vsel %vm438, %v3583, 0
      %v3648 = vsel %vm442, %v3635, 0
      %v3651 = vsel %vm442, %v3636, 0
      %v3654 = vsel %vm442, %v3637, 0
      %v3657 = vsel %vm442, %v3638, 0
      %v3660 = vsel %vm442, %v3639, 0
      %v3663 = vsel %vm442, %v3640, 0
      %v3666 = vsel %vm442, %v3641, 0
      %v3669 = vsel %vm442, %v3642, 0
      %v3672 = vsel %vm442, %v3643, 0
      %3674 = vmatpush.bf16.msra.mxu0 0
      %3675 = vmatpush.bf16.msra.mxu0 0
      %3676 = vmatpush.bf16.msra.mxu0 0
      %3677 = vmatpush.bf16.msra.mxu0 0
      %3678 = vmatpush.bf16.msra.mxu0 0
      %3679 = vmatpush.bf16.msra.mxu0 0
      %3680 = vmatpush.bf16.msra.mxu0 0
      %3681 = vmatpush.bf16.msra.mxu0 %v3648
      %3682 = vmatmul.bf16.gmra.mxu0 %v3645
      %v3683 = vpop.f32.mrf.mxu0
      %v3684 = vadd.f32 0.0, %v3683
      %v3685 = vpop.f32.mrf.mxu0
      %3686 = vdwg.mxu0
      %3687 = vmatpush.bf16.msra.mxu0 0
      %3688 = vmatpush.bf16.msra.mxu0 0
      %3689 = vmatpush.bf16.msra.mxu0 0
      %3690 = vmatpush.bf16.msra.mxu0 0
      %3691 = vmatpush.bf16.msra.mxu0 0
      %3692 = vmatpush.bf16.msra.mxu0 0
      %3693 = vmatpush.bf16.msra.mxu0 0
      %3694 = vmatpush.bf16.msra.mxu0 %v3651
      %3695 = vmatmul.bf16.gmra.mxu0 %v3645
      %v3696 = vpop.f32.mrf.mxu0
      %v3697 = vadd.f32 0.0, %v3696
      %v3698 = vpop.f32.mrf.mxu0
      %3699 = vdwg.mxu0
      %3700 = vmatpush.bf16.msra.mxu0 0
      %3701 = vmatpush.bf16.msra.mxu0 0
      %3702 = vmatpush.bf16.msra.mxu0 0
      %3703 = vmatpush.bf16.msra.mxu0 0
      %3704 = vmatpush.bf16.msra.mxu0 0
      %3705 = vmatpush.bf16.msra.mxu0 0
      %3706 = vmatpush.bf16.msra.mxu0 0
      %3707 = vmatpush.bf16.msra.mxu0 %v3654
      %3708 = vmatmul.bf16.gmra.mxu0 %v3645
      %v3709 = vpop.f32.mrf.mxu0
      %v3710 = vadd.f32 0.0, %v3709
      %v3711 = vpop.f32.mrf.mxu0
      %3712 = vdwg.mxu0
      %3713 = vmatpush.bf16.msra.mxu0 0
      %3714 = vmatpush.bf16.msra.mxu0 0
      %3715 = vmatpush.bf16.msra.mxu0 0
      %3716 = vmatpush.bf16.msra.mxu0 0
      %3717 = vmatpush.bf16.msra.mxu0 0
      %3718 = vmatpush.bf16.msra.mxu0 0
      %3719 = vmatpush.bf16.msra.mxu0 0
      %3720 = vmatpush.bf16.msra.mxu0 %v3657
      %3721 = vmatmul.bf16.gmra.mxu0 %v3645
      %v3722 = vpop.f32.mrf.mxu0
      %v3723 = vadd.f32 0.0, %v3722
      %v3724 = vpop.f32.mrf.mxu0
      %3725 = vdwg.mxu0
      %3726 = vmatpush.bf16.msra.mxu0 0
      %3727 = vmatpush.bf16.msra.mxu0 0
      %3728 = vmatpush.bf16.msra.mxu0 0
      %3729 = vmatpush.bf16.msra.mxu0 0
      %3730 = vmatpush.bf16.msra.mxu0 0
      %3731 = vmatpush.bf16.msra.mxu0 0
      %3732 = vmatpush.bf16.msra.mxu0 0
      %3733 = vmatpush.bf16.msra.mxu0 %v3660
      %3734 = vmatmul.bf16.gmra.mxu0 %v3645
      %v3735 = vpop.f32.mrf.mxu0
      %v3736 = vadd.f32 0.0, %v3735
      %v3737 = vpop.f32.mrf.mxu0
      %3738 = vdwg.mxu0
      %3739 = vmatpush.bf16.msra.mxu0 0
      %3740 = vmatpush.bf16.msra.mxu0 0
      %3741 = vmatpush.bf16.msra.mxu0 0
      %3742 = vmatpush.bf16.msra.mxu0 0
      %3743 = vmatpush.bf16.msra.mxu0 0
      %3744 = vmatpush.bf16.msra.mxu0 0
      %3745 = vmatpush.bf16.msra.mxu0 0
      %3746 = vmatpush.bf16.msra.mxu0 %v3663
      %3747 = vmatmul.bf16.gmra.mxu0 %v3645
      %v3748 = vpop.f32.mrf.mxu0
      %v3749 = vadd.f32 0.0, %v3748
      %v3750 = vpop.f32.mrf.mxu0
      %3751 = vdwg.mxu0
      %3752 = vmatpush.bf16.msra.mxu0 0
      %3753 = vmatpush.bf16.msra.mxu0 0
      %3754 = vmatpush.bf16.msra.mxu0 0
      %3755 = vmatpush.bf16.msra.mxu0 0
      %3756 = vmatpush.bf16.msra.mxu0 0
      %3757 = vmatpush.bf16.msra.mxu0 0
      %3758 = vmatpush.bf16.msra.mxu0 0
      %3759 = vmatpush.bf16.msra.mxu0 %v3666
      %3760 = vmatmul.bf16.gmra.mxu0 %v3645
      %v3761 = vpop.f32.mrf.mxu0
      %v3762 = vadd.f32 0.0, %v3761
      %v3763 = vpop.f32.mrf.mxu0
      %3764 = vdwg.mxu0
      %3765 = vmatpush.bf16.msra.mxu0 0
      %3766 = vmatpush.bf16.msra.mxu0 0
      %3767 = vmatpush.bf16.msra.mxu0 0
      %3768 = vmatpush.bf16.msra.mxu0 0
      %3769 = vmatpush.bf16.msra.mxu0 0
      %3770 = vmatpush.bf16.msra.mxu0 0
      %3771 = vmatpush.bf16.msra.mxu0 0
      %3772 = vmatpush.bf16.msra.mxu0 %v3669
      %3773 = vmatmul.bf16.gmra.mxu0 %v3645
      %v3774 = vpop.f32.mrf.mxu0
      %v3775 = vadd.f32 0.0, %v3774
      %v3776 = vpop.f32.mrf.mxu0
      %3777 = vdwg.mxu0
      %3778 = vmatpush.bf16.msra.mxu0 0
      %3779 = vmatpush.bf16.msra.mxu0 0
      %3780 = vmatpush.bf16.msra.mxu0 0
      %3781 = vmatpush.bf16.msra.mxu0 0
      %3782 = vmatpush.bf16.msra.mxu0 0
      %3783 = vmatpush.bf16.msra.mxu0 0
      %3784 = vmatpush.bf16.msra.mxu0 0
      %3785 = vmatpush.bf16.msra.mxu0 %v3672
      %3786 = vmatmul.bf16.gmra.mxu0 %v3645
      %v3787 = vpop.f32.mrf.mxu0
      %v3788 = vadd.f32 0.0, %v3787
      %v3789 = vpop.f32.mrf.mxu0
      %3790 = vdwg.mxu0
      %v3791 = vadd.f32 %v3573, %v3684
      %v3792 = vadd.f32 %v3574, %v3697
      %v3793 = vadd.f32 %v3575, %v3710
      %v3794 = vadd.f32 %v3576, %v3723
      %v3795 = vadd.f32 %v3577, %v3736
      %v3796 = vadd.f32 %v3578, %v3749
      %v3797 = vadd.f32 %v3579, %v3762
      %v3798 = vadd.f32 %v3580, %v3775
      %v3799 = vadd.f32 %v3581, %v3788
      %s3800 = scalar_lea.vmem %s3, 32
      %v3801 = vld [vmem:[%s3800] sm:$0xf]
      %v3802 = vld [vmem:[%s239] sm:$0xff]
      %v3803 = vld [vmem:[%s239 + $0x8] sm:$0xff]
      %v3804 = vld [vmem:[%s239 + $0x10] sm:$0xf]
      %3806 = vst [vmem:[#allocation1] ss:$4 sm:$0xff] %v3802
      %s3808 = scalar_lea.vmem [#allocation1], 32
      %3809 = vst [vmem:[%s3808] ss:$4 sm:$0xff] %v3803
      %v3810 = vld.sshfl [vmem:[#allocation1] sm:$0xff pattern:$0x73625140]
      %v3812 = vld.sshfl [vmem:[#allocation1 + $0x8] sm:$0xff pattern:$0x73625140]
      %v3814 = vld.sshfl [vmem:[#allocation1 + $0x10] sm:$0xff pattern:$0x73625140]
      %v3816 = vld.sshfl [vmem:[#allocation1 + $0x18] sm:$0xff pattern:$0x73625140]
      %v3818 = vld.sshfl [vmem:[#allocation1 + $0x20] sm:$0xff pattern:$0x73625140]
      %v3820 = vld.sshfl [vmem:[#allocation1 + $0x28] sm:$0xff pattern:$0x73625140]
      %v3822 = vld.sshfl [vmem:[#allocation1 + $0x30] sm:$0xff pattern:$0x73625140]
      %v3824 = vld.sshfl [vmem:[#allocation1 + $0x38] sm:$0xff pattern:$0x73625140]
      %3827 = vst [vmem:[#allocation1] ss:$4 sm:$0xff] %v3804
      %v3828 = vld.sshfl [vmem:[#allocation1] sm:$0xff pattern:$0x73625140]
      %v3830 = vld.sshfl [vmem:[#allocation1 + $0x8] sm:$0xff pattern:$0x73625140]
      %3832 = vrot.lane.b32.xlu0 %v3810, 58
      %v3833 = vpop.permute.xlu0 %3832
      %3834 = vrot.lane.b32.xlu0 %v3812, 58
      %v3835 = vpop.permute.xlu0 %3834
      %3836 = vrot.lane.b32.xlu0 %v3814, 58
      %v3837 = vpop.permute.xlu0 %3836
      %3838 = vrot.lane.b32.xlu0 %v3816, 58
      %v3839 = vpop.permute.xlu0 %3838
      %3840 = vrot.lane.b32.xlu0 %v3818, 58
      %v3841 = vpop.permute.xlu0 %3840
      %3842 = vrot.lane.b32.xlu0 %v3820, 58
      %v3843 = vpop.permute.xlu0 %3842
      %3844 = vrot.lane.b32.xlu0 %v3822, 58
      %v3845 = vpop.permute.xlu0 %3844
      %3846 = vrot.lane.b32.xlu0 %v3824, 58
      %v3847 = vpop.permute.xlu0 %3846
      %3848 = vrot.lane.b32.xlu0 %v3828, 58
      %v3849 = vpop.permute.xlu0 %3848
      %3850 = vrot.lane.b32.xlu0 %v3830, 58
      %v3851 = vpop.permute.xlu0 %3850
      %v3852 = vsel %vm3634, %v3833, %v3835
      %v3853 = vsel %vm3634, %v3835, %v3837
      %v3854 = vsel %vm3634, %v3837, %v3839
      %v3855 = vsel %vm3634, %v3839, %v3841
      %v3856 = vsel %vm3634, %v3841, %v3843
      %v3857 = vsel %vm3634, %v3843, %v3845
      %v3858 = vsel %vm3634, %v3845, %v3847
      %v3859 = vsel %vm3634, %v3847, %v3849
      %v3860 = vsel %vm3634, %v3849, %v3851
      %v3862 = vsel %vm272, %v3801, 0
      %v3865 = vand.u32 %v3852, %v279
      %v3868 = vand.u32 %v3853, %v279
      %v3871 = vand.u32 %v3854, %v279
      %v3874 = vand.u32 %v3855, %v279
      %v3877 = vand.u32 %v3856, %v279
      %v3880 = vand.u32 %v3857, %v279
      %v3883 = vand.u32 %v3858, %v279
      %v3886 = vand.u32 %v3859, %v279
      %v3889 = vand.u32 %v3860, %v279
      %3891 = vmatpush.bf16.msra.mxu0 0
      %3892 = vmatpush.bf16.msra.mxu0 0
      %3893 = vmatpush.bf16.msra.mxu0 0
      %3894 = vmatpush.bf16.msra.mxu0 0
      %3895 = vmatpush.bf16.msra.mxu0 0
      %3896 = vmatpush.bf16.msra.mxu0 0
      %3897 = vmatpush.bf16.msra.mxu0 0
      %3898 = vmatpush.bf16.msra.mxu0 %v3865
      %3899 = vmatmul.bf16.gmra.mxu0 %v3862
      %v3900 = vpop.f32.mrf.mxu0
      %v3901 = vadd.f32 0.0, %v3900
      %v3902 = vpop.f32.mrf.mxu0
      %3903 = vdwg.mxu0
      %3904 = vmatpush.bf16.msra.mxu0 0
      %3905 = vmatpush.bf16.msra.mxu0 0
      %3906 = vmatpush.bf16.msra.mxu0 0
      %3907 = vmatpush.bf16.msra.mxu0 0
      %3908 = vmatpush.bf16.msra.mxu0 0
      %3909 = vmatpush.bf16.msra.mxu0 0
      %3910 = vmatpush.bf16.msra.mxu0 0
      %3911 = vmatpush.bf16.msra.mxu0 %v3868
      %3912 = vmatmul.bf16.gmra.mxu0 %v3862
      %v3913 = vpop.f32.mrf.mxu0
      %v3914 = vadd.f32 0.0, %v3913
      %v3915 = vpop.f32.mrf.mxu0
      %3916 = vdwg.mxu0
      %3917 = vmatpush.bf16.msra.mxu0 0
      %3918 = vmatpush.bf16.msra.mxu0 0
      %3919 = vmatpush.bf16.msra.mxu0 0
      %3920 = vmatpush.bf16.msra.mxu0 0
      %3921 = vmatpush.bf16.msra.mxu0 0
      %3922 = vmatpush.bf16.msra.mxu0 0
      %3923 = vmatpush.bf16.msra.mxu0 0
      %3924 = vmatpush.bf16.msra.mxu0 %v3871
      %3925 = vmatmul.bf16.gmra.mxu0 %v3862
      %v3926 = vpop.f32.mrf.mxu0
      %v3927 = vadd.f32 0.0, %v3926
      %v3928 = vpop.f32.mrf.mxu0
      %3929 = vdwg.mxu0
      %3930 = vmatpush.bf16.msra.mxu0 0
      %3931 = vmatpush.bf16.msra.mxu0 0
      %3932 = vmatpush.bf16.msra.mxu0 0
      %3933 = vmatpush.bf16.msra.mxu0 0
      %3934 = vmatpush.bf16.msra.mxu0 0
      %3935 = vmatpush.bf16.msra.mxu0 0
      %3936 = vmatpush.bf16.msra.mxu0 0
      %3937 = vmatpush.bf16.msra.mxu0 %v3874
      %3938 = vmatmul.bf16.gmra.mxu0 %v3862
      %v3939 = vpop.f32.mrf.mxu0
      %v3940 = vadd.f32 0.0, %v3939
      %v3941 = vpop.f32.mrf.mxu0
      %3942 = vdwg.mxu0
      %3943 = vmatpush.bf16.msra.mxu0 0
      %3944 = vmatpush.bf16.msra.mxu0 0
      %3945 = vmatpush.bf16.msra.mxu0 0
      %3946 = vmatpush.bf16.msra.mxu0 0
      %3947 = vmatpush.bf16.msra.mxu0 0
      %3948 = vmatpush.bf16.msra.mxu0 0
      %3949 = vmatpush.bf16.msra.mxu0 0
      %3950 = vmatpush.bf16.msra.mxu0 %v3877
      %3951 = vmatmul.bf16.gmra.mxu0 %v3862
      %v3952 = vpop.f32.mrf.mxu0
      %v3953 = vadd.f32 0.0, %v3952
      %v3954 = vpop.f32.mrf.mxu0
      %3955 = vdwg.mxu0
      %3956 = vmatpush.bf16.msra.mxu0 0
      %3957 = vmatpush.bf16.msra.mxu0 0
      %3958 = vmatpush.bf16.msra.mxu0 0
      %3959 = vmatpush.bf16.msra.mxu0 0
      %3960 = vmatpush.bf16.msra.mxu0 0
      %3961 = vmatpush.bf16.msra.mxu0 0
      %3962 = vmatpush.bf16.msra.mxu0 0
      %3963 = vmatpush.bf16.msra.mxu0 %v3880
      %3964 = vmatmul.bf16.gmra.mxu0 %v3862
      %v3965 = vpop.f32.mrf.mxu0
      %v3966 = vadd.f32 0.0, %v3965
      %v3967 = vpop.f32.mrf.mxu0
      %3968 = vdwg.mxu0
      %3969 = vmatpush.bf16.msra.mxu0 0
      %3970 = vmatpush.bf16.msra.mxu0 0
      %3971 = vmatpush.bf16.msra.mxu0 0
      %3972 = vmatpush.bf16.msra.mxu0 0
      %3973 = vmatpush.bf16.msra.mxu0 0
      %3974 = vmatpush.bf16.msra.mxu0 0
      %3975 = vmatpush.bf16.msra.mxu0 0
      %3976 = vmatpush.bf16.msra.mxu0 %v3883
      %3977 = vmatmul.bf16.gmra.mxu0 %v3862
      %v3978 = vpop.f32.mrf.mxu0
      %v3979 = vadd.f32 0.0, %v3978
      %v3980 = vpop.f32.mrf.mxu0
      %3981 = vdwg.mxu0
      %3982 = vmatpush.bf16.msra.mxu0 0
      %3983 = vmatpush.bf16.msra.mxu0 0
      %3984 = vmatpush.bf16.msra.mxu0 0
      %3985 = vmatpush.bf16.msra.mxu0 0
      %3986 = vmatpush.bf16.msra.mxu0 0
      %3987 = vmatpush.bf16.msra.mxu0 0
      %3988 = vmatpush.bf16.msra.mxu0 0
      %3989 = vmatpush.bf16.msra.mxu0 %v3886
      %3990 = vmatmul.bf16.gmra.mxu0 %v3862
      %v3991 = vpop.f32.mrf.mxu0
      %v3992 = vadd.f32 0.0, %v3991
      %v3993 = vpop.f32.mrf.mxu0
      %3994 = vdwg.mxu0
      %3995 = vmatpush.bf16.msra.mxu0 0
      %3996 = vmatpush.bf16.msra.mxu0 0
      %3997 = vmatpush.bf16.msra.mxu0 0
      %3998 = vmatpush.bf16.msra.mxu0 0
      %3999 = vmatpush.bf16.msra.mxu0 0
      %4000 = vmatpush.bf16.msra.mxu0 0
      %4001 = vmatpush.bf16.msra.mxu0 0
      %4002 = vmatpush.bf16.msra.mxu0 %v3889
      %4003 = vmatmul.bf16.gmra.mxu0 %v3862
      %v4004 = vpop.f32.mrf.mxu0
      %v4005 = vadd.f32 0.0, %v4004
      %v4006 = vpop.f32.mrf.mxu0
      %4007 = vdwg.mxu0
      %v4008 = vadd.f32 %v3791, %v3901
      %v4009 = vadd.f32 %v3792, %v3914
      %v4010 = vadd.f32 %v3793, %v3927
      %v4011 = vadd.f32 %v3794, %v3940
      %v4012 = vadd.f32 %v3795, %v3953
      %v4013 = vadd.f32 %v3796, %v3966
      %v4014 = vadd.f32 %v3797, %v3979
      %v4015 = vadd.f32 %v3798, %v3992
      %v4016 = vadd.f32 %v3799, %v4005
      %v4017 = vld [vmem:[%s4] sm:$0xff]
      %4019 = vset.pattern.permute.xlu0 0
      %4020 = vperm.xlu0 %4019, %v4017
      %v4021 = vpop.permute.xlu0 %4020
      %v4023 = vadd.f32 %v4008, %v4021
      %v4024 = vadd.f32 %v4009, %v4021
      %v4025 = vadd.f32 %v4010, %v4021
      %v4026 = vadd.f32 %v4011, %v4021
      %v4027 = vadd.f32 %v4012, %v4021
      %v4028 = vadd.f32 %v4013, %v4021
      %v4029 = vadd.f32 %v4014, %v4021
      %v4030 = vadd.f32 %v4015, %v4021
      %v4031 = vadd.f32 %v4016, %v4021
      %v4032 = vmax.f32 %v4023, 0.0
      %v4033 = vmax.f32 %v4024, 0.0
      %v4034 = vmax.f32 %v4025, 0.0
      %v4035 = vmax.f32 %v4026, 0.0
      %v4036 = vmax.f32 %v4027, 0.0
      %v4037 = vmax.f32 %v4028, 0.0
      %v4038 = vmax.f32 %v4029, 0.0
      %v4039 = vmax.f32 %v4030, 0.0
      %v4040 = vmax.f32 %v4031, 0.0
      %v4041 = vpack.c.bf16 %v4033, %v4032
      %v4042 = vpack.c.bf16 %v4035, %v4034
      %v4043 = vpack.c.bf16 %v4037, %v4036
      %v4044 = vpack.c.bf16 %v4039, %v4038
      %v4045 = vpack.c.bf16 %v4040, %v4040
      %4046 = vst [vmem:[%s244] sm:$0xff] %v4041
      %4047 = vst [vmem:[%s244 + $0x8] sm:$0xff] %v4042
      %4048 = vst [vmem:[%s244 + $0x10] sm:$0xff] %v4043
      %4049 = vst [vmem:[%s244 + $0x18] sm:$0xff] %v4044
      %vm4050 = vcmask 519168
      %4051 = vst.msk [vmem:[%s244 + $0x20] sm:$0xf] %vm4050, %v4045
      %p4052 = scmp.lt.s32.totalorder %s16, 1
      %s4053 = scalar_select %p4052, %s16, 1
      %s4054 = smul.addr %s4053, 9
      %s4055 = smul.addr %s4054, 4
      %s4056 = scalar_lea.vmem %s5, %s4055
      // Predicated region
      $region41: #{_lambda_.9} parent=39 // pred_check
        %p4057 = pneg %p149
      $region42: #{_lambda_.9} parent=39 // pred_check_branch
        %4059 = sbr.rel (%p4057) target = $region44
      $region43: #{_lambda_.9} parent=39 // pred_region
        _
      $region44: #{_lambda_.9} parent=39 // pred_fallthru
        _
    $region40: #{_lambda_.9} parent=5 // pred_fallthru
      _
    %p4060 = scmp.le.s32.totalorder 2, %s11
    // Predicated region
    $region45: #{_lambda_.9} parent=5 // pred_check
      %p4061 = pneg %p4060
    $region46: #{_lambda_.9} parent=5 // pred_check_branch
      %4063 = sbr.rel (%p4061) target = $region48
    $region47: #{_lambda_.9} parent=5 // pred_region
      %s4064 = ssub.s32 %s11, 2
      // Predicated region
      $region49: #{_lambda_.9} parent=47 // pred_check
        %p4065 = pneg %p155
      $region50: #{_lambda_.9} parent=47 // pred_check_branch
        %4067 = sbr.rel (%p4065) target = $region52
      $region51: #{_lambda_.9} parent=47 // pred_region
        %p4068 = scmp.lt.s32.totalorder %s17, 1
        %s4069 = scalar_select %p4068, %s17, 1
        %s4070 = smul.addr %s4069, 9
        %s4071 = smul.addr %s4070, 4
        %s4072 = scalar_lea.vmem %s5, %s4071
      $region52: #{_lambda_.9} parent=47 // pred_fallthru
        _
    $region48: #{_lambda_.9} parent=5 // pred_fallthru
      _
  $region6: #{_lambda_.9} parent=0 // loop_footer
    %s15 = sadd.s32 1, %s11
  $region7: #{_lambda_.9} parent=0 // loop_footer_branch
    %10 = sbr.rel target = $region3
  $region8: #{_lambda_.9} parent=0 // loop_exit
    _

</llo_original>
